<compile_context>
chip_gen: v7x
topology: tpu7x:2x2x1
jax: 0.10.0
libtpu: 0.0.40
codegen_flags: <defaults>
</compile_context>

<pallas_src>
import functools
import math

import jax
import jax.numpy as jnp
import numpy as np
from jax import lax
from jax.experimental import pallas as pl
from jax.experimental.pallas import tpu as pltpu

_LANE = 128
_SUBLANE = 8


def _round_up(x, m):
    return ((x + m - 1) // m) * m


def _device_vmem_bytes():
    """Per-core VMEM capacity; conservative (v7x-safe) fallback."""
    try:
        info = pltpu.get_tpu_info()
        cap = getattr(info, "vmem_capacity_bytes", None)
        if cap:
            return int(cap)
    except Exception:
        pass
    return 64 << 20   # v7x per-TC floor; safe on every generation


def _pad_gates(w, rows_pad, hp, dtype=jnp.float32):
    """[rows, 4H] (PyTorch gate order i,f,g,o) -> [rows_pad, 4*hp].

    Each gate block is re-based at a lane-aligned offset k*hp; padding is 0.
    """
    rows, four_h = w.shape
    h = four_h // 4
    out = jnp.zeros((rows_pad, 4 * hp), jnp.float32)
    for k in range(4):
        out = out.at[:rows, k * hp:k * hp + h].set(w[:, k * h:(k + 1) * h])
    return out.astype(dtype)


def _pad2(a, rows, cols):
    return jnp.pad(a.astype(jnp.float32),
                   ((0, rows - a.shape[0]), (0, cols - a.shape[1])))


# ------------------------------ fused kernel ---------------------------------
def _make_fused_kernel(num_layers, t_chunk, bp, hp, seq_len):
    """Fused LSTM-stack + linear-head kernel (time-chunked grid)."""
    needs_mask = (seq_len % t_chunk) != 0   # ragged trailing chunk?

    def kernel(*refs):
        # ---- unpack -----------------------------------------------------
        x_ref = refs[0]                                   # [t_chunk*bp, Ipad]
        lstm_refs = refs[1:1 + 3 * num_layers]            # (w_ih, w_hh, b) x L
        w_head_ref = refs[1 + 3 * num_layers]             # [hp, op]  (sampled)
        b_head_ref = refs[2 + 3 * num_layers]             # [1, op]   (sampled)
        out_ref = refs[3 + 3 * num_layers]
        hn_ref = refs[4 + 3 * num_layers]
        h_s, c_s, seq_s, gx_s = refs[5 + 3 * num_layers:]

        chunk = pl.program_id(0)

        @pl.when(chunk == 0)
        def _init():
            h_s[...] = jnp.zeros_like(h_s)
            c_s[...] = jnp.zeros_like(c_s)

        for layer in range(num_layers):
            w_ih_ref = lstm_refs[3 * layer + 0]           # [in_pad, 4*hp] bf16
            w_hh_ref = lstm_refs[3 * layer + 1]           # [hp, 4*hp]     f32
            b_ref = lstm_refs[3 * layer + 2]              # [1, 4*hp]      f32

            # Hoisted input projection for the whole chunk: one tall MXU
            # matmul with bf16 operands and f32 accumulation, bias folded in.
            if layer == 0:
                xin = x_ref[...]
            else:
                xin = seq_s[...]
            gx_s[...] = (jnp.dot(xin.astype(w_ih_ref.dtype), w_ih_ref[...],
                                 preferred_element_type=jnp.float32)
                         + b_ref[...])

            def step(ts, carry, _layer=layer, _w_hh=w_hh_ref):
                row = pl.multiple_of(ts * bp, bp)         # 8-aligned sublane
                h_prev = h_s[_layer]                      # [bp, hp]
                c_prev = c_s[_layer]
                # Recurrent matmul stays f32 (it feeds itself every step).
                gates = (gx_s[pl.ds(row, bp), :]
                         + jnp.dot(h_prev, _w_hh[...],
                                   preferred_element_type=jnp.float32))
                # Lane-aligned 128-wide gate slices (hp is a multiple of 128).
                i_g = jax.nn.sigmoid(gates[:, 0 * hp:1 * hp])
                f_g = jax.nn.sigmoid(gates[:, 1 * hp:2 * hp])
                g_g = jnp.tanh(gates[:, 2 * hp:3 * hp])
                o_g = jax.nn.sigmoid(gates[:, 3 * hp:4 * hp])
                c_new = f_g * c_prev + i_g * g_g
                h_new = o_g * jnp.tanh(c_new)
                if needs_mask:
                    # Freeze state on zero-padded trailing time steps so the
                    # grid can cover T that is not a multiple of t_chunk.
                    keep = ((chunk * t_chunk + ts) < seq_len).astype(jnp.float32)
                    c_new = keep * c_new + (1.0 - keep) * c_prev
                    h_new = keep * h_new + (1.0 - keep) * h_prev
                c_s[_layer] = c_new
                h_s[_layer] = h_new
                if _layer < num_layers - 1:               # feed next layer
                    seq_s[pl.ds(row, bp), :] = h_new
                return carry

            lax.fori_loop(0, t_chunk, step, 0, unroll=min(t_chunk, 8))

        # ---- epilogue: (pre-sampled) Bayesian linear head -----------------
        @pl.when(chunk == pl.num_programs(0) - 1)
        def _finalize():
            hn_ref[...] = h_s[...]
            out_ref[...] = (jnp.dot(h_s[num_layers - 1], w_head_ref[...],
                                    preferred_element_type=jnp.float32)
                            + b_head_ref[...])

    return kernel


# ------------------------------ forward wrapper -------------------------------
def bayes_lstm_forward(params, x, eps_key, *, max_time_chunk=None,
                       bf16_input_proj=True, resident_single_buffer=True):
    """x: [B, T, input_size] (batch_first). Returns (out [B,O], hn [L,B,H])."""
    B, T, I = x.shape
    num_layers = len(params["lstm"])
    H = params["lstm"][0]["w_hh_t"].shape[0]
    O = params["bnn"]["w_mu_t"].shape[1]

    bp = _round_up(B, _SUBLANE)            # batch  -> sublane multiple
    hp = _round_up(H, _LANE)               # hidden -> lane multiple
    ip = _round_up(I, _LANE)               # input  -> lane multiple
    op = _round_up(O, _LANE)               # output -> lane multiple

    # ---- generation-aware VMEM budget & time-chunk derivation ----
    vmem_cap = _device_vmem_bytes()
    usable = max(vmem_cap - (8 << 20), 16 << 20)       # headroom for compiler
    vmem_limit = int(min(usable, 120 << 20))
    # Per-time-step chunk VMEM: gx_s (4*hp) + seq_s (hp) f32 scratch + the
    # double-buffered f32 x chunk (2*ip). Cap at ~1/3 of usable VMEM.
    per_step_bytes = 4 * bp * (5 * hp + 2 * ip)
    tt = max(1, int((usable // 3) // per_step_bytes))
    tt = min(tt, T, 1024)
    if max_time_chunk is not None:
        tt = max(1, min(tt, int(max_time_chunk)))
    n_chunks = -(-T // tt)                              # ceil: no T % tt rule
    T_pad = n_chunks * tt

    # ---- wrapper glue: pad & lay out inputs (time-major, row = (t, b)) ----
    x_tm = jnp.transpose(x.astype(jnp.float32), (1, 0, 2))        # [T, B, I]
    x_tm = jnp.pad(x_tm, ((0, T_pad - T), (0, bp - B), (0, ip - I)))
    x_flat = x_tm.reshape(T_pad * bp, ip)                         # [Tp*bp, ip]

    w_ih_dtype = jnp.bfloat16 if bf16_input_proj else jnp.float32
    lstm_inputs = []
    for layer, lp in enumerate(params["lstm"]):
        in_pad = ip if layer == 0 else hp
        lstm_inputs += [_pad_gates(lp["w_ih_t"], in_pad, hp, w_ih_dtype),
                        _pad_gates(lp["w_hh_t"], hp, hp),
                        _pad_gates(lp["b"], 1, hp)]

    # Bayesian-head sampling folded into the wrapper (pure setup work).
    bnn = params["bnn"]
    k_w, k_b = jax.random.split(eps_key)
    eps_w = jax.random.normal(k_w, bnn["w_mu_t"].shape, jnp.float32)
    eps_b = jax.random.normal(k_b, bnn["b_mu"].shape, jnp.float32)
    w_head = bnn["w_mu_t"] + jnp.exp(bnn["w_ls_t"]) * eps_w
    b_head = bnn["b_mu"] + jnp.exp(bnn["b_ls"]) * eps_b
    head_inputs = [_pad2(w_head, hp, op), _pad2(b_head, 1, op)]

    all_inputs = [x_flat] + lstm_inputs + head_inputs

    # ---- specs ----
    def _resident_spec(shape):
        idx = lambda c: (0,) * len(shape)
        if resident_single_buffer:
            try:
                # Constant block index -> no pipelining needed: single buffer.
                return pl.BlockSpec(shape, idx, pipeline_mode=pl.Buffered(1))
            except TypeError:           # BlockSpec without pipeline_mode
                pass
        return pl.BlockSpec(shape, idx)

    in_specs = [pl.BlockSpec((tt * bp, ip), lambda c: (c, 0))]      # pipelined
    in_specs += [_resident_spec(a.shape) for a in all_inputs[1:]]   # resident

    out_specs = (pl.BlockSpec((bp, op), lambda c: (0, 0)),
                 pl.BlockSpec((num_layers, bp, hp), lambda c: (0, 0, 0)))
    out_shape = (jax.ShapeDtypeStruct((bp, op), jnp.float32),
                 jax.ShapeDtypeStruct((num_layers, bp, hp), jnp.float32))

    scratch = [pltpu.VMEM((num_layers, bp, hp), jnp.float32),   # h state
               pltpu.VMEM((num_layers, bp, hp), jnp.float32),   # c state
               pltpu.VMEM((tt * bp, hp), jnp.float32),          # layer output
               pltpu.VMEM((tt * bp, 4 * hp), jnp.float32)]      # gates_x

    # ---- cost estimate (advisory) ----
    in_pads = [ip] + [hp] * (num_layers - 1)
    flops = 0
    for p in in_pads:
        flops += 2 * T_pad * bp * p * 4 * hp      # hoisted input projection
        flops += 2 * T_pad * bp * hp * 4 * hp     # recurrent matmul
    flops += 2 * bp * hp * op                     # head
    transcendentals = T_pad * bp * 5 * hp * num_layers
    bytes_in = sum(int(np.prod(a.shape)) * a.dtype.itemsize for a in all_inputs)
    bytes_out = 4 * (bp * op + num_layers * bp * hp)

    kernel = _make_fused_kernel(num_layers, tt, bp, hp, T)

    out_pad, hn_pad = pl.pallas_call(
        kernel,
        out_shape=out_shape,
        grid_spec=pltpu.PrefetchScalarGridSpec(
            num_scalar_prefetch=0,
            grid=(n_chunks,),
            in_specs=in_specs,
            out_specs=out_specs,
            scratch_shapes=scratch),
        compiler_params=pltpu.CompilerParams(
            dimension_semantics=("arbitrary",),
            vmem_limit_bytes=vmem_limit),
        cost_estimate=pl.CostEstimate(flops=int(flops),
                                      transcendentals=int(transcendentals),
                                      bytes_accessed=int(bytes_in + bytes_out)),
    )(*all_inputs)

    return out_pad[:B, :O], hn_pad[:, :B, :H]


# ------------------------------ params / reference ----------------------------
def init_params(key, input_size, hidden_size, num_layers, output_size,
                prior_sigma=0.05):
    params = {"lstm": [], "bnn": {}}
    stdv = 1.0 / math.sqrt(hidden_size)
    for layer in range(num_layers):
        in_l = input_size if layer == 0 else hidden_size
        key, k1, k2, k3, k4 = jax.random.split(key, 5)
        w_ih = jax.random.uniform(k1, (4 * hidden_size, in_l), jnp.float32,
                                  -stdv, stdv)
        w_hh = jax.random.uniform(k2, (4 * hidden_size, hidden_size),
                                  jnp.float32, -stdv, stdv)
        b_ih = jax.random.uniform(k3, (4 * hidden_size,), jnp.float32,
                                  -stdv, stdv)
        b_hh = jax.random.uniform(k4, (4 * hidden_size,), jnp.float32,
                                  -stdv, stdv)
        params["lstm"].append({
            "w_ih_t": w_ih.T,                          # [in_l, 4H]
            "w_hh_t": w_hh.T,                          # [H, 4H]
            "b": (b_ih + b_hh)[None, :],               # [1, 4H]
        })
    key, k1, k2 = jax.random.split(key, 3)
    w_mu = jax.random.uniform(k1, (output_size, hidden_size), jnp.float32,
                              -stdv, stdv)
    b_mu = jax.random.uniform(k2, (output_size,), jnp.float32, -stdv, stdv)
    log_sig = math.log(prior_sigma)
    params["bnn"] = {
        "w_mu_t": w_mu.T,                                            # [H, O]
        "w_ls_t": jnp.full((hidden_size, output_size), log_sig, jnp.float32),
        "b_mu": b_mu[None, :],                                       # [1, O]
        "b_ls": jnp.full((1, output_size), log_sig, jnp.float32),
    }
    return params


def ref_forward(params, x, eps_key):
    B, T, _ = x.shape
    hp_prec = jax.lax.Precision.HIGHEST
    layer_in = x.astype(jnp.float32)
    hns = []
    for lp in params["lstm"]:
        H = lp["w_hh_t"].shape[0]
        h = jnp.zeros((B, H), jnp.float32)
        c = jnp.zeros((B, H), jnp.float32)
        outs = []
        for t in range(T):
            g = (jnp.dot(layer_in[:, t, :], lp["w_ih_t"], precision=hp_prec)
                 + jnp.dot(h, lp["w_hh_t"], precision=hp_prec) + lp["b"])
            i_g = jax.nn.sigmoid(g[:, :H])
            f_g = jax.nn.sigmoid(g[:, H:2 * H])
            g_g = jnp.tanh(g[:, 2 * H:3 * H])
            o_g = jax.nn.sigmoid(g[:, 3 * H:])
            c = f_g * c + i_g * g_g
            h = o_g * jnp.tanh(c)
            outs.append(h)
        layer_in = jnp.stack(outs, axis=1)
        hns.append(h)
    last = layer_in[:, -1, :]
    bnn = params["bnn"]
    k_w, k_b = jax.random.split(eps_key)
    eps_w = jax.random.normal(k_w, bnn["w_mu_t"].shape, jnp.float32)
    eps_b = jax.random.normal(k_b, bnn["b_mu"].shape, jnp.float32)
    w = bnn["w_mu_t"] + jnp.exp(bnn["w_ls_t"]) * eps_w
    b = bnn["b_mu"] + jnp.exp(bnn["b_ls"]) * eps_b
    return jnp.dot(last, w, precision=hp_prec) + b, jnp.stack(hns, axis=0)


# ------------------------------------ main ------------------------------------
if __name__ == "__main__":
    B, T = 2, 8
    input_size, hidden_size, num_layers, output_size = 4, 32, 2, 4

    root = jax.random.PRNGKey(0)
    k_param, k_x, k_eps = jax.random.split(root, 3)

    params = init_params(k_param, input_size, hidden_size, num_layers,
                         output_size)
    x = jax.random.normal(k_x, (B, T, input_size), jnp.float32)

    # max_time_chunk=5 forces 2 grid steps (exercising the carried h/c state)
    # AND a ragged tail (8 % 5 != 0), exercising the time-mask path.
    def _run(single_buffer):
        fwd = jax.jit(functools.partial(bayes_lstm_forward, max_time_chunk=5,
                                        resident_single_buffer=single_buffer))
        o, h = fwd(params, x, k_eps)
        return jax.block_until_ready(o), jax.block_until_ready(h)

    try:
        out, hn = _run(True)
    except Exception:
        # Fallback if this JAX build rejects pl.Buffered(1) resident specs:
        # identical kernel, weights just stay default double-buffered.
        out, hn = _run(False)

    out_ref, hn_ref = ref_forward(params, x, k_eps)

    assert out.shape == (B, output_size)
    assert hn.shape == (num_layers, B, hidden_size)
    # bf16 feeds the hoisted input projection (its rounding error re-enters
    # the recurrence every step), so compare at bf16-matmul tolerance against
    # the f32 HIGHEST-precision reference.
    np.testing.assert_allclose(np.asarray(out), np.asarray(out_ref),
                               rtol=1e-2, atol=1e-2)
    np.testing.assert_allclose(np.asarray(hn), np.asarray(hn_ref),
                               rtol=1e-2, atol=1e-2)
    print("KERNEL_OK")
</pallas_src>

<mosaic_0001>
module attributes {stable_mosaic.version = 11 : i64} {
  func.func @kernel(%arg0: i32, %arg1: memref<40x128xf32, #tpu.memory_space<vmem>>, %arg2: memref<128x512xbf16, #tpu.memory_space<vmem>>, %arg3: memref<128x512xf32, #tpu.memory_space<vmem>>, %arg4: memref<1x512xf32, #tpu.memory_space<vmem>>, %arg5: memref<128x512xbf16, #tpu.memory_space<vmem>>, %arg6: memref<128x512xf32, #tpu.memory_space<vmem>>, %arg7: memref<1x512xf32, #tpu.memory_space<vmem>>, %arg8: memref<128x128xf32, #tpu.memory_space<vmem>>, %arg9: memref<1x128xf32, #tpu.memory_space<vmem>>, %arg10: memref<8x128xf32, #tpu.memory_space<vmem>>, %arg11: memref<2x8x128xf32, #tpu.memory_space<vmem>>, %arg12: memref<2x8x128xf32, #tpu.memory_space<vmem>>, %arg13: memref<2x8x128xf32, #tpu.memory_space<vmem>>, %arg14: memref<40x128xf32, #tpu.memory_space<vmem>>, %arg15: memref<40x512xf32, #tpu.memory_space<vmem>>) attributes {dimension_semantics = [#tpu.dimension_semantics<arbitrary>], iteration_bounds = array<i64: 2>, scalar_prefetch = 0 : i64, scratch_operands = 4 : i64, tpu.core_type = #tpu.core_type<tc>, window_params = [{transform_indices = @transform_0, window_bounds = array<i64: 40, 128>}, {pipeline_mode = #tpu.pipeline_mode<synchronous>, transform_indices = @transform_1, window_bounds = array<i64: 128, 512>}, {pipeline_mode = #tpu.pipeline_mode<synchronous>, transform_indices = @transform_2, window_bounds = array<i64: 128, 512>}, {pipeline_mode = #tpu.pipeline_mode<synchronous>, transform_indices = @transform_3, window_bounds = array<i64: 1, 512>}, {pipeline_mode = #tpu.pipeline_mode<synchronous>, transform_indices = @transform_4, window_bounds = array<i64: 128, 512>}, {pipeline_mode = #tpu.pipeline_mode<synchronous>, transform_indices = @transform_5, window_bounds = array<i64: 128, 512>}, {pipeline_mode = #tpu.pipeline_mode<synchronous>, transform_indices = @transform_6, window_bounds = array<i64: 1, 512>}, {pipeline_mode = #tpu.pipeline_mode<synchronous>, transform_indices = @transform_7, window_bounds = array<i64: 128, 128>}, {pipeline_mode = #tpu.pipeline_mode<synchronous>, transform_indices = @transform_8, window_bounds = array<i64: 1, 128>}, {pipeline_mode = #tpu.pipeline_mode<synchronous>, transform_indices = @transform_9, window_bounds = array<i64: 8, 128>}, {pipeline_mode = #tpu.pipeline_mode<synchronous>, transform_indices = @transform_10, window_bounds = array<i64: 2, 8, 128>}]} {
    %c0_i32 = arith.constant 0 : i32
    %0 = arith.cmpi eq, %arg0, %c0_i32 : i32
    %1 = arith.extui %0 : i1 to i32
    %c0_i32_0 = arith.constant 0 : i32
    %2 = arith.cmpi ne, %1, %c0_i32_0 : i32
    scf.if %2 {
      %cst_269 = arith.constant 0.000000e+00 : f32
      %622 = vector.broadcast %cst_269 : f32 to vector<2x8x128xf32>
      %c0_270 = arith.constant 0 : index
      %c0_271 = arith.constant 0 : index
      %c0_272 = arith.constant 0 : index
      %623 = vector.load %arg12[%c0_270, %c0_271, %c0_272] : memref<2x8x128xf32, #tpu.memory_space<vmem>>, vector<2x8x128xf32>
      tpu.vector_store %arg12[%c0_270, %c0_271, %c0_272], %622 {strides = array<i32>} : memref<2x8x128xf32, #tpu.memory_space<vmem>>, vector<2x8x128xf32>,
      %cst_273 = arith.constant 0.000000e+00 : f32
      %624 = vector.broadcast %cst_273 : f32 to vector<2x8x128xf32>
      %c0_274 = arith.constant 0 : index
      %c0_275 = arith.constant 0 : index
      %c0_276 = arith.constant 0 : index
      %625 = vector.load %arg13[%c0_274, %c0_275, %c0_276] : memref<2x8x128xf32, #tpu.memory_space<vmem>>, vector<2x8x128xf32>
      tpu.vector_store %arg13[%c0_274, %c0_275, %c0_276], %624 {strides = array<i32>} : memref<2x8x128xf32, #tpu.memory_space<vmem>>, vector<2x8x128xf32>,
    } else {
    }
    %c0 = arith.constant 0 : index
    %c0_1 = arith.constant 0 : index
    %3 = vector.load %arg1[%c0, %c0_1] : memref<40x128xf32, #tpu.memory_space<vmem>>, vector<40x128xf32>
    %4 = arith.truncf %3 : vector<40x128xf32> to vector<40x128xbf16>
    %c0_2 = arith.constant 0 : index
    %c0_3 = arith.constant 0 : index
    %5 = vector.load %arg2[%c0_2, %c0_3] : memref<128x512xbf16, #tpu.memory_space<vmem>>, vector<128x512xbf16>
    %cst = arith.constant dense<0.000000e+00> : vector<40x512xf32>
    %6 = tpu.matmul %4, %5, %cst {dimension_numbers = #tpu.dot_dimension_numbers<[1], [0], [0], [1], [0, 0, 1, 1], [], []>} : vector<40x128xbf16>, vector<128x512xbf16>, vector<40x512xf32> -> vector<40x512xf32>
    %c0_4 = arith.constant 0 : index
    %c0_5 = arith.constant 0 : index
    %7 = vector.load %arg4[%c0_4, %c0_5] : memref<1x512xf32, #tpu.memory_space<vmem>>, vector<1x512xf32>
    %8 = vector.broadcast %7 : vector<1x512xf32> to vector<40x512xf32>
    %9 = arith.addf %6, %8 : vector<40x512xf32>
    %c0_6 = arith.constant 0 : index
    %c0_7 = arith.constant 0 : index
    %10 = vector.load %arg15[%c0_6, %c0_7] : memref<40x512xf32, #tpu.memory_space<vmem>>, vector<40x512xf32>
    tpu.vector_store %arg15[%c0_6, %c0_7], %9 {strides = array<i32>} : memref<40x512xf32, #tpu.memory_space<vmem>>, vector<40x512xf32>,
    %c0_i32_8 = arith.constant 0 : i32
    %c8_i32 = arith.constant 8 : i32
    %11 = arith.muli %c0_i32_8, %c8_i32 : i32
    %12 = tpu.assume_multiple %11, 8 : i32
    %c0_9 = arith.constant 0 : index
    %c0_10 = arith.constant 0 : index
    %c0_11 = arith.constant 0 : index
    %13 = vector.load %arg12[%c0_9, %c0_10, %c0_11] : memref<2x8x128xf32, #tpu.memory_space<vmem>>, vector<1x8x128xf32>
    %14 = vector.shape_cast %13 : vector<1x8x128xf32> to vector<8x128xf32>
    %c0_12 = arith.constant 0 : index
    %c0_13 = arith.constant 0 : index
    %c0_14 = arith.constant 0 : index
    %15 = vector.load %arg13[%c0_12, %c0_13, %c0_14] : memref<2x8x128xf32, #tpu.memory_space<vmem>>, vector<1x8x128xf32>
    %16 = vector.shape_cast %15 : vector<1x8x128xf32> to vector<8x128xf32>
    %17 = arith.index_cast %12 : i32 to index
    %c0_15 = arith.constant 0 : index
    %18 = vector.load %arg15[%17, %c0_15] : memref<40x512xf32, #tpu.memory_space<vmem>>, vector<8x512xf32>
    %c0_16 = arith.constant 0 : index
    %c0_17 = arith.constant 0 : index
    %19 = vector.load %arg3[%c0_16, %c0_17] : memref<128x512xf32, #tpu.memory_space<vmem>>, vector<128x512xf32>
    %cst_18 = arith.constant dense<0.000000e+00> : vector<8x512xf32>
    %20 = tpu.matmul %14, %19, %cst_18 {dimension_numbers = #tpu.dot_dimension_numbers<[1], [0], [0], [1], [0, 0, 1, 1], [], []>} : vector<8x128xf32>, vector<128x512xf32>, vector<8x512xf32> -> vector<8x512xf32>
    %21 = arith.addf %18, %20 : vector<8x512xf32>
    %22 = vector.extract_strided_slice %21 {offsets = [0, 0], sizes = [8, 128], strides = [1, 1]} : vector<8x512xf32> to vector<8x128xf32>
    %23 = arith.negf %22 : vector<8x128xf32>
    %24 = math.exp %23 : vector<8x128xf32>
    %cst_19 = arith.constant 1.000000e+00 : f32
    %25 = vector.broadcast %cst_19 : f32 to vector<8x128xf32>
    %26 = arith.addf %25, %24 : vector<8x128xf32>
    %27 = arith.divf %25, %26 : vector<8x128xf32>
    %28 = vector.extract_strided_slice %21 {offsets = [0, 128], sizes = [8, 128], strides = [1, 1]} : vector<8x512xf32> to vector<8x128xf32>
    %29 = arith.negf %28 : vector<8x128xf32>
    %30 = math.exp %29 : vector<8x128xf32>
    %cst_20 = arith.constant 1.000000e+00 : f32
    %31 = vector.broadcast %cst_20 : f32 to vector<8x128xf32>
    %32 = arith.addf %31, %30 : vector<8x128xf32>
    %33 = arith.divf %31, %32 : vector<8x128xf32>
    %34 = vector.extract_strided_slice %21 {offsets = [0, 256], sizes = [8, 128], strides = [1, 1]} : vector<8x512xf32> to vector<8x128xf32>
    %35 = math.tanh %34 : vector<8x128xf32>
    %36 = vector.extract_strided_slice %21 {offsets = [0, 384], sizes = [8, 128], strides = [1, 1]} : vector<8x512xf32> to vector<8x128xf32>
    %37 = arith.negf %36 : vector<8x128xf32>
    %38 = math.exp %37 : vector<8x128xf32>
    %cst_21 = arith.constant 1.000000e+00 : f32
    %39 = vector.broadcast %cst_21 : f32 to vector<8x128xf32>
    %40 = arith.addf %39, %38 : vector<8x128xf32>
    %41 = arith.divf %39, %40 : vector<8x128xf32>
    %42 = arith.mulf %33, %16 : vector<8x128xf32>
    %43 = arith.mulf %27, %35 : vector<8x128xf32>
    %44 = arith.addf %42, %43 : vector<8x128xf32>
    %45 = math.tanh %44 : vector<8x128xf32>
    %46 = arith.mulf %41, %45 : vector<8x128xf32>
    %c5_i32 = arith.constant 5 : i32
    %47 = arith.muli %arg0, %c5_i32 : i32
    %48 = arith.addi %47, %c0_i32_8 : i32
    %c8_i32_22 = arith.constant 8 : i32
    %49 = arith.cmpi slt, %48, %c8_i32_22 : i32
    %50 = arith.extui %49 : i1 to i32
    %51 = arith.sitofp %50 : i32 to f32
    %52 = vector.broadcast %51 : f32 to vector<8x128xf32>
    %53 = arith.mulf %52, %44 : vector<8x128xf32>
    %cst_23 = arith.constant 1.000000e+00 : f32
    %54 = arith.subf %cst_23, %51 : f32
    %55 = vector.broadcast %54 : f32 to vector<8x128xf32>
    %56 = arith.mulf %55, %16 : vector<8x128xf32>
    %57 = arith.addf %53, %56 : vector<8x128xf32>
    %58 = vector.broadcast %51 : f32 to vector<8x128xf32>
    %59 = arith.mulf %58, %46 : vector<8x128xf32>
    %cst_24 = arith.constant 1.000000e+00 : f32
    %60 = arith.subf %cst_24, %51 : f32
    %61 = vector.broadcast %60 : f32 to vector<8x128xf32>
    %62 = arith.mulf %61, %14 : vector<8x128xf32>
    %63 = arith.addf %59, %62 : vector<8x128xf32>
    %c0_25 = arith.constant 0 : index
    %c0_26 = arith.constant 0 : index
    %c0_27 = arith.constant 0 : index
    %64 = vector.load %arg13[%c0_25, %c0_26, %c0_27] : memref<2x8x128xf32, #tpu.memory_space<vmem>>, vector<1x8x128xf32>
    %65 = vector.shape_cast %64 : vector<1x8x128xf32> to vector<8x128xf32>
    %66 = vector.shape_cast %57 : vector<8x128xf32> to vector<1x8x128xf32>
    tpu.vector_store %arg13[%c0_25, %c0_26, %c0_27], %66 {strides = array<i32>} : memref<2x8x128xf32, #tpu.memory_space<vmem>>, vector<1x8x128xf32>,
    %c0_28 = arith.constant 0 : index
    %c0_29 = arith.constant 0 : index
    %c0_30 = arith.constant 0 : index
    %67 = vector.load %arg12[%c0_28, %c0_29, %c0_30] : memref<2x8x128xf32, #tpu.memory_space<vmem>>, vector<1x8x128xf32>
    %68 = vector.shape_cast %67 : vector<1x8x128xf32> to vector<8x128xf32>
    %69 = vector.shape_cast %63 : vector<8x128xf32> to vector<1x8x128xf32>
    tpu.vector_store %arg12[%c0_28, %c0_29, %c0_30], %69 {strides = array<i32>} : memref<2x8x128xf32, #tpu.memory_space<vmem>>, vector<1x8x128xf32>,
    %70 = arith.index_cast %12 : i32 to index
    %c0_31 = arith.constant 0 : index
    %71 = vector.load %arg14[%70, %c0_31] : memref<40x128xf32, #tpu.memory_space<vmem>>, vector<8x128xf32>
    tpu.vector_store %arg14[%70, %c0_31], %63 {strides = array<i32>} : memref<40x128xf32, #tpu.memory_space<vmem>>, vector<8x128xf32>,
    %c1_i32 = arith.constant 1 : i32
    %c8_i32_32 = arith.constant 8 : i32
    %72 = arith.muli %c1_i32, %c8_i32_32 : i32
    %73 = tpu.assume_multiple %72, 8 : i32
    %c0_33 = arith.constant 0 : index
    %c0_34 = arith.constant 0 : index
    %c0_35 = arith.constant 0 : index
    %74 = vector.load %arg12[%c0_33, %c0_34, %c0_35] : memref<2x8x128xf32, #tpu.memory_space<vmem>>, vector<1x8x128xf32>
    %75 = vector.shape_cast %74 : vector<1x8x128xf32> to vector<8x128xf32>
    %c0_36 = arith.constant 0 : index
    %c0_37 = arith.constant 0 : index
    %c0_38 = arith.constant 0 : index
    %76 = vector.load %arg13[%c0_36, %c0_37, %c0_38] : memref<2x8x128xf32, #tpu.memory_space<vmem>>, vector<1x8x128xf32>
    %77 = vector.shape_cast %76 : vector<1x8x128xf32> to vector<8x128xf32>
    %78 = arith.index_cast %73 : i32 to index
    %c0_39 = arith.constant 0 : index
    %79 = vector.load %arg15[%78, %c0_39] : memref<40x512xf32, #tpu.memory_space<vmem>>, vector<8x512xf32>
    %c0_40 = arith.constant 0 : index
    %c0_41 = arith.constant 0 : index
    %80 = vector.load %arg3[%c0_40, %c0_41] : memref<128x512xf32, #tpu.memory_space<vmem>>, vector<128x512xf32>
    %cst_42 = arith.constant dense<0.000000e+00> : vector<8x512xf32>
    %81 = tpu.matmul %75, %80, %cst_42 {dimension_numbers = #tpu.dot_dimension_numbers<[1], [0], [0], [1], [0, 0, 1, 1], [], []>} : vector<8x128xf32>, vector<128x512xf32>, vector<8x512xf32> -> vector<8x512xf32>
    %82 = arith.addf %79, %81 : vector<8x512xf32>
    %83 = vector.extract_strided_slice %82 {offsets = [0, 0], sizes = [8, 128], strides = [1, 1]} : vector<8x512xf32> to vector<8x128xf32>
    %84 = arith.negf %83 : vector<8x128xf32>
    %85 = math.exp %84 : vector<8x128xf32>
    %cst_43 = arith.constant 1.000000e+00 : f32
    %86 = vector.broadcast %cst_43 : f32 to vector<8x128xf32>
    %87 = arith.addf %86, %85 : vector<8x128xf32>
    %88 = arith.divf %86, %87 : vector<8x128xf32>
    %89 = vector.extract_strided_slice %82 {offsets = [0, 128], sizes = [8, 128], strides = [1, 1]} : vector<8x512xf32> to vector<8x128xf32>
    %90 = arith.negf %89 : vector<8x128xf32>
    %91 = math.exp %90 : vector<8x128xf32>
    %cst_44 = arith.constant 1.000000e+00 : f32
    %92 = vector.broadcast %cst_44 : f32 to vector<8x128xf32>
    %93 = arith.addf %92, %91 : vector<8x128xf32>
    %94 = arith.divf %92, %93 : vector<8x128xf32>
    %95 = vector.extract_strided_slice %82 {offsets = [0, 256], sizes = [8, 128], strides = [1, 1]} : vector<8x512xf32> to vector<8x128xf32>
    %96 = math.tanh %95 : vector<8x128xf32>
    %97 = vector.extract_strided_slice %82 {offsets = [0, 384], sizes = [8, 128], strides = [1, 1]} : vector<8x512xf32> to vector<8x128xf32>
    %98 = arith.negf %97 : vector<8x128xf32>
    %99 = math.exp %98 : vector<8x128xf32>
    %cst_45 = arith.constant 1.000000e+00 : f32
    %100 = vector.broadcast %cst_45 : f32 to vector<8x128xf32>
    %101 = arith.addf %100, %99 : vector<8x128xf32>
    %102 = arith.divf %100, %101 : vector<8x128xf32>
    %103 = arith.mulf %94, %77 : vector<8x128xf32>
    %104 = arith.mulf %88, %96 : vector<8x128xf32>
    %105 = arith.addf %103, %104 : vector<8x128xf32>
    %106 = math.tanh %105 : vector<8x128xf32>
    %107 = arith.mulf %102, %106 : vector<8x128xf32>
    %c5_i32_46 = arith.constant 5 : i32
    %108 = arith.muli %arg0, %c5_i32_46 : i32
    %109 = arith.addi %108, %c1_i32 : i32
    %c8_i32_47 = arith.constant 8 : i32
    %110 = arith.cmpi slt, %109, %c8_i32_47 : i32
    %111 = arith.extui %110 : i1 to i32
    %112 = arith.sitofp %111 : i32 to f32
    %113 = vector.broadcast %112 : f32 to vector<8x128xf32>
    %114 = arith.mulf %113, %105 : vector<8x128xf32>
    %cst_48 = arith.constant 1.000000e+00 : f32
    %115 = arith.subf %cst_48, %112 : f32
    %116 = vector.broadcast %115 : f32 to vector<8x128xf32>
    %117 = arith.mulf %116, %77 : vector<8x128xf32>
    %118 = arith.addf %114, %117 : vector<8x128xf32>
    %119 = vector.broadcast %112 : f32 to vector<8x128xf32>
    %120 = arith.mulf %119, %107 : vector<8x128xf32>
    %cst_49 = arith.constant 1.000000e+00 : f32
    %121 = arith.subf %cst_49, %112 : f32
    %122 = vector.broadcast %121 : f32 to vector<8x128xf32>
    %123 = arith.mulf %122, %75 : vector<8x128xf32>
    %124 = arith.addf %120, %123 : vector<8x128xf32>
    %c0_50 = arith.constant 0 : index
    %c0_51 = arith.constant 0 : index
    %c0_52 = arith.constant 0 : index
    %125 = vector.load %arg13[%c0_50, %c0_51, %c0_52] : memref<2x8x128xf32, #tpu.memory_space<vmem>>, vector<1x8x128xf32>
    %126 = vector.shape_cast %125 : vector<1x8x128xf32> to vector<8x128xf32>
    %127 = vector.shape_cast %118 : vector<8x128xf32> to vector<1x8x128xf32>
    tpu.vector_store %arg13[%c0_50, %c0_51, %c0_52], %127 {strides = array<i32>} : memref<2x8x128xf32, #tpu.memory_space<vmem>>, vector<1x8x128xf32>,
    %c0_53 = arith.constant 0 : index
    %c0_54 = arith.constant 0 : index
    %c0_55 = arith.constant 0 : index
    %128 = vector.load %arg12[%c0_53, %c0_54, %c0_55] : memref<2x8x128xf32, #tpu.memory_space<vmem>>, vector<1x8x128xf32>
    %129 = vector.shape_cast %128 : vector<1x8x128xf32> to vector<8x128xf32>
    %130 = vector.shape_cast %124 : vector<8x128xf32> to vector<1x8x128xf32>
    tpu.vector_store %arg12[%c0_53, %c0_54, %c0_55], %130 {strides = array<i32>} : memref<2x8x128xf32, #tpu.memory_space<vmem>>, vector<1x8x128xf32>,
    %131 = arith.index_cast %73 : i32 to index
    %c0_56 = arith.constant 0 : index
    %132 = vector.load %arg14[%131, %c0_56] : memref<40x128xf32, #tpu.memory_space<vmem>>, vector<8x128xf32>
    tpu.vector_store %arg14[%131, %c0_56], %124 {strides = array<i32>} : memref<40x128xf32, #tpu.memory_space<vmem>>, vector<8x128xf32>,
    %c2_i32 = arith.constant 2 : i32
    %c8_i32_57 = arith.constant 8 : i32
    %133 = arith.muli %c2_i32, %c8_i32_57 : i32
    %134 = tpu.assume_multiple %133, 8 : i32
    %c0_58 = arith.constant 0 : index
    %c0_59 = arith.constant 0 : index
    %c0_60 = arith.constant 0 : index
    %135 = vector.load %arg12[%c0_58, %c0_59, %c0_60] : memref<2x8x128xf32, #tpu.memory_space<vmem>>, vector<1x8x128xf32>
    %136 = vector.shape_cast %135 : vector<1x8x128xf32> to vector<8x128xf32>
    %c0_61 = arith.constant 0 : index
    %c0_62 = arith.constant 0 : index
    %c0_63 = arith.constant 0 : index
    %137 = vector.load %arg13[%c0_61, %c0_62, %c0_63] : memref<2x8x128xf32, #tpu.memory_space<vmem>>, vector<1x8x128xf32>
    %138 = vector.shape_cast %137 : vector<1x8x128xf32> to vector<8x128xf32>
    %139 = arith.index_cast %134 : i32 to index
    %c0_64 = arith.constant 0 : index
    %140 = vector.load %arg15[%139, %c0_64] : memref<40x512xf32, #tpu.memory_space<vmem>>, vector<8x512xf32>
    %c0_65 = arith.constant 0 : index
    %c0_66 = arith.constant 0 : index
    %141 = vector.load %arg3[%c0_65, %c0_66] : memref<128x512xf32, #tpu.memory_space<vmem>>, vector<128x512xf32>
    %cst_67 = arith.constant dense<0.000000e+00> : vector<8x512xf32>
    %142 = tpu.matmul %136, %141, %cst_67 {dimension_numbers = #tpu.dot_dimension_numbers<[1], [0], [0], [1], [0, 0, 1, 1], [], []>} : vector<8x128xf32>, vector<128x512xf32>, vector<8x512xf32> -> vector<8x512xf32>
    %143 = arith.addf %140, %142 : vector<8x512xf32>
    %144 = vector.extract_strided_slice %143 {offsets = [0, 0], sizes = [8, 128], strides = [1, 1]} : vector<8x512xf32> to vector<8x128xf32>
    %145 = arith.negf %144 : vector<8x128xf32>
    %146 = math.exp %145 : vector<8x128xf32>
    %cst_68 = arith.constant 1.000000e+00 : f32
    %147 = vector.broadcast %cst_68 : f32 to vector<8x128xf32>
    %148 = arith.addf %147, %146 : vector<8x128xf32>
    %149 = arith.divf %147, %148 : vector<8x128xf32>
    %150 = vector.extract_strided_slice %143 {offsets = [0, 128], sizes = [8, 128], strides = [1, 1]} : vector<8x512xf32> to vector<8x128xf32>
    %151 = arith.negf %150 : vector<8x128xf32>
    %152 = math.exp %151 : vector<8x128xf32>
    %cst_69 = arith.constant 1.000000e+00 : f32
    %153 = vector.broadcast %cst_69 : f32 to vector<8x128xf32>
    %154 = arith.addf %153, %152 : vector<8x128xf32>
    %155 = arith.divf %153, %154 : vector<8x128xf32>
    %156 = vector.extract_strided_slice %143 {offsets = [0, 256], sizes = [8, 128], strides = [1, 1]} : vector<8x512xf32> to vector<8x128xf32>
    %157 = math.tanh %156 : vector<8x128xf32>
    %158 = vector.extract_strided_slice %143 {offsets = [0, 384], sizes = [8, 128], strides = [1, 1]} : vector<8x512xf32> to vector<8x128xf32>
    %159 = arith.negf %158 : vector<8x128xf32>
    %160 = math.exp %159 : vector<8x128xf32>
    %cst_70 = arith.constant 1.000000e+00 : f32
    %161 = vector.broadcast %cst_70 : f32 to vector<8x128xf32>
    %162 = arith.addf %161, %160 : vector<8x128xf32>
    %163 = arith.divf %161, %162 : vector<8x128xf32>
    %164 = arith.mulf %155, %138 : vector<8x128xf32>
    %165 = arith.mulf %149, %157 : vector<8x128xf32>
    %166 = arith.addf %164, %165 : vector<8x128xf32>
    %167 = math.tanh %166 : vector<8x128xf32>
    %168 = arith.mulf %163, %167 : vector<8x128xf32>
    %c5_i32_71 = arith.constant 5 : i32
    %169 = arith.muli %arg0, %c5_i32_71 : i32
    %170 = arith.addi %169, %c2_i32 : i32
    %c8_i32_72 = arith.constant 8 : i32
    %171 = arith.cmpi slt, %170, %c8_i32_72 : i32
    %172 = arith.extui %171 : i1 to i32
    %173 = arith.sitofp %172 : i32 to f32
    %174 = vector.broadcast %173 : f32 to vector<8x128xf32>
    %175 = arith.mulf %174, %166 : vector<8x128xf32>
    %cst_73 = arith.constant 1.000000e+00 : f32
    %176 = arith.subf %cst_73, %173 : f32
    %177 = vector.broadcast %176 : f32 to vector<8x128xf32>
    %178 = arith.mulf %177, %138 : vector<8x128xf32>
    %179 = arith.addf %175, %178 : vector<8x128xf32>
    %180 = vector.broadcast %173 : f32 to vector<8x128xf32>
    %181 = arith.mulf %180, %168 : vector<8x128xf32>
    %cst_74 = arith.constant 1.000000e+00 : f32
    %182 = arith.subf %cst_74, %173 : f32
    %183 = vector.broadcast %182 : f32 to vector<8x128xf32>
    %184 = arith.mulf %183, %136 : vector<8x128xf32>
    %185 = arith.addf %181, %184 : vector<8x128xf32>
    %c0_75 = arith.constant 0 : index
    %c0_76 = arith.constant 0 : index
    %c0_77 = arith.constant 0 : index
    %186 = vector.load %arg13[%c0_75, %c0_76, %c0_77] : memref<2x8x128xf32, #tpu.memory_space<vmem>>, vector<1x8x128xf32>
    %187 = vector.shape_cast %186 : vector<1x8x128xf32> to vector<8x128xf32>
    %188 = vector.shape_cast %179 : vector<8x128xf32> to vector<1x8x128xf32>
    tpu.vector_store %arg13[%c0_75, %c0_76, %c0_77], %188 {strides = array<i32>} : memref<2x8x128xf32, #tpu.memory_space<vmem>>, vector<1x8x128xf32>,
    %c0_78 = arith.constant 0 : index
    %c0_79 = arith.constant 0 : index
    %c0_80 = arith.constant 0 : index
    %189 = vector.load %arg12[%c0_78, %c0_79, %c0_80] : memref<2x8x128xf32, #tpu.memory_space<vmem>>, vector<1x8x128xf32>
    %190 = vector.shape_cast %189 : vector<1x8x128xf32> to vector<8x128xf32>
    %191 = vector.shape_cast %185 : vector<8x128xf32> to vector<1x8x128xf32>
    tpu.vector_store %arg12[%c0_78, %c0_79, %c0_80], %191 {strides = array<i32>} : memref<2x8x128xf32, #tpu.memory_space<vmem>>, vector<1x8x128xf32>,
    %192 = arith.index_cast %134 : i32 to index
    %c0_81 = arith.constant 0 : index
    %193 = vector.load %arg14[%192, %c0_81] : memref<40x128xf32, #tpu.memory_space<vmem>>, vector<8x128xf32>
    tpu.vector_store %arg14[%192, %c0_81], %185 {strides = array<i32>} : memref<40x128xf32, #tpu.memory_space<vmem>>, vector<8x128xf32>,
    %c3_i32 = arith.constant 3 : i32
    %c8_i32_82 = arith.constant 8 : i32
    %194 = arith.muli %c3_i32, %c8_i32_82 : i32
    %195 = tpu.assume_multiple %194, 8 : i32
    %c0_83 = arith.constant 0 : index
    %c0_84 = arith.constant 0 : index
    %c0_85 = arith.constant 0 : index
    %196 = vector.load %arg12[%c0_83, %c0_84, %c0_85] : memref<2x8x128xf32, #tpu.memory_space<vmem>>, vector<1x8x128xf32>
    %197 = vector.shape_cast %196 : vector<1x8x128xf32> to vector<8x128xf32>
    %c0_86 = arith.constant 0 : index
    %c0_87 = arith.constant 0 : index
    %c0_88 = arith.constant 0 : index
    %198 = vector.load %arg13[%c0_86, %c0_87, %c0_88] : memref<2x8x128xf32, #tpu.memory_space<vmem>>, vector<1x8x128xf32>
    %199 = vector.shape_cast %198 : vector<1x8x128xf32> to vector<8x128xf32>
    %200 = arith.index_cast %195 : i32 to index
    %c0_89 = arith.constant 0 : index
    %201 = vector.load %arg15[%200, %c0_89] : memref<40x512xf32, #tpu.memory_space<vmem>>, vector<8x512xf32>
    %c0_90 = arith.constant 0 : index
    %c0_91 = arith.constant 0 : index
    %202 = vector.load %arg3[%c0_90, %c0_91] : memref<128x512xf32, #tpu.memory_space<vmem>>, vector<128x512xf32>
    %cst_92 = arith.constant dense<0.000000e+00> : vector<8x512xf32>
    %203 = tpu.matmul %197, %202, %cst_92 {dimension_numbers = #tpu.dot_dimension_numbers<[1], [0], [0], [1], [0, 0, 1, 1], [], []>} : vector<8x128xf32>, vector<128x512xf32>, vector<8x512xf32> -> vector<8x512xf32>
    %204 = arith.addf %201, %203 : vector<8x512xf32>
    %205 = vector.extract_strided_slice %204 {offsets = [0, 0], sizes = [8, 128], strides = [1, 1]} : vector<8x512xf32> to vector<8x128xf32>
    %206 = arith.negf %205 : vector<8x128xf32>
    %207 = math.exp %206 : vector<8x128xf32>
    %cst_93 = arith.constant 1.000000e+00 : f32
    %208 = vector.broadcast %cst_93 : f32 to vector<8x128xf32>
    %209 = arith.addf %208, %207 : vector<8x128xf32>
    %210 = arith.divf %208, %209 : vector<8x128xf32>
    %211 = vector.extract_strided_slice %204 {offsets = [0, 128], sizes = [8, 128], strides = [1, 1]} : vector<8x512xf32> to vector<8x128xf32>
    %212 = arith.negf %211 : vector<8x128xf32>
    %213 = math.exp %212 : vector<8x128xf32>
    %cst_94 = arith.constant 1.000000e+00 : f32
    %214 = vector.broadcast %cst_94 : f32 to vector<8x128xf32>
    %215 = arith.addf %214, %213 : vector<8x128xf32>
    %216 = arith.divf %214, %215 : vector<8x128xf32>
    %217 = vector.extract_strided_slice %204 {offsets = [0, 256], sizes = [8, 128], strides = [1, 1]} : vector<8x512xf32> to vector<8x128xf32>
    %218 = math.tanh %217 : vector<8x128xf32>
    %219 = vector.extract_strided_slice %204 {offsets = [0, 384], sizes = [8, 128], strides = [1, 1]} : vector<8x512xf32> to vector<8x128xf32>
    %220 = arith.negf %219 : vector<8x128xf32>
    %221 = math.exp %220 : vector<8x128xf32>
    %cst_95 = arith.constant 1.000000e+00 : f32
    %222 = vector.broadcast %cst_95 : f32 to vector<8x128xf32>
    %223 = arith.addf %222, %221 : vector<8x128xf32>
    %224 = arith.divf %222, %223 : vector<8x128xf32>
    %225 = arith.mulf %216, %199 : vector<8x128xf32>
    %226 = arith.mulf %210, %218 : vector<8x128xf32>
    %227 = arith.addf %225, %226 : vector<8x128xf32>
    %228 = math.tanh %227 : vector<8x128xf32>
    %229 = arith.mulf %224, %228 : vector<8x128xf32>
    %c5_i32_96 = arith.constant 5 : i32
    %230 = arith.muli %arg0, %c5_i32_96 : i32
    %231 = arith.addi %230, %c3_i32 : i32
    %c8_i32_97 = arith.constant 8 : i32
    %232 = arith.cmpi slt, %231, %c8_i32_97 : i32
    %233 = arith.extui %232 : i1 to i32
    %234 = arith.sitofp %233 : i32 to f32
    %235 = vector.broadcast %234 : f32 to vector<8x128xf32>
    %236 = arith.mulf %235, %227 : vector<8x128xf32>
    %cst_98 = arith.constant 1.000000e+00 : f32
    %237 = arith.subf %cst_98, %234 : f32
    %238 = vector.broadcast %237 : f32 to vector<8x128xf32>
    %239 = arith.mulf %238, %199 : vector<8x128xf32>
    %240 = arith.addf %236, %239 : vector<8x128xf32>
    %241 = vector.broadcast %234 : f32 to vector<8x128xf32>
    %242 = arith.mulf %241, %229 : vector<8x128xf32>
    %cst_99 = arith.constant 1.000000e+00 : f32
    %243 = arith.subf %cst_99, %234 : f32
    %244 = vector.broadcast %243 : f32 to vector<8x128xf32>
    %245 = arith.mulf %244, %197 : vector<8x128xf32>
    %246 = arith.addf %242, %245 : vector<8x128xf32>
    %c0_100 = arith.constant 0 : index
    %c0_101 = arith.constant 0 : index
    %c0_102 = arith.constant 0 : index
    %247 = vector.load %arg13[%c0_100, %c0_101, %c0_102] : memref<2x8x128xf32, #tpu.memory_space<vmem>>, vector<1x8x128xf32>
    %248 = vector.shape_cast %247 : vector<1x8x128xf32> to vector<8x128xf32>
    %249 = vector.shape_cast %240 : vector<8x128xf32> to vector<1x8x128xf32>
    tpu.vector_store %arg13[%c0_100, %c0_101, %c0_102], %249 {strides = array<i32>} : memref<2x8x128xf32, #tpu.memory_space<vmem>>, vector<1x8x128xf32>,
    %c0_103 = arith.constant 0 : index
    %c0_104 = arith.constant 0 : index
    %c0_105 = arith.constant 0 : index
    %250 = vector.load %arg12[%c0_103, %c0_104, %c0_105] : memref<2x8x128xf32, #tpu.memory_space<vmem>>, vector<1x8x128xf32>
    %251 = vector.shape_cast %250 : vector<1x8x128xf32> to vector<8x128xf32>
    %252 = vector.shape_cast %246 : vector<8x128xf32> to vector<1x8x128xf32>
    tpu.vector_store %arg12[%c0_103, %c0_104, %c0_105], %252 {strides = array<i32>} : memref<2x8x128xf32, #tpu.memory_space<vmem>>, vector<1x8x128xf32>,
    %253 = arith.index_cast %195 : i32 to index
    %c0_106 = arith.constant 0 : index
    %254 = vector.load %arg14[%253, %c0_106] : memref<40x128xf32, #tpu.memory_space<vmem>>, vector<8x128xf32>
    tpu.vector_store %arg14[%253, %c0_106], %246 {strides = array<i32>} : memref<40x128xf32, #tpu.memory_space<vmem>>, vector<8x128xf32>,
    %c4_i32 = arith.constant 4 : i32
    %c8_i32_107 = arith.constant 8 : i32
    %255 = arith.muli %c4_i32, %c8_i32_107 : i32
    %256 = tpu.assume_multiple %255, 8 : i32
    %c0_108 = arith.constant 0 : index
    %c0_109 = arith.constant 0 : index
    %c0_110 = arith.constant 0 : index
    %257 = vector.load %arg12[%c0_108, %c0_109, %c0_110] : memref<2x8x128xf32, #tpu.memory_space<vmem>>, vector<1x8x128xf32>
    %258 = vector.shape_cast %257 : vector<1x8x128xf32> to vector<8x128xf32>
    %c0_111 = arith.constant 0 : index
    %c0_112 = arith.constant 0 : index
    %c0_113 = arith.constant 0 : index
    %259 = vector.load %arg13[%c0_111, %c0_112, %c0_113] : memref<2x8x128xf32, #tpu.memory_space<vmem>>, vector<1x8x128xf32>
    %260 = vector.shape_cast %259 : vector<1x8x128xf32> to vector<8x128xf32>
    %261 = arith.index_cast %256 : i32 to index
    %c0_114 = arith.constant 0 : index
    %262 = vector.load %arg15[%261, %c0_114] : memref<40x512xf32, #tpu.memory_space<vmem>>, vector<8x512xf32>
    %c0_115 = arith.constant 0 : index
    %c0_116 = arith.constant 0 : index
    %263 = vector.load %arg3[%c0_115, %c0_116] : memref<128x512xf32, #tpu.memory_space<vmem>>, vector<128x512xf32>
    %cst_117 = arith.constant dense<0.000000e+00> : vector<8x512xf32>
    %264 = tpu.matmul %258, %263, %cst_117 {dimension_numbers = #tpu.dot_dimension_numbers<[1], [0], [0], [1], [0, 0, 1, 1], [], []>} : vector<8x128xf32>, vector<128x512xf32>, vector<8x512xf32> -> vector<8x512xf32>
    %265 = arith.addf %262, %264 : vector<8x512xf32>
    %266 = vector.extract_strided_slice %265 {offsets = [0, 0], sizes = [8, 128], strides = [1, 1]} : vector<8x512xf32> to vector<8x128xf32>
    %267 = arith.negf %266 : vector<8x128xf32>
    %268 = math.exp %267 : vector<8x128xf32>
    %cst_118 = arith.constant 1.000000e+00 : f32
    %269 = vector.broadcast %cst_118 : f32 to vector<8x128xf32>
    %270 = arith.addf %269, %268 : vector<8x128xf32>
    %271 = arith.divf %269, %270 : vector<8x128xf32>
    %272 = vector.extract_strided_slice %265 {offsets = [0, 128], sizes = [8, 128], strides = [1, 1]} : vector<8x512xf32> to vector<8x128xf32>
    %273 = arith.negf %272 : vector<8x128xf32>
    %274 = math.exp %273 : vector<8x128xf32>
    %cst_119 = arith.constant 1.000000e+00 : f32
    %275 = vector.broadcast %cst_119 : f32 to vector<8x128xf32>
    %276 = arith.addf %275, %274 : vector<8x128xf32>
    %277 = arith.divf %275, %276 : vector<8x128xf32>
    %278 = vector.extract_strided_slice %265 {offsets = [0, 256], sizes = [8, 128], strides = [1, 1]} : vector<8x512xf32> to vector<8x128xf32>
    %279 = math.tanh %278 : vector<8x128xf32>
    %280 = vector.extract_strided_slice %265 {offsets = [0, 384], sizes = [8, 128], strides = [1, 1]} : vector<8x512xf32> to vector<8x128xf32>
    %281 = arith.negf %280 : vector<8x128xf32>
    %282 = math.exp %281 : vector<8x128xf32>
    %cst_120 = arith.constant 1.000000e+00 : f32
    %283 = vector.broadcast %cst_120 : f32 to vector<8x128xf32>
    %284 = arith.addf %283, %282 : vector<8x128xf32>
    %285 = arith.divf %283, %284 : vector<8x128xf32>
    %286 = arith.mulf %277, %260 : vector<8x128xf32>
    %287 = arith.mulf %271, %279 : vector<8x128xf32>
    %288 = arith.addf %286, %287 : vector<8x128xf32>
    %289 = math.tanh %288 : vector<8x128xf32>
    %290 = arith.mulf %285, %289 : vector<8x128xf32>
    %c5_i32_121 = arith.constant 5 : i32
    %291 = arith.muli %arg0, %c5_i32_121 : i32
    %292 = arith.addi %291, %c4_i32 : i32
    %c8_i32_122 = arith.constant 8 : i32
    %293 = arith.cmpi slt, %292, %c8_i32_122 : i32
    %294 = arith.extui %293 : i1 to i32
    %295 = arith.sitofp %294 : i32 to f32
    %296 = vector.broadcast %295 : f32 to vector<8x128xf32>
    %297 = arith.mulf %296, %288 : vector<8x128xf32>
    %cst_123 = arith.constant 1.000000e+00 : f32
    %298 = arith.subf %cst_123, %295 : f32
    %299 = vector.broadcast %298 : f32 to vector<8x128xf32>
    %300 = arith.mulf %299, %260 : vector<8x128xf32>
    %301 = arith.addf %297, %300 : vector<8x128xf32>
    %302 = vector.broadcast %295 : f32 to vector<8x128xf32>
    %303 = arith.mulf %302, %290 : vector<8x128xf32>
    %cst_124 = arith.constant 1.000000e+00 : f32
    %304 = arith.subf %cst_124, %295 : f32
    %305 = vector.broadcast %304 : f32 to vector<8x128xf32>
    %306 = arith.mulf %305, %258 : vector<8x128xf32>
    %307 = arith.addf %303, %306 : vector<8x128xf32>
    %c0_125 = arith.constant 0 : index
    %c0_126 = arith.constant 0 : index
    %c0_127 = arith.constant 0 : index
    %308 = vector.load %arg13[%c0_125, %c0_126, %c0_127] : memref<2x8x128xf32, #tpu.memory_space<vmem>>, vector<1x8x128xf32>
    %309 = vector.shape_cast %308 : vector<1x8x128xf32> to vector<8x128xf32>
    %310 = vector.shape_cast %301 : vector<8x128xf32> to vector<1x8x128xf32>
    tpu.vector_store %arg13[%c0_125, %c0_126, %c0_127], %310 {strides = array<i32>} : memref<2x8x128xf32, #tpu.memory_space<vmem>>, vector<1x8x128xf32>,
    %c0_128 = arith.constant 0 : index
    %c0_129 = arith.constant 0 : index
    %c0_130 = arith.constant 0 : index
    %311 = vector.load %arg12[%c0_128, %c0_129, %c0_130] : memref<2x8x128xf32, #tpu.memory_space<vmem>>, vector<1x8x128xf32>
    %312 = vector.shape_cast %311 : vector<1x8x128xf32> to vector<8x128xf32>
    %313 = vector.shape_cast %307 : vector<8x128xf32> to vector<1x8x128xf32>
    tpu.vector_store %arg12[%c0_128, %c0_129, %c0_130], %313 {strides = array<i32>} : memref<2x8x128xf32, #tpu.memory_space<vmem>>, vector<1x8x128xf32>,
    %314 = arith.index_cast %256 : i32 to index
    %c0_131 = arith.constant 0 : index
    %315 = vector.load %arg14[%314, %c0_131] : memref<40x128xf32, #tpu.memory_space<vmem>>, vector<8x128xf32>
    tpu.vector_store %arg14[%314, %c0_131], %307 {strides = array<i32>} : memref<40x128xf32, #tpu.memory_space<vmem>>, vector<8x128xf32>,
    %c5_i32_132 = arith.constant 5 : i32
    %c0_133 = arith.constant 0 : index
    %c0_134 = arith.constant 0 : index
    %316 = vector.load %arg14[%c0_133, %c0_134] : memref<40x128xf32, #tpu.memory_space<vmem>>, vector<40x128xf32>
    %317 = arith.truncf %316 : vector<40x128xf32> to vector<40x128xbf16>
    %c0_135 = arith.constant 0 : index
    %c0_136 = arith.constant 0 : index
    %318 = vector.load %arg5[%c0_135, %c0_136] : memref<128x512xbf16, #tpu.memory_space<vmem>>, vector<128x512xbf16>
    %cst_137 = arith.constant dense<0.000000e+00> : vector<40x512xf32>
    %319 = tpu.matmul %317, %318, %cst_137 {dimension_numbers = #tpu.dot_dimension_numbers<[1], [0], [0], [1], [0, 0, 1, 1], [], []>} : vector<40x128xbf16>, vector<128x512xbf16>, vector<40x512xf32> -> vector<40x512xf32>
    %c0_138 = arith.constant 0 : index
    %c0_139 = arith.constant 0 : index
    %320 = vector.load %arg7[%c0_138, %c0_139] : memref<1x512xf32, #tpu.memory_space<vmem>>, vector<1x512xf32>
    %321 = vector.broadcast %320 : vector<1x512xf32> to vector<40x512xf32>
    %322 = arith.addf %319, %321 : vector<40x512xf32>
    %c0_140 = arith.constant 0 : index
    %c0_141 = arith.constant 0 : index
    %323 = vector.load %arg15[%c0_140, %c0_141] : memref<40x512xf32, #tpu.memory_space<vmem>>, vector<40x512xf32>
    tpu.vector_store %arg15[%c0_140, %c0_141], %322 {strides = array<i32>} : memref<40x512xf32, #tpu.memory_space<vmem>>, vector<40x512xf32>,
    %c0_i32_142 = arith.constant 0 : i32
    %c8_i32_143 = arith.constant 8 : i32
    %324 = arith.muli %c0_i32_142, %c8_i32_143 : i32
    %325 = tpu.assume_multiple %324, 8 : i32
    %c1 = arith.constant 1 : index
    %c0_144 = arith.constant 0 : index
    %c0_145 = arith.constant 0 : index
    %326 = vector.load %arg12[%c1, %c0_144, %c0_145] : memref<2x8x128xf32, #tpu.memory_space<vmem>>, vector<1x8x128xf32>
    %327 = vector.shape_cast %326 : vector<1x8x128xf32> to vector<8x128xf32>
    %c1_146 = arith.constant 1 : index
    %c0_147 = arith.constant 0 : index
    %c0_148 = arith.constant 0 : index
    %328 = vector.load %arg13[%c1_146, %c0_147, %c0_148] : memref<2x8x128xf32, #tpu.memory_space<vmem>>, vector<1x8x128xf32>
    %329 = vector.shape_cast %328 : vector<1x8x128xf32> to vector<8x128xf32>
    %330 = arith.index_cast %325 : i32 to index
    %c0_149 = arith.constant 0 : index
    %331 = vector.load %arg15[%330, %c0_149] : memref<40x512xf32, #tpu.memory_space<vmem>>, vector<8x512xf32>
    %c0_150 = arith.constant 0 : index
    %c0_151 = arith.constant 0 : index
    %332 = vector.load %arg6[%c0_150, %c0_151] : memref<128x512xf32, #tpu.memory_space<vmem>>, vector<128x512xf32>
    %cst_152 = arith.constant dense<0.000000e+00> : vector<8x512xf32>
    %333 = tpu.matmul %327, %332, %cst_152 {dimension_numbers = #tpu.dot_dimension_numbers<[1], [0], [0], [1], [0, 0, 1, 1], [], []>} : vector<8x128xf32>, vector<128x512xf32>, vector<8x512xf32> -> vector<8x512xf32>
    %334 = arith.addf %331, %333 : vector<8x512xf32>
    %335 = vector.extract_strided_slice %334 {offsets = [0, 0], sizes = [8, 128], strides = [1, 1]} : vector<8x512xf32> to vector<8x128xf32>
    %336 = arith.negf %335 : vector<8x128xf32>
    %337 = math.exp %336 : vector<8x128xf32>
    %cst_153 = arith.constant 1.000000e+00 : f32
    %338 = vector.broadcast %cst_153 : f32 to vector<8x128xf32>
    %339 = arith.addf %338, %337 : vector<8x128xf32>
    %340 = arith.divf %338, %339 : vector<8x128xf32>
    %341 = vector.extract_strided_slice %334 {offsets = [0, 128], sizes = [8, 128], strides = [1, 1]} : vector<8x512xf32> to vector<8x128xf32>
    %342 = arith.negf %341 : vector<8x128xf32>
    %343 = math.exp %342 : vector<8x128xf32>
    %cst_154 = arith.constant 1.000000e+00 : f32
    %344 = vector.broadcast %cst_154 : f32 to vector<8x128xf32>
    %345 = arith.addf %344, %343 : vector<8x128xf32>
    %346 = arith.divf %344, %345 : vector<8x128xf32>
    %347 = vector.extract_strided_slice %334 {offsets = [0, 256], sizes = [8, 128], strides = [1, 1]} : vector<8x512xf32> to vector<8x128xf32>
    %348 = math.tanh %347 : vector<8x128xf32>
    %349 = vector.extract_strided_slice %334 {offsets = [0, 384], sizes = [8, 128], strides = [1, 1]} : vector<8x512xf32> to vector<8x128xf32>
    %350 = arith.negf %349 : vector<8x128xf32>
    %351 = math.exp %350 : vector<8x128xf32>
    %cst_155 = arith.constant 1.000000e+00 : f32
    %352 = vector.broadcast %cst_155 : f32 to vector<8x128xf32>
    %353 = arith.addf %352, %351 : vector<8x128xf32>
    %354 = arith.divf %352, %353 : vector<8x128xf32>
    %355 = arith.mulf %346, %329 : vector<8x128xf32>
    %356 = arith.mulf %340, %348 : vector<8x128xf32>
    %357 = arith.addf %355, %356 : vector<8x128xf32>
    %358 = math.tanh %357 : vector<8x128xf32>
    %359 = arith.mulf %354, %358 : vector<8x128xf32>
    %c5_i32_156 = arith.constant 5 : i32
    %360 = arith.muli %arg0, %c5_i32_156 : i32
    %361 = arith.addi %360, %c0_i32_142 : i32
    %c8_i32_157 = arith.constant 8 : i32
    %362 = arith.cmpi slt, %361, %c8_i32_157 : i32
    %363 = arith.extui %362 : i1 to i32
    %364 = arith.sitofp %363 : i32 to f32
    %365 = vector.broadcast %364 : f32 to vector<8x128xf32>
    %366 = arith.mulf %365, %357 : vector<8x128xf32>
    %cst_158 = arith.constant 1.000000e+00 : f32
    %367 = arith.subf %cst_158, %364 : f32
    %368 = vector.broadcast %367 : f32 to vector<8x128xf32>
    %369 = arith.mulf %368, %329 : vector<8x128xf32>
    %370 = arith.addf %366, %369 : vector<8x128xf32>
    %371 = vector.broadcast %364 : f32 to vector<8x128xf32>
    %372 = arith.mulf %371, %359 : vector<8x128xf32>
    %cst_159 = arith.constant 1.000000e+00 : f32
    %373 = arith.subf %cst_159, %364 : f32
    %374 = vector.broadcast %373 : f32 to vector<8x128xf32>
    %375 = arith.mulf %374, %327 : vector<8x128xf32>
    %376 = arith.addf %372, %375 : vector<8x128xf32>
    %c1_160 = arith.constant 1 : index
    %c0_161 = arith.constant 0 : index
    %c0_162 = arith.constant 0 : index
    %377 = vector.load %arg13[%c1_160, %c0_161, %c0_162] : memref<2x8x128xf32, #tpu.memory_space<vmem>>, vector<1x8x128xf32>
    %378 = vector.shape_cast %377 : vector<1x8x128xf32> to vector<8x128xf32>
    %379 = vector.shape_cast %370 : vector<8x128xf32> to vector<1x8x128xf32>
    tpu.vector_store %arg13[%c1_160, %c0_161, %c0_162], %379 {strides = array<i32>} : memref<2x8x128xf32, #tpu.memory_space<vmem>>, vector<1x8x128xf32>,
    %c1_163 = arith.constant 1 : index
    %c0_164 = arith.constant 0 : index
    %c0_165 = arith.constant 0 : index
    %380 = vector.load %arg12[%c1_163, %c0_164, %c0_165] : memref<2x8x128xf32, #tpu.memory_space<vmem>>, vector<1x8x128xf32>
    %381 = vector.shape_cast %380 : vector<1x8x128xf32> to vector<8x128xf32>
    %382 = vector.shape_cast %376 : vector<8x128xf32> to vector<1x8x128xf32>
    tpu.vector_store %arg12[%c1_163, %c0_164, %c0_165], %382 {strides = array<i32>} : memref<2x8x128xf32, #tpu.memory_space<vmem>>, vector<1x8x128xf32>,
    %c1_i32_166 = arith.constant 1 : i32
    %c8_i32_167 = arith.constant 8 : i32
    %383 = arith.muli %c1_i32_166, %c8_i32_167 : i32
    %384 = tpu.assume_multiple %383, 8 : i32
    %c1_168 = arith.constant 1 : index
    %c0_169 = arith.constant 0 : index
    %c0_170 = arith.constant 0 : index
    %385 = vector.load %arg12[%c1_168, %c0_169, %c0_170] : memref<2x8x128xf32, #tpu.memory_space<vmem>>, vector<1x8x128xf32>
    %386 = vector.shape_cast %385 : vector<1x8x128xf32> to vector<8x128xf32>
    %c1_171 = arith.constant 1 : index
    %c0_172 = arith.constant 0 : index
    %c0_173 = arith.constant 0 : index
    %387 = vector.load %arg13[%c1_171, %c0_172, %c0_173] : memref<2x8x128xf32, #tpu.memory_space<vmem>>, vector<1x8x128xf32>
    %388 = vector.shape_cast %387 : vector<1x8x128xf32> to vector<8x128xf32>
    %389 = arith.index_cast %384 : i32 to index
    %c0_174 = arith.constant 0 : index
    %390 = vector.load %arg15[%389, %c0_174] : memref<40x512xf32, #tpu.memory_space<vmem>>, vector<8x512xf32>
    %c0_175 = arith.constant 0 : index
    %c0_176 = arith.constant 0 : index
    %391 = vector.load %arg6[%c0_175, %c0_176] : memref<128x512xf32, #tpu.memory_space<vmem>>, vector<128x512xf32>
    %cst_177 = arith.constant dense<0.000000e+00> : vector<8x512xf32>
    %392 = tpu.matmul %386, %391, %cst_177 {dimension_numbers = #tpu.dot_dimension_numbers<[1], [0], [0], [1], [0, 0, 1, 1], [], []>} : vector<8x128xf32>, vector<128x512xf32>, vector<8x512xf32> -> vector<8x512xf32>
    %393 = arith.addf %390, %392 : vector<8x512xf32>
    %394 = vector.extract_strided_slice %393 {offsets = [0, 0], sizes = [8, 128], strides = [1, 1]} : vector<8x512xf32> to vector<8x128xf32>
    %395 = arith.negf %394 : vector<8x128xf32>
    %396 = math.exp %395 : vector<8x128xf32>
    %cst_178 = arith.constant 1.000000e+00 : f32
    %397 = vector.broadcast %cst_178 : f32 to vector<8x128xf32>
    %398 = arith.addf %397, %396 : vector<8x128xf32>
    %399 = arith.divf %397, %398 : vector<8x128xf32>
    %400 = vector.extract_strided_slice %393 {offsets = [0, 128], sizes = [8, 128], strides = [1, 1]} : vector<8x512xf32> to vector<8x128xf32>
    %401 = arith.negf %400 : vector<8x128xf32>
    %402 = math.exp %401 : vector<8x128xf32>
    %cst_179 = arith.constant 1.000000e+00 : f32
    %403 = vector.broadcast %cst_179 : f32 to vector<8x128xf32>
    %404 = arith.addf %403, %402 : vector<8x128xf32>
    %405 = arith.divf %403, %404 : vector<8x128xf32>
    %406 = vector.extract_strided_slice %393 {offsets = [0, 256], sizes = [8, 128], strides = [1, 1]} : vector<8x512xf32> to vector<8x128xf32>
    %407 = math.tanh %406 : vector<8x128xf32>
    %408 = vector.extract_strided_slice %393 {offsets = [0, 384], sizes = [8, 128], strides = [1, 1]} : vector<8x512xf32> to vector<8x128xf32>
    %409 = arith.negf %408 : vector<8x128xf32>
    %410 = math.exp %409 : vector<8x128xf32>
    %cst_180 = arith.constant 1.000000e+00 : f32
    %411 = vector.broadcast %cst_180 : f32 to vector<8x128xf32>
    %412 = arith.addf %411, %410 : vector<8x128xf32>
    %413 = arith.divf %411, %412 : vector<8x128xf32>
    %414 = arith.mulf %405, %388 : vector<8x128xf32>
    %415 = arith.mulf %399, %407 : vector<8x128xf32>
    %416 = arith.addf %414, %415 : vector<8x128xf32>
    %417 = math.tanh %416 : vector<8x128xf32>
    %418 = arith.mulf %413, %417 : vector<8x128xf32>
    %c5_i32_181 = arith.constant 5 : i32
    %419 = arith.muli %arg0, %c5_i32_181 : i32
    %420 = arith.addi %419, %c1_i32_166 : i32
    %c8_i32_182 = arith.constant 8 : i32
    %421 = arith.cmpi slt, %420, %c8_i32_182 : i32
    %422 = arith.extui %421 : i1 to i32
    %423 = arith.sitofp %422 : i32 to f32
    %424 = vector.broadcast %423 : f32 to vector<8x128xf32>
    %425 = arith.mulf %424, %416 : vector<8x128xf32>
    %cst_183 = arith.constant 1.000000e+00 : f32
    %426 = arith.subf %cst_183, %423 : f32
    %427 = vector.broadcast %426 : f32 to vector<8x128xf32>
    %428 = arith.mulf %427, %388 : vector<8x128xf32>
    %429 = arith.addf %425, %428 : vector<8x128xf32>
    %430 = vector.broadcast %423 : f32 to vector<8x128xf32>
    %431 = arith.mulf %430, %418 : vector<8x128xf32>
    %cst_184 = arith.constant 1.000000e+00 : f32
    %432 = arith.subf %cst_184, %423 : f32
    %433 = vector.broadcast %432 : f32 to vector<8x128xf32>
    %434 = arith.mulf %433, %386 : vector<8x128xf32>
    %435 = arith.addf %431, %434 : vector<8x128xf32>
    %c1_185 = arith.constant 1 : index
    %c0_186 = arith.constant 0 : index
    %c0_187 = arith.constant 0 : index
    %436 = vector.load %arg13[%c1_185, %c0_186, %c0_187] : memref<2x8x128xf32, #tpu.memory_space<vmem>>, vector<1x8x128xf32>
    %437 = vector.shape_cast %436 : vector<1x8x128xf32> to vector<8x128xf32>
    %438 = vector.shape_cast %429 : vector<8x128xf32> to vector<1x8x128xf32>
    tpu.vector_store %arg13[%c1_185, %c0_186, %c0_187], %438 {strides = array<i32>} : memref<2x8x128xf32, #tpu.memory_space<vmem>>, vector<1x8x128xf32>,
    %c1_188 = arith.constant 1 : index
    %c0_189 = arith.constant 0 : index
    %c0_190 = arith.constant 0 : index
    %439 = vector.load %arg12[%c1_188, %c0_189, %c0_190] : memref<2x8x128xf32, #tpu.memory_space<vmem>>, vector<1x8x128xf32>
    %440 = vector.shape_cast %439 : vector<1x8x128xf32> to vector<8x128xf32>
    %441 = vector.shape_cast %435 : vector<8x128xf32> to vector<1x8x128xf32>
    tpu.vector_store %arg12[%c1_188, %c0_189, %c0_190], %441 {strides = array<i32>} : memref<2x8x128xf32, #tpu.memory_space<vmem>>, vector<1x8x128xf32>,
    %c2_i32_191 = arith.constant 2 : i32
    %c8_i32_192 = arith.constant 8 : i32
    %442 = arith.muli %c2_i32_191, %c8_i32_192 : i32
    %443 = tpu.assume_multiple %442, 8 : i32
    %c1_193 = arith.constant 1 : index
    %c0_194 = arith.constant 0 : index
    %c0_195 = arith.constant 0 : index
    %444 = vector.load %arg12[%c1_193, %c0_194, %c0_195] : memref<2x8x128xf32, #tpu.memory_space<vmem>>, vector<1x8x128xf32>
    %445 = vector.shape_cast %444 : vector<1x8x128xf32> to vector<8x128xf32>
    %c1_196 = arith.constant 1 : index
    %c0_197 = arith.constant 0 : index
    %c0_198 = arith.constant 0 : index
    %446 = vector.load %arg13[%c1_196, %c0_197, %c0_198] : memref<2x8x128xf32, #tpu.memory_space<vmem>>, vector<1x8x128xf32>
    %447 = vector.shape_cast %446 : vector<1x8x128xf32> to vector<8x128xf32>
    %448 = arith.index_cast %443 : i32 to index
    %c0_199 = arith.constant 0 : index
    %449 = vector.load %arg15[%448, %c0_199] : memref<40x512xf32, #tpu.memory_space<vmem>>, vector<8x512xf32>
    %c0_200 = arith.constant 0 : index
    %c0_201 = arith.constant 0 : index
    %450 = vector.load %arg6[%c0_200, %c0_201] : memref<128x512xf32, #tpu.memory_space<vmem>>, vector<128x512xf32>
    %cst_202 = arith.constant dense<0.000000e+00> : vector<8x512xf32>
    %451 = tpu.matmul %445, %450, %cst_202 {dimension_numbers = #tpu.dot_dimension_numbers<[1], [0], [0], [1], [0, 0, 1, 1], [], []>} : vector<8x128xf32>, vector<128x512xf32>, vector<8x512xf32> -> vector<8x512xf32>
    %452 = arith.addf %449, %451 : vector<8x512xf32>
    %453 = vector.extract_strided_slice %452 {offsets = [0, 0], sizes = [8, 128], strides = [1, 1]} : vector<8x512xf32> to vector<8x128xf32>
    %454 = arith.negf %453 : vector<8x128xf32>
    %455 = math.exp %454 : vector<8x128xf32>
    %cst_203 = arith.constant 1.000000e+00 : f32
    %456 = vector.broadcast %cst_203 : f32 to vector<8x128xf32>
    %457 = arith.addf %456, %455 : vector<8x128xf32>
    %458 = arith.divf %456, %457 : vector<8x128xf32>
    %459 = vector.extract_strided_slice %452 {offsets = [0, 128], sizes = [8, 128], strides = [1, 1]} : vector<8x512xf32> to vector<8x128xf32>
    %460 = arith.negf %459 : vector<8x128xf32>
    %461 = math.exp %460 : vector<8x128xf32>
    %cst_204 = arith.constant 1.000000e+00 : f32
    %462 = vector.broadcast %cst_204 : f32 to vector<8x128xf32>
    %463 = arith.addf %462, %461 : vector<8x128xf32>
    %464 = arith.divf %462, %463 : vector<8x128xf32>
    %465 = vector.extract_strided_slice %452 {offsets = [0, 256], sizes = [8, 128], strides = [1, 1]} : vector<8x512xf32> to vector<8x128xf32>
    %466 = math.tanh %465 : vector<8x128xf32>
    %467 = vector.extract_strided_slice %452 {offsets = [0, 384], sizes = [8, 128], strides = [1, 1]} : vector<8x512xf32> to vector<8x128xf32>
    %468 = arith.negf %467 : vector<8x128xf32>
    %469 = math.exp %468 : vector<8x128xf32>
    %cst_205 = arith.constant 1.000000e+00 : f32
    %470 = vector.broadcast %cst_205 : f32 to vector<8x128xf32>
    %471 = arith.addf %470, %469 : vector<8x128xf32>
    %472 = arith.divf %470, %471 : vector<8x128xf32>
    %473 = arith.mulf %464, %447 : vector<8x128xf32>
    %474 = arith.mulf %458, %466 : vector<8x128xf32>
    %475 = arith.addf %473, %474 : vector<8x128xf32>
    %476 = math.tanh %475 : vector<8x128xf32>
    %477 = arith.mulf %472, %476 : vector<8x128xf32>
    %c5_i32_206 = arith.constant 5 : i32
    %478 = arith.muli %arg0, %c5_i32_206 : i32
    %479 = arith.addi %478, %c2_i32_191 : i32
    %c8_i32_207 = arith.constant 8 : i32
    %480 = arith.cmpi slt, %479, %c8_i32_207 : i32
    %481 = arith.extui %480 : i1 to i32
    %482 = arith.sitofp %481 : i32 to f32
    %483 = vector.broadcast %482 : f32 to vector<8x128xf32>
    %484 = arith.mulf %483, %475 : vector<8x128xf32>
    %cst_208 = arith.constant 1.000000e+00 : f32
    %485 = arith.subf %cst_208, %482 : f32
    %486 = vector.broadcast %485 : f32 to vector<8x128xf32>
    %487 = arith.mulf %486, %447 : vector<8x128xf32>
    %488 = arith.addf %484, %487 : vector<8x128xf32>
    %489 = vector.broadcast %482 : f32 to vector<8x128xf32>
    %490 = arith.mulf %489, %477 : vector<8x128xf32>
    %cst_209 = arith.constant 1.000000e+00 : f32
    %491 = arith.subf %cst_209, %482 : f32
    %492 = vector.broadcast %491 : f32 to vector<8x128xf32>
    %493 = arith.mulf %492, %445 : vector<8x128xf32>
    %494 = arith.addf %490, %493 : vector<8x128xf32>
    %c1_210 = arith.constant 1 : index
    %c0_211 = arith.constant 0 : index
    %c0_212 = arith.constant 0 : index
    %495 = vector.load %arg13[%c1_210, %c0_211, %c0_212] : memref<2x8x128xf32, #tpu.memory_space<vmem>>, vector<1x8x128xf32>
    %496 = vector.shape_cast %495 : vector<1x8x128xf32> to vector<8x128xf32>
    %497 = vector.shape_cast %488 : vector<8x128xf32> to vector<1x8x128xf32>
    tpu.vector_store %arg13[%c1_210, %c0_211, %c0_212], %497 {strides = array<i32>} : memref<2x8x128xf32, #tpu.memory_space<vmem>>, vector<1x8x128xf32>,
    %c1_213 = arith.constant 1 : index
    %c0_214 = arith.constant 0 : index
    %c0_215 = arith.constant 0 : index
    %498 = vector.load %arg12[%c1_213, %c0_214, %c0_215] : memref<2x8x128xf32, #tpu.memory_space<vmem>>, vector<1x8x128xf32>
    %499 = vector.shape_cast %498 : vector<1x8x128xf32> to vector<8x128xf32>
    %500 = vector.shape_cast %494 : vector<8x128xf32> to vector<1x8x128xf32>
    tpu.vector_store %arg12[%c1_213, %c0_214, %c0_215], %500 {strides = array<i32>} : memref<2x8x128xf32, #tpu.memory_space<vmem>>, vector<1x8x128xf32>,
    %c3_i32_216 = arith.constant 3 : i32
    %c8_i32_217 = arith.constant 8 : i32
    %501 = arith.muli %c3_i32_216, %c8_i32_217 : i32
    %502 = tpu.assume_multiple %501, 8 : i32
    %c1_218 = arith.constant 1 : index
    %c0_219 = arith.constant 0 : index
    %c0_220 = arith.constant 0 : index
    %503 = vector.load %arg12[%c1_218, %c0_219, %c0_220] : memref<2x8x128xf32, #tpu.memory_space<vmem>>, vector<1x8x128xf32>
    %504 = vector.shape_cast %503 : vector<1x8x128xf32> to vector<8x128xf32>
    %c1_221 = arith.constant 1 : index
    %c0_222 = arith.constant 0 : index
    %c0_223 = arith.constant 0 : index
    %505 = vector.load %arg13[%c1_221, %c0_222, %c0_223] : memref<2x8x128xf32, #tpu.memory_space<vmem>>, vector<1x8x128xf32>
    %506 = vector.shape_cast %505 : vector<1x8x128xf32> to vector<8x128xf32>
    %507 = arith.index_cast %502 : i32 to index
    %c0_224 = arith.constant 0 : index
    %508 = vector.load %arg15[%507, %c0_224] : memref<40x512xf32, #tpu.memory_space<vmem>>, vector<8x512xf32>
    %c0_225 = arith.constant 0 : index
    %c0_226 = arith.constant 0 : index
    %509 = vector.load %arg6[%c0_225, %c0_226] : memref<128x512xf32, #tpu.memory_space<vmem>>, vector<128x512xf32>
    %cst_227 = arith.constant dense<0.000000e+00> : vector<8x512xf32>
    %510 = tpu.matmul %504, %509, %cst_227 {dimension_numbers = #tpu.dot_dimension_numbers<[1], [0], [0], [1], [0, 0, 1, 1], [], []>} : vector<8x128xf32>, vector<128x512xf32>, vector<8x512xf32> -> vector<8x512xf32>
    %511 = arith.addf %508, %510 : vector<8x512xf32>
    %512 = vector.extract_strided_slice %511 {offsets = [0, 0], sizes = [8, 128], strides = [1, 1]} : vector<8x512xf32> to vector<8x128xf32>
    %513 = arith.negf %512 : vector<8x128xf32>
    %514 = math.exp %513 : vector<8x128xf32>
    %cst_228 = arith.constant 1.000000e+00 : f32
    %515 = vector.broadcast %cst_228 : f32 to vector<8x128xf32>
    %516 = arith.addf %515, %514 : vector<8x128xf32>
    %517 = arith.divf %515, %516 : vector<8x128xf32>
    %518 = vector.extract_strided_slice %511 {offsets = [0, 128], sizes = [8, 128], strides = [1, 1]} : vector<8x512xf32> to vector<8x128xf32>
    %519 = arith.negf %518 : vector<8x128xf32>
    %520 = math.exp %519 : vector<8x128xf32>
    %cst_229 = arith.constant 1.000000e+00 : f32
    %521 = vector.broadcast %cst_229 : f32 to vector<8x128xf32>
    %522 = arith.addf %521, %520 : vector<8x128xf32>
    %523 = arith.divf %521, %522 : vector<8x128xf32>
    %524 = vector.extract_strided_slice %511 {offsets = [0, 256], sizes = [8, 128], strides = [1, 1]} : vector<8x512xf32> to vector<8x128xf32>
    %525 = math.tanh %524 : vector<8x128xf32>
    %526 = vector.extract_strided_slice %511 {offsets = [0, 384], sizes = [8, 128], strides = [1, 1]} : vector<8x512xf32> to vector<8x128xf32>
    %527 = arith.negf %526 : vector<8x128xf32>
    %528 = math.exp %527 : vector<8x128xf32>
    %cst_230 = arith.constant 1.000000e+00 : f32
    %529 = vector.broadcast %cst_230 : f32 to vector<8x128xf32>
    %530 = arith.addf %529, %528 : vector<8x128xf32>
    %531 = arith.divf %529, %530 : vector<8x128xf32>
    %532 = arith.mulf %523, %506 : vector<8x128xf32>
    %533 = arith.mulf %517, %525 : vector<8x128xf32>
    %534 = arith.addf %532, %533 : vector<8x128xf32>
    %535 = math.tanh %534 : vector<8x128xf32>
    %536 = arith.mulf %531, %535 : vector<8x128xf32>
    %c5_i32_231 = arith.constant 5 : i32
    %537 = arith.muli %arg0, %c5_i32_231 : i32
    %538 = arith.addi %537, %c3_i32_216 : i32
    %c8_i32_232 = arith.constant 8 : i32
    %539 = arith.cmpi slt, %538, %c8_i32_232 : i32
    %540 = arith.extui %539 : i1 to i32
    %541 = arith.sitofp %540 : i32 to f32
    %542 = vector.broadcast %541 : f32 to vector<8x128xf32>
    %543 = arith.mulf %542, %534 : vector<8x128xf32>
    %cst_233 = arith.constant 1.000000e+00 : f32
    %544 = arith.subf %cst_233, %541 : f32
    %545 = vector.broadcast %544 : f32 to vector<8x128xf32>
    %546 = arith.mulf %545, %506 : vector<8x128xf32>
    %547 = arith.addf %543, %546 : vector<8x128xf32>
    %548 = vector.broadcast %541 : f32 to vector<8x128xf32>
    %549 = arith.mulf %548, %536 : vector<8x128xf32>
    %cst_234 = arith.constant 1.000000e+00 : f32
    %550 = arith.subf %cst_234, %541 : f32
    %551 = vector.broadcast %550 : f32 to vector<8x128xf32>
    %552 = arith.mulf %551, %504 : vector<8x128xf32>
    %553 = arith.addf %549, %552 : vector<8x128xf32>
    %c1_235 = arith.constant 1 : index
    %c0_236 = arith.constant 0 : index
    %c0_237 = arith.constant 0 : index
    %554 = vector.load %arg13[%c1_235, %c0_236, %c0_237] : memref<2x8x128xf32, #tpu.memory_space<vmem>>, vector<1x8x128xf32>
    %555 = vector.shape_cast %554 : vector<1x8x128xf32> to vector<8x128xf32>
    %556 = vector.shape_cast %547 : vector<8x128xf32> to vector<1x8x128xf32>
    tpu.vector_store %arg13[%c1_235, %c0_236, %c0_237], %556 {strides = array<i32>} : memref<2x8x128xf32, #tpu.memory_space<vmem>>, vector<1x8x128xf32>,
    %c1_238 = arith.constant 1 : index
    %c0_239 = arith.constant 0 : index
    %c0_240 = arith.constant 0 : index
    %557 = vector.load %arg12[%c1_238, %c0_239, %c0_240] : memref<2x8x128xf32, #tpu.memory_space<vmem>>, vector<1x8x128xf32>
    %558 = vector.shape_cast %557 : vector<1x8x128xf32> to vector<8x128xf32>
    %559 = vector.shape_cast %553 : vector<8x128xf32> to vector<1x8x128xf32>
    tpu.vector_store %arg12[%c1_238, %c0_239, %c0_240], %559 {strides = array<i32>} : memref<2x8x128xf32, #tpu.memory_space<vmem>>, vector<1x8x128xf32>,
    %c4_i32_241 = arith.constant 4 : i32
    %c8_i32_242 = arith.constant 8 : i32
    %560 = arith.muli %c4_i32_241, %c8_i32_242 : i32
    %561 = tpu.assume_multiple %560, 8 : i32
    %c1_243 = arith.constant 1 : index
    %c0_244 = arith.constant 0 : index
    %c0_245 = arith.constant 0 : index
    %562 = vector.load %arg12[%c1_243, %c0_244, %c0_245] : memref<2x8x128xf32, #tpu.memory_space<vmem>>, vector<1x8x128xf32>
    %563 = vector.shape_cast %562 : vector<1x8x128xf32> to vector<8x128xf32>
    %c1_246 = arith.constant 1 : index
    %c0_247 = arith.constant 0 : index
    %c0_248 = arith.constant 0 : index
    %564 = vector.load %arg13[%c1_246, %c0_247, %c0_248] : memref<2x8x128xf32, #tpu.memory_space<vmem>>, vector<1x8x128xf32>
    %565 = vector.shape_cast %564 : vector<1x8x128xf32> to vector<8x128xf32>
    %566 = arith.index_cast %561 : i32 to index
    %c0_249 = arith.constant 0 : index
    %567 = vector.load %arg15[%566, %c0_249] : memref<40x512xf32, #tpu.memory_space<vmem>>, vector<8x512xf32>
    %c0_250 = arith.constant 0 : index
    %c0_251 = arith.constant 0 : index
    %568 = vector.load %arg6[%c0_250, %c0_251] : memref<128x512xf32, #tpu.memory_space<vmem>>, vector<128x512xf32>
    %cst_252 = arith.constant dense<0.000000e+00> : vector<8x512xf32>
    %569 = tpu.matmul %563, %568, %cst_252 {dimension_numbers = #tpu.dot_dimension_numbers<[1], [0], [0], [1], [0, 0, 1, 1], [], []>} : vector<8x128xf32>, vector<128x512xf32>, vector<8x512xf32> -> vector<8x512xf32>
    %570 = arith.addf %567, %569 : vector<8x512xf32>
    %571 = vector.extract_strided_slice %570 {offsets = [0, 0], sizes = [8, 128], strides = [1, 1]} : vector<8x512xf32> to vector<8x128xf32>
    %572 = arith.negf %571 : vector<8x128xf32>
    %573 = math.exp %572 : vector<8x128xf32>
    %cst_253 = arith.constant 1.000000e+00 : f32
    %574 = vector.broadcast %cst_253 : f32 to vector<8x128xf32>
    %575 = arith.addf %574, %573 : vector<8x128xf32>
    %576 = arith.divf %574, %575 : vector<8x128xf32>
    %577 = vector.extract_strided_slice %570 {offsets = [0, 128], sizes = [8, 128], strides = [1, 1]} : vector<8x512xf32> to vector<8x128xf32>
    %578 = arith.negf %577 : vector<8x128xf32>
    %579 = math.exp %578 : vector<8x128xf32>
    %cst_254 = arith.constant 1.000000e+00 : f32
    %580 = vector.broadcast %cst_254 : f32 to vector<8x128xf32>
    %581 = arith.addf %580, %579 : vector<8x128xf32>
    %582 = arith.divf %580, %581 : vector<8x128xf32>
    %583 = vector.extract_strided_slice %570 {offsets = [0, 256], sizes = [8, 128], strides = [1, 1]} : vector<8x512xf32> to vector<8x128xf32>
    %584 = math.tanh %583 : vector<8x128xf32>
    %585 = vector.extract_strided_slice %570 {offsets = [0, 384], sizes = [8, 128], strides = [1, 1]} : vector<8x512xf32> to vector<8x128xf32>
    %586 = arith.negf %585 : vector<8x128xf32>
    %587 = math.exp %586 : vector<8x128xf32>
    %cst_255 = arith.constant 1.000000e+00 : f32
    %588 = vector.broadcast %cst_255 : f32 to vector<8x128xf32>
    %589 = arith.addf %588, %587 : vector<8x128xf32>
    %590 = arith.divf %588, %589 : vector<8x128xf32>
    %591 = arith.mulf %582, %565 : vector<8x128xf32>
    %592 = arith.mulf %576, %584 : vector<8x128xf32>
    %593 = arith.addf %591, %592 : vector<8x128xf32>
    %594 = math.tanh %593 : vector<8x128xf32>
    %595 = arith.mulf %590, %594 : vector<8x128xf32>
    %c5_i32_256 = arith.constant 5 : i32
    %596 = arith.muli %arg0, %c5_i32_256 : i32
    %597 = arith.addi %596, %c4_i32_241 : i32
    %c8_i32_257 = arith.constant 8 : i32
    %598 = arith.cmpi slt, %597, %c8_i32_257 : i32
    %599 = arith.extui %598 : i1 to i32
    %600 = arith.sitofp %599 : i32 to f32
    %601 = vector.broadcast %600 : f32 to vector<8x128xf32>
    %602 = arith.mulf %601, %593 : vector<8x128xf32>
    %cst_258 = arith.constant 1.000000e+00 : f32
    %603 = arith.subf %cst_258, %600 : f32
    %604 = vector.broadcast %603 : f32 to vector<8x128xf32>
    %605 = arith.mulf %604, %565 : vector<8x128xf32>
    %606 = arith.addf %602, %605 : vector<8x128xf32>
    %607 = vector.broadcast %600 : f32 to vector<8x128xf32>
    %608 = arith.mulf %607, %595 : vector<8x128xf32>
    %cst_259 = arith.constant 1.000000e+00 : f32
    %609 = arith.subf %cst_259, %600 : f32
    %610 = vector.broadcast %609 : f32 to vector<8x128xf32>
    %611 = arith.mulf %610, %563 : vector<8x128xf32>
    %612 = arith.addf %608, %611 : vector<8x128xf32>
    %c1_260 = arith.constant 1 : index
    %c0_261 = arith.constant 0 : index
    %c0_262 = arith.constant 0 : index
    %613 = vector.load %arg13[%c1_260, %c0_261, %c0_262] : memref<2x8x128xf32, #tpu.memory_space<vmem>>, vector<1x8x128xf32>
    %614 = vector.shape_cast %613 : vector<1x8x128xf32> to vector<8x128xf32>
    %615 = vector.shape_cast %606 : vector<8x128xf32> to vector<1x8x128xf32>
    tpu.vector_store %arg13[%c1_260, %c0_261, %c0_262], %615 {strides = array<i32>} : memref<2x8x128xf32, #tpu.memory_space<vmem>>, vector<1x8x128xf32>,
    %c1_263 = arith.constant 1 : index
    %c0_264 = arith.constant 0 : index
    %c0_265 = arith.constant 0 : index
    %616 = vector.load %arg12[%c1_263, %c0_264, %c0_265] : memref<2x8x128xf32, #tpu.memory_space<vmem>>, vector<1x8x128xf32>
    %617 = vector.shape_cast %616 : vector<1x8x128xf32> to vector<8x128xf32>
    %618 = vector.shape_cast %612 : vector<8x128xf32> to vector<1x8x128xf32>
    tpu.vector_store %arg12[%c1_263, %c0_264, %c0_265], %618 {strides = array<i32>} : memref<2x8x128xf32, #tpu.memory_space<vmem>>, vector<1x8x128xf32>,
    %c5_i32_266 = arith.constant 5 : i32
    %c1_i32_267 = arith.constant 1 : i32
    %619 = arith.cmpi eq, %arg0, %c1_i32_267 : i32
    %620 = arith.extui %619 : i1 to i32
    %c0_i32_268 = arith.constant 0 : i32
    %621 = arith.cmpi ne, %620, %c0_i32_268 : i32
    scf.if %621 {
      %c0_269 = arith.constant 0 : index
      %c0_270 = arith.constant 0 : index
      %c0_271 = arith.constant 0 : index
      %622 = vector.load %arg12[%c0_269, %c0_270, %c0_271] : memref<2x8x128xf32, #tpu.memory_space<vmem>>, vector<2x8x128xf32>
      %c0_272 = arith.constant 0 : index
      %c0_273 = arith.constant 0 : index
      %c0_274 = arith.constant 0 : index
      %623 = vector.load %arg11[%c0_272, %c0_273, %c0_274] : memref<2x8x128xf32, #tpu.memory_space<vmem>>, vector<2x8x128xf32>
      tpu.vector_store %arg11[%c0_272, %c0_273, %c0_274], %622 {strides = array<i32>} : memref<2x8x128xf32, #tpu.memory_space<vmem>>, vector<2x8x128xf32>,
      %c1_275 = arith.constant 1 : index
      %c0_276 = arith.constant 0 : index
      %c0_277 = arith.constant 0 : index
      %624 = vector.load %arg12[%c1_275, %c0_276, %c0_277] : memref<2x8x128xf32, #tpu.memory_space<vmem>>, vector<1x8x128xf32>
      %625 = vector.shape_cast %624 : vector<1x8x128xf32> to vector<8x128xf32>
      %c0_278 = arith.constant 0 : index
      %c0_279 = arith.constant 0 : index
      %626 = vector.load %arg8[%c0_278, %c0_279] : memref<128x128xf32, #tpu.memory_space<vmem>>, vector<128x128xf32>
      %cst_280 = arith.constant dense<0.000000e+00> : vector<8x128xf32>
      %627 = tpu.matmul %625, %626, %cst_280 {dimension_numbers = #tpu.dot_dimension_numbers<[1], [0], [0], [1], [0, 0, 1, 1], [], []>} : vector<8x128xf32>, vector<128x128xf32>, vector<8x128xf32> -> vector<8x128xf32>
      %c0_281 = arith.constant 0 : index
      %c0_282 = arith.constant 0 : index
      %628 = vector.load %arg9[%c0_281, %c0_282] : memref<1x128xf32, #tpu.memory_space<vmem>>, vector<1x128xf32>
      %629 = vector.broadcast %628 : vector<1x128xf32> to vector<8x128xf32>
      %630 = arith.addf %627, %629 : vector<8x128xf32>
      %c0_283 = arith.constant 0 : index
      %c0_284 = arith.constant 0 : index
      %631 = vector.load %arg10[%c0_283, %c0_284] : memref<8x128xf32, #tpu.memory_space<vmem>>, vector<8x128xf32>
      tpu.vector_store %arg10[%c0_283, %c0_284], %630 {strides = array<i32>} : memref<8x128xf32, #tpu.memory_space<vmem>>, vector<8x128xf32>,
    } else {
    }
    return
  }
  func.func @transform_0(%arg0: i32) -> (i32, i32) {
    %c0_i32 = arith.constant 0 : i32
    %c0_i32_0 = arith.constant 0 : i32
    return %arg0, %c0_i32 : i32, i32
  }
  func.func @transform_1(%arg0: i32) -> (i32, i32) {
    %c0_i32 = arith.constant 0 : i32
    %c0_i32_0 = arith.constant 0 : i32
    %c0_i32_1 = arith.constant 0 : i32
    return %c0_i32, %c0_i32_0 : i32, i32
  }
  func.func @transform_2(%arg0: i32) -> (i32, i32) {
    %c0_i32 = arith.constant 0 : i32
    %c0_i32_0 = arith.constant 0 : i32
    %c0_i32_1 = arith.constant 0 : i32
    return %c0_i32, %c0_i32_0 : i32, i32
  }
  func.func @transform_3(%arg0: i32) -> (i32, i32) {
    %c0_i32 = arith.constant 0 : i32
    %c0_i32_0 = arith.constant 0 : i32
    %c0_i32_1 = arith.constant 0 : i32
    return %c0_i32, %c0_i32_0 : i32, i32
  }
  func.func @transform_4(%arg0: i32) -> (i32, i32) {
    %c0_i32 = arith.constant 0 : i32
    %c0_i32_0 = arith.constant 0 : i32
    %c0_i32_1 = arith.constant 0 : i32
    return %c0_i32, %c0_i32_0 : i32, i32
  }
  func.func @transform_5(%arg0: i32) -> (i32, i32) {
    %c0_i32 = arith.constant 0 : i32
    %c0_i32_0 = arith.constant 0 : i32
    %c0_i32_1 = arith.constant 0 : i32
    return %c0_i32, %c0_i32_0 : i32, i32
  }
  func.func @transform_6(%arg0: i32) -> (i32, i32) {
    %c0_i32 = arith.constant 0 : i32
    %c0_i32_0 = arith.constant 0 : i32
    %c0_i32_1 = arith.constant 0 : i32
    return %c0_i32, %c0_i32_0 : i32, i32
  }
  func.func @transform_7(%arg0: i32) -> (i32, i32) {
    %c0_i32 = arith.constant 0 : i32
    %c0_i32_0 = arith.constant 0 : i32
    %c0_i32_1 = arith.constant 0 : i32
    return %c0_i32, %c0_i32_0 : i32, i32
  }
  func.func @transform_8(%arg0: i32) -> (i32, i32) {
    %c0_i32 = arith.constant 0 : i32
    %c0_i32_0 = arith.constant 0 : i32
    %c0_i32_1 = arith.constant 0 : i32
    return %c0_i32, %c0_i32_0 : i32, i32
  }
  func.func @transform_9(%arg0: i32) -> (i32, i32) {
    %c0_i32 = arith.constant 0 : i32
    %c0_i32_0 = arith.constant 0 : i32
    %c0_i32_1 = arith.constant 0 : i32
    return %c0_i32, %c0_i32_0 : i32, i32
  }
  func.func @transform_10(%arg0: i32) -> (i32, i32, i32) {
    %c0_i32 = arith.constant 0 : i32
    %c0_i32_0 = arith.constant 0 : i32
    %c0_i32_1 = arith.constant 0 : i32
    %c0_i32_2 = arith.constant 0 : i32
    return %c0_i32, %c0_i32_0, %c0_i32_1 : i32, i32, i32
  }
}

module attributes {stable_mosaic.version = 11 : i64} {
  func.func @kernel(%arg0: i32, %arg1: memref<40x128xf32, #tpu.memory_space<vmem>>, %arg2: memref<128x512xbf16, #tpu.memory_space<vmem>>, %arg3: memref<128x512xf32, #tpu.memory_space<vmem>>, %arg4: memref<1x512xf32, #tpu.memory_space<vmem>>, %arg5: memref<128x512xbf16, #tpu.memory_space<vmem>>, %arg6: memref<128x512xf32, #tpu.memory_space<vmem>>, %arg7: memref<1x512xf32, #tpu.memory_space<vmem>>, %arg8: memref<128x128xf32, #tpu.memory_space<vmem>>, %arg9: memref<1x128xf32, #tpu.memory_space<vmem>>, %arg10: memref<8x128xf32, #tpu.memory_space<vmem>>, %arg11: memref<2x8x128xf32, #tpu.memory_space<vmem>>, %arg12: memref<2x8x128xf32, #tpu.memory_space<vmem>>, %arg13: memref<2x8x128xf32, #tpu.memory_space<vmem>>, %arg14: memref<40x128xf32, #tpu.memory_space<vmem>>, %arg15: memref<40x512xf32, #tpu.memory_space<vmem>>) attributes {dimension_semantics = [#tpu.dimension_semantics<arbitrary>], iteration_bounds = array<i64: 2>, scalar_prefetch = 0 : i64, scratch_operands = 4 : i64, tpu.core_type = #tpu.core_type<tc>, window_params = [{transform_indices = @transform_0, window_bounds = array<i64: 40, 128>}, {pipeline_mode = #tpu.pipeline_mode<synchronous>, transform_indices = @transform_1, window_bounds = array<i64: 128, 512>}, {pipeline_mode = #tpu.pipeline_mode<synchronous>, transform_indices = @transform_2, window_bounds = array<i64: 128, 512>}, {pipeline_mode = #tpu.pipeline_mode<synchronous>, transform_indices = @transform_3, window_bounds = array<i64: 1, 512>}, {pipeline_mode = #tpu.pipeline_mode<synchronous>, transform_indices = @transform_4, window_bounds = array<i64: 128, 512>}, {pipeline_mode = #tpu.pipeline_mode<synchronous>, transform_indices = @transform_5, window_bounds = array<i64: 128, 512>}, {pipeline_mode = #tpu.pipeline_mode<synchronous>, transform_indices = @transform_6, window_bounds = array<i64: 1, 512>}, {pipeline_mode = #tpu.pipeline_mode<synchronous>, transform_indices = @transform_7, window_bounds = array<i64: 128, 128>}, {pipeline_mode = #tpu.pipeline_mode<synchronous>, transform_indices = @transform_8, window_bounds = array<i64: 1, 128>}, {pipeline_mode = #tpu.pipeline_mode<synchronous>, transform_indices = @transform_9, window_bounds = array<i64: 8, 128>}, {pipeline_mode = #tpu.pipeline_mode<synchronous>, transform_indices = @transform_10, window_bounds = array<i64: 2, 8, 128>}]} {
    %c0_i32 = arith.constant 0 : i32
    %0 = arith.cmpi eq, %arg0, %c0_i32 : i32
    %1 = arith.extui %0 : i1 to i32
    %c0_i32_0 = arith.constant 0 : i32
    %2 = arith.cmpi ne, %1, %c0_i32_0 : i32
    scf.if %2 {
      %cst_269 = arith.constant 0.000000e+00 : f32
      %622 = vector.broadcast %cst_269 : f32 to vector<2x8x128xf32>
      %c0_270 = arith.constant 0 : index
      %c0_271 = arith.constant 0 : index
      %c0_272 = arith.constant 0 : index
      %623 = vector.load %arg12[%c0_270, %c0_271, %c0_272] : memref<2x8x128xf32, #tpu.memory_space<vmem>>, vector<2x8x128xf32>
      tpu.vector_store %arg12[%c0_270, %c0_271, %c0_272], %622 {strides = array<i32>} : memref<2x8x128xf32, #tpu.memory_space<vmem>>, vector<2x8x128xf32>,
      %cst_273 = arith.constant 0.000000e+00 : f32
      %624 = vector.broadcast %cst_273 : f32 to vector<2x8x128xf32>
      %c0_274 = arith.constant 0 : index
      %c0_275 = arith.constant 0 : index
      %c0_276 = arith.constant 0 : index
      %625 = vector.load %arg13[%c0_274, %c0_275, %c0_276] : memref<2x8x128xf32, #tpu.memory_space<vmem>>, vector<2x8x128xf32>
      tpu.vector_store %arg13[%c0_274, %c0_275, %c0_276], %624 {strides = array<i32>} : memref<2x8x128xf32, #tpu.memory_space<vmem>>, vector<2x8x128xf32>,
    } else {
    }
    %c0 = arith.constant 0 : index
    %c0_1 = arith.constant 0 : index
    %3 = vector.load %arg1[%c0, %c0_1] : memref<40x128xf32, #tpu.memory_space<vmem>>, vector<40x128xf32>
    %4 = arith.truncf %3 : vector<40x128xf32> to vector<40x128xbf16>
    %c0_2 = arith.constant 0 : index
    %c0_3 = arith.constant 0 : index
    %5 = vector.load %arg2[%c0_2, %c0_3] : memref<128x512xbf16, #tpu.memory_space<vmem>>, vector<128x512xbf16>
    %cst = arith.constant dense<0.000000e+00> : vector<40x512xf32>
    %6 = tpu.matmul %4, %5, %cst {dimension_numbers = #tpu.dot_dimension_numbers<[1], [0], [0], [1], [0, 0, 1, 1], [], []>} : vector<40x128xbf16>, vector<128x512xbf16>, vector<40x512xf32> -> vector<40x512xf32>
    %c0_4 = arith.constant 0 : index
    %c0_5 = arith.constant 0 : index
    %7 = vector.load %arg4[%c0_4, %c0_5] : memref<1x512xf32, #tpu.memory_space<vmem>>, vector<1x512xf32>
    %8 = vector.broadcast %7 : vector<1x512xf32> to vector<40x512xf32>
    %9 = arith.addf %6, %8 : vector<40x512xf32>
    %c0_6 = arith.constant 0 : index
    %c0_7 = arith.constant 0 : index
    %10 = vector.load %arg15[%c0_6, %c0_7] : memref<40x512xf32, #tpu.memory_space<vmem>>, vector<40x512xf32>
    tpu.vector_store %arg15[%c0_6, %c0_7], %9 {strides = array<i32>} : memref<40x512xf32, #tpu.memory_space<vmem>>, vector<40x512xf32>,
    %c0_i32_8 = arith.constant 0 : i32
    %c8_i32 = arith.constant 8 : i32
    %11 = arith.muli %c0_i32_8, %c8_i32 : i32
    %12 = tpu.assume_multiple %11, 8 : i32
    %c0_9 = arith.constant 0 : index
    %c0_10 = arith.constant 0 : index
    %c0_11 = arith.constant 0 : index
    %13 = vector.load %arg12[%c0_9, %c0_10, %c0_11] : memref<2x8x128xf32, #tpu.memory_space<vmem>>, vector<1x8x128xf32>
    %14 = vector.shape_cast %13 : vector<1x8x128xf32> to vector<8x128xf32>
    %c0_12 = arith.constant 0 : index
    %c0_13 = arith.constant 0 : index
    %c0_14 = arith.constant 0 : index
    %15 = vector.load %arg13[%c0_12, %c0_13, %c0_14] : memref<2x8x128xf32, #tpu.memory_space<vmem>>, vector<1x8x128xf32>
    %16 = vector.shape_cast %15 : vector<1x8x128xf32> to vector<8x128xf32>
    %17 = arith.index_cast %12 : i32 to index
    %c0_15 = arith.constant 0 : index
    %18 = vector.load %arg15[%17, %c0_15] : memref<40x512xf32, #tpu.memory_space<vmem>>, vector<8x512xf32>
    %c0_16 = arith.constant 0 : index
    %c0_17 = arith.constant 0 : index
    %19 = vector.load %arg3[%c0_16, %c0_17] : memref<128x512xf32, #tpu.memory_space<vmem>>, vector<128x512xf32>
    %cst_18 = arith.constant dense<0.000000e+00> : vector<8x512xf32>
    %20 = tpu.matmul %14, %19, %cst_18 {dimension_numbers = #tpu.dot_dimension_numbers<[1], [0], [0], [1], [0, 0, 1, 1], [], []>} : vector<8x128xf32>, vector<128x512xf32>, vector<8x512xf32> -> vector<8x512xf32>
    %21 = arith.addf %18, %20 : vector<8x512xf32>
    %22 = vector.extract_strided_slice %21 {offsets = [0, 0], sizes = [8, 128], strides = [1, 1]} : vector<8x512xf32> to vector<8x128xf32>
    %23 = arith.negf %22 : vector<8x128xf32>
    %24 = math.exp %23 : vector<8x128xf32>
    %cst_19 = arith.constant 1.000000e+00 : f32
    %25 = vector.broadcast %cst_19 : f32 to vector<8x128xf32>
    %26 = arith.addf %25, %24 : vector<8x128xf32>
    %27 = arith.divf %25, %26 : vector<8x128xf32>
    %28 = vector.extract_strided_slice %21 {offsets = [0, 128], sizes = [8, 128], strides = [1, 1]} : vector<8x512xf32> to vector<8x128xf32>
    %29 = arith.negf %28 : vector<8x128xf32>
    %30 = math.exp %29 : vector<8x128xf32>
    %cst_20 = arith.constant 1.000000e+00 : f32
    %31 = vector.broadcast %cst_20 : f32 to vector<8x128xf32>
    %32 = arith.addf %31, %30 : vector<8x128xf32>
    %33 = arith.divf %31, %32 : vector<8x128xf32>
    %34 = vector.extract_strided_slice %21 {offsets = [0, 256], sizes = [8, 128], strides = [1, 1]} : vector<8x512xf32> to vector<8x128xf32>
    %35 = math.tanh %34 : vector<8x128xf32>
    %36 = vector.extract_strided_slice %21 {offsets = [0, 384], sizes = [8, 128], strides = [1, 1]} : vector<8x512xf32> to vector<8x128xf32>
    %37 = arith.negf %36 : vector<8x128xf32>
    %38 = math.exp %37 : vector<8x128xf32>
    %cst_21 = arith.constant 1.000000e+00 : f32
    %39 = vector.broadcast %cst_21 : f32 to vector<8x128xf32>
    %40 = arith.addf %39, %38 : vector<8x128xf32>
    %41 = arith.divf %39, %40 : vector<8x128xf32>
    %42 = arith.mulf %33, %16 : vector<8x128xf32>
    %43 = arith.mulf %27, %35 : vector<8x128xf32>
    %44 = arith.addf %42, %43 : vector<8x128xf32>
    %45 = math.tanh %44 : vector<8x128xf32>
    %46 = arith.mulf %41, %45 : vector<8x128xf32>
    %c5_i32 = arith.constant 5 : i32
    %47 = arith.muli %arg0, %c5_i32 : i32
    %48 = arith.addi %47, %c0_i32_8 : i32
    %c8_i32_22 = arith.constant 8 : i32
    %49 = arith.cmpi slt, %48, %c8_i32_22 : i32
    %50 = arith.extui %49 : i1 to i32
    %51 = arith.sitofp %50 : i32 to f32
    %52 = vector.broadcast %51 : f32 to vector<8x128xf32>
    %53 = arith.mulf %52, %44 : vector<8x128xf32>
    %cst_23 = arith.constant 1.000000e+00 : f32
    %54 = arith.subf %cst_23, %51 : f32
    %55 = vector.broadcast %54 : f32 to vector<8x128xf32>
    %56 = arith.mulf %55, %16 : vector<8x128xf32>
    %57 = arith.addf %53, %56 : vector<8x128xf32>
    %58 = vector.broadcast %51 : f32 to vector<8x128xf32>
    %59 = arith.mulf %58, %46 : vector<8x128xf32>
    %cst_24 = arith.constant 1.000000e+00 : f32
    %60 = arith.subf %cst_24, %51 : f32
    %61 = vector.broadcast %60 : f32 to vector<8x128xf32>
    %62 = arith.mulf %61, %14 : vector<8x128xf32>
    %63 = arith.addf %59, %62 : vector<8x128xf32>
    %c0_25 = arith.constant 0 : index
    %c0_26 = arith.constant 0 : index
    %c0_27 = arith.constant 0 : index
    %64 = vector.load %arg13[%c0_25, %c0_26, %c0_27] : memref<2x8x128xf32, #tpu.memory_space<vmem>>, vector<1x8x128xf32>
    %65 = vector.shape_cast %64 : vector<1x8x128xf32> to vector<8x128xf32>
    %66 = vector.shape_cast %57 : vector<8x128xf32> to vector<1x8x128xf32>
    tpu.vector_store %arg13[%c0_25, %c0_26, %c0_27], %66 {strides = array<i32>} : memref<2x8x128xf32, #tpu.memory_space<vmem>>, vector<1x8x128xf32>,
    %c0_28 = arith.constant 0 : index
    %c0_29 = arith.constant 0 : index
    %c0_30 = arith.constant 0 : index
    %67 = vector.load %arg12[%c0_28, %c0_29, %c0_30] : memref<2x8x128xf32, #tpu.memory_space<vmem>>, vector<1x8x128xf32>
    %68 = vector.shape_cast %67 : vector<1x8x128xf32> to vector<8x128xf32>
    %69 = vector.shape_cast %63 : vector<8x128xf32> to vector<1x8x128xf32>
    tpu.vector_store %arg12[%c0_28, %c0_29, %c0_30], %69 {strides = array<i32>} : memref<2x8x128xf32, #tpu.memory_space<vmem>>, vector<1x8x128xf32>,
    %70 = arith.index_cast %12 : i32 to index
    %c0_31 = arith.constant 0 : index
    %71 = vector.load %arg14[%70, %c0_31] : memref<40x128xf32, #tpu.memory_space<vmem>>, vector<8x128xf32>
    tpu.vector_store %arg14[%70, %c0_31], %63 {strides = array<i32>} : memref<40x128xf32, #tpu.memory_space<vmem>>, vector<8x128xf32>,
    %c1_i32 = arith.constant 1 : i32
    %c8_i32_32 = arith.constant 8 : i32
    %72 = arith.muli %c1_i32, %c8_i32_32 : i32
    %73 = tpu.assume_multiple %72, 8 : i32
    %c0_33 = arith.constant 0 : index
    %c0_34 = arith.constant 0 : index
    %c0_35 = arith.constant 0 : index
    %74 = vector.load %arg12[%c0_33, %c0_34, %c0_35] : memref<2x8x128xf32, #tpu.memory_space<vmem>>, vector<1x8x128xf32>
    %75 = vector.shape_cast %74 : vector<1x8x128xf32> to vector<8x128xf32>
    %c0_36 = arith.constant 0 : index
    %c0_37 = arith.constant 0 : index
    %c0_38 = arith.constant 0 : index
    %76 = vector.load %arg13[%c0_36, %c0_37, %c0_38] : memref<2x8x128xf32, #tpu.memory_space<vmem>>, vector<1x8x128xf32>
    %77 = vector.shape_cast %76 : vector<1x8x128xf32> to vector<8x128xf32>
    %78 = arith.index_cast %73 : i32 to index
    %c0_39 = arith.constant 0 : index
    %79 = vector.load %arg15[%78, %c0_39] : memref<40x512xf32, #tpu.memory_space<vmem>>, vector<8x512xf32>
    %c0_40 = arith.constant 0 : index
    %c0_41 = arith.constant 0 : index
    %80 = vector.load %arg3[%c0_40, %c0_41] : memref<128x512xf32, #tpu.memory_space<vmem>>, vector<128x512xf32>
    %cst_42 = arith.constant dense<0.000000e+00> : vector<8x512xf32>
    %81 = tpu.matmul %75, %80, %cst_42 {dimension_numbers = #tpu.dot_dimension_numbers<[1], [0], [0], [1], [0, 0, 1, 1], [], []>} : vector<8x128xf32>, vector<128x512xf32>, vector<8x512xf32> -> vector<8x512xf32>
    %82 = arith.addf %79, %81 : vector<8x512xf32>
    %83 = vector.extract_strided_slice %82 {offsets = [0, 0], sizes = [8, 128], strides = [1, 1]} : vector<8x512xf32> to vector<8x128xf32>
    %84 = arith.negf %83 : vector<8x128xf32>
    %85 = math.exp %84 : vector<8x128xf32>
    %cst_43 = arith.constant 1.000000e+00 : f32
    %86 = vector.broadcast %cst_43 : f32 to vector<8x128xf32>
    %87 = arith.addf %86, %85 : vector<8x128xf32>
    %88 = arith.divf %86, %87 : vector<8x128xf32>
    %89 = vector.extract_strided_slice %82 {offsets = [0, 128], sizes = [8, 128], strides = [1, 1]} : vector<8x512xf32> to vector<8x128xf32>
    %90 = arith.negf %89 : vector<8x128xf32>
    %91 = math.exp %90 : vector<8x128xf32>
    %cst_44 = arith.constant 1.000000e+00 : f32
    %92 = vector.broadcast %cst_44 : f32 to vector<8x128xf32>
    %93 = arith.addf %92, %91 : vector<8x128xf32>
    %94 = arith.divf %92, %93 : vector<8x128xf32>
    %95 = vector.extract_strided_slice %82 {offsets = [0, 256], sizes = [8, 128], strides = [1, 1]} : vector<8x512xf32> to vector<8x128xf32>
    %96 = math.tanh %95 : vector<8x128xf32>
    %97 = vector.extract_strided_slice %82 {offsets = [0, 384], sizes = [8, 128], strides = [1, 1]} : vector<8x512xf32> to vector<8x128xf32>
    %98 = arith.negf %97 : vector<8x128xf32>
    %99 = math.exp %98 : vector<8x128xf32>
    %cst_45 = arith.constant 1.000000e+00 : f32
    %100 = vector.broadcast %cst_45 : f32 to vector<8x128xf32>
    %101 = arith.addf %100, %99 : vector<8x128xf32>
    %102 = arith.divf %100, %101 : vector<8x128xf32>
    %103 = arith.mulf %94, %77 : vector<8x128xf32>
    %104 = arith.mulf %88, %96 : vector<8x128xf32>
    %105 = arith.addf %103, %104 : vector<8x128xf32>
    %106 = math.tanh %105 : vector<8x128xf32>
    %107 = arith.mulf %102, %106 : vector<8x128xf32>
    %c5_i32_46 = arith.constant 5 : i32
    %108 = arith.muli %arg0, %c5_i32_46 : i32
    %109 = arith.addi %108, %c1_i32 : i32
    %c8_i32_47 = arith.constant 8 : i32
    %110 = arith.cmpi slt, %109, %c8_i32_47 : i32
    %111 = arith.extui %110 : i1 to i32
    %112 = arith.sitofp %111 : i32 to f32
    %113 = vector.broadcast %112 : f32 to vector<8x128xf32>
    %114 = arith.mulf %113, %105 : vector<8x128xf32>
    %cst_48 = arith.constant 1.000000e+00 : f32
    %115 = arith.subf %cst_48, %112 : f32
    %116 = vector.broadcast %115 : f32 to vector<8x128xf32>
    %117 = arith.mulf %116, %77 : vector<8x128xf32>
    %118 = arith.addf %114, %117 : vector<8x128xf32>
    %119 = vector.broadcast %112 : f32 to vector<8x128xf32>
    %120 = arith.mulf %119, %107 : vector<8x128xf32>
    %cst_49 = arith.constant 1.000000e+00 : f32
    %121 = arith.subf %cst_49, %112 : f32
    %122 = vector.broadcast %121 : f32 to vector<8x128xf32>
    %123 = arith.mulf %122, %75 : vector<8x128xf32>
    %124 = arith.addf %120, %123 : vector<8x128xf32>
    %c0_50 = arith.constant 0 : index
    %c0_51 = arith.constant 0 : index
    %c0_52 = arith.constant 0 : index
    %125 = vector.load %arg13[%c0_50, %c0_51, %c0_52] : memref<2x8x128xf32, #tpu.memory_space<vmem>>, vector<1x8x128xf32>
    %126 = vector.shape_cast %125 : vector<1x8x128xf32> to vector<8x128xf32>
    %127 = vector.shape_cast %118 : vector<8x128xf32> to vector<1x8x128xf32>
    tpu.vector_store %arg13[%c0_50, %c0_51, %c0_52], %127 {strides = array<i32>} : memref<2x8x128xf32, #tpu.memory_space<vmem>>, vector<1x8x128xf32>,
    %c0_53 = arith.constant 0 : index
    %c0_54 = arith.constant 0 : index
    %c0_55 = arith.constant 0 : index
    %128 = vector.load %arg12[%c0_53, %c0_54, %c0_55] : memref<2x8x128xf32, #tpu.memory_space<vmem>>, vector<1x8x128xf32>
    %129 = vector.shape_cast %128 : vector<1x8x128xf32> to vector<8x128xf32>
    %130 = vector.shape_cast %124 : vector<8x128xf32> to vector<1x8x128xf32>
    tpu.vector_store %arg12[%c0_53, %c0_54, %c0_55], %130 {strides = array<i32>} : memref<2x8x128xf32, #tpu.memory_space<vmem>>, vector<1x8x128xf32>,
    %131 = arith.index_cast %73 : i32 to index
    %c0_56 = arith.constant 0 : index
    %132 = vector.load %arg14[%131, %c0_56] : memref<40x128xf32, #tpu.memory_space<vmem>>, vector<8x128xf32>
    tpu.vector_store %arg14[%131, %c0_56], %124 {strides = array<i32>} : memref<40x128xf32, #tpu.memory_space<vmem>>, vector<8x128xf32>,
    %c2_i32 = arith.constant 2 : i32
    %c8_i32_57 = arith.constant 8 : i32
    %133 = arith.muli %c2_i32, %c8_i32_57 : i32
    %134 = tpu.assume_multiple %133, 8 : i32
    %c0_58 = arith.constant 0 : index
    %c0_59 = arith.constant 0 : index
    %c0_60 = arith.constant 0 : index
    %135 = vector.load %arg12[%c0_58, %c0_59, %c0_60] : memref<2x8x128xf32, #tpu.memory_space<vmem>>, vector<1x8x128xf32>
    %136 = vector.shape_cast %135 : vector<1x8x128xf32> to vector<8x128xf32>
    %c0_61 = arith.constant 0 : index
    %c0_62 = arith.constant 0 : index
    %c0_63 = arith.constant 0 : index
    %137 = vector.load %arg13[%c0_61, %c0_62, %c0_63] : memref<2x8x128xf32, #tpu.memory_space<vmem>>, vector<1x8x128xf32>
    %138 = vector.shape_cast %137 : vector<1x8x128xf32> to vector<8x128xf32>
    %139 = arith.index_cast %134 : i32 to index
    %c0_64 = arith.constant 0 : index
    %140 = vector.load %arg15[%139, %c0_64] : memref<40x512xf32, #tpu.memory_space<vmem>>, vector<8x512xf32>
    %c0_65 = arith.constant 0 : index
    %c0_66 = arith.constant 0 : index
    %141 = vector.load %arg3[%c0_65, %c0_66] : memref<128x512xf32, #tpu.memory_space<vmem>>, vector<128x512xf32>
    %cst_67 = arith.constant dense<0.000000e+00> : vector<8x512xf32>
    %142 = tpu.matmul %136, %141, %cst_67 {dimension_numbers = #tpu.dot_dimension_numbers<[1], [0], [0], [1], [0, 0, 1, 1], [], []>} : vector<8x128xf32>, vector<128x512xf32>, vector<8x512xf32> -> vector<8x512xf32>
    %143 = arith.addf %140, %142 : vector<8x512xf32>
    %144 = vector.extract_strided_slice %143 {offsets = [0, 0], sizes = [8, 128], strides = [1, 1]} : vector<8x512xf32> to vector<8x128xf32>
    %145 = arith.negf %144 : vector<8x128xf32>
    %146 = math.exp %145 : vector<8x128xf32>
    %cst_68 = arith.constant 1.000000e+00 : f32
    %147 = vector.broadcast %cst_68 : f32 to vector<8x128xf32>
    %148 = arith.addf %147, %146 : vector<8x128xf32>
    %149 = arith.divf %147, %148 : vector<8x128xf32>
    %150 = vector.extract_strided_slice %143 {offsets = [0, 128], sizes = [8, 128], strides = [1, 1]} : vector<8x512xf32> to vector<8x128xf32>
    %151 = arith.negf %150 : vector<8x128xf32>
    %152 = math.exp %151 : vector<8x128xf32>
    %cst_69 = arith.constant 1.000000e+00 : f32
    %153 = vector.broadcast %cst_69 : f32 to vector<8x128xf32>
    %154 = arith.addf %153, %152 : vector<8x128xf32>
    %155 = arith.divf %153, %154 : vector<8x128xf32>
    %156 = vector.extract_strided_slice %143 {offsets = [0, 256], sizes = [8, 128], strides = [1, 1]} : vector<8x512xf32> to vector<8x128xf32>
    %157 = math.tanh %156 : vector<8x128xf32>
    %158 = vector.extract_strided_slice %143 {offsets = [0, 384], sizes = [8, 128], strides = [1, 1]} : vector<8x512xf32> to vector<8x128xf32>
    %159 = arith.negf %158 : vector<8x128xf32>
    %160 = math.exp %159 : vector<8x128xf32>
    %cst_70 = arith.constant 1.000000e+00 : f32
    %161 = vector.broadcast %cst_70 : f32 to vector<8x128xf32>
    %162 = arith.addf %161, %160 : vector<8x128xf32>
    %163 = arith.divf %161, %162 : vector<8x128xf32>
    %164 = arith.mulf %155, %138 : vector<8x128xf32>
    %165 = arith.mulf %149, %157 : vector<8x128xf32>
    %166 = arith.addf %164, %165 : vector<8x128xf32>
    %167 = math.tanh %166 : vector<8x128xf32>
    %168 = arith.mulf %163, %167 : vector<8x128xf32>
    %c5_i32_71 = arith.constant 5 : i32
    %169 = arith.muli %arg0, %c5_i32_71 : i32
    %170 = arith.addi %169, %c2_i32 : i32
    %c8_i32_72 = arith.constant 8 : i32
    %171 = arith.cmpi slt, %170, %c8_i32_72 : i32
    %172 = arith.extui %171 : i1 to i32
    %173 = arith.sitofp %172 : i32 to f32
    %174 = vector.broadcast %173 : f32 to vector<8x128xf32>
    %175 = arith.mulf %174, %166 : vector<8x128xf32>
    %cst_73 = arith.constant 1.000000e+00 : f32
    %176 = arith.subf %cst_73, %173 : f32
    %177 = vector.broadcast %176 : f32 to vector<8x128xf32>
    %178 = arith.mulf %177, %138 : vector<8x128xf32>
    %179 = arith.addf %175, %178 : vector<8x128xf32>
    %180 = vector.broadcast %173 : f32 to vector<8x128xf32>
    %181 = arith.mulf %180, %168 : vector<8x128xf32>
    %cst_74 = arith.constant 1.000000e+00 : f32
    %182 = arith.subf %cst_74, %173 : f32
    %183 = vector.broadcast %182 : f32 to vector<8x128xf32>
    %184 = arith.mulf %183, %136 : vector<8x128xf32>
    %185 = arith.addf %181, %184 : vector<8x128xf32>
    %c0_75 = arith.constant 0 : index
    %c0_76 = arith.constant 0 : index
    %c0_77 = arith.constant 0 : index
    %186 = vector.load %arg13[%c0_75, %c0_76, %c0_77] : memref<2x8x128xf32, #tpu.memory_space<vmem>>, vector<1x8x128xf32>
    %187 = vector.shape_cast %186 : vector<1x8x128xf32> to vector<8x128xf32>
    %188 = vector.shape_cast %179 : vector<8x128xf32> to vector<1x8x128xf32>
    tpu.vector_store %arg13[%c0_75, %c0_76, %c0_77], %188 {strides = array<i32>} : memref<2x8x128xf32, #tpu.memory_space<vmem>>, vector<1x8x128xf32>,
    %c0_78 = arith.constant 0 : index
    %c0_79 = arith.constant 0 : index
    %c0_80 = arith.constant 0 : index
    %189 = vector.load %arg12[%c0_78, %c0_79, %c0_80] : memref<2x8x128xf32, #tpu.memory_space<vmem>>, vector<1x8x128xf32>
    %190 = vector.shape_cast %189 : vector<1x8x128xf32> to vector<8x128xf32>
    %191 = vector.shape_cast %185 : vector<8x128xf32> to vector<1x8x128xf32>
    tpu.vector_store %arg12[%c0_78, %c0_79, %c0_80], %191 {strides = array<i32>} : memref<2x8x128xf32, #tpu.memory_space<vmem>>, vector<1x8x128xf32>,
    %192 = arith.index_cast %134 : i32 to index
    %c0_81 = arith.constant 0 : index
    %193 = vector.load %arg14[%192, %c0_81] : memref<40x128xf32, #tpu.memory_space<vmem>>, vector<8x128xf32>
    tpu.vector_store %arg14[%192, %c0_81], %185 {strides = array<i32>} : memref<40x128xf32, #tpu.memory_space<vmem>>, vector<8x128xf32>,
    %c3_i32 = arith.constant 3 : i32
    %c8_i32_82 = arith.constant 8 : i32
    %194 = arith.muli %c3_i32, %c8_i32_82 : i32
    %195 = tpu.assume_multiple %194, 8 : i32
    %c0_83 = arith.constant 0 : index
    %c0_84 = arith.constant 0 : index
    %c0_85 = arith.constant 0 : index
    %196 = vector.load %arg12[%c0_83, %c0_84, %c0_85] : memref<2x8x128xf32, #tpu.memory_space<vmem>>, vector<1x8x128xf32>
    %197 = vector.shape_cast %196 : vector<1x8x128xf32> to vector<8x128xf32>
    %c0_86 = arith.constant 0 : index
    %c0_87 = arith.constant 0 : index
    %c0_88 = arith.constant 0 : index
    %198 = vector.load %arg13[%c0_86, %c0_87, %c0_88] : memref<2x8x128xf32, #tpu.memory_space<vmem>>, vector<1x8x128xf32>
    %199 = vector.shape_cast %198 : vector<1x8x128xf32> to vector<8x128xf32>
    %200 = arith.index_cast %195 : i32 to index
    %c0_89 = arith.constant 0 : index
    %201 = vector.load %arg15[%200, %c0_89] : memref<40x512xf32, #tpu.memory_space<vmem>>, vector<8x512xf32>
    %c0_90 = arith.constant 0 : index
    %c0_91 = arith.constant 0 : index
    %202 = vector.load %arg3[%c0_90, %c0_91] : memref<128x512xf32, #tpu.memory_space<vmem>>, vector<128x512xf32>
    %cst_92 = arith.constant dense<0.000000e+00> : vector<8x512xf32>
    %203 = tpu.matmul %197, %202, %cst_92 {dimension_numbers = #tpu.dot_dimension_numbers<[1], [0], [0], [1], [0, 0, 1, 1], [], []>} : vector<8x128xf32>, vector<128x512xf32>, vector<8x512xf32> -> vector<8x512xf32>
    %204 = arith.addf %201, %203 : vector<8x512xf32>
    %205 = vector.extract_strided_slice %204 {offsets = [0, 0], sizes = [8, 128], strides = [1, 1]} : vector<8x512xf32> to vector<8x128xf32>
    %206 = arith.negf %205 : vector<8x128xf32>
    %207 = math.exp %206 : vector<8x128xf32>
    %cst_93 = arith.constant 1.000000e+00 : f32
    %208 = vector.broadcast %cst_93 : f32 to vector<8x128xf32>
    %209 = arith.addf %208, %207 : vector<8x128xf32>
    %210 = arith.divf %208, %209 : vector<8x128xf32>
    %211 = vector.extract_strided_slice %204 {offsets = [0, 128], sizes = [8, 128], strides = [1, 1]} : vector<8x512xf32> to vector<8x128xf32>
    %212 = arith.negf %211 : vector<8x128xf32>
    %213 = math.exp %212 : vector<8x128xf32>
    %cst_94 = arith.constant 1.000000e+00 : f32
    %214 = vector.broadcast %cst_94 : f32 to vector<8x128xf32>
    %215 = arith.addf %214, %213 : vector<8x128xf32>
    %216 = arith.divf %214, %215 : vector<8x128xf32>
    %217 = vector.extract_strided_slice %204 {offsets = [0, 256], sizes = [8, 128], strides = [1, 1]} : vector<8x512xf32> to vector<8x128xf32>
    %218 = math.tanh %217 : vector<8x128xf32>
    %219 = vector.extract_strided_slice %204 {offsets = [0, 384], sizes = [8, 128], strides = [1, 1]} : vector<8x512xf32> to vector<8x128xf32>
    %220 = arith.negf %219 : vector<8x128xf32>
    %221 = math.exp %220 : vector<8x128xf32>
    %cst_95 = arith.constant 1.000000e+00 : f32
    %222 = vector.broadcast %cst_95 : f32 to vector<8x128xf32>
    %223 = arith.addf %222, %221 : vector<8x128xf32>
    %224 = arith.divf %222, %223 : vector<8x128xf32>
    %225 = arith.mulf %216, %199 : vector<8x128xf32>
    %226 = arith.mulf %210, %218 : vector<8x128xf32>
    %227 = arith.addf %225, %226 : vector<8x128xf32>
    %228 = math.tanh %227 : vector<8x128xf32>
    %229 = arith.mulf %224, %228 : vector<8x128xf32>
    %c5_i32_96 = arith.constant 5 : i32
    %230 = arith.muli %arg0, %c5_i32_96 : i32
    %231 = arith.addi %230, %c3_i32 : i32
    %c8_i32_97 = arith.constant 8 : i32
    %232 = arith.cmpi slt, %231, %c8_i32_97 : i32
    %233 = arith.extui %232 : i1 to i32
    %234 = arith.sitofp %233 : i32 to f32
    %235 = vector.broadcast %234 : f32 to vector<8x128xf32>
    %236 = arith.mulf %235, %227 : vector<8x128xf32>
    %cst_98 = arith.constant 1.000000e+00 : f32
    %237 = arith.subf %cst_98, %234 : f32
    %238 = vector.broadcast %237 : f32 to vector<8x128xf32>
    %239 = arith.mulf %238, %199 : vector<8x128xf32>
    %240 = arith.addf %236, %239 : vector<8x128xf32>
    %241 = vector.broadcast %234 : f32 to vector<8x128xf32>
    %242 = arith.mulf %241, %229 : vector<8x128xf32>
    %cst_99 = arith.constant 1.000000e+00 : f32
    %243 = arith.subf %cst_99, %234 : f32
    %244 = vector.broadcast %243 : f32 to vector<8x128xf32>
    %245 = arith.mulf %244, %197 : vector<8x128xf32>
    %246 = arith.addf %242, %245 : vector<8x128xf32>
    %c0_100 = arith.constant 0 : index
    %c0_101 = arith.constant 0 : index
    %c0_102 = arith.constant 0 : index
    %247 = vector.load %arg13[%c0_100, %c0_101, %c0_102] : memref<2x8x128xf32, #tpu.memory_space<vmem>>, vector<1x8x128xf32>
    %248 = vector.shape_cast %247 : vector<1x8x128xf32> to vector<8x128xf32>
    %249 = vector.shape_cast %240 : vector<8x128xf32> to vector<1x8x128xf32>
    tpu.vector_store %arg13[%c0_100, %c0_101, %c0_102], %249 {strides = array<i32>} : memref<2x8x128xf32, #tpu.memory_space<vmem>>, vector<1x8x128xf32>,
    %c0_103 = arith.constant 0 : index
    %c0_104 = arith.constant 0 : index
    %c0_105 = arith.constant 0 : index
    %250 = vector.load %arg12[%c0_103, %c0_104, %c0_105] : memref<2x8x128xf32, #tpu.memory_space<vmem>>, vector<1x8x128xf32>
    %251 = vector.shape_cast %250 : vector<1x8x128xf32> to vector<8x128xf32>
    %252 = vector.shape_cast %246 : vector<8x128xf32> to vector<1x8x128xf32>
    tpu.vector_store %arg12[%c0_103, %c0_104, %c0_105], %252 {strides = array<i32>} : memref<2x8x128xf32, #tpu.memory_space<vmem>>, vector<1x8x128xf32>,
    %253 = arith.index_cast %195 : i32 to index
    %c0_106 = arith.constant 0 : index
    %254 = vector.load %arg14[%253, %c0_106] : memref<40x128xf32, #tpu.memory_space<vmem>>, vector<8x128xf32>
    tpu.vector_store %arg14[%253, %c0_106], %246 {strides = array<i32>} : memref<40x128xf32, #tpu.memory_space<vmem>>, vector<8x128xf32>,
    %c4_i32 = arith.constant 4 : i32
    %c8_i32_107 = arith.constant 8 : i32
    %255 = arith.muli %c4_i32, %c8_i32_107 : i32
    %256 = tpu.assume_multiple %255, 8 : i32
    %c0_108 = arith.constant 0 : index
    %c0_109 = arith.constant 0 : index
    %c0_110 = arith.constant 0 : index
    %257 = vector.load %arg12[%c0_108, %c0_109, %c0_110] : memref<2x8x128xf32, #tpu.memory_space<vmem>>, vector<1x8x128xf32>
    %258 = vector.shape_cast %257 : vector<1x8x128xf32> to vector<8x128xf32>
    %c0_111 = arith.constant 0 : index
    %c0_112 = arith.constant 0 : index
    %c0_113 = arith.constant 0 : index
    %259 = vector.load %arg13[%c0_111, %c0_112, %c0_113] : memref<2x8x128xf32, #tpu.memory_space<vmem>>, vector<1x8x128xf32>
    %260 = vector.shape_cast %259 : vector<1x8x128xf32> to vector<8x128xf32>
    %261 = arith.index_cast %256 : i32 to index
    %c0_114 = arith.constant 0 : index
    %262 = vector.load %arg15[%261, %c0_114] : memref<40x512xf32, #tpu.memory_space<vmem>>, vector<8x512xf32>
    %c0_115 = arith.constant 0 : index
    %c0_116 = arith.constant 0 : index
    %263 = vector.load %arg3[%c0_115, %c0_116] : memref<128x512xf32, #tpu.memory_space<vmem>>, vector<128x512xf32>
    %cst_117 = arith.constant dense<0.000000e+00> : vector<8x512xf32>
    %264 = tpu.matmul %258, %263, %cst_117 {dimension_numbers = #tpu.dot_dimension_numbers<[1], [0], [0], [1], [0, 0, 1, 1], [], []>} : vector<8x128xf32>, vector<128x512xf32>, vector<8x512xf32> -> vector<8x512xf32>
    %265 = arith.addf %262, %264 : vector<8x512xf32>
    %266 = vector.extract_strided_slice %265 {offsets = [0, 0], sizes = [8, 128], strides = [1, 1]} : vector<8x512xf32> to vector<8x128xf32>
    %267 = arith.negf %266 : vector<8x128xf32>
    %268 = math.exp %267 : vector<8x128xf32>
    %cst_118 = arith.constant 1.000000e+00 : f32
    %269 = vector.broadcast %cst_118 : f32 to vector<8x128xf32>
    %270 = arith.addf %269, %268 : vector<8x128xf32>
    %271 = arith.divf %269, %270 : vector<8x128xf32>
    %272 = vector.extract_strided_slice %265 {offsets = [0, 128], sizes = [8, 128], strides = [1, 1]} : vector<8x512xf32> to vector<8x128xf32>
    %273 = arith.negf %272 : vector<8x128xf32>
    %274 = math.exp %273 : vector<8x128xf32>
    %cst_119 = arith.constant 1.000000e+00 : f32
    %275 = vector.broadcast %cst_119 : f32 to vector<8x128xf32>
    %276 = arith.addf %275, %274 : vector<8x128xf32>
    %277 = arith.divf %275, %276 : vector<8x128xf32>
    %278 = vector.extract_strided_slice %265 {offsets = [0, 256], sizes = [8, 128], strides = [1, 1]} : vector<8x512xf32> to vector<8x128xf32>
    %279 = math.tanh %278 : vector<8x128xf32>
    %280 = vector.extract_strided_slice %265 {offsets = [0, 384], sizes = [8, 128], strides = [1, 1]} : vector<8x512xf32> to vector<8x128xf32>
    %281 = arith.negf %280 : vector<8x128xf32>
    %282 = math.exp %281 : vector<8x128xf32>
    %cst_120 = arith.constant 1.000000e+00 : f32
    %283 = vector.broadcast %cst_120 : f32 to vector<8x128xf32>
    %284 = arith.addf %283, %282 : vector<8x128xf32>
    %285 = arith.divf %283, %284 : vector<8x128xf32>
    %286 = arith.mulf %277, %260 : vector<8x128xf32>
    %287 = arith.mulf %271, %279 : vector<8x128xf32>
    %288 = arith.addf %286, %287 : vector<8x128xf32>
    %289 = math.tanh %288 : vector<8x128xf32>
    %290 = arith.mulf %285, %289 : vector<8x128xf32>
    %c5_i32_121 = arith.constant 5 : i32
    %291 = arith.muli %arg0, %c5_i32_121 : i32
    %292 = arith.addi %291, %c4_i32 : i32
    %c8_i32_122 = arith.constant 8 : i32
    %293 = arith.cmpi slt, %292, %c8_i32_122 : i32
    %294 = arith.extui %293 : i1 to i32
    %295 = arith.sitofp %294 : i32 to f32
    %296 = vector.broadcast %295 : f32 to vector<8x128xf32>
    %297 = arith.mulf %296, %288 : vector<8x128xf32>
    %cst_123 = arith.constant 1.000000e+00 : f32
    %298 = arith.subf %cst_123, %295 : f32
    %299 = vector.broadcast %298 : f32 to vector<8x128xf32>
    %300 = arith.mulf %299, %260 : vector<8x128xf32>
    %301 = arith.addf %297, %300 : vector<8x128xf32>
    %302 = vector.broadcast %295 : f32 to vector<8x128xf32>
    %303 = arith.mulf %302, %290 : vector<8x128xf32>
    %cst_124 = arith.constant 1.000000e+00 : f32
    %304 = arith.subf %cst_124, %295 : f32
    %305 = vector.broadcast %304 : f32 to vector<8x128xf32>
    %306 = arith.mulf %305, %258 : vector<8x128xf32>
    %307 = arith.addf %303, %306 : vector<8x128xf32>
    %c0_125 = arith.constant 0 : index
    %c0_126 = arith.constant 0 : index
    %c0_127 = arith.constant 0 : index
    %308 = vector.load %arg13[%c0_125, %c0_126, %c0_127] : memref<2x8x128xf32, #tpu.memory_space<vmem>>, vector<1x8x128xf32>
    %309 = vector.shape_cast %308 : vector<1x8x128xf32> to vector<8x128xf32>
    %310 = vector.shape_cast %301 : vector<8x128xf32> to vector<1x8x128xf32>
    tpu.vector_store %arg13[%c0_125, %c0_126, %c0_127], %310 {strides = array<i32>} : memref<2x8x128xf32, #tpu.memory_space<vmem>>, vector<1x8x128xf32>,
    %c0_128 = arith.constant 0 : index
    %c0_129 = arith.constant 0 : index
    %c0_130 = arith.constant 0 : index
    %311 = vector.load %arg12[%c0_128, %c0_129, %c0_130] : memref<2x8x128xf32, #tpu.memory_space<vmem>>, vector<1x8x128xf32>
    %312 = vector.shape_cast %311 : vector<1x8x128xf32> to vector<8x128xf32>
    %313 = vector.shape_cast %307 : vector<8x128xf32> to vector<1x8x128xf32>
    tpu.vector_store %arg12[%c0_128, %c0_129, %c0_130], %313 {strides = array<i32>} : memref<2x8x128xf32, #tpu.memory_space<vmem>>, vector<1x8x128xf32>,
    %314 = arith.index_cast %256 : i32 to index
    %c0_131 = arith.constant 0 : index
    %315 = vector.load %arg14[%314, %c0_131] : memref<40x128xf32, #tpu.memory_space<vmem>>, vector<8x128xf32>
    tpu.vector_store %arg14[%314, %c0_131], %307 {strides = array<i32>} : memref<40x128xf32, #tpu.memory_space<vmem>>, vector<8x128xf32>,
    %c5_i32_132 = arith.constant 5 : i32
    %c0_133 = arith.constant 0 : index
    %c0_134 = arith.constant 0 : index
    %316 = vector.load %arg14[%c0_133, %c0_134] : memref<40x128xf32, #tpu.memory_space<vmem>>, vector<40x128xf32>
    %317 = arith.truncf %316 : vector<40x128xf32> to vector<40x128xbf16>
    %c0_135 = arith.constant 0 : index
    %c0_136 = arith.constant 0 : index
    %318 = vector.load %arg5[%c0_135, %c0_136] : memref<128x512xbf16, #tpu.memory_space<vmem>>, vector<128x512xbf16>
    %cst_137 = arith.constant dense<0.000000e+00> : vector<40x512xf32>
    %319 = tpu.matmul %317, %318, %cst_137 {dimension_numbers = #tpu.dot_dimension_numbers<[1], [0], [0], [1], [0, 0, 1, 1], [], []>} : vector<40x128xbf16>, vector<128x512xbf16>, vector<40x512xf32> -> vector<40x512xf32>
    %c0_138 = arith.constant 0 : index
    %c0_139 = arith.constant 0 : index
    %320 = vector.load %arg7[%c0_138, %c0_139] : memref<1x512xf32, #tpu.memory_space<vmem>>, vector<1x512xf32>
    %321 = vector.broadcast %320 : vector<1x512xf32> to vector<40x512xf32>
    %322 = arith.addf %319, %321 : vector<40x512xf32>
    %c0_140 = arith.constant 0 : index
    %c0_141 = arith.constant 0 : index
    %323 = vector.load %arg15[%c0_140, %c0_141] : memref<40x512xf32, #tpu.memory_space<vmem>>, vector<40x512xf32>
    tpu.vector_store %arg15[%c0_140, %c0_141], %322 {strides = array<i32>} : memref<40x512xf32, #tpu.memory_space<vmem>>, vector<40x512xf32>,
    %c0_i32_142 = arith.constant 0 : i32
    %c8_i32_143 = arith.constant 8 : i32
    %324 = arith.muli %c0_i32_142, %c8_i32_143 : i32
    %325 = tpu.assume_multiple %324, 8 : i32
    %c1 = arith.constant 1 : index
    %c0_144 = arith.constant 0 : index
    %c0_145 = arith.constant 0 : index
    %326 = vector.load %arg12[%c1, %c0_144, %c0_145] : memref<2x8x128xf32, #tpu.memory_space<vmem>>, vector<1x8x128xf32>
    %327 = vector.shape_cast %326 : vector<1x8x128xf32> to vector<8x128xf32>
    %c1_146 = arith.constant 1 : index
    %c0_147 = arith.constant 0 : index
    %c0_148 = arith.constant 0 : index
    %328 = vector.load %arg13[%c1_146, %c0_147, %c0_148] : memref<2x8x128xf32, #tpu.memory_space<vmem>>, vector<1x8x128xf32>
    %329 = vector.shape_cast %328 : vector<1x8x128xf32> to vector<8x128xf32>
    %330 = arith.index_cast %325 : i32 to index
    %c0_149 = arith.constant 0 : index
    %331 = vector.load %arg15[%330, %c0_149] : memref<40x512xf32, #tpu.memory_space<vmem>>, vector<8x512xf32>
    %c0_150 = arith.constant 0 : index
    %c0_151 = arith.constant 0 : index
    %332 = vector.load %arg6[%c0_150, %c0_151] : memref<128x512xf32, #tpu.memory_space<vmem>>, vector<128x512xf32>
    %cst_152 = arith.constant dense<0.000000e+00> : vector<8x512xf32>
    %333 = tpu.matmul %327, %332, %cst_152 {dimension_numbers = #tpu.dot_dimension_numbers<[1], [0], [0], [1], [0, 0, 1, 1], [], []>} : vector<8x128xf32>, vector<128x512xf32>, vector<8x512xf32> -> vector<8x512xf32>
    %334 = arith.addf %331, %333 : vector<8x512xf32>
    %335 = vector.extract_strided_slice %334 {offsets = [0, 0], sizes = [8, 128], strides = [1, 1]} : vector<8x512xf32> to vector<8x128xf32>
    %336 = arith.negf %335 : vector<8x128xf32>
    %337 = math.exp %336 : vector<8x128xf32>
    %cst_153 = arith.constant 1.000000e+00 : f32
    %338 = vector.broadcast %cst_153 : f32 to vector<8x128xf32>
    %339 = arith.addf %338, %337 : vector<8x128xf32>
    %340 = arith.divf %338, %339 : vector<8x128xf32>
    %341 = vector.extract_strided_slice %334 {offsets = [0, 128], sizes = [8, 128], strides = [1, 1]} : vector<8x512xf32> to vector<8x128xf32>
    %342 = arith.negf %341 : vector<8x128xf32>
    %343 = math.exp %342 : vector<8x128xf32>
    %cst_154 = arith.constant 1.000000e+00 : f32
    %344 = vector.broadcast %cst_154 : f32 to vector<8x128xf32>
    %345 = arith.addf %344, %343 : vector<8x128xf32>
    %346 = arith.divf %344, %345 : vector<8x128xf32>
    %347 = vector.extract_strided_slice %334 {offsets = [0, 256], sizes = [8, 128], strides = [1, 1]} : vector<8x512xf32> to vector<8x128xf32>
    %348 = math.tanh %347 : vector<8x128xf32>
    %349 = vector.extract_strided_slice %334 {offsets = [0, 384], sizes = [8, 128], strides = [1, 1]} : vector<8x512xf32> to vector<8x128xf32>
    %350 = arith.negf %349 : vector<8x128xf32>
    %351 = math.exp %350 : vector<8x128xf32>
    %cst_155 = arith.constant 1.000000e+00 : f32
    %352 = vector.broadcast %cst_155 : f32 to vector<8x128xf32>
    %353 = arith.addf %352, %351 : vector<8x128xf32>
    %354 = arith.divf %352, %353 : vector<8x128xf32>
    %355 = arith.mulf %346, %329 : vector<8x128xf32>
    %356 = arith.mulf %340, %348 : vector<8x128xf32>
    %357 = arith.addf %355, %356 : vector<8x128xf32>
    %358 = math.tanh %357 : vector<8x128xf32>
    %359 = arith.mulf %354, %358 : vector<8x128xf32>
    %c5_i32_156 = arith.constant 5 : i32
    %360 = arith.muli %arg0, %c5_i32_156 : i32
    %361 = arith.addi %360, %c0_i32_142 : i32
    %c8_i32_157 = arith.constant 8 : i32
    %362 = arith.cmpi slt, %361, %c8_i32_157 : i32
    %363 = arith.extui %362 : i1 to i32
    %364 = arith.sitofp %363 : i32 to f32
    %365 = vector.broadcast %364 : f32 to vector<8x128xf32>
    %366 = arith.mulf %365, %357 : vector<8x128xf32>
    %cst_158 = arith.constant 1.000000e+00 : f32
    %367 = arith.subf %cst_158, %364 : f32
    %368 = vector.broadcast %367 : f32 to vector<8x128xf32>
    %369 = arith.mulf %368, %329 : vector<8x128xf32>
    %370 = arith.addf %366, %369 : vector<8x128xf32>
    %371 = vector.broadcast %364 : f32 to vector<8x128xf32>
    %372 = arith.mulf %371, %359 : vector<8x128xf32>
    %cst_159 = arith.constant 1.000000e+00 : f32
    %373 = arith.subf %cst_159, %364 : f32
    %374 = vector.broadcast %373 : f32 to vector<8x128xf32>
    %375 = arith.mulf %374, %327 : vector<8x128xf32>
    %376 = arith.addf %372, %375 : vector<8x128xf32>
    %c1_160 = arith.constant 1 : index
    %c0_161 = arith.constant 0 : index
    %c0_162 = arith.constant 0 : index
    %377 = vector.load %arg13[%c1_160, %c0_161, %c0_162] : memref<2x8x128xf32, #tpu.memory_space<vmem>>, vector<1x8x128xf32>
    %378 = vector.shape_cast %377 : vector<1x8x128xf32> to vector<8x128xf32>
    %379 = vector.shape_cast %370 : vector<8x128xf32> to vector<1x8x128xf32>
    tpu.vector_store %arg13[%c1_160, %c0_161, %c0_162], %379 {strides = array<i32>} : memref<2x8x128xf32, #tpu.memory_space<vmem>>, vector<1x8x128xf32>,
    %c1_163 = arith.constant 1 : index
    %c0_164 = arith.constant 0 : index
    %c0_165 = arith.constant 0 : index
    %380 = vector.load %arg12[%c1_163, %c0_164, %c0_165] : memref<2x8x128xf32, #tpu.memory_space<vmem>>, vector<1x8x128xf32>
    %381 = vector.shape_cast %380 : vector<1x8x128xf32> to vector<8x128xf32>
    %382 = vector.shape_cast %376 : vector<8x128xf32> to vector<1x8x128xf32>
    tpu.vector_store %arg12[%c1_163, %c0_164, %c0_165], %382 {strides = array<i32>} : memref<2x8x128xf32, #tpu.memory_space<vmem>>, vector<1x8x128xf32>,
    %c1_i32_166 = arith.constant 1 : i32
    %c8_i32_167 = arith.constant 8 : i32
    %383 = arith.muli %c1_i32_166, %c8_i32_167 : i32
    %384 = tpu.assume_multiple %383, 8 : i32
    %c1_168 = arith.constant 1 : index
    %c0_169 = arith.constant 0 : index
    %c0_170 = arith.constant 0 : index
    %385 = vector.load %arg12[%c1_168, %c0_169, %c0_170] : memref<2x8x128xf32, #tpu.memory_space<vmem>>, vector<1x8x128xf32>
    %386 = vector.shape_cast %385 : vector<1x8x128xf32> to vector<8x128xf32>
    %c1_171 = arith.constant 1 : index
    %c0_172 = arith.constant 0 : index
    %c0_173 = arith.constant 0 : index
    %387 = vector.load %arg13[%c1_171, %c0_172, %c0_173] : memref<2x8x128xf32, #tpu.memory_space<vmem>>, vector<1x8x128xf32>
    %388 = vector.shape_cast %387 : vector<1x8x128xf32> to vector<8x128xf32>
    %389 = arith.index_cast %384 : i32 to index
    %c0_174 = arith.constant 0 : index
    %390 = vector.load %arg15[%389, %c0_174] : memref<40x512xf32, #tpu.memory_space<vmem>>, vector<8x512xf32>
    %c0_175 = arith.constant 0 : index
    %c0_176 = arith.constant 0 : index
    %391 = vector.load %arg6[%c0_175, %c0_176] : memref<128x512xf32, #tpu.memory_space<vmem>>, vector<128x512xf32>
    %cst_177 = arith.constant dense<0.000000e+00> : vector<8x512xf32>
    %392 = tpu.matmul %386, %391, %cst_177 {dimension_numbers = #tpu.dot_dimension_numbers<[1], [0], [0], [1], [0, 0, 1, 1], [], []>} : vector<8x128xf32>, vector<128x512xf32>, vector<8x512xf32> -> vector<8x512xf32>
    %393 = arith.addf %390, %392 : vector<8x512xf32>
    %394 = vector.extract_strided_slice %393 {offsets = [0, 0], sizes = [8, 128], strides = [1, 1]} : vector<8x512xf32> to vector<8x128xf32>
    %395 = arith.negf %394 : vector<8x128xf32>
    %396 = math.exp %395 : vector<8x128xf32>
    %cst_178 = arith.constant 1.000000e+00 : f32
    %397 = vector.broadcast %cst_178 : f32 to vector<8x128xf32>
    %398 = arith.addf %397, %396 : vector<8x128xf32>
    %399 = arith.divf %397, %398 : vector<8x128xf32>
    %400 = vector.extract_strided_slice %393 {offsets = [0, 128], sizes = [8, 128], strides = [1, 1]} : vector<8x512xf32> to vector<8x128xf32>
    %401 = arith.negf %400 : vector<8x128xf32>
    %402 = math.exp %401 : vector<8x128xf32>
    %cst_179 = arith.constant 1.000000e+00 : f32
    %403 = vector.broadcast %cst_179 : f32 to vector<8x128xf32>
    %404 = arith.addf %403, %402 : vector<8x128xf32>
    %405 = arith.divf %403, %404 : vector<8x128xf32>
    %406 = vector.extract_strided_slice %393 {offsets = [0, 256], sizes = [8, 128], strides = [1, 1]} : vector<8x512xf32> to vector<8x128xf32>
    %407 = math.tanh %406 : vector<8x128xf32>
    %408 = vector.extract_strided_slice %393 {offsets = [0, 384], sizes = [8, 128], strides = [1, 1]} : vector<8x512xf32> to vector<8x128xf32>
    %409 = arith.negf %408 : vector<8x128xf32>
    %410 = math.exp %409 : vector<8x128xf32>
    %cst_180 = arith.constant 1.000000e+00 : f32
    %411 = vector.broadcast %cst_180 : f32 to vector<8x128xf32>
    %412 = arith.addf %411, %410 : vector<8x128xf32>
    %413 = arith.divf %411, %412 : vector<8x128xf32>
    %414 = arith.mulf %405, %388 : vector<8x128xf32>
    %415 = arith.mulf %399, %407 : vector<8x128xf32>
    %416 = arith.addf %414, %415 : vector<8x128xf32>
    %417 = math.tanh %416 : vector<8x128xf32>
    %418 = arith.mulf %413, %417 : vector<8x128xf32>
    %c5_i32_181 = arith.constant 5 : i32
    %419 = arith.muli %arg0, %c5_i32_181 : i32
    %420 = arith.addi %419, %c1_i32_166 : i32
    %c8_i32_182 = arith.constant 8 : i32
    %421 = arith.cmpi slt, %420, %c8_i32_182 : i32
    %422 = arith.extui %421 : i1 to i32
    %423 = arith.sitofp %422 : i32 to f32
    %424 = vector.broadcast %423 : f32 to vector<8x128xf32>
    %425 = arith.mulf %424, %416 : vector<8x128xf32>
    %cst_183 = arith.constant 1.000000e+00 : f32
    %426 = arith.subf %cst_183, %423 : f32
    %427 = vector.broadcast %426 : f32 to vector<8x128xf32>
    %428 = arith.mulf %427, %388 : vector<8x128xf32>
    %429 = arith.addf %425, %428 : vector<8x128xf32>
    %430 = vector.broadcast %423 : f32 to vector<8x128xf32>
    %431 = arith.mulf %430, %418 : vector<8x128xf32>
    %cst_184 = arith.constant 1.000000e+00 : f32
    %432 = arith.subf %cst_184, %423 : f32
    %433 = vector.broadcast %432 : f32 to vector<8x128xf32>
    %434 = arith.mulf %433, %386 : vector<8x128xf32>
    %435 = arith.addf %431, %434 : vector<8x128xf32>
    %c1_185 = arith.constant 1 : index
    %c0_186 = arith.constant 0 : index
    %c0_187 = arith.constant 0 : index
    %436 = vector.load %arg13[%c1_185, %c0_186, %c0_187] : memref<2x8x128xf32, #tpu.memory_space<vmem>>, vector<1x8x128xf32>
    %437 = vector.shape_cast %436 : vector<1x8x128xf32> to vector<8x128xf32>
    %438 = vector.shape_cast %429 : vector<8x128xf32> to vector<1x8x128xf32>
    tpu.vector_store %arg13[%c1_185, %c0_186, %c0_187], %438 {strides = array<i32>} : memref<2x8x128xf32, #tpu.memory_space<vmem>>, vector<1x8x128xf32>,
    %c1_188 = arith.constant 1 : index
    %c0_189 = arith.constant 0 : index
    %c0_190 = arith.constant 0 : index
    %439 = vector.load %arg12[%c1_188, %c0_189, %c0_190] : memref<2x8x128xf32, #tpu.memory_space<vmem>>, vector<1x8x128xf32>
    %440 = vector.shape_cast %439 : vector<1x8x128xf32> to vector<8x128xf32>
    %441 = vector.shape_cast %435 : vector<8x128xf32> to vector<1x8x128xf32>
    tpu.vector_store %arg12[%c1_188, %c0_189, %c0_190], %441 {strides = array<i32>} : memref<2x8x128xf32, #tpu.memory_space<vmem>>, vector<1x8x128xf32>,
    %c2_i32_191 = arith.constant 2 : i32
    %c8_i32_192 = arith.constant 8 : i32
    %442 = arith.muli %c2_i32_191, %c8_i32_192 : i32
    %443 = tpu.assume_multiple %442, 8 : i32
    %c1_193 = arith.constant 1 : index
    %c0_194 = arith.constant 0 : index
    %c0_195 = arith.constant 0 : index
    %444 = vector.load %arg12[%c1_193, %c0_194, %c0_195] : memref<2x8x128xf32, #tpu.memory_space<vmem>>, vector<1x8x128xf32>
    %445 = vector.shape_cast %444 : vector<1x8x128xf32> to vector<8x128xf32>
    %c1_196 = arith.constant 1 : index
    %c0_197 = arith.constant 0 : index
    %c0_198 = arith.constant 0 : index
    %446 = vector.load %arg13[%c1_196, %c0_197, %c0_198] : memref<2x8x128xf32, #tpu.memory_space<vmem>>, vector<1x8x128xf32>
    %447 = vector.shape_cast %446 : vector<1x8x128xf32> to vector<8x128xf32>
    %448 = arith.index_cast %443 : i32 to index
    %c0_199 = arith.constant 0 : index
    %449 = vector.load %arg15[%448, %c0_199] : memref<40x512xf32, #tpu.memory_space<vmem>>, vector<8x512xf32>
    %c0_200 = arith.constant 0 : index
    %c0_201 = arith.constant 0 : index
    %450 = vector.load %arg6[%c0_200, %c0_201] : memref<128x512xf32, #tpu.memory_space<vmem>>, vector<128x512xf32>
    %cst_202 = arith.constant dense<0.000000e+00> : vector<8x512xf32>
    %451 = tpu.matmul %445, %450, %cst_202 {dimension_numbers = #tpu.dot_dimension_numbers<[1], [0], [0], [1], [0, 0, 1, 1], [], []>} : vector<8x128xf32>, vector<128x512xf32>, vector<8x512xf32> -> vector<8x512xf32>
    %452 = arith.addf %449, %451 : vector<8x512xf32>
    %453 = vector.extract_strided_slice %452 {offsets = [0, 0], sizes = [8, 128], strides = [1, 1]} : vector<8x512xf32> to vector<8x128xf32>
    %454 = arith.negf %453 : vector<8x128xf32>
    %455 = math.exp %454 : vector<8x128xf32>
    %cst_203 = arith.constant 1.000000e+00 : f32
    %456 = vector.broadcast %cst_203 : f32 to vector<8x128xf32>
    %457 = arith.addf %456, %455 : vector<8x128xf32>
    %458 = arith.divf %456, %457 : vector<8x128xf32>
    %459 = vector.extract_strided_slice %452 {offsets = [0, 128], sizes = [8, 128], strides = [1, 1]} : vector<8x512xf32> to vector<8x128xf32>
    %460 = arith.negf %459 : vector<8x128xf32>
    %461 = math.exp %460 : vector<8x128xf32>
    %cst_204 = arith.constant 1.000000e+00 : f32
    %462 = vector.broadcast %cst_204 : f32 to vector<8x128xf32>
    %463 = arith.addf %462, %461 : vector<8x128xf32>
    %464 = arith.divf %462, %463 : vector<8x128xf32>
    %465 = vector.extract_strided_slice %452 {offsets = [0, 256], sizes = [8, 128], strides = [1, 1]} : vector<8x512xf32> to vector<8x128xf32>
    %466 = math.tanh %465 : vector<8x128xf32>
    %467 = vector.extract_strided_slice %452 {offsets = [0, 384], sizes = [8, 128], strides = [1, 1]} : vector<8x512xf32> to vector<8x128xf32>
    %468 = arith.negf %467 : vector<8x128xf32>
    %469 = math.exp %468 : vector<8x128xf32>
    %cst_205 = arith.constant 1.000000e+00 : f32
    %470 = vector.broadcast %cst_205 : f32 to vector<8x128xf32>
    %471 = arith.addf %470, %469 : vector<8x128xf32>
    %472 = arith.divf %470, %471 : vector<8x128xf32>
    %473 = arith.mulf %464, %447 : vector<8x128xf32>
    %474 = arith.mulf %458, %466 : vector<8x128xf32>
    %475 = arith.addf %473, %474 : vector<8x128xf32>
    %476 = math.tanh %475 : vector<8x128xf32>
    %477 = arith.mulf %472, %476 : vector<8x128xf32>
    %c5_i32_206 = arith.constant 5 : i32
    %478 = arith.muli %arg0, %c5_i32_206 : i32
    %479 = arith.addi %478, %c2_i32_191 : i32
    %c8_i32_207 = arith.constant 8 : i32
    %480 = arith.cmpi slt, %479, %c8_i32_207 : i32
    %481 = arith.extui %480 : i1 to i32
    %482 = arith.sitofp %481 : i32 to f32
    %483 = vector.broadcast %482 : f32 to vector<8x128xf32>
    %484 = arith.mulf %483, %475 : vector<8x128xf32>
    %cst_208 = arith.constant 1.000000e+00 : f32
    %485 = arith.subf %cst_208, %482 : f32
    %486 = vector.broadcast %485 : f32 to vector<8x128xf32>
    %487 = arith.mulf %486, %447 : vector<8x128xf32>
    %488 = arith.addf %484, %487 : vector<8x128xf32>
    %489 = vector.broadcast %482 : f32 to vector<8x128xf32>
    %490 = arith.mulf %489, %477 : vector<8x128xf32>
    %cst_209 = arith.constant 1.000000e+00 : f32
    %491 = arith.subf %cst_209, %482 : f32
    %492 = vector.broadcast %491 : f32 to vector<8x128xf32>
    %493 = arith.mulf %492, %445 : vector<8x128xf32>
    %494 = arith.addf %490, %493 : vector<8x128xf32>
    %c1_210 = arith.constant 1 : index
    %c0_211 = arith.constant 0 : index
    %c0_212 = arith.constant 0 : index
    %495 = vector.load %arg13[%c1_210, %c0_211, %c0_212] : memref<2x8x128xf32, #tpu.memory_space<vmem>>, vector<1x8x128xf32>
    %496 = vector.shape_cast %495 : vector<1x8x128xf32> to vector<8x128xf32>
    %497 = vector.shape_cast %488 : vector<8x128xf32> to vector<1x8x128xf32>
    tpu.vector_store %arg13[%c1_210, %c0_211, %c0_212], %497 {strides = array<i32>} : memref<2x8x128xf32, #tpu.memory_space<vmem>>, vector<1x8x128xf32>,
    %c1_213 = arith.constant 1 : index
    %c0_214 = arith.constant 0 : index
    %c0_215 = arith.constant 0 : index
    %498 = vector.load %arg12[%c1_213, %c0_214, %c0_215] : memref<2x8x128xf32, #tpu.memory_space<vmem>>, vector<1x8x128xf32>
    %499 = vector.shape_cast %498 : vector<1x8x128xf32> to vector<8x128xf32>
    %500 = vector.shape_cast %494 : vector<8x128xf32> to vector<1x8x128xf32>
    tpu.vector_store %arg12[%c1_213, %c0_214, %c0_215], %500 {strides = array<i32>} : memref<2x8x128xf32, #tpu.memory_space<vmem>>, vector<1x8x128xf32>,
    %c3_i32_216 = arith.constant 3 : i32
    %c8_i32_217 = arith.constant 8 : i32
    %501 = arith.muli %c3_i32_216, %c8_i32_217 : i32
    %502 = tpu.assume_multiple %501, 8 : i32
    %c1_218 = arith.constant 1 : index
    %c0_219 = arith.constant 0 : index
    %c0_220 = arith.constant 0 : index
    %503 = vector.load %arg12[%c1_218, %c0_219, %c0_220] : memref<2x8x128xf32, #tpu.memory_space<vmem>>, vector<1x8x128xf32>
    %504 = vector.shape_cast %503 : vector<1x8x128xf32> to vector<8x128xf32>
    %c1_221 = arith.constant 1 : index
    %c0_222 = arith.constant 0 : index
    %c0_223 = arith.constant 0 : index
    %505 = vector.load %arg13[%c1_221, %c0_222, %c0_223] : memref<2x8x128xf32, #tpu.memory_space<vmem>>, vector<1x8x128xf32>
    %506 = vector.shape_cast %505 : vector<1x8x128xf32> to vector<8x128xf32>
    %507 = arith.index_cast %502 : i32 to index
    %c0_224 = arith.constant 0 : index
    %508 = vector.load %arg15[%507, %c0_224] : memref<40x512xf32, #tpu.memory_space<vmem>>, vector<8x512xf32>
    %c0_225 = arith.constant 0 : index
    %c0_226 = arith.constant 0 : index
    %509 = vector.load %arg6[%c0_225, %c0_226] : memref<128x512xf32, #tpu.memory_space<vmem>>, vector<128x512xf32>
    %cst_227 = arith.constant dense<0.000000e+00> : vector<8x512xf32>
    %510 = tpu.matmul %504, %509, %cst_227 {dimension_numbers = #tpu.dot_dimension_numbers<[1], [0], [0], [1], [0, 0, 1, 1], [], []>} : vector<8x128xf32>, vector<128x512xf32>, vector<8x512xf32> -> vector<8x512xf32>
    %511 = arith.addf %508, %510 : vector<8x512xf32>
    %512 = vector.extract_strided_slice %511 {offsets = [0, 0], sizes = [8, 128], strides = [1, 1]} : vector<8x512xf32> to vector<8x128xf32>
    %513 = arith.negf %512 : vector<8x128xf32>
    %514 = math.exp %513 : vector<8x128xf32>
    %cst_228 = arith.constant 1.000000e+00 : f32
    %515 = vector.broadcast %cst_228 : f32 to vector<8x128xf32>
    %516 = arith.addf %515, %514 : vector<8x128xf32>
    %517 = arith.divf %515, %516 : vector<8x128xf32>
    %518 = vector.extract_strided_slice %511 {offsets = [0, 128], sizes = [8, 128], strides = [1, 1]} : vector<8x512xf32> to vector<8x128xf32>
    %519 = arith.negf %518 : vector<8x128xf32>
    %520 = math.exp %519 : vector<8x128xf32>
    %cst_229 = arith.constant 1.000000e+00 : f32
    %521 = vector.broadcast %cst_229 : f32 to vector<8x128xf32>
    %522 = arith.addf %521, %520 : vector<8x128xf32>
    %523 = arith.divf %521, %522 : vector<8x128xf32>
    %524 = vector.extract_strided_slice %511 {offsets = [0, 256], sizes = [8, 128], strides = [1, 1]} : vector<8x512xf32> to vector<8x128xf32>
    %525 = math.tanh %524 : vector<8x128xf32>
    %526 = vector.extract_strided_slice %511 {offsets = [0, 384], sizes = [8, 128], strides = [1, 1]} : vector<8x512xf32> to vector<8x128xf32>
    %527 = arith.negf %526 : vector<8x128xf32>
    %528 = math.exp %527 : vector<8x128xf32>
    %cst_230 = arith.constant 1.000000e+00 : f32
    %529 = vector.broadcast %cst_230 : f32 to vector<8x128xf32>
    %530 = arith.addf %529, %528 : vector<8x128xf32>
    %531 = arith.divf %529, %530 : vector<8x128xf32>
    %532 = arith.mulf %523, %506 : vector<8x128xf32>
    %533 = arith.mulf %517, %525 : vector<8x128xf32>
    %534 = arith.addf %532, %533 : vector<8x128xf32>
    %535 = math.tanh %534 : vector<8x128xf32>
    %536 = arith.mulf %531, %535 : vector<8x128xf32>
    %c5_i32_231 = arith.constant 5 : i32
    %537 = arith.muli %arg0, %c5_i32_231 : i32
    %538 = arith.addi %537, %c3_i32_216 : i32
    %c8_i32_232 = arith.constant 8 : i32
    %539 = arith.cmpi slt, %538, %c8_i32_232 : i32
    %540 = arith.extui %539 : i1 to i32
    %541 = arith.sitofp %540 : i32 to f32
    %542 = vector.broadcast %541 : f32 to vector<8x128xf32>
    %543 = arith.mulf %542, %534 : vector<8x128xf32>
    %cst_233 = arith.constant 1.000000e+00 : f32
    %544 = arith.subf %cst_233, %541 : f32
    %545 = vector.broadcast %544 : f32 to vector<8x128xf32>
    %546 = arith.mulf %545, %506 : vector<8x128xf32>
    %547 = arith.addf %543, %546 : vector<8x128xf32>
    %548 = vector.broadcast %541 : f32 to vector<8x128xf32>
    %549 = arith.mulf %548, %536 : vector<8x128xf32>
    %cst_234 = arith.constant 1.000000e+00 : f32
    %550 = arith.subf %cst_234, %541 : f32
    %551 = vector.broadcast %550 : f32 to vector<8x128xf32>
    %552 = arith.mulf %551, %504 : vector<8x128xf32>
    %553 = arith.addf %549, %552 : vector<8x128xf32>
    %c1_235 = arith.constant 1 : index
    %c0_236 = arith.constant 0 : index
    %c0_237 = arith.constant 0 : index
    %554 = vector.load %arg13[%c1_235, %c0_236, %c0_237] : memref<2x8x128xf32, #tpu.memory_space<vmem>>, vector<1x8x128xf32>
    %555 = vector.shape_cast %554 : vector<1x8x128xf32> to vector<8x128xf32>
    %556 = vector.shape_cast %547 : vector<8x128xf32> to vector<1x8x128xf32>
    tpu.vector_store %arg13[%c1_235, %c0_236, %c0_237], %556 {strides = array<i32>} : memref<2x8x128xf32, #tpu.memory_space<vmem>>, vector<1x8x128xf32>,
    %c1_238 = arith.constant 1 : index
    %c0_239 = arith.constant 0 : index
    %c0_240 = arith.constant 0 : index
    %557 = vector.load %arg12[%c1_238, %c0_239, %c0_240] : memref<2x8x128xf32, #tpu.memory_space<vmem>>, vector<1x8x128xf32>
    %558 = vector.shape_cast %557 : vector<1x8x128xf32> to vector<8x128xf32>
    %559 = vector.shape_cast %553 : vector<8x128xf32> to vector<1x8x128xf32>
    tpu.vector_store %arg12[%c1_238, %c0_239, %c0_240], %559 {strides = array<i32>} : memref<2x8x128xf32, #tpu.memory_space<vmem>>, vector<1x8x128xf32>,
    %c4_i32_241 = arith.constant 4 : i32
    %c8_i32_242 = arith.constant 8 : i32
    %560 = arith.muli %c4_i32_241, %c8_i32_242 : i32
    %561 = tpu.assume_multiple %560, 8 : i32
    %c1_243 = arith.constant 1 : index
    %c0_244 = arith.constant 0 : index
    %c0_245 = arith.constant 0 : index
    %562 = vector.load %arg12[%c1_243, %c0_244, %c0_245] : memref<2x8x128xf32, #tpu.memory_space<vmem>>, vector<1x8x128xf32>
    %563 = vector.shape_cast %562 : vector<1x8x128xf32> to vector<8x128xf32>
    %c1_246 = arith.constant 1 : index
    %c0_247 = arith.constant 0 : index
    %c0_248 = arith.constant 0 : index
    %564 = vector.load %arg13[%c1_246, %c0_247, %c0_248] : memref<2x8x128xf32, #tpu.memory_space<vmem>>, vector<1x8x128xf32>
    %565 = vector.shape_cast %564 : vector<1x8x128xf32> to vector<8x128xf32>
    %566 = arith.index_cast %561 : i32 to index
    %c0_249 = arith.constant 0 : index
    %567 = vector.load %arg15[%566, %c0_249] : memref<40x512xf32, #tpu.memory_space<vmem>>, vector<8x512xf32>
    %c0_250 = arith.constant 0 : index
    %c0_251 = arith.constant 0 : index
    %568 = vector.load %arg6[%c0_250, %c0_251] : memref<128x512xf32, #tpu.memory_space<vmem>>, vector<128x512xf32>
    %cst_252 = arith.constant dense<0.000000e+00> : vector<8x512xf32>
    %569 = tpu.matmul %563, %568, %cst_252 {dimension_numbers = #tpu.dot_dimension_numbers<[1], [0], [0], [1], [0, 0, 1, 1], [], []>} : vector<8x128xf32>, vector<128x512xf32>, vector<8x512xf32> -> vector<8x512xf32>
    %570 = arith.addf %567, %569 : vector<8x512xf32>
    %571 = vector.extract_strided_slice %570 {offsets = [0, 0], sizes = [8, 128], strides = [1, 1]} : vector<8x512xf32> to vector<8x128xf32>
    %572 = arith.negf %571 : vector<8x128xf32>
    %573 = math.exp %572 : vector<8x128xf32>
    %cst_253 = arith.constant 1.000000e+00 : f32
    %574 = vector.broadcast %cst_253 : f32 to vector<8x128xf32>
    %575 = arith.addf %574, %573 : vector<8x128xf32>
    %576 = arith.divf %574, %575 : vector<8x128xf32>
    %577 = vector.extract_strided_slice %570 {offsets = [0, 128], sizes = [8, 128], strides = [1, 1]} : vector<8x512xf32> to vector<8x128xf32>
    %578 = arith.negf %577 : vector<8x128xf32>
    %579 = math.exp %578 : vector<8x128xf32>
    %cst_254 = arith.constant 1.000000e+00 : f32
    %580 = vector.broadcast %cst_254 : f32 to vector<8x128xf32>
    %581 = arith.addf %580, %579 : vector<8x128xf32>
    %582 = arith.divf %580, %581 : vector<8x128xf32>
    %583 = vector.extract_strided_slice %570 {offsets = [0, 256], sizes = [8, 128], strides = [1, 1]} : vector<8x512xf32> to vector<8x128xf32>
    %584 = math.tanh %583 : vector<8x128xf32>
    %585 = vector.extract_strided_slice %570 {offsets = [0, 384], sizes = [8, 128], strides = [1, 1]} : vector<8x512xf32> to vector<8x128xf32>
    %586 = arith.negf %585 : vector<8x128xf32>
    %587 = math.exp %586 : vector<8x128xf32>
    %cst_255 = arith.constant 1.000000e+00 : f32
    %588 = vector.broadcast %cst_255 : f32 to vector<8x128xf32>
    %589 = arith.addf %588, %587 : vector<8x128xf32>
    %590 = arith.divf %588, %589 : vector<8x128xf32>
    %591 = arith.mulf %582, %565 : vector<8x128xf32>
    %592 = arith.mulf %576, %584 : vector<8x128xf32>
    %593 = arith.addf %591, %592 : vector<8x128xf32>
    %594 = math.tanh %593 : vector<8x128xf32>
    %595 = arith.mulf %590, %594 : vector<8x128xf32>
    %c5_i32_256 = arith.constant 5 : i32
    %596 = arith.muli %arg0, %c5_i32_256 : i32
    %597 = arith.addi %596, %c4_i32_241 : i32
    %c8_i32_257 = arith.constant 8 : i32
    %598 = arith.cmpi slt, %597, %c8_i32_257 : i32
    %599 = arith.extui %598 : i1 to i32
    %600 = arith.sitofp %599 : i32 to f32
    %601 = vector.broadcast %600 : f32 to vector<8x128xf32>
    %602 = arith.mulf %601, %593 : vector<8x128xf32>
    %cst_258 = arith.constant 1.000000e+00 : f32
    %603 = arith.subf %cst_258, %600 : f32
    %604 = vector.broadcast %603 : f32 to vector<8x128xf32>
    %605 = arith.mulf %604, %565 : vector<8x128xf32>
    %606 = arith.addf %602, %605 : vector<8x128xf32>
    %607 = vector.broadcast %600 : f32 to vector<8x128xf32>
    %608 = arith.mulf %607, %595 : vector<8x128xf32>
    %cst_259 = arith.constant 1.000000e+00 : f32
    %609 = arith.subf %cst_259, %600 : f32
    %610 = vector.broadcast %609 : f32 to vector<8x128xf32>
    %611 = arith.mulf %610, %563 : vector<8x128xf32>
    %612 = arith.addf %608, %611 : vector<8x128xf32>
    %c1_260 = arith.constant 1 : index
    %c0_261 = arith.constant 0 : index
    %c0_262 = arith.constant 0 : index
    %613 = vector.load %arg13[%c1_260, %c0_261, %c0_262] : memref<2x8x128xf32, #tpu.memory_space<vmem>>, vector<1x8x128xf32>
    %614 = vector.shape_cast %613 : vector<1x8x128xf32> to vector<8x128xf32>
    %615 = vector.shape_cast %606 : vector<8x128xf32> to vector<1x8x128xf32>
    tpu.vector_store %arg13[%c1_260, %c0_261, %c0_262], %615 {strides = array<i32>} : memref<2x8x128xf32, #tpu.memory_space<vmem>>, vector<1x8x128xf32>,
    %c1_263 = arith.constant 1 : index
    %c0_264 = arith.constant 0 : index
    %c0_265 = arith.constant 0 : index
    %616 = vector.load %arg12[%c1_263, %c0_264, %c0_265] : memref<2x8x128xf32, #tpu.memory_space<vmem>>, vector<1x8x128xf32>
    %617 = vector.shape_cast %616 : vector<1x8x128xf32> to vector<8x128xf32>
    %618 = vector.shape_cast %612 : vector<8x128xf32> to vector<1x8x128xf32>
    tpu.vector_store %arg12[%c1_263, %c0_264, %c0_265], %618 {strides = array<i32>} : memref<2x8x128xf32, #tpu.memory_space<vmem>>, vector<1x8x128xf32>,
    %c5_i32_266 = arith.constant 5 : i32
    %c1_i32_267 = arith.constant 1 : i32
    %619 = arith.cmpi eq, %arg0, %c1_i32_267 : i32
    %620 = arith.extui %619 : i1 to i32
    %c0_i32_268 = arith.constant 0 : i32
    %621 = arith.cmpi ne, %620, %c0_i32_268 : i32
    scf.if %621 {
      %c0_269 = arith.constant 0 : index
      %c0_270 = arith.constant 0 : index
      %c0_271 = arith.constant 0 : index
      %622 = vector.load %arg12[%c0_269, %c0_270, %c0_271] : memref<2x8x128xf32, #tpu.memory_space<vmem>>, vector<2x8x128xf32>
      %c0_272 = arith.constant 0 : index
      %c0_273 = arith.constant 0 : index
      %c0_274 = arith.constant 0 : index
      %623 = vector.load %arg11[%c0_272, %c0_273, %c0_274] : memref<2x8x128xf32, #tpu.memory_space<vmem>>, vector<2x8x128xf32>
      tpu.vector_store %arg11[%c0_272, %c0_273, %c0_274], %622 {strides = array<i32>} : memref<2x8x128xf32, #tpu.memory_space<vmem>>, vector<2x8x128xf32>,
      %c1_275 = arith.constant 1 : index
      %c0_276 = arith.constant 0 : index
      %c0_277 = arith.constant 0 : index
      %624 = vector.load %arg12[%c1_275, %c0_276, %c0_277] : memref<2x8x128xf32, #tpu.memory_space<vmem>>, vector<1x8x128xf32>
      %625 = vector.shape_cast %624 : vector<1x8x128xf32> to vector<8x128xf32>
      %c0_278 = arith.constant 0 : index
      %c0_279 = arith.constant 0 : index
      %626 = vector.load %arg8[%c0_278, %c0_279] : memref<128x128xf32, #tpu.memory_space<vmem>>, vector<128x128xf32>
      %cst_280 = arith.constant dense<0.000000e+00> : vector<8x128xf32>
      %627 = tpu.matmul %625, %626, %cst_280 {dimension_numbers = #tpu.dot_dimension_numbers<[1], [0], [0], [1], [0, 0, 1, 1], [], []>} : vector<8x128xf32>, vector<128x128xf32>, vector<8x128xf32> -> vector<8x128xf32>
      %c0_281 = arith.constant 0 : index
      %c0_282 = arith.constant 0 : index
      %628 = vector.load %arg9[%c0_281, %c0_282] : memref<1x128xf32, #tpu.memory_space<vmem>>, vector<1x128xf32>
      %629 = vector.broadcast %628 : vector<1x128xf32> to vector<8x128xf32>
      %630 = arith.addf %627, %629 : vector<8x128xf32>
      %c0_283 = arith.constant 0 : index
      %c0_284 = arith.constant 0 : index
      %631 = vector.load %arg10[%c0_283, %c0_284] : memref<8x128xf32, #tpu.memory_space<vmem>>, vector<8x128xf32>
      tpu.vector_store %arg10[%c0_283, %c0_284], %630 {strides = array<i32>} : memref<8x128xf32, #tpu.memory_space<vmem>>, vector<8x128xf32>,
    } else {
    }
    return
  }
  func.func @transform_0(%arg0: i32) -> (i32, i32) {
    %c0_i32 = arith.constant 0 : i32
    %c0_i32_0 = arith.constant 0 : i32
    return %arg0, %c0_i32 : i32, i32
  }
  func.func @transform_1(%arg0: i32) -> (i32, i32) {
    %c0_i32 = arith.constant 0 : i32
    %c0_i32_0 = arith.constant 0 : i32
    %c0_i32_1 = arith.constant 0 : i32
    return %c0_i32, %c0_i32_0 : i32, i32
  }
  func.func @transform_2(%arg0: i32) -> (i32, i32) {
    %c0_i32 = arith.constant 0 : i32
    %c0_i32_0 = arith.constant 0 : i32
    %c0_i32_1 = arith.constant 0 : i32
    return %c0_i32, %c0_i32_0 : i32, i32
  }
  func.func @transform_3(%arg0: i32) -> (i32, i32) {
    %c0_i32 = arith.constant 0 : i32
    %c0_i32_0 = arith.constant 0 : i32
    %c0_i32_1 = arith.constant 0 : i32
    return %c0_i32, %c0_i32_0 : i32, i32
  }
  func.func @transform_4(%arg0: i32) -> (i32, i32) {
    %c0_i32 = arith.constant 0 : i32
    %c0_i32_0 = arith.constant 0 : i32
    %c0_i32_1 = arith.constant 0 : i32
    return %c0_i32, %c0_i32_0 : i32, i32
  }
  func.func @transform_5(%arg0: i32) -> (i32, i32) {
    %c0_i32 = arith.constant 0 : i32
    %c0_i32_0 = arith.constant 0 : i32
    %c0_i32_1 = arith.constant 0 : i32
    return %c0_i32, %c0_i32_0 : i32, i32
  }
  func.func @transform_6(%arg0: i32) -> (i32, i32) {
    %c0_i32 = arith.constant 0 : i32
    %c0_i32_0 = arith.constant 0 : i32
    %c0_i32_1 = arith.constant 0 : i32
    return %c0_i32, %c0_i32_0 : i32, i32
  }
  func.func @transform_7(%arg0: i32) -> (i32, i32) {
    %c0_i32 = arith.constant 0 : i32
    %c0_i32_0 = arith.constant 0 : i32
    %c0_i32_1 = arith.constant 0 : i32
    return %c0_i32, %c0_i32_0 : i32, i32
  }
  func.func @transform_8(%arg0: i32) -> (i32, i32) {
    %c0_i32 = arith.constant 0 : i32
    %c0_i32_0 = arith.constant 0 : i32
    %c0_i32_1 = arith.constant 0 : i32
    return %c0_i32, %c0_i32_0 : i32, i32
  }
  func.func @transform_9(%arg0: i32) -> (i32, i32) {
    %c0_i32 = arith.constant 0 : i32
    %c0_i32_0 = arith.constant 0 : i32
    %c0_i32_1 = arith.constant 0 : i32
    return %c0_i32, %c0_i32_0 : i32, i32
  }
  func.func @transform_10(%arg0: i32) -> (i32, i32, i32) {
    %c0_i32 = arith.constant 0 : i32
    %c0_i32_0 = arith.constant 0 : i32
    %c0_i32_1 = arith.constant 0 : i32
    %c0_i32_2 = arith.constant 0 : i32
    return %c0_i32, %c0_i32_0, %c0_i32_1 : i32, i32, i32
  }
}

</mosaic_0001>

<llo_original>
// kernel: bayes_lstm_forward.3
$region0: #{bayes_lstm_forward.3}
  #allocation0 [shape = 'u32[]', space=smem, size = 0x4, offset = 0x4, fixed_abs, tag = 'smem constant byte address 0x4 - core index']
  #allocation1 [shape = 'u32[144,128]{1,0:T(1,128)}', space=vmem, size = 0x12000, scoped, tag = 'internal scratch']
  #allocation2 [shape = 'f32[2,8,128]{2,1,0:T(8,128)}', space=vmem, size = 0x2000, scoped, tag = 'scratch operand']
  #allocation3 [shape = 'f32[2,8,128]{2,1,0:T(8,128)}', space=vmem, size = 0x2000, scoped, tag = 'scratch operand']
  #allocation4 [shape = 'f32[40,128]{1,0:T(8,128)}', space=vmem, size = 0x5000, scoped, tag = 'scratch operand']
  #allocation5 [shape = 'f32[40,512]{1,0:T(8,128)}', space=vmem, size = 0x14000, scoped, tag = 'scratch operand']
  %s0 = inlined_call_operand.vmem [shape: f32[80,128], index: 0, kind: input, shape index: {}]
  %s1 = inlined_call_operand.vmem [shape: bf16[128,512], index: 1, kind: input, shape index: {}]
  %s2 = inlined_call_operand.vmem [shape: f32[128,512], index: 2, kind: input, shape index: {}]
  %s3 = inlined_call_operand.vmem [shape: f32[1,512], index: 3, kind: input, shape index: {}]
  %s4 = inlined_call_operand.vmem [shape: bf16[128,512], index: 4, kind: input, shape index: {}]
  %s5 = inlined_call_operand.vmem [shape: f32[128,512], index: 5, kind: input, shape index: {}]
  %s6 = inlined_call_operand.vmem [shape: f32[1,512], index: 6, kind: input, shape index: {}]
  %s7 = inlined_call_operand.vmem [shape: f32[128,128], index: 7, kind: input, shape index: {}]
  %s8 = inlined_call_operand.vmem [shape: f32[1,128], index: 8, kind: input, shape index: {}]
  %s9 = inlined_call_operand.vmem [shape: f32[8,128], index: 9, kind: output, shape index: {0}]
  %s10 = inlined_call_operand.vmem [shape: f32[2,8,128], index: 10, kind: output, shape index: {1}]
  %11 = xla_tuple %s9, %s10
  %s12 = sld [smem:[#allocation0]]
  $region85: #{bayes_lstm_forward.3} parent=0
    _
  %s14 = ssub.s32 1, %s12
  %s15 = scalar_select 0, %s14, %s12
  loop: start=0, step=1, limit=4
  $region2: #{bayes_lstm_forward.3} parent=0 // loop_pre_header
    _
  $region3: #{bayes_lstm_forward.3} parent=0 // loop_header
    %s17 = sphi 0, %s21
    %p18 = scmp.ge.s32.totalorder %s17, 4
    %s27 = sphi 0, %s29
    %s30 = sphi 0, %s27
    %s31 = sphi 0, %s30
    %s47 = sphi 0, %s31
    %s51 = sphi 0, %s51
    %s53 = sphi 0, %s51
    %s54 = sphi 0, %s53
    %s68 = sphi 0, %s54
    %s72 = sphi 0, %s72
    %s74 = sphi 0, %s72
    %s75 = sphi 0, %s74
    %s89 = sphi 0, %s75
    %s93 = sphi 0, %s93
    %s95 = sphi 0, %s93
    %s96 = sphi 0, %s95
    %s110 = sphi 0, %s96
    %s114 = sphi 0, %s114
    %s116 = sphi 0, %s114
    %s117 = sphi 0, %s116
    %s131 = sphi 0, %s117
    %s135 = sphi 0, %s135
    %s137 = sphi 0, %s135
    %s138 = sphi 0, %s137
    %s152 = sphi 0, %s138
    %s156 = sphi 0, %s156
    %s158 = sphi 0, %s156
    %s159 = sphi 0, %s158
    %s173 = sphi 0, %s159
    %s177 = sphi 0, %s177
    %s179 = sphi 0, %s177
    %s180 = sphi 0, %s179
    %s194 = sphi 0, %s180
    %s198 = sphi 0, %s198
    %s200 = sphi 0, %s198
    %s201 = sphi 0, %s200
    %s215 = sphi 0, %s201
    %s219 = sphi 0, %s219
    %s221 = sphi 0, %s219
    %s222 = sphi 0, %s221
    %s236 = sphi 0, %s222
    %s240 = sphi 0, %s240
    %s242 = sphi 0, %s240
    %s243 = sphi 0, %s242
    %s257 = sphi 0, %s243
  $region4: #{bayes_lstm_forward.3} parent=0 // loop_header_branch
    %20 = sbr.rel (%p18) target = $region8
  $region5: #{bayes_lstm_forward.3} parent=0 // loop_body
    %s22 = ssub.s32 %s17, 1
    %s23 = ssub.s32 %s17, 2
    %s24 = sadd.s32 %s17, 1
    %s25 = ssub.s32 %s17, %s24
    %p26 = scmp.eq.s32.totalorder %s25, 0
    %s28 = sadd.s32 %s27, 1
    %s29 = scalar_select %p26, %s27, %s28
    %p32 = pneg %p26
    %p33 = scmp.eq.s32.totalorder %s17, 1
    %p34 = por %p32, %p33
    %p35 = scmp.ne.s32.totalorder %s27, %s30
    %p36 = scmp.eq.s32.totalorder %s17, 0
    %p37 = por %p35, %p36
    %p38 = scmp.ne.s32.totalorder %s27, %s30
    %p39 = scmp.eq.s32.totalorder %s22, 1
    %p40 = por %p38, %p39
    %p41 = scmp.ne.s32.totalorder %s30, %s31
    %p42 = scmp.eq.s32.totalorder %s22, 0
    %p43 = por %p41, %p42
    %p44 = scmp.ne.s32.totalorder %s30, %s31
    %p45 = scmp.eq.s32.totalorder %s23, 1
    %p46 = por %p44, %p45
    %p48 = scmp.ne.s32.totalorder %s31, %s47
    %p49 = scmp.eq.s32.totalorder %s23, 0
    %p50 = por %p48, %p49
    %s52 = sadd.s32 %s51, 1
    %p55 = scmp.eq.s32.totalorder %s17, 1
    %p56 = scmp.ne.s32.totalorder %s51, %s53
    %p57 = scmp.eq.s32.totalorder %s17, 0
    %p58 = por %p56, %p57
    %p59 = scmp.ne.s32.totalorder %s51, %s53
    %p60 = scmp.eq.s32.totalorder %s22, 1
    %p61 = por %p59, %p60
    %p62 = scmp.ne.s32.totalorder %s53, %s54
    %p63 = scmp.eq.s32.totalorder %s22, 0
    %p64 = por %p62, %p63
    %p65 = scmp.ne.s32.totalorder %s53, %s54
    %p66 = scmp.eq.s32.totalorder %s23, 1
    %p67 = por %p65, %p66
    %p69 = scmp.ne.s32.totalorder %s54, %s68
    %p70 = scmp.eq.s32.totalorder %s23, 0
    %p71 = por %p69, %p70
    %s73 = sadd.s32 %s72, 1
    %p76 = scmp.eq.s32.totalorder %s17, 1
    %p77 = scmp.ne.s32.totalorder %s72, %s74
    %p78 = scmp.eq.s32.totalorder %s17, 0
    %p79 = por %p77, %p78
    %p80 = scmp.ne.s32.totalorder %s72, %s74
    %p81 = scmp.eq.s32.totalorder %s22, 1
    %p82 = por %p80, %p81
    %p83 = scmp.ne.s32.totalorder %s74, %s75
    %p84 = scmp.eq.s32.totalorder %s22, 0
    %p85 = por %p83, %p84
    %p86 = scmp.ne.s32.totalorder %s74, %s75
    %p87 = scmp.eq.s32.totalorder %s23, 1
    %p88 = por %p86, %p87
    %p90 = scmp.ne.s32.totalorder %s75, %s89
    %p91 = scmp.eq.s32.totalorder %s23, 0
    %p92 = por %p90, %p91
    %s94 = sadd.s32 %s93, 1
    %p97 = scmp.eq.s32.totalorder %s17, 1
    %p98 = scmp.ne.s32.totalorder %s93, %s95
    %p99 = scmp.eq.s32.totalorder %s17, 0
    %p100 = por %p98, %p99
    %p101 = scmp.ne.s32.totalorder %s93, %s95
    %p102 = scmp.eq.s32.totalorder %s22, 1
    %p103 = por %p101, %p102
    %p104 = scmp.ne.s32.totalorder %s95, %s96
    %p105 = scmp.eq.s32.totalorder %s22, 0
    %p106 = por %p104, %p105
    %p107 = scmp.ne.s32.totalorder %s95, %s96
    %p108 = scmp.eq.s32.totalorder %s23, 1
    %p109 = por %p107, %p108
    %p111 = scmp.ne.s32.totalorder %s96, %s110
    %p112 = scmp.eq.s32.totalorder %s23, 0
    %p113 = por %p111, %p112
    %s115 = sadd.s32 %s114, 1
    %p118 = scmp.eq.s32.totalorder %s17, 1
    %p119 = scmp.ne.s32.totalorder %s114, %s116
    %p120 = scmp.eq.s32.totalorder %s17, 0
    %p121 = por %p119, %p120
    %p122 = scmp.ne.s32.totalorder %s114, %s116
    %p123 = scmp.eq.s32.totalorder %s22, 1
    %p124 = por %p122, %p123
    %p125 = scmp.ne.s32.totalorder %s116, %s117
    %p126 = scmp.eq.s32.totalorder %s22, 0
    %p127 = por %p125, %p126
    %p128 = scmp.ne.s32.totalorder %s116, %s117
    %p129 = scmp.eq.s32.totalorder %s23, 1
    %p130 = por %p128, %p129
    %p132 = scmp.ne.s32.totalorder %s117, %s131
    %p133 = scmp.eq.s32.totalorder %s23, 0
    %p134 = por %p132, %p133
    %s136 = sadd.s32 %s135, 1
    %p139 = scmp.eq.s32.totalorder %s17, 1
    %p140 = scmp.ne.s32.totalorder %s135, %s137
    %p141 = scmp.eq.s32.totalorder %s17, 0
    %p142 = por %p140, %p141
    %p143 = scmp.ne.s32.totalorder %s135, %s137
    %p144 = scmp.eq.s32.totalorder %s22, 1
    %p145 = por %p143, %p144
    %p146 = scmp.ne.s32.totalorder %s137, %s138
    %p147 = scmp.eq.s32.totalorder %s22, 0
    %p148 = por %p146, %p147
    %p149 = scmp.ne.s32.totalorder %s137, %s138
    %p150 = scmp.eq.s32.totalorder %s23, 1
    %p151 = por %p149, %p150
    %p153 = scmp.ne.s32.totalorder %s138, %s152
    %p154 = scmp.eq.s32.totalorder %s23, 0
    %p155 = por %p153, %p154
    %s157 = sadd.s32 %s156, 1
    %p160 = scmp.eq.s32.totalorder %s17, 1
    %p161 = scmp.ne.s32.totalorder %s156, %s158
    %p162 = scmp.eq.s32.totalorder %s17, 0
    %p163 = por %p161, %p162
    %p164 = scmp.ne.s32.totalorder %s156, %s158
    %p165 = scmp.eq.s32.totalorder %s22, 1
    %p166 = por %p164, %p165
    %p167 = scmp.ne.s32.totalorder %s158, %s159
    %p168 = scmp.eq.s32.totalorder %s22, 0
    %p169 = por %p167, %p168
    %p170 = scmp.ne.s32.totalorder %s158, %s159
    %p171 = scmp.eq.s32.totalorder %s23, 1
    %p172 = por %p170, %p171
    %p174 = scmp.ne.s32.totalorder %s159, %s173
    %p175 = scmp.eq.s32.totalorder %s23, 0
    %p176 = por %p174, %p175
    %s178 = sadd.s32 %s177, 1
    %p181 = scmp.eq.s32.totalorder %s17, 1
    %p182 = scmp.ne.s32.totalorder %s177, %s179
    %p183 = scmp.eq.s32.totalorder %s17, 0
    %p184 = por %p182, %p183
    %p185 = scmp.ne.s32.totalorder %s177, %s179
    %p186 = scmp.eq.s32.totalorder %s22, 1
    %p187 = por %p185, %p186
    %p188 = scmp.ne.s32.totalorder %s179, %s180
    %p189 = scmp.eq.s32.totalorder %s22, 0
    %p190 = por %p188, %p189
    %p191 = scmp.ne.s32.totalorder %s179, %s180
    %p192 = scmp.eq.s32.totalorder %s23, 1
    %p193 = por %p191, %p192
    %p195 = scmp.ne.s32.totalorder %s180, %s194
    %p196 = scmp.eq.s32.totalorder %s23, 0
    %p197 = por %p195, %p196
    %s199 = sadd.s32 %s198, 1
    %p202 = scmp.eq.s32.totalorder %s17, 1
    %p203 = scmp.ne.s32.totalorder %s198, %s200
    %p204 = scmp.eq.s32.totalorder %s17, 0
    %p205 = por %p203, %p204
    %p206 = scmp.ne.s32.totalorder %s198, %s200
    %p207 = scmp.eq.s32.totalorder %s22, 1
    %p208 = por %p206, %p207
    %p209 = scmp.ne.s32.totalorder %s200, %s201
    %p210 = scmp.eq.s32.totalorder %s22, 0
    %p211 = por %p209, %p210
    %p212 = scmp.ne.s32.totalorder %s200, %s201
    %p213 = scmp.eq.s32.totalorder %s23, 1
    %p214 = por %p212, %p213
    %p216 = scmp.ne.s32.totalorder %s201, %s215
    %p217 = scmp.eq.s32.totalorder %s23, 0
    %p218 = por %p216, %p217
    %s220 = sadd.s32 %s219, 1
    %p223 = scmp.eq.s32.totalorder %s17, 1
    %p224 = scmp.ne.s32.totalorder %s219, %s221
    %p225 = scmp.eq.s32.totalorder %s17, 0
    %p226 = por %p224, %p225
    %p227 = scmp.ne.s32.totalorder %s219, %s221
    %p228 = scmp.eq.s32.totalorder %s22, 1
    %p229 = por %p227, %p228
    %p230 = scmp.ne.s32.totalorder %s221, %s222
    %p231 = scmp.eq.s32.totalorder %s22, 0
    %p232 = por %p230, %p231
    %p233 = scmp.ne.s32.totalorder %s221, %s222
    %p234 = scmp.eq.s32.totalorder %s23, 1
    %p235 = por %p233, %p234
    %p237 = scmp.ne.s32.totalorder %s222, %s236
    %p238 = scmp.eq.s32.totalorder %s23, 0
    %p239 = por %p237, %p238
    %s241 = sadd.s32 %s240, 1
    %p244 = scmp.eq.s32.totalorder %s17, 1
    %p245 = scmp.ne.s32.totalorder %s240, %s242
    %p246 = scmp.eq.s32.totalorder %s17, 0
    %p247 = por %p245, %p246
    %p248 = scmp.ne.s32.totalorder %s240, %s242
    %p249 = scmp.eq.s32.totalorder %s22, 1
    %p250 = por %p248, %p249
    %p251 = scmp.ne.s32.totalorder %s242, %s243
    %p252 = scmp.eq.s32.totalorder %s22, 0
    %p253 = por %p251, %p252
    %p254 = scmp.ne.s32.totalorder %s242, %s243
    %p255 = scmp.eq.s32.totalorder %s23, 1
    %p256 = por %p254, %p255
    %p258 = scmp.ne.s32.totalorder %s243, %s257
    %p259 = scmp.eq.s32.totalorder %s23, 0
    %p260 = por %p258, %p259
    %p261 = scmp.le.s32.totalorder 1, %s17
    %p262 = scmp.lt.s32.totalorder %s17, 3
    %p263 = pnand %p261, %p262
    %p264 = pneg %p263
    // Predicated region
    $region9: #{bayes_lstm_forward.3} parent=5 // pred_check
      _
    $region10: #{bayes_lstm_forward.3} parent=5 // pred_check_branch
      %266 = sbr.rel (%p263) target = $region12
    $region11: #{bayes_lstm_forward.3} parent=5 // pred_region
      %s267 = ssub.s32 %s17, 1
      // Predicated region
      $region13: #{bayes_lstm_forward.3} parent=11 // pred_check
        %p268 = pneg %p64
      $region14: #{bayes_lstm_forward.3} parent=11 // pred_check_branch
        %270 = sbr.rel (%p268) target = $region16
      $region15: #{bayes_lstm_forward.3} parent=11 // pred_region
        _
      $region16: #{bayes_lstm_forward.3} parent=11 // pred_fallthru
        _
      // Predicated region
      $region17: #{bayes_lstm_forward.3} parent=11 // pred_check
        %p271 = pneg %p85
      $region18: #{bayes_lstm_forward.3} parent=11 // pred_check_branch
        %273 = sbr.rel (%p271) target = $region20
      $region19: #{bayes_lstm_forward.3} parent=11 // pred_region
        _
      $region20: #{bayes_lstm_forward.3} parent=11 // pred_fallthru
        _
      // Predicated region
      $region21: #{bayes_lstm_forward.3} parent=11 // pred_check
        %p274 = pneg %p106
      $region22: #{bayes_lstm_forward.3} parent=11 // pred_check_branch
        %276 = sbr.rel (%p274) target = $region24
      $region23: #{bayes_lstm_forward.3} parent=11 // pred_region
        _
      $region24: #{bayes_lstm_forward.3} parent=11 // pred_fallthru
        _
      // Predicated region
      $region25: #{bayes_lstm_forward.3} parent=11 // pred_check
        %p277 = pneg %p127
      $region26: #{bayes_lstm_forward.3} parent=11 // pred_check_branch
        %279 = sbr.rel (%p277) target = $region28
      $region27: #{bayes_lstm_forward.3} parent=11 // pred_region
        _
      $region28: #{bayes_lstm_forward.3} parent=11 // pred_fallthru
        _
      // Predicated region
      $region29: #{bayes_lstm_forward.3} parent=11 // pred_check
        %p280 = pneg %p148
      $region30: #{bayes_lstm_forward.3} parent=11 // pred_check_branch
        %282 = sbr.rel (%p280) target = $region32
      $region31: #{bayes_lstm_forward.3} parent=11 // pred_region
        _
      $region32: #{bayes_lstm_forward.3} parent=11 // pred_fallthru
        _
      // Predicated region
      $region33: #{bayes_lstm_forward.3} parent=11 // pred_check
        %p283 = pneg %p169
      $region34: #{bayes_lstm_forward.3} parent=11 // pred_check_branch
        %285 = sbr.rel (%p283) target = $region36
      $region35: #{bayes_lstm_forward.3} parent=11 // pred_region
        _
      $region36: #{bayes_lstm_forward.3} parent=11 // pred_fallthru
        _
      // Predicated region
      $region37: #{bayes_lstm_forward.3} parent=11 // pred_check
        %p286 = pneg %p190
      $region38: #{bayes_lstm_forward.3} parent=11 // pred_check_branch
        %288 = sbr.rel (%p286) target = $region40
      $region39: #{bayes_lstm_forward.3} parent=11 // pred_region
        _
      $region40: #{bayes_lstm_forward.3} parent=11 // pred_fallthru
        _
      // Predicated region
      $region41: #{bayes_lstm_forward.3} parent=11 // pred_check
        %p289 = pneg %p211
      $region42: #{bayes_lstm_forward.3} parent=11 // pred_check_branch
        %291 = sbr.rel (%p289) target = $region44
      $region43: #{bayes_lstm_forward.3} parent=11 // pred_region
        _
      $region44: #{bayes_lstm_forward.3} parent=11 // pred_fallthru
        _
    $region12: #{bayes_lstm_forward.3} parent=5 // pred_fallthru
      _
    %p292 = scmp.lt.s32.totalorder %s17, 2
    // Predicated region
    $region45: #{bayes_lstm_forward.3} parent=5 // pred_check
      %p293 = pneg %p292
    $region46: #{bayes_lstm_forward.3} parent=5 // pred_check_branch
      %295 = sbr.rel (%p293) target = $region48
    $region47: #{bayes_lstm_forward.3} parent=5 // pred_region
      // Predicated region
      $region49: #{bayes_lstm_forward.3} parent=47 // pred_check
        %p296 = pneg %p37
      $region50: #{bayes_lstm_forward.3} parent=47 // pred_check_branch
        %298 = sbr.rel (%p296) target = $region52
      $region51: #{bayes_lstm_forward.3} parent=47 // pred_region
        %s299 = smul.u32 5, %s17
        %p300 = scmp.lt.s32.totalorder %s299, 9
        %s301 = scalar_select %p300, %s299, 9
        %s302 = smul.addr %s301, 8
        %s303 = scalar_lea.vmem %s0, %s302
        %s304 = smul.u32 5, %s17
      $region52: #{bayes_lstm_forward.3} parent=47 // pred_fallthru
        _
    $region48: #{bayes_lstm_forward.3} parent=5 // pred_fallthru
      _
    %p305 = scmp.le.s32.totalorder 1, %s17
    %p306 = scmp.lt.s32.totalorder %s17, 3
    %p307 = pnand %p305, %p306
    %p308 = pneg %p307
    // Predicated region
    $region53: #{bayes_lstm_forward.3} parent=5 // pred_check
      _
    $region54: #{bayes_lstm_forward.3} parent=5 // pred_check_branch
      %310 = sbr.rel (%p307) target = $region56
    $region55: #{bayes_lstm_forward.3} parent=5 // pred_region
      %s311 = ssub.s32 %s17, 1
      %s312 = smul.u32 5, %s22
      %p313 = scmp.lt.s32.totalorder %s312, 9
      %s314 = scalar_select %p313, %s312, 9
      %s315 = smul.addr %s314, 8
      %s316 = scalar_lea.vmem %s0, %s315
      %p317 = pneg %p43
      %p318 = pneg %p40
      %p319 = pneg %p64
      %p320 = pneg %p61
      %p321 = pneg %p85
      %p322 = pneg %p82
      %p323 = pneg %p106
      %p324 = pneg %p103
      %p325 = pneg %p127
      %p326 = pneg %p124
      %p327 = pneg %p148
      %p328 = pneg %p145
      %p329 = pneg %p169
      %p330 = pneg %p166
      %p331 = pneg %p190
      %p332 = pneg %p187
      %p333 = pneg %p211
      %p334 = pneg %p208
      %p335 = pneg %p232
      %p336 = pneg %p229
      %p337 = pneg %p253
      %p338 = pneg %p250
      %s339 = smul.u32 5, %s22
      %p340 = scmp.lt.s32.totalorder %s339, 9
      %s341 = scalar_select %p340, %s339, 9
      %s342 = smul.addr %s341, 8
      %s343 = scalar_lea.vmem %s0, %s342
      %s344 = smul.u32 5, %s22
      %p346 = scmp.eq.s32.totalorder %s22, 0
      // Predicated region
      $region57: #{bayes_lstm_forward.3} parent=55 // pred_check
        %p347 = pneg %p346
      $region58: #{bayes_lstm_forward.3} parent=55 // pred_check_branch
        %349 = sbr.rel (%p347) target = $region60
      $region59: #{bayes_lstm_forward.3} parent=55 // pred_region
        %350 = vst [vmem:[#allocation2] sm:$0xff] 0.0
        %351 = vst [vmem:[#allocation2 + $0x8] sm:$0xff] 0.0
        %352 = vst [vmem:[#allocation3] sm:$0xff] 0.0
        %353 = vst [vmem:[#allocation3 + $0x8] sm:$0xff] 0.0
      $region60: #{bayes_lstm_forward.3} parent=55 // pred_fallthru
        _
      %v354 = vld [vmem:[%s343] sm:$0xff]
      %v355 = vld [vmem:[%s343 + $0x8] sm:$0xff]
      %v356 = vld [vmem:[%s343 + $0x10] sm:$0xff]
      %v357 = vld [vmem:[%s343 + $0x18] sm:$0xff]
      %v358 = vld [vmem:[%s343 + $0x20] sm:$0xff]
      %v359 = vpack.c.bf16 %v355, %v354
      %v360 = vpack.c.bf16 %v357, %v356
      %v361 = vpack.c.bf16 %v358, %v358
      %v362 = vld [vmem:[%s1] sm:$0xff]
      %v363 = vld [vmem:[%s1 + $0x8] sm:$0xff]
      %v364 = vld [vmem:[%s1 + $0x10] sm:$0xff]
      %v365 = vld [vmem:[%s1 + $0x18] sm:$0xff]
      %v366 = vld [vmem:[%s1 + $0x20] sm:$0xff]
      %v367 = vld [vmem:[%s1 + $0x28] sm:$0xff]
      %v368 = vld [vmem:[%s1 + $0x30] sm:$0xff]
      %v369 = vld [vmem:[%s1 + $0x38] sm:$0xff]
      %v370 = vld [vmem:[%s1 + $0x40] sm:$0xff]
      %v371 = vld [vmem:[%s1 + $0x48] sm:$0xff]
      %v372 = vld [vmem:[%s1 + $0x50] sm:$0xff]
      %v373 = vld [vmem:[%s1 + $0x58] sm:$0xff]
      %v374 = vld [vmem:[%s1 + $0x60] sm:$0xff]
      %v375 = vld [vmem:[%s1 + $0x68] sm:$0xff]
      %v376 = vld [vmem:[%s1 + $0x70] sm:$0xff]
      %v377 = vld [vmem:[%s1 + $0x78] sm:$0xff]
      %v378 = vld [vmem:[%s1 + $0x80] sm:$0xff]
      %v379 = vld [vmem:[%s1 + $0x88] sm:$0xff]
      %v380 = vld [vmem:[%s1 + $0x90] sm:$0xff]
      %v381 = vld [vmem:[%s1 + $0x98] sm:$0xff]
      %v382 = vld [vmem:[%s1 + $0xa0] sm:$0xff]
      %v383 = vld [vmem:[%s1 + $0xa8] sm:$0xff]
      %v384 = vld [vmem:[%s1 + $0xb0] sm:$0xff]
      %v385 = vld [vmem:[%s1 + $0xb8] sm:$0xff]
      %v386 = vld [vmem:[%s1 + $0xc0] sm:$0xff]
      %v387 = vld [vmem:[%s1 + $0xc8] sm:$0xff]
      %v388 = vld [vmem:[%s1 + $0xd0] sm:$0xff]
      %v389 = vld [vmem:[%s1 + $0xd8] sm:$0xff]
      %v390 = vld [vmem:[%s1 + $0xe0] sm:$0xff]
      %v391 = vld [vmem:[%s1 + $0xe8] sm:$0xff]
      %v392 = vld [vmem:[%s1 + $0xf0] sm:$0xff]
      %v393 = vld [vmem:[%s1 + $0xf8] sm:$0xff]
      %v394 = vld [vmem:[%s3] sm:$0xf]
      %v396 = vlaneseq
      %v397 = vshrl.u32 %v396, 7
      %v398 = vsub.s32 0, %v397
      %v399 = vrot.slane %v394, %v398
      %v400 = vlaneseq
      %v401 = vshrl.u32 %v400, 7
      %v402 = vsub.s32 1, %v401
      %v403 = vrot.slane %v394, %v402
      %v404 = vlaneseq
      %v405 = vshrl.u32 %v404, 7
      %v406 = vsub.s32 2, %v405
      %v407 = vrot.slane %v394, %v406
      %v408 = vlaneseq
      %v409 = vshrl.u32 %v408, 7
      %v410 = vsub.s32 3, %v409
      %v411 = vrot.slane %v394, %v410
      %v448 = vunpack.c.l.b16 %v362
      %v449 = vunpack.c.h.b16 %v362
      %v450 = vunpack.c.l.b16 %v363
      %v451 = vunpack.c.h.b16 %v363
      %v452 = vunpack.c.l.b16 %v364
      %v453 = vunpack.c.h.b16 %v364
      %v454 = vunpack.c.l.b16 %v365
      %v455 = vunpack.c.h.b16 %v365
      %v456 = vunpack.c.l.b16 %v366
      %v457 = vunpack.c.h.b16 %v366
      %v458 = vunpack.c.l.b16 %v367
      %v459 = vunpack.c.h.b16 %v367
      %v460 = vunpack.c.l.b16 %v368
      %v461 = vunpack.c.h.b16 %v368
      %v462 = vunpack.c.l.b16 %v369
      %v463 = vunpack.c.h.b16 %v369
      %v464 = vunpack.c.l.b16 %v370
      %v465 = vunpack.c.h.b16 %v370
      %v466 = vunpack.c.l.b16 %v371
      %v467 = vunpack.c.h.b16 %v371
      %v468 = vunpack.c.l.b16 %v372
      %v469 = vunpack.c.h.b16 %v372
      %v470 = vunpack.c.l.b16 %v373
      %v471 = vunpack.c.h.b16 %v373
      %v472 = vunpack.c.l.b16 %v374
      %v473 = vunpack.c.h.b16 %v374
      %v474 = vunpack.c.l.b16 %v375
      %v475 = vunpack.c.h.b16 %v375
      %v476 = vunpack.c.l.b16 %v376
      %v477 = vunpack.c.h.b16 %v376
      %v478 = vunpack.c.l.b16 %v377
      %v479 = vunpack.c.h.b16 %v377
      %v480 = vunpack.c.l.b16 %v378
      %v481 = vunpack.c.h.b16 %v378
      %v482 = vunpack.c.l.b16 %v379
      %v483 = vunpack.c.h.b16 %v379
      %v484 = vunpack.c.l.b16 %v380
      %v485 = vunpack.c.h.b16 %v380
      %v486 = vunpack.c.l.b16 %v381
      %v487 = vunpack.c.h.b16 %v381
      %v488 = vunpack.c.l.b16 %v382
      %v489 = vunpack.c.h.b16 %v382
      %v490 = vunpack.c.l.b16 %v383
      %v491 = vunpack.c.h.b16 %v383
      %v492 = vunpack.c.l.b16 %v384
      %v493 = vunpack.c.h.b16 %v384
      %v494 = vunpack.c.l.b16 %v385
      %v495 = vunpack.c.h.b16 %v385
      %v496 = vunpack.c.l.b16 %v386
      %v497 = vunpack.c.h.b16 %v386
      %v498 = vunpack.c.l.b16 %v387
      %v499 = vunpack.c.h.b16 %v387
      %v500 = vunpack.c.l.b16 %v388
      %v501 = vunpack.c.h.b16 %v388
      %v502 = vunpack.c.l.b16 %v389
      %v503 = vunpack.c.h.b16 %v389
      %v504 = vunpack.c.l.b16 %v390
      %v505 = vunpack.c.h.b16 %v390
      %v506 = vunpack.c.l.b16 %v391
      %v507 = vunpack.c.h.b16 %v391
      %v508 = vunpack.c.l.b16 %v392
      %v509 = vunpack.c.h.b16 %v392
      %v510 = vunpack.c.l.b16 %v393
      %v511 = vunpack.c.h.b16 %v393
      %v512 = vpack.c.b16 %v452, %v448
      %v513 = vpack.c.b16 %v453, %v449
      %v514 = vpack.c.b16 %v454, %v450
      %v515 = vpack.c.b16 %v455, %v451
      %v516 = vpack.c.b16 %v460, %v456
      %v517 = vpack.c.b16 %v461, %v457
      %v518 = vpack.c.b16 %v462, %v458
      %v519 = vpack.c.b16 %v463, %v459
      %v520 = vpack.c.b16 %v468, %v464
      %v521 = vpack.c.b16 %v469, %v465
      %v522 = vpack.c.b16 %v470, %v466
      %v523 = vpack.c.b16 %v471, %v467
      %v524 = vpack.c.b16 %v476, %v472
      %v525 = vpack.c.b16 %v477, %v473
      %v526 = vpack.c.b16 %v478, %v474
      %v527 = vpack.c.b16 %v479, %v475
      %v528 = vpack.c.b16 %v484, %v480
      %v529 = vpack.c.b16 %v485, %v481
      %v530 = vpack.c.b16 %v486, %v482
      %v531 = vpack.c.b16 %v487, %v483
      %v532 = vpack.c.b16 %v492, %v488
      %v533 = vpack.c.b16 %v493, %v489
      %v534 = vpack.c.b16 %v494, %v490
      %v535 = vpack.c.b16 %v495, %v491
      %v536 = vpack.c.b16 %v500, %v496
      %v537 = vpack.c.b16 %v501, %v497
      %v538 = vpack.c.b16 %v502, %v498
      %v539 = vpack.c.b16 %v503, %v499
      %v540 = vpack.c.b16 %v508, %v504
      %v541 = vpack.c.b16 %v509, %v505
      %v542 = vpack.c.b16 %v510, %v506
      %v543 = vpack.c.b16 %v511, %v507
      %576 = vmatprep.subr.bf16.mxu0 %v513
      %577 = vmatpush1.bf16.msra.mxu0 %v512
      %578 = vmatprep.subr.bf16.mxu0 %v517
      %579 = vmatpush1.bf16.msra.mxu0 %v516
      %580 = vmatprep.subr.bf16.mxu0 %v521
      %581 = vmatpush1.bf16.msra.mxu0 %v520
      %582 = vmatprep.subr.bf16.mxu0 %v525
      %583 = vmatpush1.bf16.msra.mxu0 %v524
      %584 = vmatprep.subr.bf16.mxu0 %v529
      %585 = vmatpush1.bf16.msra.mxu0 %v528
      %586 = vmatprep.subr.bf16.mxu0 %v533
      %587 = vmatpush1.bf16.msra.mxu0 %v532
      %588 = vmatprep.subr.bf16.mxu0 %v537
      %589 = vmatpush1.bf16.msra.mxu0 %v536
      %590 = vmatprep.subr.bf16.mxu0 %v541
      %591 = vmatpush1.bf16.msra.mxu0 %v540
      %592 = vmatprep.subr.bf16.mxu0 0
      %593 = vmatpush1.bf16.msra.mxu0 0
      %594 = vmatprep.subr.bf16.mxu0 0
      %595 = vmatpush1.bf16.msra.mxu0 0
      %596 = vmatprep.subr.bf16.mxu0 0
      %597 = vmatpush1.bf16.msra.mxu0 0
      %598 = vmatprep.subr.bf16.mxu0 0
      %599 = vmatpush1.bf16.msra.mxu0 0
      %600 = vmatprep.subr.bf16.mxu0 0
      %601 = vmatpush1.bf16.msra.mxu0 0
      %602 = vmatprep.subr.bf16.mxu0 0
      %603 = vmatpush1.bf16.msra.mxu0 0
      %604 = vmatprep.subr.bf16.mxu0 0
      %605 = vmatpush1.bf16.msra.mxu0 0
      %606 = vmatprep.subr.bf16.mxu0 0
      %607 = vmatpush1.bf16.msra.mxu0 0
      %608 = vmatprep.mubr.bf16.mxu0 0
      %609 = vmatmul.mubr.bf16.gmra.mrb[0].mxu0 %v359
      %v610 = vpop.f32.mrb[0].mxu0
      %v611 = vadd.f32 %v399, %v610
      %v612 = vpop.f32.mrb[0].mxu0
      %v613 = vadd.f32 %v403, %v612
      %v614 = vpop.f32.mrb[0].mxu0
      %v615 = vadd.f32 %v399, %v614
      %v616 = vpop.f32.mrb[0].mxu0
      %v617 = vadd.f32 %v403, %v616
      %618 = vmatprep.mubr.bf16.mxu0 0
      %619 = vmatmul.mubr.bf16.gmra.mrb[0].mxu0 %v360
      %v620 = vpop.f32.mrb[0].mxu0
      %v621 = vadd.f32 %v399, %v620
      %v622 = vpop.f32.mrb[0].mxu0
      %v623 = vadd.f32 %v403, %v622
      %v624 = vpop.f32.mrb[0].mxu0
      %v625 = vadd.f32 %v399, %v624
      %v626 = vpop.f32.mrb[0].mxu0
      %v627 = vadd.f32 %v403, %v626
      %628 = vmatprep.mubr.bf16.mxu0 0
      %629 = vmatmul.mubr.bf16.gmra.mrb[0].mxu0 %v361
      %v630 = vpop.f32.mrb[0].mxu0
      %v631 = vadd.f32 %v399, %v630
      %v632 = vpop.f32.mrb[0].mxu0
      %v633 = vadd.f32 %v403, %v632
      %v634 = vpop.f32.mrb[0].mxu0
      %v635 = vpop.f32.mrb[0].mxu0
      %636 = vdwg.mxu0
      %637 = vmatprep.subr.bf16.mxu0 %v515
      %638 = vmatpush1.bf16.msra.mxu0 %v514
      %639 = vmatprep.subr.bf16.mxu0 %v519
      %640 = vmatpush1.bf16.msra.mxu0 %v518
      %641 = vmatprep.subr.bf16.mxu0 %v523
      %642 = vmatpush1.bf16.msra.mxu0 %v522
      %643 = vmatprep.subr.bf16.mxu0 %v527
      %644 = vmatpush1.bf16.msra.mxu0 %v526
      %645 = vmatprep.subr.bf16.mxu0 %v531
      %646 = vmatpush1.bf16.msra.mxu0 %v530
      %647 = vmatprep.subr.bf16.mxu0 %v535
      %648 = vmatpush1.bf16.msra.mxu0 %v534
      %649 = vmatprep.subr.bf16.mxu0 %v539
      %650 = vmatpush1.bf16.msra.mxu0 %v538
      %651 = vmatprep.subr.bf16.mxu0 %v543
      %652 = vmatpush1.bf16.msra.mxu0 %v542
      %653 = vmatprep.subr.bf16.mxu0 0
      %654 = vmatpush1.bf16.msra.mxu0 0
      %655 = vmatprep.subr.bf16.mxu0 0
      %656 = vmatpush1.bf16.msra.mxu0 0
      %657 = vmatprep.subr.bf16.mxu0 0
      %658 = vmatpush1.bf16.msra.mxu0 0
      %659 = vmatprep.subr.bf16.mxu0 0
      %660 = vmatpush1.bf16.msra.mxu0 0
      %661 = vmatprep.subr.bf16.mxu0 0
      %662 = vmatpush1.bf16.msra.mxu0 0
      %663 = vmatprep.subr.bf16.mxu0 0
      %664 = vmatpush1.bf16.msra.mxu0 0
      %665 = vmatprep.subr.bf16.mxu0 0
      %666 = vmatpush1.bf16.msra.mxu0 0
      %667 = vmatprep.subr.bf16.mxu0 0
      %668 = vmatpush1.bf16.msra.mxu0 0
      %669 = vmatprep.mubr.bf16.mxu0 0
      %670 = vmatmul.mubr.bf16.gmra.mrb[0].mxu0 %v359
      %v671 = vpop.f32.mrb[0].mxu0
      %v672 = vadd.f32 %v407, %v671
      %v673 = vpop.f32.mrb[0].mxu0
      %v674 = vadd.f32 %v411, %v673
      %v675 = vpop.f32.mrb[0].mxu0
      %v676 = vadd.f32 %v407, %v675
      %v677 = vpop.f32.mrb[0].mxu0
      %v678 = vadd.f32 %v411, %v677
      %679 = vmatprep.mubr.bf16.mxu0 0
      %680 = vmatmul.mubr.bf16.gmra.mrb[0].mxu0 %v360
      %v681 = vpop.f32.mrb[0].mxu0
      %v682 = vadd.f32 %v407, %v681
      %v683 = vpop.f32.mrb[0].mxu0
      %v684 = vadd.f32 %v411, %v683
      %v685 = vpop.f32.mrb[0].mxu0
      %v686 = vadd.f32 %v407, %v685
      %v687 = vpop.f32.mrb[0].mxu0
      %v688 = vadd.f32 %v411, %v687
      %689 = vmatprep.mubr.bf16.mxu0 0
      %690 = vmatmul.mubr.bf16.gmra.mrb[0].mxu0 %v361
      %v691 = vpop.f32.mrb[0].mxu0
      %v692 = vadd.f32 %v407, %v691
      %v693 = vpop.f32.mrb[0].mxu0
      %v694 = vadd.f32 %v411, %v693
      %v695 = vpop.f32.mrb[0].mxu0
      %v696 = vpop.f32.mrb[0].mxu0
      %697 = vdwg.mxu0
      %698 = vst [vmem:[#allocation5] sm:$0xff] %v611
      %699 = vst [vmem:[#allocation5 + $0x8] sm:$0xff] %v613
      %700 = vst [vmem:[#allocation5 + $0x10] sm:$0xff] %v672
      %701 = vst [vmem:[#allocation5 + $0x18] sm:$0xff] %v674
      %702 = vst [vmem:[#allocation5 + $0x20] sm:$0xff] %v615
      %703 = vst [vmem:[#allocation5 + $0x28] sm:$0xff] %v617
      %704 = vst [vmem:[#allocation5 + $0x30] sm:$0xff] %v676
      %705 = vst [vmem:[#allocation5 + $0x38] sm:$0xff] %v678
      %706 = vst [vmem:[#allocation5 + $0x40] sm:$0xff] %v621
      %707 = vst [vmem:[#allocation5 + $0x48] sm:$0xff] %v623
      %708 = vst [vmem:[#allocation5 + $0x50] sm:$0xff] %v682
      %709 = vst [vmem:[#allocation5 + $0x58] sm:$0xff] %v684
      %710 = vst [vmem:[#allocation5 + $0x60] sm:$0xff] %v625
      %711 = vst [vmem:[#allocation5 + $0x68] sm:$0xff] %v627
      %712 = vst [vmem:[#allocation5 + $0x70] sm:$0xff] %v686
      %713 = vst [vmem:[#allocation5 + $0x78] sm:$0xff] %v688
      %714 = vst [vmem:[#allocation5 + $0x80] sm:$0xff] %v631
      %715 = vst [vmem:[#allocation5 + $0x88] sm:$0xff] %v633
      %716 = vst [vmem:[#allocation5 + $0x90] sm:$0xff] %v692
      %717 = vst [vmem:[#allocation5 + $0x98] sm:$0xff] %v694
      %v718 = vld [vmem:[#allocation2] sm:$0xff]
      %v719 = vld [vmem:[#allocation3] sm:$0xff]
      %s720 = smul.u32 0, 4
      %s721 = smul.addr %s720, 8
      %s722 = scalar_lea.vmem [#allocation5], %s721
      %v723 = vld [vmem:[%s722] sm:$0xff]
      %v724 = vld [vmem:[%s722 + $0x8] sm:$0xff]
      %v725 = vld [vmem:[%s722 + $0x10] sm:$0xff]
      %v726 = vld [vmem:[%s722 + $0x18] sm:$0xff]
      %v727 = vld [vmem:[%s2] sm:$0xff]
      %v728 = vld [vmem:[%s2 + $0x8] sm:$0xff]
      %v729 = vld [vmem:[%s2 + $0x10] sm:$0xff]
      %v730 = vld [vmem:[%s2 + $0x18] sm:$0xff]
      %v731 = vld [vmem:[%s2 + $0x20] sm:$0xff]
      %v732 = vld [vmem:[%s2 + $0x28] sm:$0xff]
      %v733 = vld [vmem:[%s2 + $0x30] sm:$0xff]
      %v734 = vld [vmem:[%s2 + $0x38] sm:$0xff]
      %v735 = vld [vmem:[%s2 + $0x40] sm:$0xff]
      %v736 = vld [vmem:[%s2 + $0x48] sm:$0xff]
      %v737 = vld [vmem:[%s2 + $0x50] sm:$0xff]
      %v738 = vld [vmem:[%s2 + $0x58] sm:$0xff]
      %v739 = vld [vmem:[%s2 + $0x60] sm:$0xff]
      %v740 = vld [vmem:[%s2 + $0x68] sm:$0xff]
      %v741 = vld [vmem:[%s2 + $0x70] sm:$0xff]
      %v742 = vld [vmem:[%s2 + $0x78] sm:$0xff]
      %v743 = vld [vmem:[%s2 + $0x80] sm:$0xff]
      %v744 = vld [vmem:[%s2 + $0x88] sm:$0xff]
      %v745 = vld [vmem:[%s2 + $0x90] sm:$0xff]
      %v746 = vld [vmem:[%s2 + $0x98] sm:$0xff]
      %v747 = vld [vmem:[%s2 + $0xa0] sm:$0xff]
      %v748 = vld [vmem:[%s2 + $0xa8] sm:$0xff]
      %v749 = vld [vmem:[%s2 + $0xb0] sm:$0xff]
      %v750 = vld [vmem:[%s2 + $0xb8] sm:$0xff]
      %v751 = vld [vmem:[%s2 + $0xc0] sm:$0xff]
      %v752 = vld [vmem:[%s2 + $0xc8] sm:$0xff]
      %v753 = vld [vmem:[%s2 + $0xd0] sm:$0xff]
      %v754 = vld [vmem:[%s2 + $0xd8] sm:$0xff]
      %v755 = vld [vmem:[%s2 + $0xe0] sm:$0xff]
      %v756 = vld [vmem:[%s2 + $0xe8] sm:$0xff]
      %v757 = vld [vmem:[%s2 + $0xf0] sm:$0xff]
      %v758 = vld [vmem:[%s2 + $0xf8] sm:$0xff]
      %v759 = vld [vmem:[%s2 + $0x100] sm:$0xff]
      %v760 = vld [vmem:[%s2 + $0x108] sm:$0xff]
      %v761 = vld [vmem:[%s2 + $0x110] sm:$0xff]
      %v762 = vld [vmem:[%s2 + $0x118] sm:$0xff]
      %v763 = vld [vmem:[%s2 + $0x120] sm:$0xff]
      %v764 = vld [vmem:[%s2 + $0x128] sm:$0xff]
      %v765 = vld [vmem:[%s2 + $0x130] sm:$0xff]
      %v766 = vld [vmem:[%s2 + $0x138] sm:$0xff]
      %v767 = vld [vmem:[%s2 + $0x140] sm:$0xff]
      %v768 = vld [vmem:[%s2 + $0x148] sm:$0xff]
      %v769 = vld [vmem:[%s2 + $0x150] sm:$0xff]
      %v770 = vld [vmem:[%s2 + $0x158] sm:$0xff]
      %v771 = vld [vmem:[%s2 + $0x160] sm:$0xff]
      %v772 = vld [vmem:[%s2 + $0x168] sm:$0xff]
      %v773 = vld [vmem:[%s2 + $0x170] sm:$0xff]
      %v774 = vld [vmem:[%s2 + $0x178] sm:$0xff]
      %v775 = vld [vmem:[%s2 + $0x180] sm:$0xff]
      %v776 = vld [vmem:[%s2 + $0x188] sm:$0xff]
      %v777 = vld [vmem:[%s2 + $0x190] sm:$0xff]
      %v778 = vld [vmem:[%s2 + $0x198] sm:$0xff]
      %v779 = vld [vmem:[%s2 + $0x1a0] sm:$0xff]
      %v780 = vld [vmem:[%s2 + $0x1a8] sm:$0xff]
      %v781 = vld [vmem:[%s2 + $0x1b0] sm:$0xff]
      %v782 = vld [vmem:[%s2 + $0x1b8] sm:$0xff]
      %v783 = vld [vmem:[%s2 + $0x1c0] sm:$0xff]
      %v784 = vld [vmem:[%s2 + $0x1c8] sm:$0xff]
      %v785 = vld [vmem:[%s2 + $0x1d0] sm:$0xff]
      %v786 = vld [vmem:[%s2 + $0x1d8] sm:$0xff]
      %v787 = vld [vmem:[%s2 + $0x1e0] sm:$0xff]
      %v788 = vld [vmem:[%s2 + $0x1e8] sm:$0xff]
      %v789 = vld [vmem:[%s2 + $0x1f0] sm:$0xff]
      %v790 = vld [vmem:[%s2 + $0x1f8] sm:$0xff]
      %791 = vmatprep.subr.mxu0 %v728
      %792 = vmatpush1.msra.mxu0 %v727
      %793 = vmatprep.subr.mxu0 %v732
      %794 = vmatpush1.msra.mxu0 %v731
      %795 = vmatprep.subr.mxu0 %v736
      %796 = vmatpush1.msra.mxu0 %v735
      %797 = vmatprep.subr.mxu0 %v740
      %798 = vmatpush1.msra.mxu0 %v739
      %799 = vmatprep.subr.mxu0 %v744
      %800 = vmatpush1.msra.mxu0 %v743
      %801 = vmatprep.subr.mxu0 %v748
      %802 = vmatpush1.msra.mxu0 %v747
      %803 = vmatprep.subr.mxu0 %v752
      %804 = vmatpush1.msra.mxu0 %v751
      %805 = vmatprep.subr.mxu0 %v756
      %806 = vmatpush1.msra.mxu0 %v755
      %807 = vmatprep.subr.mxu0 %v760
      %808 = vmatpush1.msra.mxu0 %v759
      %809 = vmatprep.subr.mxu0 %v764
      %810 = vmatpush1.msra.mxu0 %v763
      %811 = vmatprep.subr.mxu0 %v768
      %812 = vmatpush1.msra.mxu0 %v767
      %813 = vmatprep.subr.mxu0 %v772
      %814 = vmatpush1.msra.mxu0 %v771
      %815 = vmatprep.subr.mxu0 %v776
      %816 = vmatpush1.msra.mxu0 %v775
      %817 = vmatprep.subr.mxu0 %v780
      %818 = vmatpush1.msra.mxu0 %v779
      %819 = vmatprep.subr.mxu0 %v784
      %820 = vmatpush1.msra.mxu0 %v783
      %821 = vmatprep.subr.mxu0 %v788
      %822 = vmatpush1.msra.mxu0 %v787
      %823 = vmatprep.subr.mxu0 0.0
      %824 = vmatpush1.msra.mxu0 0.0
      %825 = vmatprep.subr.mxu0 0.0
      %826 = vmatpush1.msra.mxu0 0.0
      %827 = vmatprep.subr.mxu0 0.0
      %828 = vmatpush1.msra.mxu0 0.0
      %829 = vmatprep.subr.mxu0 0.0
      %830 = vmatpush1.msra.mxu0 0.0
      %831 = vmatprep.subr.mxu0 0.0
      %832 = vmatpush1.msra.mxu0 0.0
      %833 = vmatprep.subr.mxu0 0.0
      %834 = vmatpush1.msra.mxu0 0.0
      %835 = vmatprep.subr.mxu0 0.0
      %836 = vmatpush1.msra.mxu0 0.0
      %837 = vmatprep.subr.mxu0 0.0
      %838 = vmatpush1.msra.mxu0 0.0
      %839 = vmatprep.subr.mxu0 0.0
      %840 = vmatpush1.msra.mxu0 0.0
      %841 = vmatprep.subr.mxu0 0.0
      %842 = vmatpush1.msra.mxu0 0.0
      %843 = vmatprep.subr.mxu0 0.0
      %844 = vmatpush1.msra.mxu0 0.0
      %845 = vmatprep.subr.mxu0 0.0
      %846 = vmatpush1.msra.mxu0 0.0
      %847 = vmatprep.subr.mxu0 0.0
      %848 = vmatpush1.msra.mxu0 0.0
      %849 = vmatprep.subr.mxu0 0.0
      %850 = vmatpush1.msra.mxu0 0.0
      %851 = vmatprep.subr.mxu0 0.0
      %852 = vmatpush1.msra.mxu0 0.0
      %853 = vmatprep.subr.mxu0 0.0
      %854 = vmatpush1.msra.mxu0 0.0
      %855 = vmatprep.mubr.f32.mxu0 0.0
      %856 = vmatmul.mubr.f32.gmra.mrb[0].mxu0 %v718
      %v857 = vpop.f32.mrb[0].mxu0
      %v858 = vadd.f32 0.0, %v857
      %v859 = vpop.f32.mrb[0].mxu0
      %v860 = vadd.f32 0.0, %v859
      %861 = vdwg.mxu0
      %862 = vmatprep.subr.mxu0 %v730
      %863 = vmatpush1.msra.mxu0 %v729
      %864 = vmatprep.subr.mxu0 %v734
      %865 = vmatpush1.msra.mxu0 %v733
      %866 = vmatprep.subr.mxu0 %v738
      %867 = vmatpush1.msra.mxu0 %v737
      %868 = vmatprep.subr.mxu0 %v742
      %869 = vmatpush1.msra.mxu0 %v741
      %870 = vmatprep.subr.mxu0 %v746
      %871 = vmatpush1.msra.mxu0 %v745
      %872 = vmatprep.subr.mxu0 %v750
      %873 = vmatpush1.msra.mxu0 %v749
      %874 = vmatprep.subr.mxu0 %v754
      %875 = vmatpush1.msra.mxu0 %v753
      %876 = vmatprep.subr.mxu0 %v758
      %877 = vmatpush1.msra.mxu0 %v757
      %878 = vmatprep.subr.mxu0 %v762
      %879 = vmatpush1.msra.mxu0 %v761
      %880 = vmatprep.subr.mxu0 %v766
      %881 = vmatpush1.msra.mxu0 %v765
      %882 = vmatprep.subr.mxu0 %v770
      %883 = vmatpush1.msra.mxu0 %v769
      %884 = vmatprep.subr.mxu0 %v774
      %885 = vmatpush1.msra.mxu0 %v773
      %886 = vmatprep.subr.mxu0 %v778
      %887 = vmatpush1.msra.mxu0 %v777
      %888 = vmatprep.subr.mxu0 %v782
      %889 = vmatpush1.msra.mxu0 %v781
      %890 = vmatprep.subr.mxu0 %v786
      %891 = vmatpush1.msra.mxu0 %v785
      %892 = vmatprep.subr.mxu0 %v790
      %893 = vmatpush1.msra.mxu0 %v789
      %894 = vmatprep.subr.mxu0 0.0
      %895 = vmatpush1.msra.mxu0 0.0
      %896 = vmatprep.subr.mxu0 0.0
      %897 = vmatpush1.msra.mxu0 0.0
      %898 = vmatprep.subr.mxu0 0.0
      %899 = vmatpush1.msra.mxu0 0.0
      %900 = vmatprep.subr.mxu0 0.0
      %901 = vmatpush1.msra.mxu0 0.0
      %902 = vmatprep.subr.mxu0 0.0
      %903 = vmatpush1.msra.mxu0 0.0
      %904 = vmatprep.subr.mxu0 0.0
      %905 = vmatpush1.msra.mxu0 0.0
      %906 = vmatprep.subr.mxu0 0.0
      %907 = vmatpush1.msra.mxu0 0.0
      %908 = vmatprep.subr.mxu0 0.0
      %909 = vmatpush1.msra.mxu0 0.0
      %910 = vmatprep.subr.mxu0 0.0
      %911 = vmatpush1.msra.mxu0 0.0
      %912 = vmatprep.subr.mxu0 0.0
      %913 = vmatpush1.msra.mxu0 0.0
      %914 = vmatprep.subr.mxu0 0.0
      %915 = vmatpush1.msra.mxu0 0.0
      %916 = vmatprep.subr.mxu0 0.0
      %917 = vmatpush1.msra.mxu0 0.0
      %918 = vmatprep.subr.mxu0 0.0
      %919 = vmatpush1.msra.mxu0 0.0
      %920 = vmatprep.subr.mxu0 0.0
      %921 = vmatpush1.msra.mxu0 0.0
      %922 = vmatprep.subr.mxu0 0.0
      %923 = vmatpush1.msra.mxu0 0.0
      %924 = vmatprep.subr.mxu0 0.0
      %925 = vmatpush1.msra.mxu0 0.0
      %926 = vmatprep.mubr.f32.mxu0 0.0
      %927 = vmatmul.mubr.f32.gmra.mrb[0].mxu0 %v718
      %v928 = vpop.f32.mrb[0].mxu0
      %v929 = vadd.f32 0.0, %v928
      %v930 = vpop.f32.mrb[0].mxu0
      %v931 = vadd.f32 0.0, %v930
      %932 = vdwg.mxu0
      %v933 = vadd.f32 %v723, %v858
      %v934 = vadd.f32 %v724, %v860
      %v935 = vadd.f32 %v725, %v929
      %v936 = vadd.f32 %v726, %v931
      %v937 = vxor.u32 %v933, 2147483648
      %v938 = vmul.f32 %v937, 1.442695
      %v939 = vpow.pop %v938
      %v940 = vadd.f32 %v939, 1.0
      %v941 = vrcp.pop %v940
      %v942 = vmul.f32 1.0, %v941
      %v943 = vxor.u32 %v934, 2147483648
      %v944 = vmul.f32 %v943, 1.442695
      %v945 = vpow.pop %v944
      %v946 = vadd.f32 %v945, 1.0
      %v947 = vrcp.pop %v946
      %v948 = vmul.f32 1.0, %v947
      %v949 = vtanh.pop %v935
      %v950 = vxor.u32 %v936, 2147483648
      %v951 = vmul.f32 %v950, 1.442695
      %v952 = vpow.pop %v951
      %v953 = vadd.f32 %v952, 1.0
      %v954 = vrcp.pop %v953
      %v955 = vmul.f32 1.0, %v954
      %v956 = vmul.f32 %v948, %v719
      %v957 = vmul.f32 %v942, %v949
      %v958 = vadd.f32 %v956, %v957
      %v959 = vtanh.pop %v958
      %v960 = vmul.f32 %v955, %v959
      %s961 = smul.u32 %s22, 5
      %p962 = scmp.lt.s32.totalorder %s961, 8
      %s963 = scalar_select %p962, 1, 0
      %s964 = scvt.s32.f32 %s963
      %v965 = vstv %s964
      %v966 = vmul.f32 %v965, %v958
      %s967 = ssub.f32 1.0, %s964
      %v968 = vstv %s967
      %v969 = vmul.f32 %v968, %v719
      %v970 = vadd.f32 %v966, %v969
      %v971 = vmul.f32 %v965, %v960
      %v972 = vmul.f32 %v968, %v718
      %v973 = vadd.f32 %v971, %v972
      %974 = vst [vmem:[#allocation3] sm:$0xff] %v970
      %975 = vst [vmem:[#allocation2] sm:$0xff] %v973
      %976 = vst [vmem:[#allocation4] sm:$0xff] %v973
      %v977 = vld [vmem:[#allocation2] sm:$0xff]
      %v978 = vld [vmem:[#allocation3] sm:$0xff]
      %s979 = smul.u32 1, 4
      %s980 = smul.addr %s979, 8
      %s981 = scalar_lea.vmem [#allocation5], %s980
      %v982 = vld [vmem:[%s981] sm:$0xff]
      %v983 = vld [vmem:[%s981 + $0x8] sm:$0xff]
      %v984 = vld [vmem:[%s981 + $0x10] sm:$0xff]
      %v985 = vld [vmem:[%s981 + $0x18] sm:$0xff]
      %v986 = vld [vmem:[%s2] sm:$0xff]
      %v987 = vld [vmem:[%s2 + $0x8] sm:$0xff]
      %v988 = vld [vmem:[%s2 + $0x10] sm:$0xff]
      %v989 = vld [vmem:[%s2 + $0x18] sm:$0xff]
      %v990 = vld [vmem:[%s2 + $0x20] sm:$0xff]
      %v991 = vld [vmem:[%s2 + $0x28] sm:$0xff]
      %v992 = vld [vmem:[%s2 + $0x30] sm:$0xff]
      %v993 = vld [vmem:[%s2 + $0x38] sm:$0xff]
      %v994 = vld [vmem:[%s2 + $0x40] sm:$0xff]
      %v995 = vld [vmem:[%s2 + $0x48] sm:$0xff]
      %v996 = vld [vmem:[%s2 + $0x50] sm:$0xff]
      %v997 = vld [vmem:[%s2 + $0x58] sm:$0xff]
      %v998 = vld [vmem:[%s2 + $0x60] sm:$0xff]
      %v999 = vld [vmem:[%s2 + $0x68] sm:$0xff]
      %v1000 = vld [vmem:[%s2 + $0x70] sm:$0xff]
      %v1001 = vld [vmem:[%s2 + $0x78] sm:$0xff]
      %v1002 = vld [vmem:[%s2 + $0x80] sm:$0xff]
      %v1003 = vld [vmem:[%s2 + $0x88] sm:$0xff]
      %v1004 = vld [vmem:[%s2 + $0x90] sm:$0xff]
      %v1005 = vld [vmem:[%s2 + $0x98] sm:$0xff]
      %v1006 = vld [vmem:[%s2 + $0xa0] sm:$0xff]
      %v1007 = vld [vmem:[%s2 + $0xa8] sm:$0xff]
      %v1008 = vld [vmem:[%s2 + $0xb0] sm:$0xff]
      %v1009 = vld [vmem:[%s2 + $0xb8] sm:$0xff]
      %v1010 = vld [vmem:[%s2 + $0xc0] sm:$0xff]
      %v1011 = vld [vmem:[%s2 + $0xc8] sm:$0xff]
      %v1012 = vld [vmem:[%s2 + $0xd0] sm:$0xff]
      %v1013 = vld [vmem:[%s2 + $0xd8] sm:$0xff]
      %v1014 = vld [vmem:[%s2 + $0xe0] sm:$0xff]
      %v1015 = vld [vmem:[%s2 + $0xe8] sm:$0xff]
      %v1016 = vld [vmem:[%s2 + $0xf0] sm:$0xff]
      %v1017 = vld [vmem:[%s2 + $0xf8] sm:$0xff]
      %v1018 = vld [vmem:[%s2 + $0x100] sm:$0xff]
      %v1019 = vld [vmem:[%s2 + $0x108] sm:$0xff]
      %v1020 = vld [vmem:[%s2 + $0x110] sm:$0xff]
      %v1021 = vld [vmem:[%s2 + $0x118] sm:$0xff]
      %v1022 = vld [vmem:[%s2 + $0x120] sm:$0xff]
      %v1023 = vld [vmem:[%s2 + $0x128] sm:$0xff]
      %v1024 = vld [vmem:[%s2 + $0x130] sm:$0xff]
      %v1025 = vld [vmem:[%s2 + $0x138] sm:$0xff]
      %v1026 = vld [vmem:[%s2 + $0x140] sm:$0xff]
      %v1027 = vld [vmem:[%s2 + $0x148] sm:$0xff]
      %v1028 = vld [vmem:[%s2 + $0x150] sm:$0xff]
      %v1029 = vld [vmem:[%s2 + $0x158] sm:$0xff]
      %v1030 = vld [vmem:[%s2 + $0x160] sm:$0xff]
      %v1031 = vld [vmem:[%s2 + $0x168] sm:$0xff]
      %v1032 = vld [vmem:[%s2 + $0x170] sm:$0xff]
      %v1033 = vld [vmem:[%s2 + $0x178] sm:$0xff]
      %v1034 = vld [vmem:[%s2 + $0x180] sm:$0xff]
      %v1035 = vld [vmem:[%s2 + $0x188] sm:$0xff]
      %v1036 = vld [vmem:[%s2 + $0x190] sm:$0xff]
      %v1037 = vld [vmem:[%s2 + $0x198] sm:$0xff]
      %v1038 = vld [vmem:[%s2 + $0x1a0] sm:$0xff]
      %v1039 = vld [vmem:[%s2 + $0x1a8] sm:$0xff]
      %v1040 = vld [vmem:[%s2 + $0x1b0] sm:$0xff]
      %v1041 = vld [vmem:[%s2 + $0x1b8] sm:$0xff]
      %v1042 = vld [vmem:[%s2 + $0x1c0] sm:$0xff]
      %v1043 = vld [vmem:[%s2 + $0x1c8] sm:$0xff]
      %v1044 = vld [vmem:[%s2 + $0x1d0] sm:$0xff]
      %v1045 = vld [vmem:[%s2 + $0x1d8] sm:$0xff]
      %v1046 = vld [vmem:[%s2 + $0x1e0] sm:$0xff]
      %v1047 = vld [vmem:[%s2 + $0x1e8] sm:$0xff]
      %v1048 = vld [vmem:[%s2 + $0x1f0] sm:$0xff]
      %v1049 = vld [vmem:[%s2 + $0x1f8] sm:$0xff]
      %1050 = vmatprep.subr.mxu0 %v987
      %1051 = vmatpush1.msra.mxu0 %v986
      %1052 = vmatprep.subr.mxu0 %v991
      %1053 = vmatpush1.msra.mxu0 %v990
      %1054 = vmatprep.subr.mxu0 %v995
      %1055 = vmatpush1.msra.mxu0 %v994
      %1056 = vmatprep.subr.mxu0 %v999
      %1057 = vmatpush1.msra.mxu0 %v998
      %1058 = vmatprep.subr.mxu0 %v1003
      %1059 = vmatpush1.msra.mxu0 %v1002
      %1060 = vmatprep.subr.mxu0 %v1007
      %1061 = vmatpush1.msra.mxu0 %v1006
      %1062 = vmatprep.subr.mxu0 %v1011
      %1063 = vmatpush1.msra.mxu0 %v1010
      %1064 = vmatprep.subr.mxu0 %v1015
      %1065 = vmatpush1.msra.mxu0 %v1014
      %1066 = vmatprep.subr.mxu0 %v1019
      %1067 = vmatpush1.msra.mxu0 %v1018
      %1068 = vmatprep.subr.mxu0 %v1023
      %1069 = vmatpush1.msra.mxu0 %v1022
      %1070 = vmatprep.subr.mxu0 %v1027
      %1071 = vmatpush1.msra.mxu0 %v1026
      %1072 = vmatprep.subr.mxu0 %v1031
      %1073 = vmatpush1.msra.mxu0 %v1030
      %1074 = vmatprep.subr.mxu0 %v1035
      %1075 = vmatpush1.msra.mxu0 %v1034
      %1076 = vmatprep.subr.mxu0 %v1039
      %1077 = vmatpush1.msra.mxu0 %v1038
      %1078 = vmatprep.subr.mxu0 %v1043
      %1079 = vmatpush1.msra.mxu0 %v1042
      %1080 = vmatprep.subr.mxu0 %v1047
      %1081 = vmatpush1.msra.mxu0 %v1046
      %1082 = vmatprep.subr.mxu0 0.0
      %1083 = vmatpush1.msra.mxu0 0.0
      %1084 = vmatprep.subr.mxu0 0.0
      %1085 = vmatpush1.msra.mxu0 0.0
      %1086 = vmatprep.subr.mxu0 0.0
      %1087 = vmatpush1.msra.mxu0 0.0
      %1088 = vmatprep.subr.mxu0 0.0
      %1089 = vmatpush1.msra.mxu0 0.0
      %1090 = vmatprep.subr.mxu0 0.0
      %1091 = vmatpush1.msra.mxu0 0.0
      %1092 = vmatprep.subr.mxu0 0.0
      %1093 = vmatpush1.msra.mxu0 0.0
      %1094 = vmatprep.subr.mxu0 0.0
      %1095 = vmatpush1.msra.mxu0 0.0
      %1096 = vmatprep.subr.mxu0 0.0
      %1097 = vmatpush1.msra.mxu0 0.0
      %1098 = vmatprep.subr.mxu0 0.0
      %1099 = vmatpush1.msra.mxu0 0.0
      %1100 = vmatprep.subr.mxu0 0.0
      %1101 = vmatpush1.msra.mxu0 0.0
      %1102 = vmatprep.subr.mxu0 0.0
      %1103 = vmatpush1.msra.mxu0 0.0
      %1104 = vmatprep.subr.mxu0 0.0
      %1105 = vmatpush1.msra.mxu0 0.0
      %1106 = vmatprep.subr.mxu0 0.0
      %1107 = vmatpush1.msra.mxu0 0.0
      %1108 = vmatprep.subr.mxu0 0.0
      %1109 = vmatpush1.msra.mxu0 0.0
      %1110 = vmatprep.subr.mxu0 0.0
      %1111 = vmatpush1.msra.mxu0 0.0
      %1112 = vmatprep.subr.mxu0 0.0
      %1113 = vmatpush1.msra.mxu0 0.0
      %1114 = vmatprep.mubr.f32.mxu0 0.0
      %1115 = vmatmul.mubr.f32.gmra.mrb[0].mxu0 %v977
      %v1116 = vpop.f32.mrb[0].mxu0
      %v1117 = vadd.f32 0.0, %v1116
      %v1118 = vpop.f32.mrb[0].mxu0
      %v1119 = vadd.f32 0.0, %v1118
      %1120 = vdwg.mxu0
      %1121 = vmatprep.subr.mxu0 %v989
      %1122 = vmatpush1.msra.mxu0 %v988
      %1123 = vmatprep.subr.mxu0 %v993
      %1124 = vmatpush1.msra.mxu0 %v992
      %1125 = vmatprep.subr.mxu0 %v997
      %1126 = vmatpush1.msra.mxu0 %v996
      %1127 = vmatprep.subr.mxu0 %v1001
      %1128 = vmatpush1.msra.mxu0 %v1000
      %1129 = vmatprep.subr.mxu0 %v1005
      %1130 = vmatpush1.msra.mxu0 %v1004
      %1131 = vmatprep.subr.mxu0 %v1009
      %1132 = vmatpush1.msra.mxu0 %v1008
      %1133 = vmatprep.subr.mxu0 %v1013
      %1134 = vmatpush1.msra.mxu0 %v1012
      %1135 = vmatprep.subr.mxu0 %v1017
      %1136 = vmatpush1.msra.mxu0 %v1016
      %1137 = vmatprep.subr.mxu0 %v1021
      %1138 = vmatpush1.msra.mxu0 %v1020
      %1139 = vmatprep.subr.mxu0 %v1025
      %1140 = vmatpush1.msra.mxu0 %v1024
      %1141 = vmatprep.subr.mxu0 %v1029
      %1142 = vmatpush1.msra.mxu0 %v1028
      %1143 = vmatprep.subr.mxu0 %v1033
      %1144 = vmatpush1.msra.mxu0 %v1032
      %1145 = vmatprep.subr.mxu0 %v1037
      %1146 = vmatpush1.msra.mxu0 %v1036
      %1147 = vmatprep.subr.mxu0 %v1041
      %1148 = vmatpush1.msra.mxu0 %v1040
      %1149 = vmatprep.subr.mxu0 %v1045
      %1150 = vmatpush1.msra.mxu0 %v1044
      %1151 = vmatprep.subr.mxu0 %v1049
      %1152 = vmatpush1.msra.mxu0 %v1048
      %1153 = vmatprep.subr.mxu0 0.0
      %1154 = vmatpush1.msra.mxu0 0.0
      %1155 = vmatprep.subr.mxu0 0.0
      %1156 = vmatpush1.msra.mxu0 0.0
      %1157 = vmatprep.subr.mxu0 0.0
      %1158 = vmatpush1.msra.mxu0 0.0
      %1159 = vmatprep.subr.mxu0 0.0
      %1160 = vmatpush1.msra.mxu0 0.0
      %1161 = vmatprep.subr.mxu0 0.0
      %1162 = vmatpush1.msra.mxu0 0.0
      %1163 = vmatprep.subr.mxu0 0.0
      %1164 = vmatpush1.msra.mxu0 0.0
      %1165 = vmatprep.subr.mxu0 0.0
      %1166 = vmatpush1.msra.mxu0 0.0
      %1167 = vmatprep.subr.mxu0 0.0
      %1168 = vmatpush1.msra.mxu0 0.0
      %1169 = vmatprep.subr.mxu0 0.0
      %1170 = vmatpush1.msra.mxu0 0.0
      %1171 = vmatprep.subr.mxu0 0.0
      %1172 = vmatpush1.msra.mxu0 0.0
      %1173 = vmatprep.subr.mxu0 0.0
      %1174 = vmatpush1.msra.mxu0 0.0
      %1175 = vmatprep.subr.mxu0 0.0
      %1176 = vmatpush1.msra.mxu0 0.0
      %1177 = vmatprep.subr.mxu0 0.0
      %1178 = vmatpush1.msra.mxu0 0.0
      %1179 = vmatprep.subr.mxu0 0.0
      %1180 = vmatpush1.msra.mxu0 0.0
      %1181 = vmatprep.subr.mxu0 0.0
      %1182 = vmatpush1.msra.mxu0 0.0
      %1183 = vmatprep.subr.mxu0 0.0
      %1184 = vmatpush1.msra.mxu0 0.0
      %1185 = vmatprep.mubr.f32.mxu0 0.0
      %1186 = vmatmul.mubr.f32.gmra.mrb[0].mxu0 %v977
      %v1187 = vpop.f32.mrb[0].mxu0
      %v1188 = vadd.f32 0.0, %v1187
      %v1189 = vpop.f32.mrb[0].mxu0
      %v1190 = vadd.f32 0.0, %v1189
      %1191 = vdwg.mxu0
      %v1192 = vadd.f32 %v982, %v1117
      %v1193 = vadd.f32 %v983, %v1119
      %v1194 = vadd.f32 %v984, %v1188
      %v1195 = vadd.f32 %v985, %v1190
      %v1196 = vxor.u32 %v1192, 2147483648
      %v1197 = vmul.f32 %v1196, 1.442695
      %v1198 = vpow.pop %v1197
      %v1199 = vadd.f32 %v1198, 1.0
      %v1200 = vrcp.pop %v1199
      %v1201 = vmul.f32 1.0, %v1200
      %v1202 = vxor.u32 %v1193, 2147483648
      %v1203 = vmul.f32 %v1202, 1.442695
      %v1204 = vpow.pop %v1203
      %v1205 = vadd.f32 %v1204, 1.0
      %v1206 = vrcp.pop %v1205
      %v1207 = vmul.f32 1.0, %v1206
      %v1208 = vtanh.pop %v1194
      %v1209 = vxor.u32 %v1195, 2147483648
      %v1210 = vmul.f32 %v1209, 1.442695
      %v1211 = vpow.pop %v1210
      %v1212 = vadd.f32 %v1211, 1.0
      %v1213 = vrcp.pop %v1212
      %v1214 = vmul.f32 1.0, %v1213
      %v1215 = vmul.f32 %v1207, %v978
      %v1216 = vmul.f32 %v1201, %v1208
      %v1217 = vadd.f32 %v1215, %v1216
      %v1218 = vtanh.pop %v1217
      %v1219 = vmul.f32 %v1214, %v1218
      %s1220 = sadd.s32 %s961, 1
      %p1221 = scmp.lt.s32.totalorder %s1220, 8
      %s1222 = scalar_select %p1221, 1, 0
      %s1223 = scvt.s32.f32 %s1222
      %v1224 = vstv %s1223
      %v1225 = vmul.f32 %v1224, %v1217
      %s1226 = ssub.f32 1.0, %s1223
      %v1227 = vstv %s1226
      %v1228 = vmul.f32 %v1227, %v978
      %v1229 = vadd.f32 %v1225, %v1228
      %v1230 = vmul.f32 %v1224, %v1219
      %v1231 = vmul.f32 %v1227, %v977
      %v1232 = vadd.f32 %v1230, %v1231
      %1233 = vst [vmem:[#allocation3] sm:$0xff] %v1229
      %1234 = vst [vmem:[#allocation2] sm:$0xff] %v1232
      %s1235 = scalar_lea.vmem [#allocation4], 8
      %1236 = vst [vmem:[%s1235] sm:$0xff] %v1232
      %v1237 = vld [vmem:[#allocation2] sm:$0xff]
      %v1238 = vld [vmem:[#allocation3] sm:$0xff]
      %s1239 = smul.u32 2, 4
      %s1240 = smul.addr %s1239, 8
      %s1241 = scalar_lea.vmem [#allocation5], %s1240
      %v1242 = vld [vmem:[%s1241] sm:$0xff]
      %v1243 = vld [vmem:[%s1241 + $0x8] sm:$0xff]
      %v1244 = vld [vmem:[%s1241 + $0x10] sm:$0xff]
      %v1245 = vld [vmem:[%s1241 + $0x18] sm:$0xff]
      %v1246 = vld [vmem:[%s2] sm:$0xff]
      %v1247 = vld [vmem:[%s2 + $0x8] sm:$0xff]
      %v1248 = vld [vmem:[%s2 + $0x10] sm:$0xff]
      %v1249 = vld [vmem:[%s2 + $0x18] sm:$0xff]
      %v1250 = vld [vmem:[%s2 + $0x20] sm:$0xff]
      %v1251 = vld [vmem:[%s2 + $0x28] sm:$0xff]
      %v1252 = vld [vmem:[%s2 + $0x30] sm:$0xff]
      %v1253 = vld [vmem:[%s2 + $0x38] sm:$0xff]
      %v1254 = vld [vmem:[%s2 + $0x40] sm:$0xff]
      %v1255 = vld [vmem:[%s2 + $0x48] sm:$0xff]
      %v1256 = vld [vmem:[%s2 + $0x50] sm:$0xff]
      %v1257 = vld [vmem:[%s2 + $0x58] sm:$0xff]
      %v1258 = vld [vmem:[%s2 + $0x60] sm:$0xff]
      %v1259 = vld [vmem:[%s2 + $0x68] sm:$0xff]
      %v1260 = vld [vmem:[%s2 + $0x70] sm:$0xff]
      %v1261 = vld [vmem:[%s2 + $0x78] sm:$0xff]
      %v1262 = vld [vmem:[%s2 + $0x80] sm:$0xff]
      %v1263 = vld [vmem:[%s2 + $0x88] sm:$0xff]
      %v1264 = vld [vmem:[%s2 + $0x90] sm:$0xff]
      %v1265 = vld [vmem:[%s2 + $0x98] sm:$0xff]
      %v1266 = vld [vmem:[%s2 + $0xa0] sm:$0xff]
      %v1267 = vld [vmem:[%s2 + $0xa8] sm:$0xff]
      %v1268 = vld [vmem:[%s2 + $0xb0] sm:$0xff]
      %v1269 = vld [vmem:[%s2 + $0xb8] sm:$0xff]
      %v1270 = vld [vmem:[%s2 + $0xc0] sm:$0xff]
      %v1271 = vld [vmem:[%s2 + $0xc8] sm:$0xff]
      %v1272 = vld [vmem:[%s2 + $0xd0] sm:$0xff]
      %v1273 = vld [vmem:[%s2 + $0xd8] sm:$0xff]
      %v1274 = vld [vmem:[%s2 + $0xe0] sm:$0xff]
      %v1275 = vld [vmem:[%s2 + $0xe8] sm:$0xff]
      %v1276 = vld [vmem:[%s2 + $0xf0] sm:$0xff]
      %v1277 = vld [vmem:[%s2 + $0xf8] sm:$0xff]
      %v1278 = vld [vmem:[%s2 + $0x100] sm:$0xff]
      %v1279 = vld [vmem:[%s2 + $0x108] sm:$0xff]
      %v1280 = vld [vmem:[%s2 + $0x110] sm:$0xff]
      %v1281 = vld [vmem:[%s2 + $0x118] sm:$0xff]
      %v1282 = vld [vmem:[%s2 + $0x120] sm:$0xff]
      %v1283 = vld [vmem:[%s2 + $0x128] sm:$0xff]
      %v1284 = vld [vmem:[%s2 + $0x130] sm:$0xff]
      %v1285 = vld [vmem:[%s2 + $0x138] sm:$0xff]
      %v1286 = vld [vmem:[%s2 + $0x140] sm:$0xff]
      %v1287 = vld [vmem:[%s2 + $0x148] sm:$0xff]
      %v1288 = vld [vmem:[%s2 + $0x150] sm:$0xff]
      %v1289 = vld [vmem:[%s2 + $0x158] sm:$0xff]
      %v1290 = vld [vmem:[%s2 + $0x160] sm:$0xff]
      %v1291 = vld [vmem:[%s2 + $0x168] sm:$0xff]
      %v1292 = vld [vmem:[%s2 + $0x170] sm:$0xff]
      %v1293 = vld [vmem:[%s2 + $0x178] sm:$0xff]
      %v1294 = vld [vmem:[%s2 + $0x180] sm:$0xff]
      %v1295 = vld [vmem:[%s2 + $0x188] sm:$0xff]
      %v1296 = vld [vmem:[%s2 + $0x190] sm:$0xff]
      %v1297 = vld [vmem:[%s2 + $0x198] sm:$0xff]
      %v1298 = vld [vmem:[%s2 + $0x1a0] sm:$0xff]
      %v1299 = vld [vmem:[%s2 + $0x1a8] sm:$0xff]
      %v1300 = vld [vmem:[%s2 + $0x1b0] sm:$0xff]
      %v1301 = vld [vmem:[%s2 + $0x1b8] sm:$0xff]
      %v1302 = vld [vmem:[%s2 + $0x1c0] sm:$0xff]
      %v1303 = vld [vmem:[%s2 + $0x1c8] sm:$0xff]
      %v1304 = vld [vmem:[%s2 + $0x1d0] sm:$0xff]
      %v1305 = vld [vmem:[%s2 + $0x1d8] sm:$0xff]
      %v1306 = vld [vmem:[%s2 + $0x1e0] sm:$0xff]
      %v1307 = vld [vmem:[%s2 + $0x1e8] sm:$0xff]
      %v1308 = vld [vmem:[%s2 + $0x1f0] sm:$0xff]
      %v1309 = vld [vmem:[%s2 + $0x1f8] sm:$0xff]
      %1310 = vmatprep.subr.mxu0 %v1247
      %1311 = vmatpush1.msra.mxu0 %v1246
      %1312 = vmatprep.subr.mxu0 %v1251
      %1313 = vmatpush1.msra.mxu0 %v1250
      %1314 = vmatprep.subr.mxu0 %v1255
      %1315 = vmatpush1.msra.mxu0 %v1254
      %1316 = vmatprep.subr.mxu0 %v1259
      %1317 = vmatpush1.msra.mxu0 %v1258
      %1318 = vmatprep.subr.mxu0 %v1263
      %1319 = vmatpush1.msra.mxu0 %v1262
      %1320 = vmatprep.subr.mxu0 %v1267
      %1321 = vmatpush1.msra.mxu0 %v1266
      %1322 = vmatprep.subr.mxu0 %v1271
      %1323 = vmatpush1.msra.mxu0 %v1270
      %1324 = vmatprep.subr.mxu0 %v1275
      %1325 = vmatpush1.msra.mxu0 %v1274
      %1326 = vmatprep.subr.mxu0 %v1279
      %1327 = vmatpush1.msra.mxu0 %v1278
      %1328 = vmatprep.subr.mxu0 %v1283
      %1329 = vmatpush1.msra.mxu0 %v1282
      %1330 = vmatprep.subr.mxu0 %v1287
      %1331 = vmatpush1.msra.mxu0 %v1286
      %1332 = vmatprep.subr.mxu0 %v1291
      %1333 = vmatpush1.msra.mxu0 %v1290
      %1334 = vmatprep.subr.mxu0 %v1295
      %1335 = vmatpush1.msra.mxu0 %v1294
      %1336 = vmatprep.subr.mxu0 %v1299
      %1337 = vmatpush1.msra.mxu0 %v1298
      %1338 = vmatprep.subr.mxu0 %v1303
      %1339 = vmatpush1.msra.mxu0 %v1302
      %1340 = vmatprep.subr.mxu0 %v1307
      %1341 = vmatpush1.msra.mxu0 %v1306
      %1342 = vmatprep.subr.mxu0 0.0
      %1343 = vmatpush1.msra.mxu0 0.0
      %1344 = vmatprep.subr.mxu0 0.0
      %1345 = vmatpush1.msra.mxu0 0.0
      %1346 = vmatprep.subr.mxu0 0.0
      %1347 = vmatpush1.msra.mxu0 0.0
      %1348 = vmatprep.subr.mxu0 0.0
      %1349 = vmatpush1.msra.mxu0 0.0
      %1350 = vmatprep.subr.mxu0 0.0
      %1351 = vmatpush1.msra.mxu0 0.0
      %1352 = vmatprep.subr.mxu0 0.0
      %1353 = vmatpush1.msra.mxu0 0.0
      %1354 = vmatprep.subr.mxu0 0.0
      %1355 = vmatpush1.msra.mxu0 0.0
      %1356 = vmatprep.subr.mxu0 0.0
      %1357 = vmatpush1.msra.mxu0 0.0
      %1358 = vmatprep.subr.mxu0 0.0
      %1359 = vmatpush1.msra.mxu0 0.0
      %1360 = vmatprep.subr.mxu0 0.0
      %1361 = vmatpush1.msra.mxu0 0.0
      %1362 = vmatprep.subr.mxu0 0.0
      %1363 = vmatpush1.msra.mxu0 0.0
      %1364 = vmatprep.subr.mxu0 0.0
      %1365 = vmatpush1.msra.mxu0 0.0
      %1366 = vmatprep.subr.mxu0 0.0
      %1367 = vmatpush1.msra.mxu0 0.0
      %1368 = vmatprep.subr.mxu0 0.0
      %1369 = vmatpush1.msra.mxu0 0.0
      %1370 = vmatprep.subr.mxu0 0.0
      %1371 = vmatpush1.msra.mxu0 0.0
      %1372 = vmatprep.subr.mxu0 0.0
      %1373 = vmatpush1.msra.mxu0 0.0
      %1374 = vmatprep.mubr.f32.mxu0 0.0
      %1375 = vmatmul.mubr.f32.gmra.mrb[0].mxu0 %v1237
      %v1376 = vpop.f32.mrb[0].mxu0
      %v1377 = vadd.f32 0.0, %v1376
      %v1378 = vpop.f32.mrb[0].mxu0
      %v1379 = vadd.f32 0.0, %v1378
      %1380 = vdwg.mxu0
      %1381 = vmatprep.subr.mxu0 %v1249
      %1382 = vmatpush1.msra.mxu0 %v1248
      %1383 = vmatprep.subr.mxu0 %v1253
      %1384 = vmatpush1.msra.mxu0 %v1252
      %1385 = vmatprep.subr.mxu0 %v1257
      %1386 = vmatpush1.msra.mxu0 %v1256
      %1387 = vmatprep.subr.mxu0 %v1261
      %1388 = vmatpush1.msra.mxu0 %v1260
      %1389 = vmatprep.subr.mxu0 %v1265
      %1390 = vmatpush1.msra.mxu0 %v1264
      %1391 = vmatprep.subr.mxu0 %v1269
      %1392 = vmatpush1.msra.mxu0 %v1268
      %1393 = vmatprep.subr.mxu0 %v1273
      %1394 = vmatpush1.msra.mxu0 %v1272
      %1395 = vmatprep.subr.mxu0 %v1277
      %1396 = vmatpush1.msra.mxu0 %v1276
      %1397 = vmatprep.subr.mxu0 %v1281
      %1398 = vmatpush1.msra.mxu0 %v1280
      %1399 = vmatprep.subr.mxu0 %v1285
      %1400 = vmatpush1.msra.mxu0 %v1284
      %1401 = vmatprep.subr.mxu0 %v1289
      %1402 = vmatpush1.msra.mxu0 %v1288
      %1403 = vmatprep.subr.mxu0 %v1293
      %1404 = vmatpush1.msra.mxu0 %v1292
      %1405 = vmatprep.subr.mxu0 %v1297
      %1406 = vmatpush1.msra.mxu0 %v1296
      %1407 = vmatprep.subr.mxu0 %v1301
      %1408 = vmatpush1.msra.mxu0 %v1300
      %1409 = vmatprep.subr.mxu0 %v1305
      %1410 = vmatpush1.msra.mxu0 %v1304
      %1411 = vmatprep.subr.mxu0 %v1309
      %1412 = vmatpush1.msra.mxu0 %v1308
      %1413 = vmatprep.subr.mxu0 0.0
      %1414 = vmatpush1.msra.mxu0 0.0
      %1415 = vmatprep.subr.mxu0 0.0
      %1416 = vmatpush1.msra.mxu0 0.0
      %1417 = vmatprep.subr.mxu0 0.0
      %1418 = vmatpush1.msra.mxu0 0.0
      %1419 = vmatprep.subr.mxu0 0.0
      %1420 = vmatpush1.msra.mxu0 0.0
      %1421 = vmatprep.subr.mxu0 0.0
      %1422 = vmatpush1.msra.mxu0 0.0
      %1423 = vmatprep.subr.mxu0 0.0
      %1424 = vmatpush1.msra.mxu0 0.0
      %1425 = vmatprep.subr.mxu0 0.0
      %1426 = vmatpush1.msra.mxu0 0.0
      %1427 = vmatprep.subr.mxu0 0.0
      %1428 = vmatpush1.msra.mxu0 0.0
      %1429 = vmatprep.subr.mxu0 0.0
      %1430 = vmatpush1.msra.mxu0 0.0
      %1431 = vmatprep.subr.mxu0 0.0
      %1432 = vmatpush1.msra.mxu0 0.0
      %1433 = vmatprep.subr.mxu0 0.0
      %1434 = vmatpush1.msra.mxu0 0.0
      %1435 = vmatprep.subr.mxu0 0.0
      %1436 = vmatpush1.msra.mxu0 0.0
      %1437 = vmatprep.subr.mxu0 0.0
      %1438 = vmatpush1.msra.mxu0 0.0
      %1439 = vmatprep.subr.mxu0 0.0
      %1440 = vmatpush1.msra.mxu0 0.0
      %1441 = vmatprep.subr.mxu0 0.0
      %1442 = vmatpush1.msra.mxu0 0.0
      %1443 = vmatprep.subr.mxu0 0.0
      %1444 = vmatpush1.msra.mxu0 0.0
      %1445 = vmatprep.mubr.f32.mxu0 0.0
      %1446 = vmatmul.mubr.f32.gmra.mrb[0].mxu0 %v1237
      %v1447 = vpop.f32.mrb[0].mxu0
      %v1448 = vadd.f32 0.0, %v1447
      %v1449 = vpop.f32.mrb[0].mxu0
      %v1450 = vadd.f32 0.0, %v1449
      %1451 = vdwg.mxu0
      %v1452 = vadd.f32 %v1242, %v1377
      %v1453 = vadd.f32 %v1243, %v1379
      %v1454 = vadd.f32 %v1244, %v1448
      %v1455 = vadd.f32 %v1245, %v1450
      %v1456 = vxor.u32 %v1452, 2147483648
      %v1457 = vmul.f32 %v1456, 1.442695
      %v1458 = vpow.pop %v1457
      %v1459 = vadd.f32 %v1458, 1.0
      %v1460 = vrcp.pop %v1459
      %v1461 = vmul.f32 1.0, %v1460
      %v1462 = vxor.u32 %v1453, 2147483648
      %v1463 = vmul.f32 %v1462, 1.442695
      %v1464 = vpow.pop %v1463
      %v1465 = vadd.f32 %v1464, 1.0
      %v1466 = vrcp.pop %v1465
      %v1467 = vmul.f32 1.0, %v1466
      %v1468 = vtanh.pop %v1454
      %v1469 = vxor.u32 %v1455, 2147483648
      %v1470 = vmul.f32 %v1469, 1.442695
      %v1471 = vpow.pop %v1470
      %v1472 = vadd.f32 %v1471, 1.0
      %v1473 = vrcp.pop %v1472
      %v1474 = vmul.f32 1.0, %v1473
      %v1475 = vmul.f32 %v1467, %v1238
      %v1476 = vmul.f32 %v1461, %v1468
      %v1477 = vadd.f32 %v1475, %v1476
      %v1478 = vtanh.pop %v1477
      %v1479 = vmul.f32 %v1474, %v1478
      %s1480 = sadd.s32 %s961, 2
      %p1481 = scmp.lt.s32.totalorder %s1480, 8
      %s1482 = scalar_select %p1481, 1, 0
      %s1483 = scvt.s32.f32 %s1482
      %v1484 = vstv %s1483
      %v1485 = vmul.f32 %v1484, %v1477
      %s1486 = ssub.f32 1.0, %s1483
      %v1487 = vstv %s1486
      %v1488 = vmul.f32 %v1487, %v1238
      %v1489 = vadd.f32 %v1485, %v1488
      %v1490 = vmul.f32 %v1484, %v1479
      %v1491 = vmul.f32 %v1487, %v1237
      %v1492 = vadd.f32 %v1490, %v1491
      %1493 = vst [vmem:[#allocation3] sm:$0xff] %v1489
      %1494 = vst [vmem:[#allocation2] sm:$0xff] %v1492
      %s1495 = scalar_lea.vmem [#allocation4], 16
      %1496 = vst [vmem:[%s1495] sm:$0xff] %v1492
      %v1497 = vld [vmem:[#allocation2] sm:$0xff]
      %v1498 = vld [vmem:[#allocation3] sm:$0xff]
      %s1499 = smul.u32 3, 4
      %s1500 = smul.addr %s1499, 8
      %s1501 = scalar_lea.vmem [#allocation5], %s1500
      %v1502 = vld [vmem:[%s1501] sm:$0xff]
      %v1503 = vld [vmem:[%s1501 + $0x8] sm:$0xff]
      %v1504 = vld [vmem:[%s1501 + $0x10] sm:$0xff]
      %v1505 = vld [vmem:[%s1501 + $0x18] sm:$0xff]
      %v1506 = vld [vmem:[%s2] sm:$0xff]
      %v1507 = vld [vmem:[%s2 + $0x8] sm:$0xff]
      %v1508 = vld [vmem:[%s2 + $0x10] sm:$0xff]
      %v1509 = vld [vmem:[%s2 + $0x18] sm:$0xff]
      %v1510 = vld [vmem:[%s2 + $0x20] sm:$0xff]
      %v1511 = vld [vmem:[%s2 + $0x28] sm:$0xff]
      %v1512 = vld [vmem:[%s2 + $0x30] sm:$0xff]
      %v1513 = vld [vmem:[%s2 + $0x38] sm:$0xff]
      %v1514 = vld [vmem:[%s2 + $0x40] sm:$0xff]
      %v1515 = vld [vmem:[%s2 + $0x48] sm:$0xff]
      %v1516 = vld [vmem:[%s2 + $0x50] sm:$0xff]
      %v1517 = vld [vmem:[%s2 + $0x58] sm:$0xff]
      %v1518 = vld [vmem:[%s2 + $0x60] sm:$0xff]
      %v1519 = vld [vmem:[%s2 + $0x68] sm:$0xff]
      %v1520 = vld [vmem:[%s2 + $0x70] sm:$0xff]
      %v1521 = vld [vmem:[%s2 + $0x78] sm:$0xff]
      %v1522 = vld [vmem:[%s2 + $0x80] sm:$0xff]
      %v1523 = vld [vmem:[%s2 + $0x88] sm:$0xff]
      %v1524 = vld [vmem:[%s2 + $0x90] sm:$0xff]
      %v1525 = vld [vmem:[%s2 + $0x98] sm:$0xff]
      %v1526 = vld [vmem:[%s2 + $0xa0] sm:$0xff]
      %v1527 = vld [vmem:[%s2 + $0xa8] sm:$0xff]
      %v1528 = vld [vmem:[%s2 + $0xb0] sm:$0xff]
      %v1529 = vld [vmem:[%s2 + $0xb8] sm:$0xff]
      %v1530 = vld [vmem:[%s2 + $0xc0] sm:$0xff]
      %v1531 = vld [vmem:[%s2 + $0xc8] sm:$0xff]
      %v1532 = vld [vmem:[%s2 + $0xd0] sm:$0xff]
      %v1533 = vld [vmem:[%s2 + $0xd8] sm:$0xff]
      %v1534 = vld [vmem:[%s2 + $0xe0] sm:$0xff]
      %v1535 = vld [vmem:[%s2 + $0xe8] sm:$0xff]
      %v1536 = vld [vmem:[%s2 + $0xf0] sm:$0xff]
      %v1537 = vld [vmem:[%s2 + $0xf8] sm:$0xff]
      %v1538 = vld [vmem:[%s2 + $0x100] sm:$0xff]
      %v1539 = vld [vmem:[%s2 + $0x108] sm:$0xff]
      %v1540 = vld [vmem:[%s2 + $0x110] sm:$0xff]
      %v1541 = vld [vmem:[%s2 + $0x118] sm:$0xff]
      %v1542 = vld [vmem:[%s2 + $0x120] sm:$0xff]
      %v1543 = vld [vmem:[%s2 + $0x128] sm:$0xff]
      %v1544 = vld [vmem:[%s2 + $0x130] sm:$0xff]
      %v1545 = vld [vmem:[%s2 + $0x138] sm:$0xff]
      %v1546 = vld [vmem:[%s2 + $0x140] sm:$0xff]
      %v1547 = vld [vmem:[%s2 + $0x148] sm:$0xff]
      %v1548 = vld [vmem:[%s2 + $0x150] sm:$0xff]
      %v1549 = vld [vmem:[%s2 + $0x158] sm:$0xff]
      %v1550 = vld [vmem:[%s2 + $0x160] sm:$0xff]
      %v1551 = vld [vmem:[%s2 + $0x168] sm:$0xff]
      %v1552 = vld [vmem:[%s2 + $0x170] sm:$0xff]
      %v1553 = vld [vmem:[%s2 + $0x178] sm:$0xff]
      %v1554 = vld [vmem:[%s2 + $0x180] sm:$0xff]
      %v1555 = vld [vmem:[%s2 + $0x188] sm:$0xff]
      %v1556 = vld [vmem:[%s2 + $0x190] sm:$0xff]
      %v1557 = vld [vmem:[%s2 + $0x198] sm:$0xff]
      %v1558 = vld [vmem:[%s2 + $0x1a0] sm:$0xff]
      %v1559 = vld [vmem:[%s2 + $0x1a8] sm:$0xff]
      %v1560 = vld [vmem:[%s2 + $0x1b0] sm:$0xff]
      %v1561 = vld [vmem:[%s2 + $0x1b8] sm:$0xff]
      %v1562 = vld [vmem:[%s2 + $0x1c0] sm:$0xff]
      %v1563 = vld [vmem:[%s2 + $0x1c8] sm:$0xff]
      %v1564 = vld [vmem:[%s2 + $0x1d0] sm:$0xff]
      %v1565 = vld [vmem:[%s2 + $0x1d8] sm:$0xff]
      %v1566 = vld [vmem:[%s2 + $0x1e0] sm:$0xff]
      %v1567 = vld [vmem:[%s2 + $0x1e8] sm:$0xff]
      %v1568 = vld [vmem:[%s2 + $0x1f0] sm:$0xff]
      %v1569 = vld [vmem:[%s2 + $0x1f8] sm:$0xff]
      %1570 = vmatprep.subr.mxu0 %v1507
      %1571 = vmatpush1.msra.mxu0 %v1506
      %1572 = vmatprep.subr.mxu0 %v1511
      %1573 = vmatpush1.msra.mxu0 %v1510
      %1574 = vmatprep.subr.mxu0 %v1515
      %1575 = vmatpush1.msra.mxu0 %v1514
      %1576 = vmatprep.subr.mxu0 %v1519
      %1577 = vmatpush1.msra.mxu0 %v1518
      %1578 = vmatprep.subr.mxu0 %v1523
      %1579 = vmatpush1.msra.mxu0 %v1522
      %1580 = vmatprep.subr.mxu0 %v1527
      %1581 = vmatpush1.msra.mxu0 %v1526
      %1582 = vmatprep.subr.mxu0 %v1531
      %1583 = vmatpush1.msra.mxu0 %v1530
      %1584 = vmatprep.subr.mxu0 %v1535
      %1585 = vmatpush1.msra.mxu0 %v1534
      %1586 = vmatprep.subr.mxu0 %v1539
      %1587 = vmatpush1.msra.mxu0 %v1538
      %1588 = vmatprep.subr.mxu0 %v1543
      %1589 = vmatpush1.msra.mxu0 %v1542
      %1590 = vmatprep.subr.mxu0 %v1547
      %1591 = vmatpush1.msra.mxu0 %v1546
      %1592 = vmatprep.subr.mxu0 %v1551
      %1593 = vmatpush1.msra.mxu0 %v1550
      %1594 = vmatprep.subr.mxu0 %v1555
      %1595 = vmatpush1.msra.mxu0 %v1554
      %1596 = vmatprep.subr.mxu0 %v1559
      %1597 = vmatpush1.msra.mxu0 %v1558
      %1598 = vmatprep.subr.mxu0 %v1563
      %1599 = vmatpush1.msra.mxu0 %v1562
      %1600 = vmatprep.subr.mxu0 %v1567
      %1601 = vmatpush1.msra.mxu0 %v1566
      %1602 = vmatprep.subr.mxu0 0.0
      %1603 = vmatpush1.msra.mxu0 0.0
      %1604 = vmatprep.subr.mxu0 0.0
      %1605 = vmatpush1.msra.mxu0 0.0
      %1606 = vmatprep.subr.mxu0 0.0
      %1607 = vmatpush1.msra.mxu0 0.0
      %1608 = vmatprep.subr.mxu0 0.0
      %1609 = vmatpush1.msra.mxu0 0.0
      %1610 = vmatprep.subr.mxu0 0.0
      %1611 = vmatpush1.msra.mxu0 0.0
      %1612 = vmatprep.subr.mxu0 0.0
      %1613 = vmatpush1.msra.mxu0 0.0
      %1614 = vmatprep.subr.mxu0 0.0
      %1615 = vmatpush1.msra.mxu0 0.0
      %1616 = vmatprep.subr.mxu0 0.0
      %1617 = vmatpush1.msra.mxu0 0.0
      %1618 = vmatprep.subr.mxu0 0.0
      %1619 = vmatpush1.msra.mxu0 0.0
      %1620 = vmatprep.subr.mxu0 0.0
      %1621 = vmatpush1.msra.mxu0 0.0
      %1622 = vmatprep.subr.mxu0 0.0
      %1623 = vmatpush1.msra.mxu0 0.0
      %1624 = vmatprep.subr.mxu0 0.0
      %1625 = vmatpush1.msra.mxu0 0.0
      %1626 = vmatprep.subr.mxu0 0.0
      %1627 = vmatpush1.msra.mxu0 0.0
      %1628 = vmatprep.subr.mxu0 0.0
      %1629 = vmatpush1.msra.mxu0 0.0
      %1630 = vmatprep.subr.mxu0 0.0
      %1631 = vmatpush1.msra.mxu0 0.0
      %1632 = vmatprep.subr.mxu0 0.0
      %1633 = vmatpush1.msra.mxu0 0.0
      %1634 = vmatprep.mubr.f32.mxu0 0.0
      %1635 = vmatmul.mubr.f32.gmra.mrb[0].mxu0 %v1497
      %v1636 = vpop.f32.mrb[0].mxu0
      %v1637 = vadd.f32 0.0, %v1636
      %v1638 = vpop.f32.mrb[0].mxu0
      %v1639 = vadd.f32 0.0, %v1638
      %1640 = vdwg.mxu0
      %1641 = vmatprep.subr.mxu0 %v1509
      %1642 = vmatpush1.msra.mxu0 %v1508
      %1643 = vmatprep.subr.mxu0 %v1513
      %1644 = vmatpush1.msra.mxu0 %v1512
      %1645 = vmatprep.subr.mxu0 %v1517
      %1646 = vmatpush1.msra.mxu0 %v1516
      %1647 = vmatprep.subr.mxu0 %v1521
      %1648 = vmatpush1.msra.mxu0 %v1520
      %1649 = vmatprep.subr.mxu0 %v1525
      %1650 = vmatpush1.msra.mxu0 %v1524
      %1651 = vmatprep.subr.mxu0 %v1529
      %1652 = vmatpush1.msra.mxu0 %v1528
      %1653 = vmatprep.subr.mxu0 %v1533
      %1654 = vmatpush1.msra.mxu0 %v1532
      %1655 = vmatprep.subr.mxu0 %v1537
      %1656 = vmatpush1.msra.mxu0 %v1536
      %1657 = vmatprep.subr.mxu0 %v1541
      %1658 = vmatpush1.msra.mxu0 %v1540
      %1659 = vmatprep.subr.mxu0 %v1545
      %1660 = vmatpush1.msra.mxu0 %v1544
      %1661 = vmatprep.subr.mxu0 %v1549
      %1662 = vmatpush1.msra.mxu0 %v1548
      %1663 = vmatprep.subr.mxu0 %v1553
      %1664 = vmatpush1.msra.mxu0 %v1552
      %1665 = vmatprep.subr.mxu0 %v1557
      %1666 = vmatpush1.msra.mxu0 %v1556
      %1667 = vmatprep.subr.mxu0 %v1561
      %1668 = vmatpush1.msra.mxu0 %v1560
      %1669 = vmatprep.subr.mxu0 %v1565
      %1670 = vmatpush1.msra.mxu0 %v1564
      %1671 = vmatprep.subr.mxu0 %v1569
      %1672 = vmatpush1.msra.mxu0 %v1568
      %1673 = vmatprep.subr.mxu0 0.0
      %1674 = vmatpush1.msra.mxu0 0.0
      %1675 = vmatprep.subr.mxu0 0.0
      %1676 = vmatpush1.msra.mxu0 0.0
      %1677 = vmatprep.subr.mxu0 0.0
      %1678 = vmatpush1.msra.mxu0 0.0
      %1679 = vmatprep.subr.mxu0 0.0
      %1680 = vmatpush1.msra.mxu0 0.0
      %1681 = vmatprep.subr.mxu0 0.0
      %1682 = vmatpush1.msra.mxu0 0.0
      %1683 = vmatprep.subr.mxu0 0.0
      %1684 = vmatpush1.msra.mxu0 0.0
      %1685 = vmatprep.subr.mxu0 0.0
      %1686 = vmatpush1.msra.mxu0 0.0
      %1687 = vmatprep.subr.mxu0 0.0
      %1688 = vmatpush1.msra.mxu0 0.0
      %1689 = vmatprep.subr.mxu0 0.0
      %1690 = vmatpush1.msra.mxu0 0.0
      %1691 = vmatprep.subr.mxu0 0.0
      %1692 = vmatpush1.msra.mxu0 0.0
      %1693 = vmatprep.subr.mxu0 0.0
      %1694 = vmatpush1.msra.mxu0 0.0
      %1695 = vmatprep.subr.mxu0 0.0
      %1696 = vmatpush1.msra.mxu0 0.0
      %1697 = vmatprep.subr.mxu0 0.0
      %1698 = vmatpush1.msra.mxu0 0.0
      %1699 = vmatprep.subr.mxu0 0.0
      %1700 = vmatpush1.msra.mxu0 0.0
      %1701 = vmatprep.subr.mxu0 0.0
      %1702 = vmatpush1.msra.mxu0 0.0
      %1703 = vmatprep.subr.mxu0 0.0
      %1704 = vmatpush1.msra.mxu0 0.0
      %1705 = vmatprep.mubr.f32.mxu0 0.0
      %1706 = vmatmul.mubr.f32.gmra.mrb[0].mxu0 %v1497
      %v1707 = vpop.f32.mrb[0].mxu0
      %v1708 = vadd.f32 0.0, %v1707
      %v1709 = vpop.f32.mrb[0].mxu0
      %v1710 = vadd.f32 0.0, %v1709
      %1711 = vdwg.mxu0
      %v1712 = vadd.f32 %v1502, %v1637
      %v1713 = vadd.f32 %v1503, %v1639
      %v1714 = vadd.f32 %v1504, %v1708
      %v1715 = vadd.f32 %v1505, %v1710
      %v1716 = vxor.u32 %v1712, 2147483648
      %v1717 = vmul.f32 %v1716, 1.442695
      %v1718 = vpow.pop %v1717
      %v1719 = vadd.f32 %v1718, 1.0
      %v1720 = vrcp.pop %v1719
      %v1721 = vmul.f32 1.0, %v1720
      %v1722 = vxor.u32 %v1713, 2147483648
      %v1723 = vmul.f32 %v1722, 1.442695
      %v1724 = vpow.pop %v1723
      %v1725 = vadd.f32 %v1724, 1.0
      %v1726 = vrcp.pop %v1725
      %v1727 = vmul.f32 1.0, %v1726
      %v1728 = vtanh.pop %v1714
      %v1729 = vxor.u32 %v1715, 2147483648
      %v1730 = vmul.f32 %v1729, 1.442695
      %v1731 = vpow.pop %v1730
      %v1732 = vadd.f32 %v1731, 1.0
      %v1733 = vrcp.pop %v1732
      %v1734 = vmul.f32 1.0, %v1733
      %v1735 = vmul.f32 %v1727, %v1498
      %v1736 = vmul.f32 %v1721, %v1728
      %v1737 = vadd.f32 %v1735, %v1736
      %v1738 = vtanh.pop %v1737
      %v1739 = vmul.f32 %v1734, %v1738
      %s1740 = sadd.s32 %s961, 3
      %p1741 = scmp.lt.s32.totalorder %s1740, 8
      %s1742 = scalar_select %p1741, 1, 0
      %s1743 = scvt.s32.f32 %s1742
      %v1744 = vstv %s1743
      %v1745 = vmul.f32 %v1744, %v1737
      %s1746 = ssub.f32 1.0, %s1743
      %v1747 = vstv %s1746
      %v1748 = vmul.f32 %v1747, %v1498
      %v1749 = vadd.f32 %v1745, %v1748
      %v1750 = vmul.f32 %v1744, %v1739
      %v1751 = vmul.f32 %v1747, %v1497
      %v1752 = vadd.f32 %v1750, %v1751
      %1753 = vst [vmem:[#allocation3] sm:$0xff] %v1749
      %1754 = vst [vmem:[#allocation2] sm:$0xff] %v1752
      %s1755 = scalar_lea.vmem [#allocation4], 24
      %1756 = vst [vmem:[%s1755] sm:$0xff] %v1752
      %v1757 = vld [vmem:[#allocation2] sm:$0xff]
      %v1758 = vld [vmem:[#allocation3] sm:$0xff]
      %s1759 = smul.u32 4, 4
      %s1760 = smul.addr %s1759, 8
      %s1761 = scalar_lea.vmem [#allocation5], %s1760
      %v1762 = vld [vmem:[%s1761] sm:$0xff]
      %v1763 = vld [vmem:[%s1761 + $0x8] sm:$0xff]
      %v1764 = vld [vmem:[%s1761 + $0x10] sm:$0xff]
      %v1765 = vld [vmem:[%s1761 + $0x18] sm:$0xff]
      %v1766 = vld [vmem:[%s2] sm:$0xff]
      %v1767 = vld [vmem:[%s2 + $0x8] sm:$0xff]
      %v1768 = vld [vmem:[%s2 + $0x10] sm:$0xff]
      %v1769 = vld [vmem:[%s2 + $0x18] sm:$0xff]
      %v1770 = vld [vmem:[%s2 + $0x20] sm:$0xff]
      %v1771 = vld [vmem:[%s2 + $0x28] sm:$0xff]
      %v1772 = vld [vmem:[%s2 + $0x30] sm:$0xff]
      %v1773 = vld [vmem:[%s2 + $0x38] sm:$0xff]
      %v1774 = vld [vmem:[%s2 + $0x40] sm:$0xff]
      %v1775 = vld [vmem:[%s2 + $0x48] sm:$0xff]
      %v1776 = vld [vmem:[%s2 + $0x50] sm:$0xff]
      %v1777 = vld [vmem:[%s2 + $0x58] sm:$0xff]
      %v1778 = vld [vmem:[%s2 + $0x60] sm:$0xff]
      %v1779 = vld [vmem:[%s2 + $0x68] sm:$0xff]
      %v1780 = vld [vmem:[%s2 + $0x70] sm:$0xff]
      %v1781 = vld [vmem:[%s2 + $0x78] sm:$0xff]
      %v1782 = vld [vmem:[%s2 + $0x80] sm:$0xff]
      %v1783 = vld [vmem:[%s2 + $0x88] sm:$0xff]
      %v1784 = vld [vmem:[%s2 + $0x90] sm:$0xff]
      %v1785 = vld [vmem:[%s2 + $0x98] sm:$0xff]
      %v1786 = vld [vmem:[%s2 + $0xa0] sm:$0xff]
      %v1787 = vld [vmem:[%s2 + $0xa8] sm:$0xff]
      %v1788 = vld [vmem:[%s2 + $0xb0] sm:$0xff]
      %v1789 = vld [vmem:[%s2 + $0xb8] sm:$0xff]
      %v1790 = vld [vmem:[%s2 + $0xc0] sm:$0xff]
      %v1791 = vld [vmem:[%s2 + $0xc8] sm:$0xff]
      %v1792 = vld [vmem:[%s2 + $0xd0] sm:$0xff]
      %v1793 = vld [vmem:[%s2 + $0xd8] sm:$0xff]
      %v1794 = vld [vmem:[%s2 + $0xe0] sm:$0xff]
      %v1795 = vld [vmem:[%s2 + $0xe8] sm:$0xff]
      %v1796 = vld [vmem:[%s2 + $0xf0] sm:$0xff]
      %v1797 = vld [vmem:[%s2 + $0xf8] sm:$0xff]
      %v1798 = vld [vmem:[%s2 + $0x100] sm:$0xff]
      %v1799 = vld [vmem:[%s2 + $0x108] sm:$0xff]
      %v1800 = vld [vmem:[%s2 + $0x110] sm:$0xff]
      %v1801 = vld [vmem:[%s2 + $0x118] sm:$0xff]
      %v1802 = vld [vmem:[%s2 + $0x120] sm:$0xff]
      %v1803 = vld [vmem:[%s2 + $0x128] sm:$0xff]
      %v1804 = vld [vmem:[%s2 + $0x130] sm:$0xff]
      %v1805 = vld [vmem:[%s2 + $0x138] sm:$0xff]
      %v1806 = vld [vmem:[%s2 + $0x140] sm:$0xff]
      %v1807 = vld [vmem:[%s2 + $0x148] sm:$0xff]
      %v1808 = vld [vmem:[%s2 + $0x150] sm:$0xff]
      %v1809 = vld [vmem:[%s2 + $0x158] sm:$0xff]
      %v1810 = vld [vmem:[%s2 + $0x160] sm:$0xff]
      %v1811 = vld [vmem:[%s2 + $0x168] sm:$0xff]
      %v1812 = vld [vmem:[%s2 + $0x170] sm:$0xff]
      %v1813 = vld [vmem:[%s2 + $0x178] sm:$0xff]
      %v1814 = vld [vmem:[%s2 + $0x180] sm:$0xff]
      %v1815 = vld [vmem:[%s2 + $0x188] sm:$0xff]
      %v1816 = vld [vmem:[%s2 + $0x190] sm:$0xff]
      %v1817 = vld [vmem:[%s2 + $0x198] sm:$0xff]
      %v1818 = vld [vmem:[%s2 + $0x1a0] sm:$0xff]
      %v1819 = vld [vmem:[%s2 + $0x1a8] sm:$0xff]
      %v1820 = vld [vmem:[%s2 + $0x1b0] sm:$0xff]
      %v1821 = vld [vmem:[%s2 + $0x1b8] sm:$0xff]
      %v1822 = vld [vmem:[%s2 + $0x1c0] sm:$0xff]
      %v1823 = vld [vmem:[%s2 + $0x1c8] sm:$0xff]
      %v1824 = vld [vmem:[%s2 + $0x1d0] sm:$0xff]
      %v1825 = vld [vmem:[%s2 + $0x1d8] sm:$0xff]
      %v1826 = vld [vmem:[%s2 + $0x1e0] sm:$0xff]
      %v1827 = vld [vmem:[%s2 + $0x1e8] sm:$0xff]
      %v1828 = vld [vmem:[%s2 + $0x1f0] sm:$0xff]
      %v1829 = vld [vmem:[%s2 + $0x1f8] sm:$0xff]
      %1830 = vmatprep.subr.mxu0 %v1767
      %1831 = vmatpush1.msra.mxu0 %v1766
      %1832 = vmatprep.subr.mxu0 %v1771
      %1833 = vmatpush1.msra.mxu0 %v1770
      %1834 = vmatprep.subr.mxu0 %v1775
      %1835 = vmatpush1.msra.mxu0 %v1774
      %1836 = vmatprep.subr.mxu0 %v1779
      %1837 = vmatpush1.msra.mxu0 %v1778
      %1838 = vmatprep.subr.mxu0 %v1783
      %1839 = vmatpush1.msra.mxu0 %v1782
      %1840 = vmatprep.subr.mxu0 %v1787
      %1841 = vmatpush1.msra.mxu0 %v1786
      %1842 = vmatprep.subr.mxu0 %v1791
      %1843 = vmatpush1.msra.mxu0 %v1790
      %1844 = vmatprep.subr.mxu0 %v1795
      %1845 = vmatpush1.msra.mxu0 %v1794
      %1846 = vmatprep.subr.mxu0 %v1799
      %1847 = vmatpush1.msra.mxu0 %v1798
      %1848 = vmatprep.subr.mxu0 %v1803
      %1849 = vmatpush1.msra.mxu0 %v1802
      %1850 = vmatprep.subr.mxu0 %v1807
      %1851 = vmatpush1.msra.mxu0 %v1806
      %1852 = vmatprep.subr.mxu0 %v1811
      %1853 = vmatpush1.msra.mxu0 %v1810
      %1854 = vmatprep.subr.mxu0 %v1815
      %1855 = vmatpush1.msra.mxu0 %v1814
      %1856 = vmatprep.subr.mxu0 %v1819
      %1857 = vmatpush1.msra.mxu0 %v1818
      %1858 = vmatprep.subr.mxu0 %v1823
      %1859 = vmatpush1.msra.mxu0 %v1822
      %1860 = vmatprep.subr.mxu0 %v1827
      %1861 = vmatpush1.msra.mxu0 %v1826
      %1862 = vmatprep.subr.mxu0 0.0
      %1863 = vmatpush1.msra.mxu0 0.0
      %1864 = vmatprep.subr.mxu0 0.0
      %1865 = vmatpush1.msra.mxu0 0.0
      %1866 = vmatprep.subr.mxu0 0.0
      %1867 = vmatpush1.msra.mxu0 0.0
      %1868 = vmatprep.subr.mxu0 0.0
      %1869 = vmatpush1.msra.mxu0 0.0
      %1870 = vmatprep.subr.mxu0 0.0
      %1871 = vmatpush1.msra.mxu0 0.0
      %1872 = vmatprep.subr.mxu0 0.0
      %1873 = vmatpush1.msra.mxu0 0.0
      %1874 = vmatprep.subr.mxu0 0.0
      %1875 = vmatpush1.msra.mxu0 0.0
      %1876 = vmatprep.subr.mxu0 0.0
      %1877 = vmatpush1.msra.mxu0 0.0
      %1878 = vmatprep.subr.mxu0 0.0
      %1879 = vmatpush1.msra.mxu0 0.0
      %1880 = vmatprep.subr.mxu0 0.0
      %1881 = vmatpush1.msra.mxu0 0.0
      %1882 = vmatprep.subr.mxu0 0.0
      %1883 = vmatpush1.msra.mxu0 0.0
      %1884 = vmatprep.subr.mxu0 0.0
      %1885 = vmatpush1.msra.mxu0 0.0
      %1886 = vmatprep.subr.mxu0 0.0
      %1887 = vmatpush1.msra.mxu0 0.0
      %1888 = vmatprep.subr.mxu0 0.0
      %1889 = vmatpush1.msra.mxu0 0.0
      %1890 = vmatprep.subr.mxu0 0.0
      %1891 = vmatpush1.msra.mxu0 0.0
      %1892 = vmatprep.subr.mxu0 0.0
      %1893 = vmatpush1.msra.mxu0 0.0
      %1894 = vmatprep.mubr.f32.mxu0 0.0
      %1895 = vmatmul.mubr.f32.gmra.mrb[0].mxu0 %v1757
      %v1896 = vpop.f32.mrb[0].mxu0
      %v1897 = vadd.f32 0.0, %v1896
      %v1898 = vpop.f32.mrb[0].mxu0
      %v1899 = vadd.f32 0.0, %v1898
      %1900 = vdwg.mxu0
      %1901 = vmatprep.subr.mxu0 %v1769
      %1902 = vmatpush1.msra.mxu0 %v1768
      %1903 = vmatprep.subr.mxu0 %v1773
      %1904 = vmatpush1.msra.mxu0 %v1772
      %1905 = vmatprep.subr.mxu0 %v1777
      %1906 = vmatpush1.msra.mxu0 %v1776
      %1907 = vmatprep.subr.mxu0 %v1781
      %1908 = vmatpush1.msra.mxu0 %v1780
      %1909 = vmatprep.subr.mxu0 %v1785
      %1910 = vmatpush1.msra.mxu0 %v1784
      %1911 = vmatprep.subr.mxu0 %v1789
      %1912 = vmatpush1.msra.mxu0 %v1788
      %1913 = vmatprep.subr.mxu0 %v1793
      %1914 = vmatpush1.msra.mxu0 %v1792
      %1915 = vmatprep.subr.mxu0 %v1797
      %1916 = vmatpush1.msra.mxu0 %v1796
      %1917 = vmatprep.subr.mxu0 %v1801
      %1918 = vmatpush1.msra.mxu0 %v1800
      %1919 = vmatprep.subr.mxu0 %v1805
      %1920 = vmatpush1.msra.mxu0 %v1804
      %1921 = vmatprep.subr.mxu0 %v1809
      %1922 = vmatpush1.msra.mxu0 %v1808
      %1923 = vmatprep.subr.mxu0 %v1813
      %1924 = vmatpush1.msra.mxu0 %v1812
      %1925 = vmatprep.subr.mxu0 %v1817
      %1926 = vmatpush1.msra.mxu0 %v1816
      %1927 = vmatprep.subr.mxu0 %v1821
      %1928 = vmatpush1.msra.mxu0 %v1820
      %1929 = vmatprep.subr.mxu0 %v1825
      %1930 = vmatpush1.msra.mxu0 %v1824
      %1931 = vmatprep.subr.mxu0 %v1829
      %1932 = vmatpush1.msra.mxu0 %v1828
      %1933 = vmatprep.subr.mxu0 0.0
      %1934 = vmatpush1.msra.mxu0 0.0
      %1935 = vmatprep.subr.mxu0 0.0
      %1936 = vmatpush1.msra.mxu0 0.0
      %1937 = vmatprep.subr.mxu0 0.0
      %1938 = vmatpush1.msra.mxu0 0.0
      %1939 = vmatprep.subr.mxu0 0.0
      %1940 = vmatpush1.msra.mxu0 0.0
      %1941 = vmatprep.subr.mxu0 0.0
      %1942 = vmatpush1.msra.mxu0 0.0
      %1943 = vmatprep.subr.mxu0 0.0
      %1944 = vmatpush1.msra.mxu0 0.0
      %1945 = vmatprep.subr.mxu0 0.0
      %1946 = vmatpush1.msra.mxu0 0.0
      %1947 = vmatprep.subr.mxu0 0.0
      %1948 = vmatpush1.msra.mxu0 0.0
      %1949 = vmatprep.subr.mxu0 0.0
      %1950 = vmatpush1.msra.mxu0 0.0
      %1951 = vmatprep.subr.mxu0 0.0
      %1952 = vmatpush1.msra.mxu0 0.0
      %1953 = vmatprep.subr.mxu0 0.0
      %1954 = vmatpush1.msra.mxu0 0.0
      %1955 = vmatprep.subr.mxu0 0.0
      %1956 = vmatpush1.msra.mxu0 0.0
      %1957 = vmatprep.subr.mxu0 0.0
      %1958 = vmatpush1.msra.mxu0 0.0
      %1959 = vmatprep.subr.mxu0 0.0
      %1960 = vmatpush1.msra.mxu0 0.0
      %1961 = vmatprep.subr.mxu0 0.0
      %1962 = vmatpush1.msra.mxu0 0.0
      %1963 = vmatprep.subr.mxu0 0.0
      %1964 = vmatpush1.msra.mxu0 0.0
      %1965 = vmatprep.mubr.f32.mxu0 0.0
      %1966 = vmatmul.mubr.f32.gmra.mrb[0].mxu0 %v1757
      %v1967 = vpop.f32.mrb[0].mxu0
      %v1968 = vadd.f32 0.0, %v1967
      %v1969 = vpop.f32.mrb[0].mxu0
      %v1970 = vadd.f32 0.0, %v1969
      %1971 = vdwg.mxu0
      %v1972 = vadd.f32 %v1762, %v1897
      %v1973 = vadd.f32 %v1763, %v1899
      %v1974 = vadd.f32 %v1764, %v1968
      %v1975 = vadd.f32 %v1765, %v1970
      %v1976 = vxor.u32 %v1972, 2147483648
      %v1977 = vmul.f32 %v1976, 1.442695
      %v1978 = vpow.pop %v1977
      %v1979 = vadd.f32 %v1978, 1.0
      %v1980 = vrcp.pop %v1979
      %v1981 = vmul.f32 1.0, %v1980
      %v1982 = vxor.u32 %v1973, 2147483648
      %v1983 = vmul.f32 %v1982, 1.442695
      %v1984 = vpow.pop %v1983
      %v1985 = vadd.f32 %v1984, 1.0
      %v1986 = vrcp.pop %v1985
      %v1987 = vmul.f32 1.0, %v1986
      %v1988 = vtanh.pop %v1974
      %v1989 = vxor.u32 %v1975, 2147483648
      %v1990 = vmul.f32 %v1989, 1.442695
      %v1991 = vpow.pop %v1990
      %v1992 = vadd.f32 %v1991, 1.0
      %v1993 = vrcp.pop %v1992
      %v1994 = vmul.f32 1.0, %v1993
      %v1995 = vmul.f32 %v1987, %v1758
      %v1996 = vmul.f32 %v1981, %v1988
      %v1997 = vadd.f32 %v1995, %v1996
      %v1998 = vtanh.pop %v1997
      %v1999 = vmul.f32 %v1994, %v1998
      %s2000 = sadd.s32 %s961, 4
      %p2001 = scmp.lt.s32.totalorder %s2000, 8
      %s2002 = scalar_select %p2001, 1, 0
      %s2003 = scvt.s32.f32 %s2002
      %v2004 = vstv %s2003
      %v2005 = vmul.f32 %v2004, %v1997
      %s2006 = ssub.f32 1.0, %s2003
      %v2007 = vstv %s2006
      %v2008 = vmul.f32 %v2007, %v1758
      %v2009 = vadd.f32 %v2005, %v2008
      %v2010 = vmul.f32 %v2004, %v1999
      %v2011 = vmul.f32 %v2007, %v1757
      %v2012 = vadd.f32 %v2010, %v2011
      %2013 = vst [vmem:[#allocation3] sm:$0xff] %v2009
      %2014 = vst [vmem:[#allocation2] sm:$0xff] %v2012
      %s2015 = scalar_lea.vmem [#allocation4], 32
      %2016 = vst [vmem:[%s2015] sm:$0xff] %v2012
      %v2017 = vld [vmem:[#allocation4] sm:$0xff]
      %v2018 = vld [vmem:[#allocation4 + $0x8] sm:$0xff]
      %v2019 = vld [vmem:[#allocation4 + $0x10] sm:$0xff]
      %v2020 = vld [vmem:[#allocation4 + $0x18] sm:$0xff]
      %v2021 = vld [vmem:[#allocation4 + $0x20] sm:$0xff]
      %v2022 = vpack.c.bf16 %v2018, %v2017
      %v2023 = vpack.c.bf16 %v2020, %v2019
      %v2024 = vpack.c.bf16 %v2021, %v2021
      %v2025 = vld [vmem:[%s4] sm:$0xff]
      %v2026 = vld [vmem:[%s4 + $0x8] sm:$0xff]
      %v2027 = vld [vmem:[%s4 + $0x10] sm:$0xff]
      %v2028 = vld [vmem:[%s4 + $0x18] sm:$0xff]
      %v2029 = vld [vmem:[%s4 + $0x20] sm:$0xff]
      %v2030 = vld [vmem:[%s4 + $0x28] sm:$0xff]
      %v2031 = vld [vmem:[%s4 + $0x30] sm:$0xff]
      %v2032 = vld [vmem:[%s4 + $0x38] sm:$0xff]
      %v2033 = vld [vmem:[%s4 + $0x40] sm:$0xff]
      %v2034 = vld [vmem:[%s4 + $0x48] sm:$0xff]
      %v2035 = vld [vmem:[%s4 + $0x50] sm:$0xff]
      %v2036 = vld [vmem:[%s4 + $0x58] sm:$0xff]
      %v2037 = vld [vmem:[%s4 + $0x60] sm:$0xff]
      %v2038 = vld [vmem:[%s4 + $0x68] sm:$0xff]
      %v2039 = vld [vmem:[%s4 + $0x70] sm:$0xff]
      %v2040 = vld [vmem:[%s4 + $0x78] sm:$0xff]
      %v2041 = vld [vmem:[%s4 + $0x80] sm:$0xff]
      %v2042 = vld [vmem:[%s4 + $0x88] sm:$0xff]
      %v2043 = vld [vmem:[%s4 + $0x90] sm:$0xff]
      %v2044 = vld [vmem:[%s4 + $0x98] sm:$0xff]
      %v2045 = vld [vmem:[%s4 + $0xa0] sm:$0xff]
      %v2046 = vld [vmem:[%s4 + $0xa8] sm:$0xff]
      %v2047 = vld [vmem:[%s4 + $0xb0] sm:$0xff]
      %v2048 = vld [vmem:[%s4 + $0xb8] sm:$0xff]
      %v2049 = vld [vmem:[%s4 + $0xc0] sm:$0xff]
      %v2050 = vld [vmem:[%s4 + $0xc8] sm:$0xff]
      %v2051 = vld [vmem:[%s4 + $0xd0] sm:$0xff]
      %v2052 = vld [vmem:[%s4 + $0xd8] sm:$0xff]
      %v2053 = vld [vmem:[%s4 + $0xe0] sm:$0xff]
      %v2054 = vld [vmem:[%s4 + $0xe8] sm:$0xff]
      %v2055 = vld [vmem:[%s4 + $0xf0] sm:$0xff]
      %v2056 = vld [vmem:[%s4 + $0xf8] sm:$0xff]
      %v2057 = vld [vmem:[%s6] sm:$0xf]
      %v2059 = vlaneseq
      %v2060 = vshrl.u32 %v2059, 7
      %v2061 = vsub.s32 0, %v2060
      %v2062 = vrot.slane %v2057, %v2061
      %v2063 = vlaneseq
      %v2064 = vshrl.u32 %v2063, 7
      %v2065 = vsub.s32 1, %v2064
      %v2066 = vrot.slane %v2057, %v2065
      %v2067 = vlaneseq
      %v2068 = vshrl.u32 %v2067, 7
      %v2069 = vsub.s32 2, %v2068
      %v2070 = vrot.slane %v2057, %v2069
      %v2071 = vlaneseq
      %v2072 = vshrl.u32 %v2071, 7
      %v2073 = vsub.s32 3, %v2072
      %v2074 = vrot.slane %v2057, %v2073
      %v2111 = vunpack.c.l.b16 %v2025
      %v2112 = vunpack.c.h.b16 %v2025
      %v2113 = vunpack.c.l.b16 %v2026
      %v2114 = vunpack.c.h.b16 %v2026
      %v2115 = vunpack.c.l.b16 %v2027
      %v2116 = vunpack.c.h.b16 %v2027
      %v2117 = vunpack.c.l.b16 %v2028
      %v2118 = vunpack.c.h.b16 %v2028
      %v2119 = vunpack.c.l.b16 %v2029
      %v2120 = vunpack.c.h.b16 %v2029
      %v2121 = vunpack.c.l.b16 %v2030
      %v2122 = vunpack.c.h.b16 %v2030
      %v2123 = vunpack.c.l.b16 %v2031
      %v2124 = vunpack.c.h.b16 %v2031
      %v2125 = vunpack.c.l.b16 %v2032
      %v2126 = vunpack.c.h.b16 %v2032
      %v2127 = vunpack.c.l.b16 %v2033
      %v2128 = vunpack.c.h.b16 %v2033
      %v2129 = vunpack.c.l.b16 %v2034
      %v2130 = vunpack.c.h.b16 %v2034
      %v2131 = vunpack.c.l.b16 %v2035
      %v2132 = vunpack.c.h.b16 %v2035
      %v2133 = vunpack.c.l.b16 %v2036
      %v2134 = vunpack.c.h.b16 %v2036
      %v2135 = vunpack.c.l.b16 %v2037
      %v2136 = vunpack.c.h.b16 %v2037
      %v2137 = vunpack.c.l.b16 %v2038
      %v2138 = vunpack.c.h.b16 %v2038
      %v2139 = vunpack.c.l.b16 %v2039
      %v2140 = vunpack.c.h.b16 %v2039
      %v2141 = vunpack.c.l.b16 %v2040
      %v2142 = vunpack.c.h.b16 %v2040
      %v2143 = vunpack.c.l.b16 %v2041
      %v2144 = vunpack.c.h.b16 %v2041
      %v2145 = vunpack.c.l.b16 %v2042
      %v2146 = vunpack.c.h.b16 %v2042
      %v2147 = vunpack.c.l.b16 %v2043
      %v2148 = vunpack.c.h.b16 %v2043
      %v2149 = vunpack.c.l.b16 %v2044
      %v2150 = vunpack.c.h.b16 %v2044
      %v2151 = vunpack.c.l.b16 %v2045
      %v2152 = vunpack.c.h.b16 %v2045
      %v2153 = vunpack.c.l.b16 %v2046
      %v2154 = vunpack.c.h.b16 %v2046
      %v2155 = vunpack.c.l.b16 %v2047
      %v2156 = vunpack.c.h.b16 %v2047
      %v2157 = vunpack.c.l.b16 %v2048
      %v2158 = vunpack.c.h.b16 %v2048
      %v2159 = vunpack.c.l.b16 %v2049
      %v2160 = vunpack.c.h.b16 %v2049
      %v2161 = vunpack.c.l.b16 %v2050
      %v2162 = vunpack.c.h.b16 %v2050
      %v2163 = vunpack.c.l.b16 %v2051
      %v2164 = vunpack.c.h.b16 %v2051
      %v2165 = vunpack.c.l.b16 %v2052
      %v2166 = vunpack.c.h.b16 %v2052
      %v2167 = vunpack.c.l.b16 %v2053
      %v2168 = vunpack.c.h.b16 %v2053
      %v2169 = vunpack.c.l.b16 %v2054
      %v2170 = vunpack.c.h.b16 %v2054
      %v2171 = vunpack.c.l.b16 %v2055
      %v2172 = vunpack.c.h.b16 %v2055
      %v2173 = vunpack.c.l.b16 %v2056
      %v2174 = vunpack.c.h.b16 %v2056
      %v2175 = vpack.c.b16 %v2115, %v2111
      %v2176 = vpack.c.b16 %v2116, %v2112
      %v2177 = vpack.c.b16 %v2117, %v2113
      %v2178 = vpack.c.b16 %v2118, %v2114
      %v2179 = vpack.c.b16 %v2123, %v2119
      %v2180 = vpack.c.b16 %v2124, %v2120
      %v2181 = vpack.c.b16 %v2125, %v2121
      %v2182 = vpack.c.b16 %v2126, %v2122
      %v2183 = vpack.c.b16 %v2131, %v2127
      %v2184 = vpack.c.b16 %v2132, %v2128
      %v2185 = vpack.c.b16 %v2133, %v2129
      %v2186 = vpack.c.b16 %v2134, %v2130
      %v2187 = vpack.c.b16 %v2139, %v2135
      %v2188 = vpack.c.b16 %v2140, %v2136
      %v2189 = vpack.c.b16 %v2141, %v2137
      %v2190 = vpack.c.b16 %v2142, %v2138
      %v2191 = vpack.c.b16 %v2147, %v2143
      %v2192 = vpack.c.b16 %v2148, %v2144
      %v2193 = vpack.c.b16 %v2149, %v2145
      %v2194 = vpack.c.b16 %v2150, %v2146
      %v2195 = vpack.c.b16 %v2155, %v2151
      %v2196 = vpack.c.b16 %v2156, %v2152
      %v2197 = vpack.c.b16 %v2157, %v2153
      %v2198 = vpack.c.b16 %v2158, %v2154
      %v2199 = vpack.c.b16 %v2163, %v2159
      %v2200 = vpack.c.b16 %v2164, %v2160
      %v2201 = vpack.c.b16 %v2165, %v2161
      %v2202 = vpack.c.b16 %v2166, %v2162
      %v2203 = vpack.c.b16 %v2171, %v2167
      %v2204 = vpack.c.b16 %v2172, %v2168
      %v2205 = vpack.c.b16 %v2173, %v2169
      %v2206 = vpack.c.b16 %v2174, %v2170
      %2239 = vmatprep.subr.bf16.mxu0 %v2176
      %2240 = vmatpush1.bf16.msra.mxu0 %v2175
      %2241 = vmatprep.subr.bf16.mxu0 %v2180
      %2242 = vmatpush1.bf16.msra.mxu0 %v2179
      %2243 = vmatprep.subr.bf16.mxu0 %v2184
      %2244 = vmatpush1.bf16.msra.mxu0 %v2183
      %2245 = vmatprep.subr.bf16.mxu0 %v2188
      %2246 = vmatpush1.bf16.msra.mxu0 %v2187
      %2247 = vmatprep.subr.bf16.mxu0 %v2192
      %2248 = vmatpush1.bf16.msra.mxu0 %v2191
      %2249 = vmatprep.subr.bf16.mxu0 %v2196
      %2250 = vmatpush1.bf16.msra.mxu0 %v2195
      %2251 = vmatprep.subr.bf16.mxu0 %v2200
      %2252 = vmatpush1.bf16.msra.mxu0 %v2199
      %2253 = vmatprep.subr.bf16.mxu0 %v2204
      %2254 = vmatpush1.bf16.msra.mxu0 %v2203
      %2255 = vmatprep.subr.bf16.mxu0 0
      %2256 = vmatpush1.bf16.msra.mxu0 0
      %2257 = vmatprep.subr.bf16.mxu0 0
      %2258 = vmatpush1.bf16.msra.mxu0 0
      %2259 = vmatprep.subr.bf16.mxu0 0
      %2260 = vmatpush1.bf16.msra.mxu0 0
      %2261 = vmatprep.subr.bf16.mxu0 0
      %2262 = vmatpush1.bf16.msra.mxu0 0
      %2263 = vmatprep.subr.bf16.mxu0 0
      %2264 = vmatpush1.bf16.msra.mxu0 0
      %2265 = vmatprep.subr.bf16.mxu0 0
      %2266 = vmatpush1.bf16.msra.mxu0 0
      %2267 = vmatprep.subr.bf16.mxu0 0
      %2268 = vmatpush1.bf16.msra.mxu0 0
      %2269 = vmatprep.subr.bf16.mxu0 0
      %2270 = vmatpush1.bf16.msra.mxu0 0
      %2271 = vmatprep.mubr.bf16.mxu0 0
      %2272 = vmatmul.mubr.bf16.gmra.mrb[0].mxu0 %v2022
      %v2273 = vpop.f32.mrb[0].mxu0
      %v2274 = vadd.f32 %v2062, %v2273
      %v2275 = vpop.f32.mrb[0].mxu0
      %v2276 = vadd.f32 %v2066, %v2275
      %v2277 = vpop.f32.mrb[0].mxu0
      %v2278 = vadd.f32 %v2062, %v2277
      %v2279 = vpop.f32.mrb[0].mxu0
      %v2280 = vadd.f32 %v2066, %v2279
      %2281 = vmatprep.mubr.bf16.mxu0 0
      %2282 = vmatmul.mubr.bf16.gmra.mrb[0].mxu0 %v2023
      %v2283 = vpop.f32.mrb[0].mxu0
      %v2284 = vadd.f32 %v2062, %v2283
      %v2285 = vpop.f32.mrb[0].mxu0
      %v2286 = vadd.f32 %v2066, %v2285
      %v2287 = vpop.f32.mrb[0].mxu0
      %v2288 = vadd.f32 %v2062, %v2287
      %v2289 = vpop.f32.mrb[0].mxu0
      %v2290 = vadd.f32 %v2066, %v2289
      %2291 = vmatprep.mubr.bf16.mxu0 0
      %2292 = vmatmul.mubr.bf16.gmra.mrb[0].mxu0 %v2024
      %v2293 = vpop.f32.mrb[0].mxu0
      %v2294 = vadd.f32 %v2062, %v2293
      %v2295 = vpop.f32.mrb[0].mxu0
      %v2296 = vadd.f32 %v2066, %v2295
      %v2297 = vpop.f32.mrb[0].mxu0
      %v2298 = vpop.f32.mrb[0].mxu0
      %2299 = vdwg.mxu0
      %2300 = vmatprep.subr.bf16.mxu0 %v2178
      %2301 = vmatpush1.bf16.msra.mxu0 %v2177
      %2302 = vmatprep.subr.bf16.mxu0 %v2182
      %2303 = vmatpush1.bf16.msra.mxu0 %v2181
      %2304 = vmatprep.subr.bf16.mxu0 %v2186
      %2305 = vmatpush1.bf16.msra.mxu0 %v2185
      %2306 = vmatprep.subr.bf16.mxu0 %v2190
      %2307 = vmatpush1.bf16.msra.mxu0 %v2189
      %2308 = vmatprep.subr.bf16.mxu0 %v2194
      %2309 = vmatpush1.bf16.msra.mxu0 %v2193
      %2310 = vmatprep.subr.bf16.mxu0 %v2198
      %2311 = vmatpush1.bf16.msra.mxu0 %v2197
      %2312 = vmatprep.subr.bf16.mxu0 %v2202
      %2313 = vmatpush1.bf16.msra.mxu0 %v2201
      %2314 = vmatprep.subr.bf16.mxu0 %v2206
      %2315 = vmatpush1.bf16.msra.mxu0 %v2205
      %2316 = vmatprep.subr.bf16.mxu0 0
      %2317 = vmatpush1.bf16.msra.mxu0 0
      %2318 = vmatprep.subr.bf16.mxu0 0
      %2319 = vmatpush1.bf16.msra.mxu0 0
      %2320 = vmatprep.subr.bf16.mxu0 0
      %2321 = vmatpush1.bf16.msra.mxu0 0
      %2322 = vmatprep.subr.bf16.mxu0 0
      %2323 = vmatpush1.bf16.msra.mxu0 0
      %2324 = vmatprep.subr.bf16.mxu0 0
      %2325 = vmatpush1.bf16.msra.mxu0 0
      %2326 = vmatprep.subr.bf16.mxu0 0
      %2327 = vmatpush1.bf16.msra.mxu0 0
      %2328 = vmatprep.subr.bf16.mxu0 0
      %2329 = vmatpush1.bf16.msra.mxu0 0
      %2330 = vmatprep.subr.bf16.mxu0 0
      %2331 = vmatpush1.bf16.msra.mxu0 0
      %2332 = vmatprep.mubr.bf16.mxu0 0
      %2333 = vmatmul.mubr.bf16.gmra.mrb[0].mxu0 %v2022
      %v2334 = vpop.f32.mrb[0].mxu0
      %v2335 = vadd.f32 %v2070, %v2334
      %v2336 = vpop.f32.mrb[0].mxu0
      %v2337 = vadd.f32 %v2074, %v2336
      %v2338 = vpop.f32.mrb[0].mxu0
      %v2339 = vadd.f32 %v2070, %v2338
      %v2340 = vpop.f32.mrb[0].mxu0
      %v2341 = vadd.f32 %v2074, %v2340
      %2342 = vmatprep.mubr.bf16.mxu0 0
      %2343 = vmatmul.mubr.bf16.gmra.mrb[0].mxu0 %v2023
      %v2344 = vpop.f32.mrb[0].mxu0
      %v2345 = vadd.f32 %v2070, %v2344
      %v2346 = vpop.f32.mrb[0].mxu0
      %v2347 = vadd.f32 %v2074, %v2346
      %v2348 = vpop.f32.mrb[0].mxu0
      %v2349 = vadd.f32 %v2070, %v2348
      %v2350 = vpop.f32.mrb[0].mxu0
      %v2351 = vadd.f32 %v2074, %v2350
      %2352 = vmatprep.mubr.bf16.mxu0 0
      %2353 = vmatmul.mubr.bf16.gmra.mrb[0].mxu0 %v2024
      %v2354 = vpop.f32.mrb[0].mxu0
      %v2355 = vadd.f32 %v2070, %v2354
      %v2356 = vpop.f32.mrb[0].mxu0
      %v2357 = vadd.f32 %v2074, %v2356
      %v2358 = vpop.f32.mrb[0].mxu0
      %v2359 = vpop.f32.mrb[0].mxu0
      %2360 = vdwg.mxu0
      %2361 = vst [vmem:[#allocation5] sm:$0xff] %v2274
      %2362 = vst [vmem:[#allocation5 + $0x8] sm:$0xff] %v2276
      %2363 = vst [vmem:[#allocation5 + $0x10] sm:$0xff] %v2335
      %2364 = vst [vmem:[#allocation5 + $0x18] sm:$0xff] %v2337
      %2365 = vst [vmem:[#allocation5 + $0x20] sm:$0xff] %v2278
      %2366 = vst [vmem:[#allocation5 + $0x28] sm:$0xff] %v2280
      %2367 = vst [vmem:[#allocation5 + $0x30] sm:$0xff] %v2339
      %2368 = vst [vmem:[#allocation5 + $0x38] sm:$0xff] %v2341
      %2369 = vst [vmem:[#allocation5 + $0x40] sm:$0xff] %v2284
      %2370 = vst [vmem:[#allocation5 + $0x48] sm:$0xff] %v2286
      %2371 = vst [vmem:[#allocation5 + $0x50] sm:$0xff] %v2345
      %2372 = vst [vmem:[#allocation5 + $0x58] sm:$0xff] %v2347
      %2373 = vst [vmem:[#allocation5 + $0x60] sm:$0xff] %v2288
      %2374 = vst [vmem:[#allocation5 + $0x68] sm:$0xff] %v2290
      %2375 = vst [vmem:[#allocation5 + $0x70] sm:$0xff] %v2349
      %2376 = vst [vmem:[#allocation5 + $0x78] sm:$0xff] %v2351
      %2377 = vst [vmem:[#allocation5 + $0x80] sm:$0xff] %v2294
      %2378 = vst [vmem:[#allocation5 + $0x88] sm:$0xff] %v2296
      %2379 = vst [vmem:[#allocation5 + $0x90] sm:$0xff] %v2355
      %2380 = vst [vmem:[#allocation5 + $0x98] sm:$0xff] %v2357
      %s2381 = scalar_lea.vmem [#allocation2], 8
      %v2382 = vld [vmem:[%s2381] sm:$0xff]
      %s2383 = scalar_lea.vmem [#allocation3], 8
      %v2384 = vld [vmem:[%s2383] sm:$0xff]
      %v2385 = vld [vmem:[%s722] sm:$0xff]
      %v2386 = vld [vmem:[%s722 + $0x8] sm:$0xff]
      %v2387 = vld [vmem:[%s722 + $0x10] sm:$0xff]
      %v2388 = vld [vmem:[%s722 + $0x18] sm:$0xff]
      %v2389 = vld [vmem:[%s5] sm:$0xff]
      %v2390 = vld [vmem:[%s5 + $0x8] sm:$0xff]
      %v2391 = vld [vmem:[%s5 + $0x10] sm:$0xff]
      %v2392 = vld [vmem:[%s5 + $0x18] sm:$0xff]
      %v2393 = vld [vmem:[%s5 + $0x20] sm:$0xff]
      %v2394 = vld [vmem:[%s5 + $0x28] sm:$0xff]
      %v2395 = vld [vmem:[%s5 + $0x30] sm:$0xff]
      %v2396 = vld [vmem:[%s5 + $0x38] sm:$0xff]
      %v2397 = vld [vmem:[%s5 + $0x40] sm:$0xff]
      %v2398 = vld [vmem:[%s5 + $0x48] sm:$0xff]
      %v2399 = vld [vmem:[%s5 + $0x50] sm:$0xff]
      %v2400 = vld [vmem:[%s5 + $0x58] sm:$0xff]
      %v2401 = vld [vmem:[%s5 + $0x60] sm:$0xff]
      %v2402 = vld [vmem:[%s5 + $0x68] sm:$0xff]
      %v2403 = vld [vmem:[%s5 + $0x70] sm:$0xff]
      %v2404 = vld [vmem:[%s5 + $0x78] sm:$0xff]
      %v2405 = vld [vmem:[%s5 + $0x80] sm:$0xff]
      %v2406 = vld [vmem:[%s5 + $0x88] sm:$0xff]
      %v2407 = vld [vmem:[%s5 + $0x90] sm:$0xff]
      %v2408 = vld [vmem:[%s5 + $0x98] sm:$0xff]
      %v2409 = vld [vmem:[%s5 + $0xa0] sm:$0xff]
      %v2410 = vld [vmem:[%s5 + $0xa8] sm:$0xff]
      %v2411 = vld [vmem:[%s5 + $0xb0] sm:$0xff]
      %v2412 = vld [vmem:[%s5 + $0xb8] sm:$0xff]
      %v2413 = vld [vmem:[%s5 + $0xc0] sm:$0xff]
      %v2414 = vld [vmem:[%s5 + $0xc8] sm:$0xff]
      %v2415 = vld [vmem:[%s5 + $0xd0] sm:$0xff]
      %v2416 = vld [vmem:[%s5 + $0xd8] sm:$0xff]
      %v2417 = vld [vmem:[%s5 + $0xe0] sm:$0xff]
      %v2418 = vld [vmem:[%s5 + $0xe8] sm:$0xff]
      %v2419 = vld [vmem:[%s5 + $0xf0] sm:$0xff]
      %v2420 = vld [vmem:[%s5 + $0xf8] sm:$0xff]
      %v2421 = vld [vmem:[%s5 + $0x100] sm:$0xff]
      %v2422 = vld [vmem:[%s5 + $0x108] sm:$0xff]
      %v2423 = vld [vmem:[%s5 + $0x110] sm:$0xff]
      %v2424 = vld [vmem:[%s5 + $0x118] sm:$0xff]
      %v2425 = vld [vmem:[%s5 + $0x120] sm:$0xff]
      %v2426 = vld [vmem:[%s5 + $0x128] sm:$0xff]
      %v2427 = vld [vmem:[%s5 + $0x130] sm:$0xff]
      %v2428 = vld [vmem:[%s5 + $0x138] sm:$0xff]
      %v2429 = vld [vmem:[%s5 + $0x140] sm:$0xff]
      %v2430 = vld [vmem:[%s5 + $0x148] sm:$0xff]
      %v2431 = vld [vmem:[%s5 + $0x150] sm:$0xff]
      %v2432 = vld [vmem:[%s5 + $0x158] sm:$0xff]
      %v2433 = vld [vmem:[%s5 + $0x160] sm:$0xff]
      %v2434 = vld [vmem:[%s5 + $0x168] sm:$0xff]
      %v2435 = vld [vmem:[%s5 + $0x170] sm:$0xff]
      %v2436 = vld [vmem:[%s5 + $0x178] sm:$0xff]
      %v2437 = vld [vmem:[%s5 + $0x180] sm:$0xff]
      %v2438 = vld [vmem:[%s5 + $0x188] sm:$0xff]
      %v2439 = vld [vmem:[%s5 + $0x190] sm:$0xff]
      %v2440 = vld [vmem:[%s5 + $0x198] sm:$0xff]
      %v2441 = vld [vmem:[%s5 + $0x1a0] sm:$0xff]
      %v2442 = vld [vmem:[%s5 + $0x1a8] sm:$0xff]
      %v2443 = vld [vmem:[%s5 + $0x1b0] sm:$0xff]
      %v2444 = vld [vmem:[%s5 + $0x1b8] sm:$0xff]
      %v2445 = vld [vmem:[%s5 + $0x1c0] sm:$0xff]
      %v2446 = vld [vmem:[%s5 + $0x1c8] sm:$0xff]
      %v2447 = vld [vmem:[%s5 + $0x1d0] sm:$0xff]
      %v2448 = vld [vmem:[%s5 + $0x1d8] sm:$0xff]
      %v2449 = vld [vmem:[%s5 + $0x1e0] sm:$0xff]
      %v2450 = vld [vmem:[%s5 + $0x1e8] sm:$0xff]
      %v2451 = vld [vmem:[%s5 + $0x1f0] sm:$0xff]
      %v2452 = vld [vmem:[%s5 + $0x1f8] sm:$0xff]
      %2453 = vmatprep.subr.mxu0 %v2390
      %2454 = vmatpush1.msra.mxu0 %v2389
      %2455 = vmatprep.subr.mxu0 %v2394
      %2456 = vmatpush1.msra.mxu0 %v2393
      %2457 = vmatprep.subr.mxu0 %v2398
      %2458 = vmatpush1.msra.mxu0 %v2397
      %2459 = vmatprep.subr.mxu0 %v2402
      %2460 = vmatpush1.msra.mxu0 %v2401
      %2461 = vmatprep.subr.mxu0 %v2406
      %2462 = vmatpush1.msra.mxu0 %v2405
      %2463 = vmatprep.subr.mxu0 %v2410
      %2464 = vmatpush1.msra.mxu0 %v2409
      %2465 = vmatprep.subr.mxu0 %v2414
      %2466 = vmatpush1.msra.mxu0 %v2413
      %2467 = vmatprep.subr.mxu0 %v2418
      %2468 = vmatpush1.msra.mxu0 %v2417
      %2469 = vmatprep.subr.mxu0 %v2422
      %2470 = vmatpush1.msra.mxu0 %v2421
      %2471 = vmatprep.subr.mxu0 %v2426
      %2472 = vmatpush1.msra.mxu0 %v2425
      %2473 = vmatprep.subr.mxu0 %v2430
      %2474 = vmatpush1.msra.mxu0 %v2429
      %2475 = vmatprep.subr.mxu0 %v2434
      %2476 = vmatpush1.msra.mxu0 %v2433
      %2477 = vmatprep.subr.mxu0 %v2438
      %2478 = vmatpush1.msra.mxu0 %v2437
      %2479 = vmatprep.subr.mxu0 %v2442
      %2480 = vmatpush1.msra.mxu0 %v2441
      %2481 = vmatprep.subr.mxu0 %v2446
      %2482 = vmatpush1.msra.mxu0 %v2445
      %2483 = vmatprep.subr.mxu0 %v2450
      %2484 = vmatpush1.msra.mxu0 %v2449
      %2485 = vmatprep.subr.mxu0 0.0
      %2486 = vmatpush1.msra.mxu0 0.0
      %2487 = vmatprep.subr.mxu0 0.0
      %2488 = vmatpush1.msra.mxu0 0.0
      %2489 = vmatprep.subr.mxu0 0.0
      %2490 = vmatpush1.msra.mxu0 0.0
      %2491 = vmatprep.subr.mxu0 0.0
      %2492 = vmatpush1.msra.mxu0 0.0
      %2493 = vmatprep.subr.mxu0 0.0
      %2494 = vmatpush1.msra.mxu0 0.0
      %2495 = vmatprep.subr.mxu0 0.0
      %2496 = vmatpush1.msra.mxu0 0.0
      %2497 = vmatprep.subr.mxu0 0.0
      %2498 = vmatpush1.msra.mxu0 0.0
      %2499 = vmatprep.subr.mxu0 0.0
      %2500 = vmatpush1.msra.mxu0 0.0
      %2501 = vmatprep.subr.mxu0 0.0
      %2502 = vmatpush1.msra.mxu0 0.0
      %2503 = vmatprep.subr.mxu0 0.0
      %2504 = vmatpush1.msra.mxu0 0.0
      %2505 = vmatprep.subr.mxu0 0.0
      %2506 = vmatpush1.msra.mxu0 0.0
      %2507 = vmatprep.subr.mxu0 0.0
      %2508 = vmatpush1.msra.mxu0 0.0
      %2509 = vmatprep.subr.mxu0 0.0
      %2510 = vmatpush1.msra.mxu0 0.0
      %2511 = vmatprep.subr.mxu0 0.0
      %2512 = vmatpush1.msra.mxu0 0.0
      %2513 = vmatprep.subr.mxu0 0.0
      %2514 = vmatpush1.msra.mxu0 0.0
      %2515 = vmatprep.subr.mxu0 0.0
      %2516 = vmatpush1.msra.mxu0 0.0
      %2517 = vmatprep.mubr.f32.mxu0 0.0
      %2518 = vmatmul.mubr.f32.gmra.mrb[0].mxu0 %v2382
      %v2519 = vpop.f32.mrb[0].mxu0
      %v2520 = vadd.f32 0.0, %v2519
      %v2521 = vpop.f32.mrb[0].mxu0
      %v2522 = vadd.f32 0.0, %v2521
      %2523 = vdwg.mxu0
      %2524 = vmatprep.subr.mxu0 %v2392
      %2525 = vmatpush1.msra.mxu0 %v2391
      %2526 = vmatprep.subr.mxu0 %v2396
      %2527 = vmatpush1.msra.mxu0 %v2395
      %2528 = vmatprep.subr.mxu0 %v2400
      %2529 = vmatpush1.msra.mxu0 %v2399
      %2530 = vmatprep.subr.mxu0 %v2404
      %2531 = vmatpush1.msra.mxu0 %v2403
      %2532 = vmatprep.subr.mxu0 %v2408
      %2533 = vmatpush1.msra.mxu0 %v2407
      %2534 = vmatprep.subr.mxu0 %v2412
      %2535 = vmatpush1.msra.mxu0 %v2411
      %2536 = vmatprep.subr.mxu0 %v2416
      %2537 = vmatpush1.msra.mxu0 %v2415
      %2538 = vmatprep.subr.mxu0 %v2420
      %2539 = vmatpush1.msra.mxu0 %v2419
      %2540 = vmatprep.subr.mxu0 %v2424
      %2541 = vmatpush1.msra.mxu0 %v2423
      %2542 = vmatprep.subr.mxu0 %v2428
      %2543 = vmatpush1.msra.mxu0 %v2427
      %2544 = vmatprep.subr.mxu0 %v2432
      %2545 = vmatpush1.msra.mxu0 %v2431
      %2546 = vmatprep.subr.mxu0 %v2436
      %2547 = vmatpush1.msra.mxu0 %v2435
      %2548 = vmatprep.subr.mxu0 %v2440
      %2549 = vmatpush1.msra.mxu0 %v2439
      %2550 = vmatprep.subr.mxu0 %v2444
      %2551 = vmatpush1.msra.mxu0 %v2443
      %2552 = vmatprep.subr.mxu0 %v2448
      %2553 = vmatpush1.msra.mxu0 %v2447
      %2554 = vmatprep.subr.mxu0 %v2452
      %2555 = vmatpush1.msra.mxu0 %v2451
      %2556 = vmatprep.subr.mxu0 0.0
      %2557 = vmatpush1.msra.mxu0 0.0
      %2558 = vmatprep.subr.mxu0 0.0
      %2559 = vmatpush1.msra.mxu0 0.0
      %2560 = vmatprep.subr.mxu0 0.0
      %2561 = vmatpush1.msra.mxu0 0.0
      %2562 = vmatprep.subr.mxu0 0.0
      %2563 = vmatpush1.msra.mxu0 0.0
      %2564 = vmatprep.subr.mxu0 0.0
      %2565 = vmatpush1.msra.mxu0 0.0
      %2566 = vmatprep.subr.mxu0 0.0
      %2567 = vmatpush1.msra.mxu0 0.0
      %2568 = vmatprep.subr.mxu0 0.0
      %2569 = vmatpush1.msra.mxu0 0.0
      %2570 = vmatprep.subr.mxu0 0.0
      %2571 = vmatpush1.msra.mxu0 0.0
      %2572 = vmatprep.subr.mxu0 0.0
      %2573 = vmatpush1.msra.mxu0 0.0
      %2574 = vmatprep.subr.mxu0 0.0
      %2575 = vmatpush1.msra.mxu0 0.0
      %2576 = vmatprep.subr.mxu0 0.0
      %2577 = vmatpush1.msra.mxu0 0.0
      %2578 = vmatprep.subr.mxu0 0.0
      %2579 = vmatpush1.msra.mxu0 0.0
      %2580 = vmatprep.subr.mxu0 0.0
      %2581 = vmatpush1.msra.mxu0 0.0
      %2582 = vmatprep.subr.mxu0 0.0
      %2583 = vmatpush1.msra.mxu0 0.0
      %2584 = vmatprep.subr.mxu0 0.0
      %2585 = vmatpush1.msra.mxu0 0.0
      %2586 = vmatprep.subr.mxu0 0.0
      %2587 = vmatpush1.msra.mxu0 0.0
      %2588 = vmatprep.mubr.f32.mxu0 0.0
      %2589 = vmatmul.mubr.f32.gmra.mrb[0].mxu0 %v2382
      %v2590 = vpop.f32.mrb[0].mxu0
      %v2591 = vadd.f32 0.0, %v2590
      %v2592 = vpop.f32.mrb[0].mxu0
      %v2593 = vadd.f32 0.0, %v2592
      %2594 = vdwg.mxu0
      %v2595 = vadd.f32 %v2385, %v2520
      %v2596 = vadd.f32 %v2386, %v2522
      %v2597 = vadd.f32 %v2387, %v2591
      %v2598 = vadd.f32 %v2388, %v2593
      %v2599 = vxor.u32 %v2595, 2147483648
      %v2600 = vmul.f32 %v2599, 1.442695
      %v2601 = vpow.pop %v2600
      %v2602 = vadd.f32 %v2601, 1.0
      %v2603 = vrcp.pop %v2602
      %v2604 = vmul.f32 1.0, %v2603
      %v2605 = vxor.u32 %v2596, 2147483648
      %v2606 = vmul.f32 %v2605, 1.442695
      %v2607 = vpow.pop %v2606
      %v2608 = vadd.f32 %v2607, 1.0
      %v2609 = vrcp.pop %v2608
      %v2610 = vmul.f32 1.0, %v2609
      %v2611 = vtanh.pop %v2597
      %v2612 = vxor.u32 %v2598, 2147483648
      %v2613 = vmul.f32 %v2612, 1.442695
      %v2614 = vpow.pop %v2613
      %v2615 = vadd.f32 %v2614, 1.0
      %v2616 = vrcp.pop %v2615
      %v2617 = vmul.f32 1.0, %v2616
      %v2618 = vmul.f32 %v2610, %v2384
      %v2619 = vmul.f32 %v2604, %v2611
      %v2620 = vadd.f32 %v2618, %v2619
      %v2621 = vtanh.pop %v2620
      %v2622 = vmul.f32 %v2617, %v2621
      %v2623 = vmul.f32 %v965, %v2620
      %v2624 = vmul.f32 %v968, %v2384
      %v2625 = vadd.f32 %v2623, %v2624
      %v2626 = vmul.f32 %v965, %v2622
      %v2627 = vmul.f32 %v968, %v2382
      %v2628 = vadd.f32 %v2626, %v2627
      %2629 = vst [vmem:[%s2383] sm:$0xff] %v2625
      %2630 = vst [vmem:[%s2381] sm:$0xff] %v2628
      %v2631 = vld [vmem:[%s2381] sm:$0xff]
      %v2632 = vld [vmem:[%s2383] sm:$0xff]
      %v2633 = vld [vmem:[%s981] sm:$0xff]
      %v2634 = vld [vmem:[%s981 + $0x8] sm:$0xff]
      %v2635 = vld [vmem:[%s981 + $0x10] sm:$0xff]
      %v2636 = vld [vmem:[%s981 + $0x18] sm:$0xff]
      %v2637 = vld [vmem:[%s5] sm:$0xff]
      %v2638 = vld [vmem:[%s5 + $0x8] sm:$0xff]
      %v2639 = vld [vmem:[%s5 + $0x10] sm:$0xff]
      %v2640 = vld [vmem:[%s5 + $0x18] sm:$0xff]
      %v2641 = vld [vmem:[%s5 + $0x20] sm:$0xff]
      %v2642 = vld [vmem:[%s5 + $0x28] sm:$0xff]
      %v2643 = vld [vmem:[%s5 + $0x30] sm:$0xff]
      %v2644 = vld [vmem:[%s5 + $0x38] sm:$0xff]
      %v2645 = vld [vmem:[%s5 + $0x40] sm:$0xff]
      %v2646 = vld [vmem:[%s5 + $0x48] sm:$0xff]
      %v2647 = vld [vmem:[%s5 + $0x50] sm:$0xff]
      %v2648 = vld [vmem:[%s5 + $0x58] sm:$0xff]
      %v2649 = vld [vmem:[%s5 + $0x60] sm:$0xff]
      %v2650 = vld [vmem:[%s5 + $0x68] sm:$0xff]
      %v2651 = vld [vmem:[%s5 + $0x70] sm:$0xff]
      %v2652 = vld [vmem:[%s5 + $0x78] sm:$0xff]
      %v2653 = vld [vmem:[%s5 + $0x80] sm:$0xff]
      %v2654 = vld [vmem:[%s5 + $0x88] sm:$0xff]
      %v2655 = vld [vmem:[%s5 + $0x90] sm:$0xff]
      %v2656 = vld [vmem:[%s5 + $0x98] sm:$0xff]
      %v2657 = vld [vmem:[%s5 + $0xa0] sm:$0xff]
      %v2658 = vld [vmem:[%s5 + $0xa8] sm:$0xff]
      %v2659 = vld [vmem:[%s5 + $0xb0] sm:$0xff]
      %v2660 = vld [vmem:[%s5 + $0xb8] sm:$0xff]
      %v2661 = vld [vmem:[%s5 + $0xc0] sm:$0xff]
      %v2662 = vld [vmem:[%s5 + $0xc8] sm:$0xff]
      %v2663 = vld [vmem:[%s5 + $0xd0] sm:$0xff]
      %v2664 = vld [vmem:[%s5 + $0xd8] sm:$0xff]
      %v2665 = vld [vmem:[%s5 + $0xe0] sm:$0xff]
      %v2666 = vld [vmem:[%s5 + $0xe8] sm:$0xff]
      %v2667 = vld [vmem:[%s5 + $0xf0] sm:$0xff]
      %v2668 = vld [vmem:[%s5 + $0xf8] sm:$0xff]
      %v2669 = vld [vmem:[%s5 + $0x100] sm:$0xff]
      %v2670 = vld [vmem:[%s5 + $0x108] sm:$0xff]
      %v2671 = vld [vmem:[%s5 + $0x110] sm:$0xff]
      %v2672 = vld [vmem:[%s5 + $0x118] sm:$0xff]
      %v2673 = vld [vmem:[%s5 + $0x120] sm:$0xff]
      %v2674 = vld [vmem:[%s5 + $0x128] sm:$0xff]
      %v2675 = vld [vmem:[%s5 + $0x130] sm:$0xff]
      %v2676 = vld [vmem:[%s5 + $0x138] sm:$0xff]
      %v2677 = vld [vmem:[%s5 + $0x140] sm:$0xff]
      %v2678 = vld [vmem:[%s5 + $0x148] sm:$0xff]
      %v2679 = vld [vmem:[%s5 + $0x150] sm:$0xff]
      %v2680 = vld [vmem:[%s5 + $0x158] sm:$0xff]
      %v2681 = vld [vmem:[%s5 + $0x160] sm:$0xff]
      %v2682 = vld [vmem:[%s5 + $0x168] sm:$0xff]
      %v2683 = vld [vmem:[%s5 + $0x170] sm:$0xff]
      %v2684 = vld [vmem:[%s5 + $0x178] sm:$0xff]
      %v2685 = vld [vmem:[%s5 + $0x180] sm:$0xff]
      %v2686 = vld [vmem:[%s5 + $0x188] sm:$0xff]
      %v2687 = vld [vmem:[%s5 + $0x190] sm:$0xff]
      %v2688 = vld [vmem:[%s5 + $0x198] sm:$0xff]
      %v2689 = vld [vmem:[%s5 + $0x1a0] sm:$0xff]
      %v2690 = vld [vmem:[%s5 + $0x1a8] sm:$0xff]
      %v2691 = vld [vmem:[%s5 + $0x1b0] sm:$0xff]
      %v2692 = vld [vmem:[%s5 + $0x1b8] sm:$0xff]
      %v2693 = vld [vmem:[%s5 + $0x1c0] sm:$0xff]
      %v2694 = vld [vmem:[%s5 + $0x1c8] sm:$0xff]
      %v2695 = vld [vmem:[%s5 + $0x1d0] sm:$0xff]
      %v2696 = vld [vmem:[%s5 + $0x1d8] sm:$0xff]
      %v2697 = vld [vmem:[%s5 + $0x1e0] sm:$0xff]
      %v2698 = vld [vmem:[%s5 + $0x1e8] sm:$0xff]
      %v2699 = vld [vmem:[%s5 + $0x1f0] sm:$0xff]
      %v2700 = vld [vmem:[%s5 + $0x1f8] sm:$0xff]
      %2701 = vmatprep.subr.mxu0 %v2638
      %2702 = vmatpush1.msra.mxu0 %v2637
      %2703 = vmatprep.subr.mxu0 %v2642
      %2704 = vmatpush1.msra.mxu0 %v2641
      %2705 = vmatprep.subr.mxu0 %v2646
      %2706 = vmatpush1.msra.mxu0 %v2645
      %2707 = vmatprep.subr.mxu0 %v2650
      %2708 = vmatpush1.msra.mxu0 %v2649
      %2709 = vmatprep.subr.mxu0 %v2654
      %2710 = vmatpush1.msra.mxu0 %v2653
      %2711 = vmatprep.subr.mxu0 %v2658
      %2712 = vmatpush1.msra.mxu0 %v2657
      %2713 = vmatprep.subr.mxu0 %v2662
      %2714 = vmatpush1.msra.mxu0 %v2661
      %2715 = vmatprep.subr.mxu0 %v2666
      %2716 = vmatpush1.msra.mxu0 %v2665
      %2717 = vmatprep.subr.mxu0 %v2670
      %2718 = vmatpush1.msra.mxu0 %v2669
      %2719 = vmatprep.subr.mxu0 %v2674
      %2720 = vmatpush1.msra.mxu0 %v2673
      %2721 = vmatprep.subr.mxu0 %v2678
      %2722 = vmatpush1.msra.mxu0 %v2677
      %2723 = vmatprep.subr.mxu0 %v2682
      %2724 = vmatpush1.msra.mxu0 %v2681
      %2725 = vmatprep.subr.mxu0 %v2686
      %2726 = vmatpush1.msra.mxu0 %v2685
      %2727 = vmatprep.subr.mxu0 %v2690
      %2728 = vmatpush1.msra.mxu0 %v2689
      %2729 = vmatprep.subr.mxu0 %v2694
      %2730 = vmatpush1.msra.mxu0 %v2693
      %2731 = vmatprep.subr.mxu0 %v2698
      %2732 = vmatpush1.msra.mxu0 %v2697
      %2733 = vmatprep.subr.mxu0 0.0
      %2734 = vmatpush1.msra.mxu0 0.0
      %2735 = vmatprep.subr.mxu0 0.0
      %2736 = vmatpush1.msra.mxu0 0.0
      %2737 = vmatprep.subr.mxu0 0.0
      %2738 = vmatpush1.msra.mxu0 0.0
      %2739 = vmatprep.subr.mxu0 0.0
      %2740 = vmatpush1.msra.mxu0 0.0
      %2741 = vmatprep.subr.mxu0 0.0
      %2742 = vmatpush1.msra.mxu0 0.0
      %2743 = vmatprep.subr.mxu0 0.0
      %2744 = vmatpush1.msra.mxu0 0.0
      %2745 = vmatprep.subr.mxu0 0.0
      %2746 = vmatpush1.msra.mxu0 0.0
      %2747 = vmatprep.subr.mxu0 0.0
      %2748 = vmatpush1.msra.mxu0 0.0
      %2749 = vmatprep.subr.mxu0 0.0
      %2750 = vmatpush1.msra.mxu0 0.0
      %2751 = vmatprep.subr.mxu0 0.0
      %2752 = vmatpush1.msra.mxu0 0.0
      %2753 = vmatprep.subr.mxu0 0.0
      %2754 = vmatpush1.msra.mxu0 0.0
      %2755 = vmatprep.subr.mxu0 0.0
      %2756 = vmatpush1.msra.mxu0 0.0
      %2757 = vmatprep.subr.mxu0 0.0
      %2758 = vmatpush1.msra.mxu0 0.0
      %2759 = vmatprep.subr.mxu0 0.0
      %2760 = vmatpush1.msra.mxu0 0.0
      %2761 = vmatprep.subr.mxu0 0.0
      %2762 = vmatpush1.msra.mxu0 0.0
      %2763 = vmatprep.subr.mxu0 0.0
      %2764 = vmatpush1.msra.mxu0 0.0
      %2765 = vmatprep.mubr.f32.mxu0 0.0
      %2766 = vmatmul.mubr.f32.gmra.mrb[0].mxu0 %v2631
      %v2767 = vpop.f32.mrb[0].mxu0
      %v2768 = vadd.f32 0.0, %v2767
      %v2769 = vpop.f32.mrb[0].mxu0
      %v2770 = vadd.f32 0.0, %v2769
      %2771 = vdwg.mxu0
      %2772 = vmatprep.subr.mxu0 %v2640
      %2773 = vmatpush1.msra.mxu0 %v2639
      %2774 = vmatprep.subr.mxu0 %v2644
      %2775 = vmatpush1.msra.mxu0 %v2643
      %2776 = vmatprep.subr.mxu0 %v2648
      %2777 = vmatpush1.msra.mxu0 %v2647
      %2778 = vmatprep.subr.mxu0 %v2652
      %2779 = vmatpush1.msra.mxu0 %v2651
      %2780 = vmatprep.subr.mxu0 %v2656
      %2781 = vmatpush1.msra.mxu0 %v2655
      %2782 = vmatprep.subr.mxu0 %v2660
      %2783 = vmatpush1.msra.mxu0 %v2659
      %2784 = vmatprep.subr.mxu0 %v2664
      %2785 = vmatpush1.msra.mxu0 %v2663
      %2786 = vmatprep.subr.mxu0 %v2668
      %2787 = vmatpush1.msra.mxu0 %v2667
      %2788 = vmatprep.subr.mxu0 %v2672
      %2789 = vmatpush1.msra.mxu0 %v2671
      %2790 = vmatprep.subr.mxu0 %v2676
      %2791 = vmatpush1.msra.mxu0 %v2675
      %2792 = vmatprep.subr.mxu0 %v2680
      %2793 = vmatpush1.msra.mxu0 %v2679
      %2794 = vmatprep.subr.mxu0 %v2684
      %2795 = vmatpush1.msra.mxu0 %v2683
      %2796 = vmatprep.subr.mxu0 %v2688
      %2797 = vmatpush1.msra.mxu0 %v2687
      %2798 = vmatprep.subr.mxu0 %v2692
      %2799 = vmatpush1.msra.mxu0 %v2691
      %2800 = vmatprep.subr.mxu0 %v2696
      %2801 = vmatpush1.msra.mxu0 %v2695
      %2802 = vmatprep.subr.mxu0 %v2700
      %2803 = vmatpush1.msra.mxu0 %v2699
      %2804 = vmatprep.subr.mxu0 0.0
      %2805 = vmatpush1.msra.mxu0 0.0
      %2806 = vmatprep.subr.mxu0 0.0
      %2807 = vmatpush1.msra.mxu0 0.0
      %2808 = vmatprep.subr.mxu0 0.0
      %2809 = vmatpush1.msra.mxu0 0.0
      %2810 = vmatprep.subr.mxu0 0.0
      %2811 = vmatpush1.msra.mxu0 0.0
      %2812 = vmatprep.subr.mxu0 0.0
      %2813 = vmatpush1.msra.mxu0 0.0
      %2814 = vmatprep.subr.mxu0 0.0
      %2815 = vmatpush1.msra.mxu0 0.0
      %2816 = vmatprep.subr.mxu0 0.0
      %2817 = vmatpush1.msra.mxu0 0.0
      %2818 = vmatprep.subr.mxu0 0.0
      %2819 = vmatpush1.msra.mxu0 0.0
      %2820 = vmatprep.subr.mxu0 0.0
      %2821 = vmatpush1.msra.mxu0 0.0
      %2822 = vmatprep.subr.mxu0 0.0
      %2823 = vmatpush1.msra.mxu0 0.0
      %2824 = vmatprep.subr.mxu0 0.0
      %2825 = vmatpush1.msra.mxu0 0.0
      %2826 = vmatprep.subr.mxu0 0.0
      %2827 = vmatpush1.msra.mxu0 0.0
      %2828 = vmatprep.subr.mxu0 0.0
      %2829 = vmatpush1.msra.mxu0 0.0
      %2830 = vmatprep.subr.mxu0 0.0
      %2831 = vmatpush1.msra.mxu0 0.0
      %2832 = vmatprep.subr.mxu0 0.0
      %2833 = vmatpush1.msra.mxu0 0.0
      %2834 = vmatprep.subr.mxu0 0.0
      %2835 = vmatpush1.msra.mxu0 0.0
      %2836 = vmatprep.mubr.f32.mxu0 0.0
      %2837 = vmatmul.mubr.f32.gmra.mrb[0].mxu0 %v2631
      %v2838 = vpop.f32.mrb[0].mxu0
      %v2839 = vadd.f32 0.0, %v2838
      %v2840 = vpop.f32.mrb[0].mxu0
      %v2841 = vadd.f32 0.0, %v2840
      %2842 = vdwg.mxu0
      %v2843 = vadd.f32 %v2633, %v2768
      %v2844 = vadd.f32 %v2634, %v2770
      %v2845 = vadd.f32 %v2635, %v2839
      %v2846 = vadd.f32 %v2636, %v2841
      %v2847 = vxor.u32 %v2843, 2147483648
      %v2848 = vmul.f32 %v2847, 1.442695
      %v2849 = vpow.pop %v2848
      %v2850 = vadd.f32 %v2849, 1.0
      %v2851 = vrcp.pop %v2850
      %v2852 = vmul.f32 1.0, %v2851
      %v2853 = vxor.u32 %v2844, 2147483648
      %v2854 = vmul.f32 %v2853, 1.442695
      %v2855 = vpow.pop %v2854
      %v2856 = vadd.f32 %v2855, 1.0
      %v2857 = vrcp.pop %v2856
      %v2858 = vmul.f32 1.0, %v2857
      %v2859 = vtanh.pop %v2845
      %v2860 = vxor.u32 %v2846, 2147483648
      %v2861 = vmul.f32 %v2860, 1.442695
      %v2862 = vpow.pop %v2861
      %v2863 = vadd.f32 %v2862, 1.0
      %v2864 = vrcp.pop %v2863
      %v2865 = vmul.f32 1.0, %v2864
      %v2866 = vmul.f32 %v2858, %v2632
      %v2867 = vmul.f32 %v2852, %v2859
      %v2868 = vadd.f32 %v2866, %v2867
      %v2869 = vtanh.pop %v2868
      %v2870 = vmul.f32 %v2865, %v2869
      %v2871 = vmul.f32 %v1224, %v2868
      %v2872 = vmul.f32 %v1227, %v2632
      %v2873 = vadd.f32 %v2871, %v2872
      %v2874 = vmul.f32 %v1224, %v2870
      %v2875 = vmul.f32 %v1227, %v2631
      %v2876 = vadd.f32 %v2874, %v2875
      %2877 = vst [vmem:[%s2383] sm:$0xff] %v2873
      %2878 = vst [vmem:[%s2381] sm:$0xff] %v2876
      %v2879 = vld [vmem:[%s2381] sm:$0xff]
      %v2880 = vld [vmem:[%s2383] sm:$0xff]
      %v2881 = vld [vmem:[%s1241] sm:$0xff]
      %v2882 = vld [vmem:[%s1241 + $0x8] sm:$0xff]
      %v2883 = vld [vmem:[%s1241 + $0x10] sm:$0xff]
      %v2884 = vld [vmem:[%s1241 + $0x18] sm:$0xff]
      %v2885 = vld [vmem:[%s5] sm:$0xff]
      %v2886 = vld [vmem:[%s5 + $0x8] sm:$0xff]
      %v2887 = vld [vmem:[%s5 + $0x10] sm:$0xff]
      %v2888 = vld [vmem:[%s5 + $0x18] sm:$0xff]
      %v2889 = vld [vmem:[%s5 + $0x20] sm:$0xff]
      %v2890 = vld [vmem:[%s5 + $0x28] sm:$0xff]
      %v2891 = vld [vmem:[%s5 + $0x30] sm:$0xff]
      %v2892 = vld [vmem:[%s5 + $0x38] sm:$0xff]
      %v2893 = vld [vmem:[%s5 + $0x40] sm:$0xff]
      %v2894 = vld [vmem:[%s5 + $0x48] sm:$0xff]
      %v2895 = vld [vmem:[%s5 + $0x50] sm:$0xff]
      %v2896 = vld [vmem:[%s5 + $0x58] sm:$0xff]
      %v2897 = vld [vmem:[%s5 + $0x60] sm:$0xff]
      %v2898 = vld [vmem:[%s5 + $0x68] sm:$0xff]
      %v2899 = vld [vmem:[%s5 + $0x70] sm:$0xff]
      %v2900 = vld [vmem:[%s5 + $0x78] sm:$0xff]
      %v2901 = vld [vmem:[%s5 + $0x80] sm:$0xff]
      %v2902 = vld [vmem:[%s5 + $0x88] sm:$0xff]
      %v2903 = vld [vmem:[%s5 + $0x90] sm:$0xff]
      %v2904 = vld [vmem:[%s5 + $0x98] sm:$0xff]
      %v2905 = vld [vmem:[%s5 + $0xa0] sm:$0xff]
      %v2906 = vld [vmem:[%s5 + $0xa8] sm:$0xff]
      %v2907 = vld [vmem:[%s5 + $0xb0] sm:$0xff]
      %v2908 = vld [vmem:[%s5 + $0xb8] sm:$0xff]
      %v2909 = vld [vmem:[%s5 + $0xc0] sm:$0xff]
      %v2910 = vld [vmem:[%s5 + $0xc8] sm:$0xff]
      %v2911 = vld [vmem:[%s5 + $0xd0] sm:$0xff]
      %v2912 = vld [vmem:[%s5 + $0xd8] sm:$0xff]
      %v2913 = vld [vmem:[%s5 + $0xe0] sm:$0xff]
      %v2914 = vld [vmem:[%s5 + $0xe8] sm:$0xff]
      %v2915 = vld [vmem:[%s5 + $0xf0] sm:$0xff]
      %v2916 = vld [vmem:[%s5 + $0xf8] sm:$0xff]
      %v2917 = vld [vmem:[%s5 + $0x100] sm:$0xff]
      %v2918 = vld [vmem:[%s5 + $0x108] sm:$0xff]
      %v2919 = vld [vmem:[%s5 + $0x110] sm:$0xff]
      %v2920 = vld [vmem:[%s5 + $0x118] sm:$0xff]
      %v2921 = vld [vmem:[%s5 + $0x120] sm:$0xff]
      %v2922 = vld [vmem:[%s5 + $0x128] sm:$0xff]
      %v2923 = vld [vmem:[%s5 + $0x130] sm:$0xff]
      %v2924 = vld [vmem:[%s5 + $0x138] sm:$0xff]
      %v2925 = vld [vmem:[%s5 + $0x140] sm:$0xff]
      %v2926 = vld [vmem:[%s5 + $0x148] sm:$0xff]
      %v2927 = vld [vmem:[%s5 + $0x150] sm:$0xff]
      %v2928 = vld [vmem:[%s5 + $0x158] sm:$0xff]
      %v2929 = vld [vmem:[%s5 + $0x160] sm:$0xff]
      %v2930 = vld [vmem:[%s5 + $0x168] sm:$0xff]
      %v2931 = vld [vmem:[%s5 + $0x170] sm:$0xff]
      %v2932 = vld [vmem:[%s5 + $0x178] sm:$0xff]
      %v2933 = vld [vmem:[%s5 + $0x180] sm:$0xff]
      %v2934 = vld [vmem:[%s5 + $0x188] sm:$0xff]
      %v2935 = vld [vmem:[%s5 + $0x190] sm:$0xff]
      %v2936 = vld [vmem:[%s5 + $0x198] sm:$0xff]
      %v2937 = vld [vmem:[%s5 + $0x1a0] sm:$0xff]
      %v2938 = vld [vmem:[%s5 + $0x1a8] sm:$0xff]
      %v2939 = vld [vmem:[%s5 + $0x1b0] sm:$0xff]
      %v2940 = vld [vmem:[%s5 + $0x1b8] sm:$0xff]
      %v2941 = vld [vmem:[%s5 + $0x1c0] sm:$0xff]
      %v2942 = vld [vmem:[%s5 + $0x1c8] sm:$0xff]
      %v2943 = vld [vmem:[%s5 + $0x1d0] sm:$0xff]
      %v2944 = vld [vmem:[%s5 + $0x1d8] sm:$0xff]
      %v2945 = vld [vmem:[%s5 + $0x1e0] sm:$0xff]
      %v2946 = vld [vmem:[%s5 + $0x1e8] sm:$0xff]
      %v2947 = vld [vmem:[%s5 + $0x1f0] sm:$0xff]
      %v2948 = vld [vmem:[%s5 + $0x1f8] sm:$0xff]
      %2949 = vmatprep.subr.mxu0 %v2886
      %2950 = vmatpush1.msra.mxu0 %v2885
      %2951 = vmatprep.subr.mxu0 %v2890
      %2952 = vmatpush1.msra.mxu0 %v2889
      %2953 = vmatprep.subr.mxu0 %v2894
      %2954 = vmatpush1.msra.mxu0 %v2893
      %2955 = vmatprep.subr.mxu0 %v2898
      %2956 = vmatpush1.msra.mxu0 %v2897
      %2957 = vmatprep.subr.mxu0 %v2902
      %2958 = vmatpush1.msra.mxu0 %v2901
      %2959 = vmatprep.subr.mxu0 %v2906
      %2960 = vmatpush1.msra.mxu0 %v2905
      %2961 = vmatprep.subr.mxu0 %v2910
      %2962 = vmatpush1.msra.mxu0 %v2909
      %2963 = vmatprep.subr.mxu0 %v2914
      %2964 = vmatpush1.msra.mxu0 %v2913
      %2965 = vmatprep.subr.mxu0 %v2918
      %2966 = vmatpush1.msra.mxu0 %v2917
      %2967 = vmatprep.subr.mxu0 %v2922
      %2968 = vmatpush1.msra.mxu0 %v2921
      %2969 = vmatprep.subr.mxu0 %v2926
      %2970 = vmatpush1.msra.mxu0 %v2925
      %2971 = vmatprep.subr.mxu0 %v2930
      %2972 = vmatpush1.msra.mxu0 %v2929
      %2973 = vmatprep.subr.mxu0 %v2934
      %2974 = vmatpush1.msra.mxu0 %v2933
      %2975 = vmatprep.subr.mxu0 %v2938
      %2976 = vmatpush1.msra.mxu0 %v2937
      %2977 = vmatprep.subr.mxu0 %v2942
      %2978 = vmatpush1.msra.mxu0 %v2941
      %2979 = vmatprep.subr.mxu0 %v2946
      %2980 = vmatpush1.msra.mxu0 %v2945
      %2981 = vmatprep.subr.mxu0 0.0
      %2982 = vmatpush1.msra.mxu0 0.0
      %2983 = vmatprep.subr.mxu0 0.0
      %2984 = vmatpush1.msra.mxu0 0.0
      %2985 = vmatprep.subr.mxu0 0.0
      %2986 = vmatpush1.msra.mxu0 0.0
      %2987 = vmatprep.subr.mxu0 0.0
      %2988 = vmatpush1.msra.mxu0 0.0
      %2989 = vmatprep.subr.mxu0 0.0
      %2990 = vmatpush1.msra.mxu0 0.0
      %2991 = vmatprep.subr.mxu0 0.0
      %2992 = vmatpush1.msra.mxu0 0.0
      %2993 = vmatprep.subr.mxu0 0.0
      %2994 = vmatpush1.msra.mxu0 0.0
      %2995 = vmatprep.subr.mxu0 0.0
      %2996 = vmatpush1.msra.mxu0 0.0
      %2997 = vmatprep.subr.mxu0 0.0
      %2998 = vmatpush1.msra.mxu0 0.0
      %2999 = vmatprep.subr.mxu0 0.0
      %3000 = vmatpush1.msra.mxu0 0.0
      %3001 = vmatprep.subr.mxu0 0.0
      %3002 = vmatpush1.msra.mxu0 0.0
      %3003 = vmatprep.subr.mxu0 0.0
      %3004 = vmatpush1.msra.mxu0 0.0
      %3005 = vmatprep.subr.mxu0 0.0
      %3006 = vmatpush1.msra.mxu0 0.0
      %3007 = vmatprep.subr.mxu0 0.0
      %3008 = vmatpush1.msra.mxu0 0.0
      %3009 = vmatprep.subr.mxu0 0.0
      %3010 = vmatpush1.msra.mxu0 0.0
      %3011 = vmatprep.subr.mxu0 0.0
      %3012 = vmatpush1.msra.mxu0 0.0
      %3013 = vmatprep.mubr.f32.mxu0 0.0
      %3014 = vmatmul.mubr.f32.gmra.mrb[0].mxu0 %v2879
      %v3015 = vpop.f32.mrb[0].mxu0
      %v3016 = vadd.f32 0.0, %v3015
      %v3017 = vpop.f32.mrb[0].mxu0
      %v3018 = vadd.f32 0.0, %v3017
      %3019 = vdwg.mxu0
      %3020 = vmatprep.subr.mxu0 %v2888
      %3021 = vmatpush1.msra.mxu0 %v2887
      %3022 = vmatprep.subr.mxu0 %v2892
      %3023 = vmatpush1.msra.mxu0 %v2891
      %3024 = vmatprep.subr.mxu0 %v2896
      %3025 = vmatpush1.msra.mxu0 %v2895
      %3026 = vmatprep.subr.mxu0 %v2900
      %3027 = vmatpush1.msra.mxu0 %v2899
      %3028 = vmatprep.subr.mxu0 %v2904
      %3029 = vmatpush1.msra.mxu0 %v2903
      %3030 = vmatprep.subr.mxu0 %v2908
      %3031 = vmatpush1.msra.mxu0 %v2907
      %3032 = vmatprep.subr.mxu0 %v2912
      %3033 = vmatpush1.msra.mxu0 %v2911
      %3034 = vmatprep.subr.mxu0 %v2916
      %3035 = vmatpush1.msra.mxu0 %v2915
      %3036 = vmatprep.subr.mxu0 %v2920
      %3037 = vmatpush1.msra.mxu0 %v2919
      %3038 = vmatprep.subr.mxu0 %v2924
      %3039 = vmatpush1.msra.mxu0 %v2923
      %3040 = vmatprep.subr.mxu0 %v2928
      %3041 = vmatpush1.msra.mxu0 %v2927
      %3042 = vmatprep.subr.mxu0 %v2932
      %3043 = vmatpush1.msra.mxu0 %v2931
      %3044 = vmatprep.subr.mxu0 %v2936
      %3045 = vmatpush1.msra.mxu0 %v2935
      %3046 = vmatprep.subr.mxu0 %v2940
      %3047 = vmatpush1.msra.mxu0 %v2939
      %3048 = vmatprep.subr.mxu0 %v2944
      %3049 = vmatpush1.msra.mxu0 %v2943
      %3050 = vmatprep.subr.mxu0 %v2948
      %3051 = vmatpush1.msra.mxu0 %v2947
      %3052 = vmatprep.subr.mxu0 0.0
      %3053 = vmatpush1.msra.mxu0 0.0
      %3054 = vmatprep.subr.mxu0 0.0
      %3055 = vmatpush1.msra.mxu0 0.0
      %3056 = vmatprep.subr.mxu0 0.0
      %3057 = vmatpush1.msra.mxu0 0.0
      %3058 = vmatprep.subr.mxu0 0.0
      %3059 = vmatpush1.msra.mxu0 0.0
      %3060 = vmatprep.subr.mxu0 0.0
      %3061 = vmatpush1.msra.mxu0 0.0
      %3062 = vmatprep.subr.mxu0 0.0
      %3063 = vmatpush1.msra.mxu0 0.0
      %3064 = vmatprep.subr.mxu0 0.0
      %3065 = vmatpush1.msra.mxu0 0.0
      %3066 = vmatprep.subr.mxu0 0.0
      %3067 = vmatpush1.msra.mxu0 0.0
      %3068 = vmatprep.subr.mxu0 0.0
      %3069 = vmatpush1.msra.mxu0 0.0
      %3070 = vmatprep.subr.mxu0 0.0
      %3071 = vmatpush1.msra.mxu0 0.0
      %3072 = vmatprep.subr.mxu0 0.0
      %3073 = vmatpush1.msra.mxu0 0.0
      %3074 = vmatprep.subr.mxu0 0.0
      %3075 = vmatpush1.msra.mxu0 0.0
      %3076 = vmatprep.subr.mxu0 0.0
      %3077 = vmatpush1.msra.mxu0 0.0
      %3078 = vmatprep.subr.mxu0 0.0
      %3079 = vmatpush1.msra.mxu0 0.0
      %3080 = vmatprep.subr.mxu0 0.0
      %3081 = vmatpush1.msra.mxu0 0.0
      %3082 = vmatprep.subr.mxu0 0.0
      %3083 = vmatpush1.msra.mxu0 0.0
      %3084 = vmatprep.mubr.f32.mxu0 0.0
      %3085 = vmatmul.mubr.f32.gmra.mrb[0].mxu0 %v2879
      %v3086 = vpop.f32.mrb[0].mxu0
      %v3087 = vadd.f32 0.0, %v3086
      %v3088 = vpop.f32.mrb[0].mxu0
      %v3089 = vadd.f32 0.0, %v3088
      %3090 = vdwg.mxu0
      %v3091 = vadd.f32 %v2881, %v3016
      %v3092 = vadd.f32 %v2882, %v3018
      %v3093 = vadd.f32 %v2883, %v3087
      %v3094 = vadd.f32 %v2884, %v3089
      %v3095 = vxor.u32 %v3091, 2147483648
      %v3096 = vmul.f32 %v3095, 1.442695
      %v3097 = vpow.pop %v3096
      %v3098 = vadd.f32 %v3097, 1.0
      %v3099 = vrcp.pop %v3098
      %v3100 = vmul.f32 1.0, %v3099
      %v3101 = vxor.u32 %v3092, 2147483648
      %v3102 = vmul.f32 %v3101, 1.442695
      %v3103 = vpow.pop %v3102
      %v3104 = vadd.f32 %v3103, 1.0
      %v3105 = vrcp.pop %v3104
      %v3106 = vmul.f32 1.0, %v3105
      %v3107 = vtanh.pop %v3093
      %v3108 = vxor.u32 %v3094, 2147483648
      %v3109 = vmul.f32 %v3108, 1.442695
      %v3110 = vpow.pop %v3109
      %v3111 = vadd.f32 %v3110, 1.0
      %v3112 = vrcp.pop %v3111
      %v3113 = vmul.f32 1.0, %v3112
      %v3114 = vmul.f32 %v3106, %v2880
      %v3115 = vmul.f32 %v3100, %v3107
      %v3116 = vadd.f32 %v3114, %v3115
      %v3117 = vtanh.pop %v3116
      %v3118 = vmul.f32 %v3113, %v3117
      %v3119 = vmul.f32 %v1484, %v3116
      %v3120 = vmul.f32 %v1487, %v2880
      %v3121 = vadd.f32 %v3119, %v3120
      %v3122 = vmul.f32 %v1484, %v3118
      %v3123 = vmul.f32 %v1487, %v2879
      %v3124 = vadd.f32 %v3122, %v3123
      %3125 = vst [vmem:[%s2383] sm:$0xff] %v3121
      %3126 = vst [vmem:[%s2381] sm:$0xff] %v3124
      %v3127 = vld [vmem:[%s2381] sm:$0xff]
      %v3128 = vld [vmem:[%s2383] sm:$0xff]
      %v3129 = vld [vmem:[%s1501] sm:$0xff]
      %v3130 = vld [vmem:[%s1501 + $0x8] sm:$0xff]
      %v3131 = vld [vmem:[%s1501 + $0x10] sm:$0xff]
      %v3132 = vld [vmem:[%s1501 + $0x18] sm:$0xff]
      %v3133 = vld [vmem:[%s5] sm:$0xff]
      %v3134 = vld [vmem:[%s5 + $0x8] sm:$0xff]
      %v3135 = vld [vmem:[%s5 + $0x10] sm:$0xff]
      %v3136 = vld [vmem:[%s5 + $0x18] sm:$0xff]
      %v3137 = vld [vmem:[%s5 + $0x20] sm:$0xff]
      %v3138 = vld [vmem:[%s5 + $0x28] sm:$0xff]
      %v3139 = vld [vmem:[%s5 + $0x30] sm:$0xff]
      %v3140 = vld [vmem:[%s5 + $0x38] sm:$0xff]
      %v3141 = vld [vmem:[%s5 + $0x40] sm:$0xff]
      %v3142 = vld [vmem:[%s5 + $0x48] sm:$0xff]
      %v3143 = vld [vmem:[%s5 + $0x50] sm:$0xff]
      %v3144 = vld [vmem:[%s5 + $0x58] sm:$0xff]
      %v3145 = vld [vmem:[%s5 + $0x60] sm:$0xff]
      %v3146 = vld [vmem:[%s5 + $0x68] sm:$0xff]
      %v3147 = vld [vmem:[%s5 + $0x70] sm:$0xff]
      %v3148 = vld [vmem:[%s5 + $0x78] sm:$0xff]
      %v3149 = vld [vmem:[%s5 + $0x80] sm:$0xff]
      %v3150 = vld [vmem:[%s5 + $0x88] sm:$0xff]
      %v3151 = vld [vmem:[%s5 + $0x90] sm:$0xff]
      %v3152 = vld [vmem:[%s5 + $0x98] sm:$0xff]
      %v3153 = vld [vmem:[%s5 + $0xa0] sm:$0xff]
      %v3154 = vld [vmem:[%s5 + $0xa8] sm:$0xff]
      %v3155 = vld [vmem:[%s5 + $0xb0] sm:$0xff]
      %v3156 = vld [vmem:[%s5 + $0xb8] sm:$0xff]
      %v3157 = vld [vmem:[%s5 + $0xc0] sm:$0xff]
      %v3158 = vld [vmem:[%s5 + $0xc8] sm:$0xff]
      %v3159 = vld [vmem:[%s5 + $0xd0] sm:$0xff]
      %v3160 = vld [vmem:[%s5 + $0xd8] sm:$0xff]
      %v3161 = vld [vmem:[%s5 + $0xe0] sm:$0xff]
      %v3162 = vld [vmem:[%s5 + $0xe8] sm:$0xff]
      %v3163 = vld [vmem:[%s5 + $0xf0] sm:$0xff]
      %v3164 = vld [vmem:[%s5 + $0xf8] sm:$0xff]
      %v3165 = vld [vmem:[%s5 + $0x100] sm:$0xff]
      %v3166 = vld [vmem:[%s5 + $0x108] sm:$0xff]
      %v3167 = vld [vmem:[%s5 + $0x110] sm:$0xff]
      %v3168 = vld [vmem:[%s5 + $0x118] sm:$0xff]
      %v3169 = vld [vmem:[%s5 + $0x120] sm:$0xff]
      %v3170 = vld [vmem:[%s5 + $0x128] sm:$0xff]
      %v3171 = vld [vmem:[%s5 + $0x130] sm:$0xff]
      %v3172 = vld [vmem:[%s5 + $0x138] sm:$0xff]
      %v3173 = vld [vmem:[%s5 + $0x140] sm:$0xff]
      %v3174 = vld [vmem:[%s5 + $0x148] sm:$0xff]
      %v3175 = vld [vmem:[%s5 + $0x150] sm:$0xff]
      %v3176 = vld [vmem:[%s5 + $0x158] sm:$0xff]
      %v3177 = vld [vmem:[%s5 + $0x160] sm:$0xff]
      %v3178 = vld [vmem:[%s5 + $0x168] sm:$0xff]
      %v3179 = vld [vmem:[%s5 + $0x170] sm:$0xff]
      %v3180 = vld [vmem:[%s5 + $0x178] sm:$0xff]
      %v3181 = vld [vmem:[%s5 + $0x180] sm:$0xff]
      %v3182 = vld [vmem:[%s5 + $0x188] sm:$0xff]
      %v3183 = vld [vmem:[%s5 + $0x190] sm:$0xff]
      %v3184 = vld [vmem:[%s5 + $0x198] sm:$0xff]
      %v3185 = vld [vmem:[%s5 + $0x1a0] sm:$0xff]
      %v3186 = vld [vmem:[%s5 + $0x1a8] sm:$0xff]
      %v3187 = vld [vmem:[%s5 + $0x1b0] sm:$0xff]
      %v3188 = vld [vmem:[%s5 + $0x1b8] sm:$0xff]
      %v3189 = vld [vmem:[%s5 + $0x1c0] sm:$0xff]
      %v3190 = vld [vmem:[%s5 + $0x1c8] sm:$0xff]
      %v3191 = vld [vmem:[%s5 + $0x1d0] sm:$0xff]
      %v3192 = vld [vmem:[%s5 + $0x1d8] sm:$0xff]
      %v3193 = vld [vmem:[%s5 + $0x1e0] sm:$0xff]
      %v3194 = vld [vmem:[%s5 + $0x1e8] sm:$0xff]
      %v3195 = vld [vmem:[%s5 + $0x1f0] sm:$0xff]
      %v3196 = vld [vmem:[%s5 + $0x1f8] sm:$0xff]
      %3197 = vmatprep.subr.mxu0 %v3134
      %3198 = vmatpush1.msra.mxu0 %v3133
      %3199 = vmatprep.subr.mxu0 %v3138
      %3200 = vmatpush1.msra.mxu0 %v3137
      %3201 = vmatprep.subr.mxu0 %v3142
      %3202 = vmatpush1.msra.mxu0 %v3141
      %3203 = vmatprep.subr.mxu0 %v3146
      %3204 = vmatpush1.msra.mxu0 %v3145
      %3205 = vmatprep.subr.mxu0 %v3150
      %3206 = vmatpush1.msra.mxu0 %v3149
      %3207 = vmatprep.subr.mxu0 %v3154
      %3208 = vmatpush1.msra.mxu0 %v3153
      %3209 = vmatprep.subr.mxu0 %v3158
      %3210 = vmatpush1.msra.mxu0 %v3157
      %3211 = vmatprep.subr.mxu0 %v3162
      %3212 = vmatpush1.msra.mxu0 %v3161
      %3213 = vmatprep.subr.mxu0 %v3166
      %3214 = vmatpush1.msra.mxu0 %v3165
      %3215 = vmatprep.subr.mxu0 %v3170
      %3216 = vmatpush1.msra.mxu0 %v3169
      %3217 = vmatprep.subr.mxu0 %v3174
      %3218 = vmatpush1.msra.mxu0 %v3173
      %3219 = vmatprep.subr.mxu0 %v3178
      %3220 = vmatpush1.msra.mxu0 %v3177
      %3221 = vmatprep.subr.mxu0 %v3182
      %3222 = vmatpush1.msra.mxu0 %v3181
      %3223 = vmatprep.subr.mxu0 %v3186
      %3224 = vmatpush1.msra.mxu0 %v3185
      %3225 = vmatprep.subr.mxu0 %v3190
      %3226 = vmatpush1.msra.mxu0 %v3189
      %3227 = vmatprep.subr.mxu0 %v3194
      %3228 = vmatpush1.msra.mxu0 %v3193
      %3229 = vmatprep.subr.mxu0 0.0
      %3230 = vmatpush1.msra.mxu0 0.0
      %3231 = vmatprep.subr.mxu0 0.0
      %3232 = vmatpush1.msra.mxu0 0.0
      %3233 = vmatprep.subr.mxu0 0.0
      %3234 = vmatpush1.msra.mxu0 0.0
      %3235 = vmatprep.subr.mxu0 0.0
      %3236 = vmatpush1.msra.mxu0 0.0
      %3237 = vmatprep.subr.mxu0 0.0
      %3238 = vmatpush1.msra.mxu0 0.0
      %3239 = vmatprep.subr.mxu0 0.0
      %3240 = vmatpush1.msra.mxu0 0.0
      %3241 = vmatprep.subr.mxu0 0.0
      %3242 = vmatpush1.msra.mxu0 0.0
      %3243 = vmatprep.subr.mxu0 0.0
      %3244 = vmatpush1.msra.mxu0 0.0
      %3245 = vmatprep.subr.mxu0 0.0
      %3246 = vmatpush1.msra.mxu0 0.0
      %3247 = vmatprep.subr.mxu0 0.0
      %3248 = vmatpush1.msra.mxu0 0.0
      %3249 = vmatprep.subr.mxu0 0.0
      %3250 = vmatpush1.msra.mxu0 0.0
      %3251 = vmatprep.subr.mxu0 0.0
      %3252 = vmatpush1.msra.mxu0 0.0
      %3253 = vmatprep.subr.mxu0 0.0
      %3254 = vmatpush1.msra.mxu0 0.0
      %3255 = vmatprep.subr.mxu0 0.0
      %3256 = vmatpush1.msra.mxu0 0.0
      %3257 = vmatprep.subr.mxu0 0.0
      %3258 = vmatpush1.msra.mxu0 0.0
      %3259 = vmatprep.subr.mxu0 0.0
      %3260 = vmatpush1.msra.mxu0 0.0
      %3261 = vmatprep.mubr.f32.mxu0 0.0
      %3262 = vmatmul.mubr.f32.gmra.mrb[0].mxu0 %v3127
      %v3263 = vpop.f32.mrb[0].mxu0
      %v3264 = vadd.f32 0.0, %v3263
      %v3265 = vpop.f32.mrb[0].mxu0
      %v3266 = vadd.f32 0.0, %v3265
      %3267 = vdwg.mxu0
      %3268 = vmatprep.subr.mxu0 %v3136
      %3269 = vmatpush1.msra.mxu0 %v3135
      %3270 = vmatprep.subr.mxu0 %v3140
      %3271 = vmatpush1.msra.mxu0 %v3139
      %3272 = vmatprep.subr.mxu0 %v3144
      %3273 = vmatpush1.msra.mxu0 %v3143
      %3274 = vmatprep.subr.mxu0 %v3148
      %3275 = vmatpush1.msra.mxu0 %v3147
      %3276 = vmatprep.subr.mxu0 %v3152
      %3277 = vmatpush1.msra.mxu0 %v3151
      %3278 = vmatprep.subr.mxu0 %v3156
      %3279 = vmatpush1.msra.mxu0 %v3155
      %3280 = vmatprep.subr.mxu0 %v3160
      %3281 = vmatpush1.msra.mxu0 %v3159
      %3282 = vmatprep.subr.mxu0 %v3164
      %3283 = vmatpush1.msra.mxu0 %v3163
      %3284 = vmatprep.subr.mxu0 %v3168
      %3285 = vmatpush1.msra.mxu0 %v3167
      %3286 = vmatprep.subr.mxu0 %v3172
      %3287 = vmatpush1.msra.mxu0 %v3171
      %3288 = vmatprep.subr.mxu0 %v3176
      %3289 = vmatpush1.msra.mxu0 %v3175
      %3290 = vmatprep.subr.mxu0 %v3180
      %3291 = vmatpush1.msra.mxu0 %v3179
      %3292 = vmatprep.subr.mxu0 %v3184
      %3293 = vmatpush1.msra.mxu0 %v3183
      %3294 = vmatprep.subr.mxu0 %v3188
      %3295 = vmatpush1.msra.mxu0 %v3187
      %3296 = vmatprep.subr.mxu0 %v3192
      %3297 = vmatpush1.msra.mxu0 %v3191
      %3298 = vmatprep.subr.mxu0 %v3196
      %3299 = vmatpush1.msra.mxu0 %v3195
      %3300 = vmatprep.subr.mxu0 0.0
      %3301 = vmatpush1.msra.mxu0 0.0
      %3302 = vmatprep.subr.mxu0 0.0
      %3303 = vmatpush1.msra.mxu0 0.0
      %3304 = vmatprep.subr.mxu0 0.0
      %3305 = vmatpush1.msra.mxu0 0.0
      %3306 = vmatprep.subr.mxu0 0.0
      %3307 = vmatpush1.msra.mxu0 0.0
      %3308 = vmatprep.subr.mxu0 0.0
      %3309 = vmatpush1.msra.mxu0 0.0
      %3310 = vmatprep.subr.mxu0 0.0
      %3311 = vmatpush1.msra.mxu0 0.0
      %3312 = vmatprep.subr.mxu0 0.0
      %3313 = vmatpush1.msra.mxu0 0.0
      %3314 = vmatprep.subr.mxu0 0.0
      %3315 = vmatpush1.msra.mxu0 0.0
      %3316 = vmatprep.subr.mxu0 0.0
      %3317 = vmatpush1.msra.mxu0 0.0
      %3318 = vmatprep.subr.mxu0 0.0
      %3319 = vmatpush1.msra.mxu0 0.0
      %3320 = vmatprep.subr.mxu0 0.0
      %3321 = vmatpush1.msra.mxu0 0.0
      %3322 = vmatprep.subr.mxu0 0.0
      %3323 = vmatpush1.msra.mxu0 0.0
      %3324 = vmatprep.subr.mxu0 0.0
      %3325 = vmatpush1.msra.mxu0 0.0
      %3326 = vmatprep.subr.mxu0 0.0
      %3327 = vmatpush1.msra.mxu0 0.0
      %3328 = vmatprep.subr.mxu0 0.0
      %3329 = vmatpush1.msra.mxu0 0.0
      %3330 = vmatprep.subr.mxu0 0.0
      %3331 = vmatpush1.msra.mxu0 0.0
      %3332 = vmatprep.mubr.f32.mxu0 0.0
      %3333 = vmatmul.mubr.f32.gmra.mrb[0].mxu0 %v3127
      %v3334 = vpop.f32.mrb[0].mxu0
      %v3335 = vadd.f32 0.0, %v3334
      %v3336 = vpop.f32.mrb[0].mxu0
      %v3337 = vadd.f32 0.0, %v3336
      %3338 = vdwg.mxu0
      %v3339 = vadd.f32 %v3129, %v3264
      %v3340 = vadd.f32 %v3130, %v3266
      %v3341 = vadd.f32 %v3131, %v3335
      %v3342 = vadd.f32 %v3132, %v3337
      %v3343 = vxor.u32 %v3339, 2147483648
      %v3344 = vmul.f32 %v3343, 1.442695
      %v3345 = vpow.pop %v3344
      %v3346 = vadd.f32 %v3345, 1.0
      %v3347 = vrcp.pop %v3346
      %v3348 = vmul.f32 1.0, %v3347
      %v3349 = vxor.u32 %v3340, 2147483648
      %v3350 = vmul.f32 %v3349, 1.442695
      %v3351 = vpow.pop %v3350
      %v3352 = vadd.f32 %v3351, 1.0
      %v3353 = vrcp.pop %v3352
      %v3354 = vmul.f32 1.0, %v3353
      %v3355 = vtanh.pop %v3341
      %v3356 = vxor.u32 %v3342, 2147483648
      %v3357 = vmul.f32 %v3356, 1.442695
      %v3358 = vpow.pop %v3357
      %v3359 = vadd.f32 %v3358, 1.0
      %v3360 = vrcp.pop %v3359
      %v3361 = vmul.f32 1.0, %v3360
      %v3362 = vmul.f32 %v3354, %v3128
      %v3363 = vmul.f32 %v3348, %v3355
      %v3364 = vadd.f32 %v3362, %v3363
      %v3365 = vtanh.pop %v3364
      %v3366 = vmul.f32 %v3361, %v3365
      %v3367 = vmul.f32 %v1744, %v3364
      %v3368 = vmul.f32 %v1747, %v3128
      %v3369 = vadd.f32 %v3367, %v3368
      %v3370 = vmul.f32 %v1744, %v3366
      %v3371 = vmul.f32 %v1747, %v3127
      %v3372 = vadd.f32 %v3370, %v3371
      %3373 = vst [vmem:[%s2383] sm:$0xff] %v3369
      %3374 = vst [vmem:[%s2381] sm:$0xff] %v3372
      %v3375 = vld [vmem:[%s2381] sm:$0xff]
      %v3376 = vld [vmem:[%s2383] sm:$0xff]
      %v3377 = vld [vmem:[%s1761] sm:$0xff]
      %v3378 = vld [vmem:[%s1761 + $0x8] sm:$0xff]
      %v3379 = vld [vmem:[%s1761 + $0x10] sm:$0xff]
      %v3380 = vld [vmem:[%s1761 + $0x18] sm:$0xff]
      %v3381 = vld [vmem:[%s5] sm:$0xff]
      %v3382 = vld [vmem:[%s5 + $0x8] sm:$0xff]
      %v3383 = vld [vmem:[%s5 + $0x10] sm:$0xff]
      %v3384 = vld [vmem:[%s5 + $0x18] sm:$0xff]
      %v3385 = vld [vmem:[%s5 + $0x20] sm:$0xff]
      %v3386 = vld [vmem:[%s5 + $0x28] sm:$0xff]
      %v3387 = vld [vmem:[%s5 + $0x30] sm:$0xff]
      %v3388 = vld [vmem:[%s5 + $0x38] sm:$0xff]
      %v3389 = vld [vmem:[%s5 + $0x40] sm:$0xff]
      %v3390 = vld [vmem:[%s5 + $0x48] sm:$0xff]
      %v3391 = vld [vmem:[%s5 + $0x50] sm:$0xff]
      %v3392 = vld [vmem:[%s5 + $0x58] sm:$0xff]
      %v3393 = vld [vmem:[%s5 + $0x60] sm:$0xff]
      %v3394 = vld [vmem:[%s5 + $0x68] sm:$0xff]
      %v3395 = vld [vmem:[%s5 + $0x70] sm:$0xff]
      %v3396 = vld [vmem:[%s5 + $0x78] sm:$0xff]
      %v3397 = vld [vmem:[%s5 + $0x80] sm:$0xff]
      %v3398 = vld [vmem:[%s5 + $0x88] sm:$0xff]
      %v3399 = vld [vmem:[%s5 + $0x90] sm:$0xff]
      %v3400 = vld [vmem:[%s5 + $0x98] sm:$0xff]
      %v3401 = vld [vmem:[%s5 + $0xa0] sm:$0xff]
      %v3402 = vld [vmem:[%s5 + $0xa8] sm:$0xff]
      %v3403 = vld [vmem:[%s5 + $0xb0] sm:$0xff]
      %v3404 = vld [vmem:[%s5 + $0xb8] sm:$0xff]
      %v3405 = vld [vmem:[%s5 + $0xc0] sm:$0xff]
      %v3406 = vld [vmem:[%s5 + $0xc8] sm:$0xff]
      %v3407 = vld [vmem:[%s5 + $0xd0] sm:$0xff]
      %v3408 = vld [vmem:[%s5 + $0xd8] sm:$0xff]
      %v3409 = vld [vmem:[%s5 + $0xe0] sm:$0xff]
      %v3410 = vld [vmem:[%s5 + $0xe8] sm:$0xff]
      %v3411 = vld [vmem:[%s5 + $0xf0] sm:$0xff]
      %v3412 = vld [vmem:[%s5 + $0xf8] sm:$0xff]
      %v3413 = vld [vmem:[%s5 + $0x100] sm:$0xff]
      %v3414 = vld [vmem:[%s5 + $0x108] sm:$0xff]
      %v3415 = vld [vmem:[%s5 + $0x110] sm:$0xff]
      %v3416 = vld [vmem:[%s5 + $0x118] sm:$0xff]
      %v3417 = vld [vmem:[%s5 + $0x120] sm:$0xff]
      %v3418 = vld [vmem:[%s5 + $0x128] sm:$0xff]
      %v3419 = vld [vmem:[%s5 + $0x130] sm:$0xff]
      %v3420 = vld [vmem:[%s5 + $0x138] sm:$0xff]
      %v3421 = vld [vmem:[%s5 + $0x140] sm:$0xff]
      %v3422 = vld [vmem:[%s5 + $0x148] sm:$0xff]
      %v3423 = vld [vmem:[%s5 + $0x150] sm:$0xff]
      %v3424 = vld [vmem:[%s5 + $0x158] sm:$0xff]
      %v3425 = vld [vmem:[%s5 + $0x160] sm:$0xff]
      %v3426 = vld [vmem:[%s5 + $0x168] sm:$0xff]
      %v3427 = vld [vmem:[%s5 + $0x170] sm:$0xff]
      %v3428 = vld [vmem:[%s5 + $0x178] sm:$0xff]
      %v3429 = vld [vmem:[%s5 + $0x180] sm:$0xff]
      %v3430 = vld [vmem:[%s5 + $0x188] sm:$0xff]
      %v3431 = vld [vmem:[%s5 + $0x190] sm:$0xff]
      %v3432 = vld [vmem:[%s5 + $0x198] sm:$0xff]
      %v3433 = vld [vmem:[%s5 + $0x1a0] sm:$0xff]
      %v3434 = vld [vmem:[%s5 + $0x1a8] sm:$0xff]
      %v3435 = vld [vmem:[%s5 + $0x1b0] sm:$0xff]
      %v3436 = vld [vmem:[%s5 + $0x1b8] sm:$0xff]
      %v3437 = vld [vmem:[%s5 + $0x1c0] sm:$0xff]
      %v3438 = vld [vmem:[%s5 + $0x1c8] sm:$0xff]
      %v3439 = vld [vmem:[%s5 + $0x1d0] sm:$0xff]
      %v3440 = vld [vmem:[%s5 + $0x1d8] sm:$0xff]
      %v3441 = vld [vmem:[%s5 + $0x1e0] sm:$0xff]
      %v3442 = vld [vmem:[%s5 + $0x1e8] sm:$0xff]
      %v3443 = vld [vmem:[%s5 + $0x1f0] sm:$0xff]
      %v3444 = vld [vmem:[%s5 + $0x1f8] sm:$0xff]
      %3445 = vmatprep.subr.mxu0 %v3382
      %3446 = vmatpush1.msra.mxu0 %v3381
      %3447 = vmatprep.subr.mxu0 %v3386
      %3448 = vmatpush1.msra.mxu0 %v3385
      %3449 = vmatprep.subr.mxu0 %v3390
      %3450 = vmatpush1.msra.mxu0 %v3389
      %3451 = vmatprep.subr.mxu0 %v3394
      %3452 = vmatpush1.msra.mxu0 %v3393
      %3453 = vmatprep.subr.mxu0 %v3398
      %3454 = vmatpush1.msra.mxu0 %v3397
      %3455 = vmatprep.subr.mxu0 %v3402
      %3456 = vmatpush1.msra.mxu0 %v3401
      %3457 = vmatprep.subr.mxu0 %v3406
      %3458 = vmatpush1.msra.mxu0 %v3405
      %3459 = vmatprep.subr.mxu0 %v3410
      %3460 = vmatpush1.msra.mxu0 %v3409
      %3461 = vmatprep.subr.mxu0 %v3414
      %3462 = vmatpush1.msra.mxu0 %v3413
      %3463 = vmatprep.subr.mxu0 %v3418
      %3464 = vmatpush1.msra.mxu0 %v3417
      %3465 = vmatprep.subr.mxu0 %v3422
      %3466 = vmatpush1.msra.mxu0 %v3421
      %3467 = vmatprep.subr.mxu0 %v3426
      %3468 = vmatpush1.msra.mxu0 %v3425
      %3469 = vmatprep.subr.mxu0 %v3430
      %3470 = vmatpush1.msra.mxu0 %v3429
      %3471 = vmatprep.subr.mxu0 %v3434
      %3472 = vmatpush1.msra.mxu0 %v3433
      %3473 = vmatprep.subr.mxu0 %v3438
      %3474 = vmatpush1.msra.mxu0 %v3437
      %3475 = vmatprep.subr.mxu0 %v3442
      %3476 = vmatpush1.msra.mxu0 %v3441
      %3477 = vmatprep.subr.mxu0 0.0
      %3478 = vmatpush1.msra.mxu0 0.0
      %3479 = vmatprep.subr.mxu0 0.0
      %3480 = vmatpush1.msra.mxu0 0.0
      %3481 = vmatprep.subr.mxu0 0.0
      %3482 = vmatpush1.msra.mxu0 0.0
      %3483 = vmatprep.subr.mxu0 0.0
      %3484 = vmatpush1.msra.mxu0 0.0
      %3485 = vmatprep.subr.mxu0 0.0
      %3486 = vmatpush1.msra.mxu0 0.0
      %3487 = vmatprep.subr.mxu0 0.0
      %3488 = vmatpush1.msra.mxu0 0.0
      %3489 = vmatprep.subr.mxu0 0.0
      %3490 = vmatpush1.msra.mxu0 0.0
      %3491 = vmatprep.subr.mxu0 0.0
      %3492 = vmatpush1.msra.mxu0 0.0
      %3493 = vmatprep.subr.mxu0 0.0
      %3494 = vmatpush1.msra.mxu0 0.0
      %3495 = vmatprep.subr.mxu0 0.0
      %3496 = vmatpush1.msra.mxu0 0.0
      %3497 = vmatprep.subr.mxu0 0.0
      %3498 = vmatpush1.msra.mxu0 0.0
      %3499 = vmatprep.subr.mxu0 0.0
      %3500 = vmatpush1.msra.mxu0 0.0
      %3501 = vmatprep.subr.mxu0 0.0
      %3502 = vmatpush1.msra.mxu0 0.0
      %3503 = vmatprep.subr.mxu0 0.0
      %3504 = vmatpush1.msra.mxu0 0.0
      %3505 = vmatprep.subr.mxu0 0.0
      %3506 = vmatpush1.msra.mxu0 0.0
      %3507 = vmatprep.subr.mxu0 0.0
      %3508 = vmatpush1.msra.mxu0 0.0
      %3509 = vmatprep.mubr.f32.mxu0 0.0
      %3510 = vmatmul.mubr.f32.gmra.mrb[0].mxu0 %v3375
      %v3511 = vpop.f32.mrb[0].mxu0
      %v3512 = vadd.f32 0.0, %v3511
      %v3513 = vpop.f32.mrb[0].mxu0
      %v3514 = vadd.f32 0.0, %v3513
      %3515 = vdwg.mxu0
      %3516 = vmatprep.subr.mxu0 %v3384
      %3517 = vmatpush1.msra.mxu0 %v3383
      %3518 = vmatprep.subr.mxu0 %v3388
      %3519 = vmatpush1.msra.mxu0 %v3387
      %3520 = vmatprep.subr.mxu0 %v3392
      %3521 = vmatpush1.msra.mxu0 %v3391
      %3522 = vmatprep.subr.mxu0 %v3396
      %3523 = vmatpush1.msra.mxu0 %v3395
      %3524 = vmatprep.subr.mxu0 %v3400
      %3525 = vmatpush1.msra.mxu0 %v3399
      %3526 = vmatprep.subr.mxu0 %v3404
      %3527 = vmatpush1.msra.mxu0 %v3403
      %3528 = vmatprep.subr.mxu0 %v3408
      %3529 = vmatpush1.msra.mxu0 %v3407
      %3530 = vmatprep.subr.mxu0 %v3412
      %3531 = vmatpush1.msra.mxu0 %v3411
      %3532 = vmatprep.subr.mxu0 %v3416
      %3533 = vmatpush1.msra.mxu0 %v3415
      %3534 = vmatprep.subr.mxu0 %v3420
      %3535 = vmatpush1.msra.mxu0 %v3419
      %3536 = vmatprep.subr.mxu0 %v3424
      %3537 = vmatpush1.msra.mxu0 %v3423
      %3538 = vmatprep.subr.mxu0 %v3428
      %3539 = vmatpush1.msra.mxu0 %v3427
      %3540 = vmatprep.subr.mxu0 %v3432
      %3541 = vmatpush1.msra.mxu0 %v3431
      %3542 = vmatprep.subr.mxu0 %v3436
      %3543 = vmatpush1.msra.mxu0 %v3435
      %3544 = vmatprep.subr.mxu0 %v3440
      %3545 = vmatpush1.msra.mxu0 %v3439
      %3546 = vmatprep.subr.mxu0 %v3444
      %3547 = vmatpush1.msra.mxu0 %v3443
      %3548 = vmatprep.subr.mxu0 0.0
      %3549 = vmatpush1.msra.mxu0 0.0
      %3550 = vmatprep.subr.mxu0 0.0
      %3551 = vmatpush1.msra.mxu0 0.0
      %3552 = vmatprep.subr.mxu0 0.0
      %3553 = vmatpush1.msra.mxu0 0.0
      %3554 = vmatprep.subr.mxu0 0.0
      %3555 = vmatpush1.msra.mxu0 0.0
      %3556 = vmatprep.subr.mxu0 0.0
      %3557 = vmatpush1.msra.mxu0 0.0
      %3558 = vmatprep.subr.mxu0 0.0
      %3559 = vmatpush1.msra.mxu0 0.0
      %3560 = vmatprep.subr.mxu0 0.0
      %3561 = vmatpush1.msra.mxu0 0.0
      %3562 = vmatprep.subr.mxu0 0.0
      %3563 = vmatpush1.msra.mxu0 0.0
      %3564 = vmatprep.subr.mxu0 0.0
      %3565 = vmatpush1.msra.mxu0 0.0
      %3566 = vmatprep.subr.mxu0 0.0
      %3567 = vmatpush1.msra.mxu0 0.0
      %3568 = vmatprep.subr.mxu0 0.0
      %3569 = vmatpush1.msra.mxu0 0.0
      %3570 = vmatprep.subr.mxu0 0.0
      %3571 = vmatpush1.msra.mxu0 0.0
      %3572 = vmatprep.subr.mxu0 0.0
      %3573 = vmatpush1.msra.mxu0 0.0
      %3574 = vmatprep.subr.mxu0 0.0
      %3575 = vmatpush1.msra.mxu0 0.0
      %3576 = vmatprep.subr.mxu0 0.0
      %3577 = vmatpush1.msra.mxu0 0.0
      %3578 = vmatprep.subr.mxu0 0.0
      %3579 = vmatpush1.msra.mxu0 0.0
      %3580 = vmatprep.mubr.f32.mxu0 0.0
      %3581 = vmatmul.mubr.f32.gmra.mrb[0].mxu0 %v3375
      %v3582 = vpop.f32.mrb[0].mxu0
      %v3583 = vadd.f32 0.0, %v3582
      %v3584 = vpop.f32.mrb[0].mxu0
      %v3585 = vadd.f32 0.0, %v3584
      %3586 = vdwg.mxu0
      %v3587 = vadd.f32 %v3377, %v3512
      %v3588 = vadd.f32 %v3378, %v3514
      %v3589 = vadd.f32 %v3379, %v3583
      %v3590 = vadd.f32 %v3380, %v3585
      %v3591 = vxor.u32 %v3587, 2147483648
      %v3592 = vmul.f32 %v3591, 1.442695
      %v3593 = vpow.pop %v3592
      %v3594 = vadd.f32 %v3593, 1.0
      %v3595 = vrcp.pop %v3594
      %v3596 = vmul.f32 1.0, %v3595
      %v3597 = vxor.u32 %v3588, 2147483648
      %v3598 = vmul.f32 %v3597, 1.442695
      %v3599 = vpow.pop %v3598
      %v3600 = vadd.f32 %v3599, 1.0
      %v3601 = vrcp.pop %v3600
      %v3602 = vmul.f32 1.0, %v3601
      %v3603 = vtanh.pop %v3589
      %v3604 = vxor.u32 %v3590, 2147483648
      %v3605 = vmul.f32 %v3604, 1.442695
      %v3606 = vpow.pop %v3605
      %v3607 = vadd.f32 %v3606, 1.0
      %v3608 = vrcp.pop %v3607
      %v3609 = vmul.f32 1.0, %v3608
      %v3610 = vmul.f32 %v3602, %v3376
      %v3611 = vmul.f32 %v3596, %v3603
      %v3612 = vadd.f32 %v3610, %v3611
      %v3613 = vtanh.pop %v3612
      %v3614 = vmul.f32 %v3609, %v3613
      %v3615 = vmul.f32 %v2004, %v3612
      %v3616 = vmul.f32 %v2007, %v3376
      %v3617 = vadd.f32 %v3615, %v3616
      %v3618 = vmul.f32 %v2004, %v3614
      %v3619 = vmul.f32 %v2007, %v3375
      %v3620 = vadd.f32 %v3618, %v3619
      %3621 = vst [vmem:[%s2383] sm:$0xff] %v3617
      %3622 = vst [vmem:[%s2381] sm:$0xff] %v3620
      %p3623 = scmp.eq.s32.totalorder %s22, 1
      // Predicated region
      $region61: #{bayes_lstm_forward.3} parent=55 // pred_check
        %p3624 = pneg %p3623
      $region62: #{bayes_lstm_forward.3} parent=55 // pred_check_branch
        %3626 = sbr.rel (%p3624) target = $region64
      $region63: #{bayes_lstm_forward.3} parent=55 // pred_region
        %v3627 = vld [vmem:[#allocation2] sm:$0xff]
        %v3628 = vld [vmem:[#allocation2 + $0x8] sm:$0xff]
        %3629 = vst [vmem:[%s10] sm:$0xff] %v3627
        %3630 = vst [vmem:[%s10 + $0x8] sm:$0xff] %v3628
        %v3631 = vld [vmem:[%s2381] sm:$0xff]
        %v3632 = vld [vmem:[%s7] sm:$0xff]
        %v3633 = vld [vmem:[%s7 + $0x8] sm:$0xff]
        %v3634 = vld [vmem:[%s7 + $0x10] sm:$0xff]
        %v3635 = vld [vmem:[%s7 + $0x18] sm:$0xff]
        %v3636 = vld [vmem:[%s7 + $0x20] sm:$0xff]
        %v3637 = vld [vmem:[%s7 + $0x28] sm:$0xff]
        %v3638 = vld [vmem:[%s7 + $0x30] sm:$0xff]
        %v3639 = vld [vmem:[%s7 + $0x38] sm:$0xff]
        %v3640 = vld [vmem:[%s7 + $0x40] sm:$0xff]
        %v3641 = vld [vmem:[%s7 + $0x48] sm:$0xff]
        %v3642 = vld [vmem:[%s7 + $0x50] sm:$0xff]
        %v3643 = vld [vmem:[%s7 + $0x58] sm:$0xff]
        %v3644 = vld [vmem:[%s7 + $0x60] sm:$0xff]
        %v3645 = vld [vmem:[%s7 + $0x68] sm:$0xff]
        %v3646 = vld [vmem:[%s7 + $0x70] sm:$0xff]
        %v3647 = vld [vmem:[%s7 + $0x78] sm:$0xff]
        %v3648 = vld [vmem:[%s8] sm:$0x1]
        %v3650 = vlaneseq
        %v3651 = vshrl.u32 %v3650, 7
        %v3652 = vsub.s32 0, %v3651
        %v3653 = vrot.slane %v3648, %v3652
        %3655 = vmatprep.subr.mxu0 0.0
        %3656 = vmatpush1.msra.mxu0 %v3632
        %3657 = vmatprep.subr.mxu0 0.0
        %3658 = vmatpush1.msra.mxu0 %v3633
        %3659 = vmatprep.subr.mxu0 0.0
        %3660 = vmatpush1.msra.mxu0 %v3634
        %3661 = vmatprep.subr.mxu0 0.0
        %3662 = vmatpush1.msra.mxu0 %v3635
        %3663 = vmatprep.subr.mxu0 0.0
        %3664 = vmatpush1.msra.mxu0 %v3636
        %3665 = vmatprep.subr.mxu0 0.0
        %3666 = vmatpush1.msra.mxu0 %v3637
        %3667 = vmatprep.subr.mxu0 0.0
        %3668 = vmatpush1.msra.mxu0 %v3638
        %3669 = vmatprep.subr.mxu0 0.0
        %3670 = vmatpush1.msra.mxu0 %v3639
        %3671 = vmatprep.subr.mxu0 0.0
        %3672 = vmatpush1.msra.mxu0 %v3640
        %3673 = vmatprep.subr.mxu0 0.0
        %3674 = vmatpush1.msra.mxu0 %v3641
        %3675 = vmatprep.subr.mxu0 0.0
        %3676 = vmatpush1.msra.mxu0 %v3642
        %3677 = vmatprep.subr.mxu0 0.0
        %3678 = vmatpush1.msra.mxu0 %v3643
        %3679 = vmatprep.subr.mxu0 0.0
        %3680 = vmatpush1.msra.mxu0 %v3644
        %3681 = vmatprep.subr.mxu0 0.0
        %3682 = vmatpush1.msra.mxu0 %v3645
        %3683 = vmatprep.subr.mxu0 0.0
        %3684 = vmatpush1.msra.mxu0 %v3646
        %3685 = vmatprep.subr.mxu0 0.0
        %3686 = vmatpush1.msra.mxu0 %v3647
        %3687 = vmatprep.subr.mxu0 0.0
        %3688 = vmatpush1.msra.mxu0 0.0
        %3689 = vmatprep.subr.mxu0 0.0
        %3690 = vmatpush1.msra.mxu0 0.0
        %3691 = vmatprep.subr.mxu0 0.0
        %3692 = vmatpush1.msra.mxu0 0.0
        %3693 = vmatprep.subr.mxu0 0.0
        %3694 = vmatpush1.msra.mxu0 0.0
        %3695 = vmatprep.subr.mxu0 0.0
        %3696 = vmatpush1.msra.mxu0 0.0
        %3697 = vmatprep.subr.mxu0 0.0
        %3698 = vmatpush1.msra.mxu0 0.0
        %3699 = vmatprep.subr.mxu0 0.0
        %3700 = vmatpush1.msra.mxu0 0.0
        %3701 = vmatprep.subr.mxu0 0.0
        %3702 = vmatpush1.msra.mxu0 0.0
        %3703 = vmatprep.subr.mxu0 0.0
        %3704 = vmatpush1.msra.mxu0 0.0
        %3705 = vmatprep.subr.mxu0 0.0
        %3706 = vmatpush1.msra.mxu0 0.0
        %3707 = vmatprep.subr.mxu0 0.0
        %3708 = vmatpush1.msra.mxu0 0.0
        %3709 = vmatprep.subr.mxu0 0.0
        %3710 = vmatpush1.msra.mxu0 0.0
        %3711 = vmatprep.subr.mxu0 0.0
        %3712 = vmatpush1.msra.mxu0 0.0
        %3713 = vmatprep.subr.mxu0 0.0
        %3714 = vmatpush1.msra.mxu0 0.0
        %3715 = vmatprep.subr.mxu0 0.0
        %3716 = vmatpush1.msra.mxu0 0.0
        %3717 = vmatprep.subr.mxu0 0.0
        %3718 = vmatpush1.msra.mxu0 0.0
        %3719 = vmatprep.mubr.f32.mxu0 0.0
        %3720 = vmatmul.mubr.f32.gmra.mrb[0].mxu0 %v3631
        %v3721 = vpop.f32.mrb[0].mxu0
        %v3722 = vadd.f32 %v3653, %v3721
        %v3723 = vpop.f32.mrb[0].mxu0
        %3724 = vdwg.mxu0
        %3725 = vst [vmem:[%s9] sm:$0xff] %v3722
      $region64: #{bayes_lstm_forward.3} parent=55 // pred_fallthru
        _
      // Predicated region
      $region65: #{bayes_lstm_forward.3} parent=55 // pred_check
        %p3726 = pneg %p229
      $region66: #{bayes_lstm_forward.3} parent=55 // pred_check_branch
        %3728 = sbr.rel (%p3726) target = $region68
      $region67: #{bayes_lstm_forward.3} parent=55 // pred_region
        _
      $region68: #{bayes_lstm_forward.3} parent=55 // pred_fallthru
        _
      // Predicated region
      $region69: #{bayes_lstm_forward.3} parent=55 // pred_check
        %p3729 = pneg %p250
      $region70: #{bayes_lstm_forward.3} parent=55 // pred_check_branch
        %3731 = sbr.rel (%p3729) target = $region72
      $region71: #{bayes_lstm_forward.3} parent=55 // pred_region
        _
      $region72: #{bayes_lstm_forward.3} parent=55 // pred_fallthru
        _
      // Predicated region
      $region73: #{bayes_lstm_forward.3} parent=55 // pred_check
        %p3732 = pneg %p229
      $region74: #{bayes_lstm_forward.3} parent=55 // pred_check_branch
        %3734 = sbr.rel (%p3732) target = $region76
      $region75: #{bayes_lstm_forward.3} parent=55 // pred_region
        _
      $region76: #{bayes_lstm_forward.3} parent=55 // pred_fallthru
        _
      // Predicated region
      $region77: #{bayes_lstm_forward.3} parent=55 // pred_check
        %p3735 = pneg %p250
      $region78: #{bayes_lstm_forward.3} parent=55 // pred_check_branch
        %3737 = sbr.rel (%p3735) target = $region80
      $region79: #{bayes_lstm_forward.3} parent=55 // pred_region
        _
      $region80: #{bayes_lstm_forward.3} parent=55 // pred_fallthru
        _
    $region56: #{bayes_lstm_forward.3} parent=5 // pred_fallthru
      _
    %p3738 = scmp.le.s32.totalorder 2, %s17
    // Predicated region
    $region81: #{bayes_lstm_forward.3} parent=5 // pred_check
      %p3739 = pneg %p3738
    $region82: #{bayes_lstm_forward.3} parent=5 // pred_check_branch
      %3741 = sbr.rel (%p3739) target = $region84
    $region83: #{bayes_lstm_forward.3} parent=5 // pred_region
      %s3742 = ssub.s32 %s17, 2
    $region84: #{bayes_lstm_forward.3} parent=5 // pred_fallthru
      _
  $region6: #{bayes_lstm_forward.3} parent=0 // loop_footer
    %s21 = sadd.s32 1, %s17
  $region7: #{bayes_lstm_forward.3} parent=0 // loop_footer_branch
    %16 = sbr.rel target = $region3
  $region8: #{bayes_lstm_forward.3} parent=0 // loop_exit
    _

// kernel: bayes_lstm_forward.3
$region0: #{bayes_lstm_forward.3}
  #allocation0 [shape = 'u32[]', space=smem, size = 0x4, offset = 0x4, fixed_abs, tag = 'smem constant byte address 0x4 - core index']
  #allocation1 [shape = 'u32[144,128]{1,0:T(1,128)}', space=vmem, size = 0x12000, scoped, tag = 'internal scratch']
  #allocation2 [shape = 'f32[2,8,128]{2,1,0:T(8,128)}', space=vmem, size = 0x2000, scoped, tag = 'scratch operand']
  #allocation3 [shape = 'f32[2,8,128]{2,1,0:T(8,128)}', space=vmem, size = 0x2000, scoped, tag = 'scratch operand']
  #allocation4 [shape = 'f32[40,128]{1,0:T(8,128)}', space=vmem, size = 0x5000, scoped, tag = 'scratch operand']
  #allocation5 [shape = 'f32[40,512]{1,0:T(8,128)}', space=vmem, size = 0x14000, scoped, tag = 'scratch operand']
  %s0 = inlined_call_operand.vmem [shape: f32[80,128], index: 0, kind: input, shape index: {}]
  %s1 = inlined_call_operand.vmem [shape: bf16[128,512], index: 1, kind: input, shape index: {}]
  %s2 = inlined_call_operand.vmem [shape: f32[128,512], index: 2, kind: input, shape index: {}]
  %s3 = inlined_call_operand.vmem [shape: f32[1,512], index: 3, kind: input, shape index: {}]
  %s4 = inlined_call_operand.vmem [shape: bf16[128,512], index: 4, kind: input, shape index: {}]
  %s5 = inlined_call_operand.vmem [shape: f32[128,512], index: 5, kind: input, shape index: {}]
  %s6 = inlined_call_operand.vmem [shape: f32[1,512], index: 6, kind: input, shape index: {}]
  %s7 = inlined_call_operand.vmem [shape: f32[128,128], index: 7, kind: input, shape index: {}]
  %s8 = inlined_call_operand.vmem [shape: f32[1,128], index: 8, kind: input, shape index: {}]
  %s9 = inlined_call_operand.vmem [shape: f32[8,128], index: 9, kind: output, shape index: {0}]
  %s10 = inlined_call_operand.vmem [shape: f32[2,8,128], index: 10, kind: output, shape index: {1}]
  %11 = xla_tuple %s9, %s10
  %s12 = sld [smem:[#allocation0]]
  $region85: #{bayes_lstm_forward.3} parent=0
    _
  %s14 = ssub.s32 1, %s12
  %s15 = scalar_select 0, %s14, %s12
  loop: start=0, step=1, limit=4
  $region2: #{bayes_lstm_forward.3} parent=0 // loop_pre_header
    _
  $region3: #{bayes_lstm_forward.3} parent=0 // loop_header
    %s17 = sphi 0, %s21
    %p18 = scmp.ge.s32.totalorder %s17, 4
    %s27 = sphi 0, %s29
    %s30 = sphi 0, %s27
    %s31 = sphi 0, %s30
    %s47 = sphi 0, %s31
    %s51 = sphi 0, %s51
    %s53 = sphi 0, %s51
    %s54 = sphi 0, %s53
    %s68 = sphi 0, %s54
    %s72 = sphi 0, %s72
    %s74 = sphi 0, %s72
    %s75 = sphi 0, %s74
    %s89 = sphi 0, %s75
    %s93 = sphi 0, %s93
    %s95 = sphi 0, %s93
    %s96 = sphi 0, %s95
    %s110 = sphi 0, %s96
    %s114 = sphi 0, %s114
    %s116 = sphi 0, %s114
    %s117 = sphi 0, %s116
    %s131 = sphi 0, %s117
    %s135 = sphi 0, %s135
    %s137 = sphi 0, %s135
    %s138 = sphi 0, %s137
    %s152 = sphi 0, %s138
    %s156 = sphi 0, %s156
    %s158 = sphi 0, %s156
    %s159 = sphi 0, %s158
    %s173 = sphi 0, %s159
    %s177 = sphi 0, %s177
    %s179 = sphi 0, %s177
    %s180 = sphi 0, %s179
    %s194 = sphi 0, %s180
    %s198 = sphi 0, %s198
    %s200 = sphi 0, %s198
    %s201 = sphi 0, %s200
    %s215 = sphi 0, %s201
    %s219 = sphi 0, %s219
    %s221 = sphi 0, %s219
    %s222 = sphi 0, %s221
    %s236 = sphi 0, %s222
    %s240 = sphi 0, %s240
    %s242 = sphi 0, %s240
    %s243 = sphi 0, %s242
    %s257 = sphi 0, %s243
  $region4: #{bayes_lstm_forward.3} parent=0 // loop_header_branch
    %20 = sbr.rel (%p18) target = $region8
  $region5: #{bayes_lstm_forward.3} parent=0 // loop_body
    %s22 = ssub.s32 %s17, 1
    %s23 = ssub.s32 %s17, 2
    %s24 = sadd.s32 %s17, 1
    %s25 = ssub.s32 %s17, %s24
    %p26 = scmp.eq.s32.totalorder %s25, 0
    %s28 = sadd.s32 %s27, 1
    %s29 = scalar_select %p26, %s27, %s28
    %p32 = pneg %p26
    %p33 = scmp.eq.s32.totalorder %s17, 1
    %p34 = por %p32, %p33
    %p35 = scmp.ne.s32.totalorder %s27, %s30
    %p36 = scmp.eq.s32.totalorder %s17, 0
    %p37 = por %p35, %p36
    %p38 = scmp.ne.s32.totalorder %s27, %s30
    %p39 = scmp.eq.s32.totalorder %s22, 1
    %p40 = por %p38, %p39
    %p41 = scmp.ne.s32.totalorder %s30, %s31
    %p42 = scmp.eq.s32.totalorder %s22, 0
    %p43 = por %p41, %p42
    %p44 = scmp.ne.s32.totalorder %s30, %s31
    %p45 = scmp.eq.s32.totalorder %s23, 1
    %p46 = por %p44, %p45
    %p48 = scmp.ne.s32.totalorder %s31, %s47
    %p49 = scmp.eq.s32.totalorder %s23, 0
    %p50 = por %p48, %p49
    %s52 = sadd.s32 %s51, 1
    %p55 = scmp.eq.s32.totalorder %s17, 1
    %p56 = scmp.ne.s32.totalorder %s51, %s53
    %p57 = scmp.eq.s32.totalorder %s17, 0
    %p58 = por %p56, %p57
    %p59 = scmp.ne.s32.totalorder %s51, %s53
    %p60 = scmp.eq.s32.totalorder %s22, 1
    %p61 = por %p59, %p60
    %p62 = scmp.ne.s32.totalorder %s53, %s54
    %p63 = scmp.eq.s32.totalorder %s22, 0
    %p64 = por %p62, %p63
    %p65 = scmp.ne.s32.totalorder %s53, %s54
    %p66 = scmp.eq.s32.totalorder %s23, 1
    %p67 = por %p65, %p66
    %p69 = scmp.ne.s32.totalorder %s54, %s68
    %p70 = scmp.eq.s32.totalorder %s23, 0
    %p71 = por %p69, %p70
    %s73 = sadd.s32 %s72, 1
    %p76 = scmp.eq.s32.totalorder %s17, 1
    %p77 = scmp.ne.s32.totalorder %s72, %s74
    %p78 = scmp.eq.s32.totalorder %s17, 0
    %p79 = por %p77, %p78
    %p80 = scmp.ne.s32.totalorder %s72, %s74
    %p81 = scmp.eq.s32.totalorder %s22, 1
    %p82 = por %p80, %p81
    %p83 = scmp.ne.s32.totalorder %s74, %s75
    %p84 = scmp.eq.s32.totalorder %s22, 0
    %p85 = por %p83, %p84
    %p86 = scmp.ne.s32.totalorder %s74, %s75
    %p87 = scmp.eq.s32.totalorder %s23, 1
    %p88 = por %p86, %p87
    %p90 = scmp.ne.s32.totalorder %s75, %s89
    %p91 = scmp.eq.s32.totalorder %s23, 0
    %p92 = por %p90, %p91
    %s94 = sadd.s32 %s93, 1
    %p97 = scmp.eq.s32.totalorder %s17, 1
    %p98 = scmp.ne.s32.totalorder %s93, %s95
    %p99 = scmp.eq.s32.totalorder %s17, 0
    %p100 = por %p98, %p99
    %p101 = scmp.ne.s32.totalorder %s93, %s95
    %p102 = scmp.eq.s32.totalorder %s22, 1
    %p103 = por %p101, %p102
    %p104 = scmp.ne.s32.totalorder %s95, %s96
    %p105 = scmp.eq.s32.totalorder %s22, 0
    %p106 = por %p104, %p105
    %p107 = scmp.ne.s32.totalorder %s95, %s96
    %p108 = scmp.eq.s32.totalorder %s23, 1
    %p109 = por %p107, %p108
    %p111 = scmp.ne.s32.totalorder %s96, %s110
    %p112 = scmp.eq.s32.totalorder %s23, 0
    %p113 = por %p111, %p112
    %s115 = sadd.s32 %s114, 1
    %p118 = scmp.eq.s32.totalorder %s17, 1
    %p119 = scmp.ne.s32.totalorder %s114, %s116
    %p120 = scmp.eq.s32.totalorder %s17, 0
    %p121 = por %p119, %p120
    %p122 = scmp.ne.s32.totalorder %s114, %s116
    %p123 = scmp.eq.s32.totalorder %s22, 1
    %p124 = por %p122, %p123
    %p125 = scmp.ne.s32.totalorder %s116, %s117
    %p126 = scmp.eq.s32.totalorder %s22, 0
    %p127 = por %p125, %p126
    %p128 = scmp.ne.s32.totalorder %s116, %s117
    %p129 = scmp.eq.s32.totalorder %s23, 1
    %p130 = por %p128, %p129
    %p132 = scmp.ne.s32.totalorder %s117, %s131
    %p133 = scmp.eq.s32.totalorder %s23, 0
    %p134 = por %p132, %p133
    %s136 = sadd.s32 %s135, 1
    %p139 = scmp.eq.s32.totalorder %s17, 1
    %p140 = scmp.ne.s32.totalorder %s135, %s137
    %p141 = scmp.eq.s32.totalorder %s17, 0
    %p142 = por %p140, %p141
    %p143 = scmp.ne.s32.totalorder %s135, %s137
    %p144 = scmp.eq.s32.totalorder %s22, 1
    %p145 = por %p143, %p144
    %p146 = scmp.ne.s32.totalorder %s137, %s138
    %p147 = scmp.eq.s32.totalorder %s22, 0
    %p148 = por %p146, %p147
    %p149 = scmp.ne.s32.totalorder %s137, %s138
    %p150 = scmp.eq.s32.totalorder %s23, 1
    %p151 = por %p149, %p150
    %p153 = scmp.ne.s32.totalorder %s138, %s152
    %p154 = scmp.eq.s32.totalorder %s23, 0
    %p155 = por %p153, %p154
    %s157 = sadd.s32 %s156, 1
    %p160 = scmp.eq.s32.totalorder %s17, 1
    %p161 = scmp.ne.s32.totalorder %s156, %s158
    %p162 = scmp.eq.s32.totalorder %s17, 0
    %p163 = por %p161, %p162
    %p164 = scmp.ne.s32.totalorder %s156, %s158
    %p165 = scmp.eq.s32.totalorder %s22, 1
    %p166 = por %p164, %p165
    %p167 = scmp.ne.s32.totalorder %s158, %s159
    %p168 = scmp.eq.s32.totalorder %s22, 0
    %p169 = por %p167, %p168
    %p170 = scmp.ne.s32.totalorder %s158, %s159
    %p171 = scmp.eq.s32.totalorder %s23, 1
    %p172 = por %p170, %p171
    %p174 = scmp.ne.s32.totalorder %s159, %s173
    %p175 = scmp.eq.s32.totalorder %s23, 0
    %p176 = por %p174, %p175
    %s178 = sadd.s32 %s177, 1
    %p181 = scmp.eq.s32.totalorder %s17, 1
    %p182 = scmp.ne.s32.totalorder %s177, %s179
    %p183 = scmp.eq.s32.totalorder %s17, 0
    %p184 = por %p182, %p183
    %p185 = scmp.ne.s32.totalorder %s177, %s179
    %p186 = scmp.eq.s32.totalorder %s22, 1
    %p187 = por %p185, %p186
    %p188 = scmp.ne.s32.totalorder %s179, %s180
    %p189 = scmp.eq.s32.totalorder %s22, 0
    %p190 = por %p188, %p189
    %p191 = scmp.ne.s32.totalorder %s179, %s180
    %p192 = scmp.eq.s32.totalorder %s23, 1
    %p193 = por %p191, %p192
    %p195 = scmp.ne.s32.totalorder %s180, %s194
    %p196 = scmp.eq.s32.totalorder %s23, 0
    %p197 = por %p195, %p196
    %s199 = sadd.s32 %s198, 1
    %p202 = scmp.eq.s32.totalorder %s17, 1
    %p203 = scmp.ne.s32.totalorder %s198, %s200
    %p204 = scmp.eq.s32.totalorder %s17, 0
    %p205 = por %p203, %p204
    %p206 = scmp.ne.s32.totalorder %s198, %s200
    %p207 = scmp.eq.s32.totalorder %s22, 1
    %p208 = por %p206, %p207
    %p209 = scmp.ne.s32.totalorder %s200, %s201
    %p210 = scmp.eq.s32.totalorder %s22, 0
    %p211 = por %p209, %p210
    %p212 = scmp.ne.s32.totalorder %s200, %s201
    %p213 = scmp.eq.s32.totalorder %s23, 1
    %p214 = por %p212, %p213
    %p216 = scmp.ne.s32.totalorder %s201, %s215
    %p217 = scmp.eq.s32.totalorder %s23, 0
    %p218 = por %p216, %p217
    %s220 = sadd.s32 %s219, 1
    %p223 = scmp.eq.s32.totalorder %s17, 1
    %p224 = scmp.ne.s32.totalorder %s219, %s221
    %p225 = scmp.eq.s32.totalorder %s17, 0
    %p226 = por %p224, %p225
    %p227 = scmp.ne.s32.totalorder %s219, %s221
    %p228 = scmp.eq.s32.totalorder %s22, 1
    %p229 = por %p227, %p228
    %p230 = scmp.ne.s32.totalorder %s221, %s222
    %p231 = scmp.eq.s32.totalorder %s22, 0
    %p232 = por %p230, %p231
    %p233 = scmp.ne.s32.totalorder %s221, %s222
    %p234 = scmp.eq.s32.totalorder %s23, 1
    %p235 = por %p233, %p234
    %p237 = scmp.ne.s32.totalorder %s222, %s236
    %p238 = scmp.eq.s32.totalorder %s23, 0
    %p239 = por %p237, %p238
    %s241 = sadd.s32 %s240, 1
    %p244 = scmp.eq.s32.totalorder %s17, 1
    %p245 = scmp.ne.s32.totalorder %s240, %s242
    %p246 = scmp.eq.s32.totalorder %s17, 0
    %p247 = por %p245, %p246
    %p248 = scmp.ne.s32.totalorder %s240, %s242
    %p249 = scmp.eq.s32.totalorder %s22, 1
    %p250 = por %p248, %p249
    %p251 = scmp.ne.s32.totalorder %s242, %s243
    %p252 = scmp.eq.s32.totalorder %s22, 0
    %p253 = por %p251, %p252
    %p254 = scmp.ne.s32.totalorder %s242, %s243
    %p255 = scmp.eq.s32.totalorder %s23, 1
    %p256 = por %p254, %p255
    %p258 = scmp.ne.s32.totalorder %s243, %s257
    %p259 = scmp.eq.s32.totalorder %s23, 0
    %p260 = por %p258, %p259
    %p261 = scmp.le.s32.totalorder 1, %s17
    %p262 = scmp.lt.s32.totalorder %s17, 3
    %p263 = pnand %p261, %p262
    %p264 = pneg %p263
    // Predicated region
    $region9: #{bayes_lstm_forward.3} parent=5 // pred_check
      _
    $region10: #{bayes_lstm_forward.3} parent=5 // pred_check_branch
      %266 = sbr.rel (%p263) target = $region12
    $region11: #{bayes_lstm_forward.3} parent=5 // pred_region
      %s267 = ssub.s32 %s17, 1
      // Predicated region
      $region13: #{bayes_lstm_forward.3} parent=11 // pred_check
        %p268 = pneg %p64
      $region14: #{bayes_lstm_forward.3} parent=11 // pred_check_branch
        %270 = sbr.rel (%p268) target = $region16
      $region15: #{bayes_lstm_forward.3} parent=11 // pred_region
        _
      $region16: #{bayes_lstm_forward.3} parent=11 // pred_fallthru
        _
      // Predicated region
      $region17: #{bayes_lstm_forward.3} parent=11 // pred_check
        %p271 = pneg %p85
      $region18: #{bayes_lstm_forward.3} parent=11 // pred_check_branch
        %273 = sbr.rel (%p271) target = $region20
      $region19: #{bayes_lstm_forward.3} parent=11 // pred_region
        _
      $region20: #{bayes_lstm_forward.3} parent=11 // pred_fallthru
        _
      // Predicated region
      $region21: #{bayes_lstm_forward.3} parent=11 // pred_check
        %p274 = pneg %p106
      $region22: #{bayes_lstm_forward.3} parent=11 // pred_check_branch
        %276 = sbr.rel (%p274) target = $region24
      $region23: #{bayes_lstm_forward.3} parent=11 // pred_region
        _
      $region24: #{bayes_lstm_forward.3} parent=11 // pred_fallthru
        _
      // Predicated region
      $region25: #{bayes_lstm_forward.3} parent=11 // pred_check
        %p277 = pneg %p127
      $region26: #{bayes_lstm_forward.3} parent=11 // pred_check_branch
        %279 = sbr.rel (%p277) target = $region28
      $region27: #{bayes_lstm_forward.3} parent=11 // pred_region
        _
      $region28: #{bayes_lstm_forward.3} parent=11 // pred_fallthru
        _
      // Predicated region
      $region29: #{bayes_lstm_forward.3} parent=11 // pred_check
        %p280 = pneg %p148
      $region30: #{bayes_lstm_forward.3} parent=11 // pred_check_branch
        %282 = sbr.rel (%p280) target = $region32
      $region31: #{bayes_lstm_forward.3} parent=11 // pred_region
        _
      $region32: #{bayes_lstm_forward.3} parent=11 // pred_fallthru
        _
      // Predicated region
      $region33: #{bayes_lstm_forward.3} parent=11 // pred_check
        %p283 = pneg %p169
      $region34: #{bayes_lstm_forward.3} parent=11 // pred_check_branch
        %285 = sbr.rel (%p283) target = $region36
      $region35: #{bayes_lstm_forward.3} parent=11 // pred_region
        _
      $region36: #{bayes_lstm_forward.3} parent=11 // pred_fallthru
        _
      // Predicated region
      $region37: #{bayes_lstm_forward.3} parent=11 // pred_check
        %p286 = pneg %p190
      $region38: #{bayes_lstm_forward.3} parent=11 // pred_check_branch
        %288 = sbr.rel (%p286) target = $region40
      $region39: #{bayes_lstm_forward.3} parent=11 // pred_region
        _
      $region40: #{bayes_lstm_forward.3} parent=11 // pred_fallthru
        _
      // Predicated region
      $region41: #{bayes_lstm_forward.3} parent=11 // pred_check
        %p289 = pneg %p211
      $region42: #{bayes_lstm_forward.3} parent=11 // pred_check_branch
        %291 = sbr.rel (%p289) target = $region44
      $region43: #{bayes_lstm_forward.3} parent=11 // pred_region
        _
      $region44: #{bayes_lstm_forward.3} parent=11 // pred_fallthru
        _
    $region12: #{bayes_lstm_forward.3} parent=5 // pred_fallthru
      _
    %p292 = scmp.lt.s32.totalorder %s17, 2
    // Predicated region
    $region45: #{bayes_lstm_forward.3} parent=5 // pred_check
      %p293 = pneg %p292
    $region46: #{bayes_lstm_forward.3} parent=5 // pred_check_branch
      %295 = sbr.rel (%p293) target = $region48
    $region47: #{bayes_lstm_forward.3} parent=5 // pred_region
      // Predicated region
      $region49: #{bayes_lstm_forward.3} parent=47 // pred_check
        %p296 = pneg %p37
      $region50: #{bayes_lstm_forward.3} parent=47 // pred_check_branch
        %298 = sbr.rel (%p296) target = $region52
      $region51: #{bayes_lstm_forward.3} parent=47 // pred_region
        %s299 = smul.u32 5, %s17
        %p300 = scmp.lt.s32.totalorder %s299, 9
        %s301 = scalar_select %p300, %s299, 9
        %s302 = smul.addr %s301, 8
        %s303 = scalar_lea.vmem %s0, %s302
        %s304 = smul.u32 5, %s17
      $region52: #{bayes_lstm_forward.3} parent=47 // pred_fallthru
        _
    $region48: #{bayes_lstm_forward.3} parent=5 // pred_fallthru
      _
    %p305 = scmp.le.s32.totalorder 1, %s17
    %p306 = scmp.lt.s32.totalorder %s17, 3
    %p307 = pnand %p305, %p306
    %p308 = pneg %p307
    // Predicated region
    $region53: #{bayes_lstm_forward.3} parent=5 // pred_check
      _
    $region54: #{bayes_lstm_forward.3} parent=5 // pred_check_branch
      %310 = sbr.rel (%p307) target = $region56
    $region55: #{bayes_lstm_forward.3} parent=5 // pred_region
      %s311 = ssub.s32 %s17, 1
      %s312 = smul.u32 5, %s22
      %p313 = scmp.lt.s32.totalorder %s312, 9
      %s314 = scalar_select %p313, %s312, 9
      %s315 = smul.addr %s314, 8
      %s316 = scalar_lea.vmem %s0, %s315
      %p317 = pneg %p43
      %p318 = pneg %p40
      %p319 = pneg %p64
      %p320 = pneg %p61
      %p321 = pneg %p85
      %p322 = pneg %p82
      %p323 = pneg %p106
      %p324 = pneg %p103
      %p325 = pneg %p127
      %p326 = pneg %p124
      %p327 = pneg %p148
      %p328 = pneg %p145
      %p329 = pneg %p169
      %p330 = pneg %p166
      %p331 = pneg %p190
      %p332 = pneg %p187
      %p333 = pneg %p211
      %p334 = pneg %p208
      %p335 = pneg %p232
      %p336 = pneg %p229
      %p337 = pneg %p253
      %p338 = pneg %p250
      %s339 = smul.u32 5, %s22
      %p340 = scmp.lt.s32.totalorder %s339, 9
      %s341 = scalar_select %p340, %s339, 9
      %s342 = smul.addr %s341, 8
      %s343 = scalar_lea.vmem %s0, %s342
      %s344 = smul.u32 5, %s22
      %p346 = scmp.eq.s32.totalorder %s22, 0
      // Predicated region
      $region57: #{bayes_lstm_forward.3} parent=55 // pred_check
        %p347 = pneg %p346
      $region58: #{bayes_lstm_forward.3} parent=55 // pred_check_branch
        %349 = sbr.rel (%p347) target = $region60
      $region59: #{bayes_lstm_forward.3} parent=55 // pred_region
        %350 = vst [vmem:[#allocation2] sm:$0xff] 0.0
        %351 = vst [vmem:[#allocation2 + $0x8] sm:$0xff] 0.0
        %352 = vst [vmem:[#allocation3] sm:$0xff] 0.0
        %353 = vst [vmem:[#allocation3 + $0x8] sm:$0xff] 0.0
      $region60: #{bayes_lstm_forward.3} parent=55 // pred_fallthru
        _
      %v354 = vld [vmem:[%s343] sm:$0xff]
      %v355 = vld [vmem:[%s343 + $0x8] sm:$0xff]
      %v356 = vld [vmem:[%s343 + $0x10] sm:$0xff]
      %v357 = vld [vmem:[%s343 + $0x18] sm:$0xff]
      %v358 = vld [vmem:[%s343 + $0x20] sm:$0xff]
      %v359 = vpack.c.bf16 %v355, %v354
      %v360 = vpack.c.bf16 %v357, %v356
      %v361 = vpack.c.bf16 %v358, %v358
      %v362 = vld [vmem:[%s1] sm:$0xff]
      %v363 = vld [vmem:[%s1 + $0x8] sm:$0xff]
      %v364 = vld [vmem:[%s1 + $0x10] sm:$0xff]
      %v365 = vld [vmem:[%s1 + $0x18] sm:$0xff]
      %v366 = vld [vmem:[%s1 + $0x20] sm:$0xff]
      %v367 = vld [vmem:[%s1 + $0x28] sm:$0xff]
      %v368 = vld [vmem:[%s1 + $0x30] sm:$0xff]
      %v369 = vld [vmem:[%s1 + $0x38] sm:$0xff]
      %v370 = vld [vmem:[%s1 + $0x40] sm:$0xff]
      %v371 = vld [vmem:[%s1 + $0x48] sm:$0xff]
      %v372 = vld [vmem:[%s1 + $0x50] sm:$0xff]
      %v373 = vld [vmem:[%s1 + $0x58] sm:$0xff]
      %v374 = vld [vmem:[%s1 + $0x60] sm:$0xff]
      %v375 = vld [vmem:[%s1 + $0x68] sm:$0xff]
      %v376 = vld [vmem:[%s1 + $0x70] sm:$0xff]
      %v377 = vld [vmem:[%s1 + $0x78] sm:$0xff]
      %v378 = vld [vmem:[%s1 + $0x80] sm:$0xff]
      %v379 = vld [vmem:[%s1 + $0x88] sm:$0xff]
      %v380 = vld [vmem:[%s1 + $0x90] sm:$0xff]
      %v381 = vld [vmem:[%s1 + $0x98] sm:$0xff]
      %v382 = vld [vmem:[%s1 + $0xa0] sm:$0xff]
      %v383 = vld [vmem:[%s1 + $0xa8] sm:$0xff]
      %v384 = vld [vmem:[%s1 + $0xb0] sm:$0xff]
      %v385 = vld [vmem:[%s1 + $0xb8] sm:$0xff]
      %v386 = vld [vmem:[%s1 + $0xc0] sm:$0xff]
      %v387 = vld [vmem:[%s1 + $0xc8] sm:$0xff]
      %v388 = vld [vmem:[%s1 + $0xd0] sm:$0xff]
      %v389 = vld [vmem:[%s1 + $0xd8] sm:$0xff]
      %v390 = vld [vmem:[%s1 + $0xe0] sm:$0xff]
      %v391 = vld [vmem:[%s1 + $0xe8] sm:$0xff]
      %v392 = vld [vmem:[%s1 + $0xf0] sm:$0xff]
      %v393 = vld [vmem:[%s1 + $0xf8] sm:$0xff]
      %v394 = vld [vmem:[%s3] sm:$0xf]
      %v396 = vlaneseq
      %v397 = vshrl.u32 %v396, 7
      %v398 = vsub.s32 0, %v397
      %v399 = vrot.slane %v394, %v398
      %v400 = vlaneseq
      %v401 = vshrl.u32 %v400, 7
      %v402 = vsub.s32 1, %v401
      %v403 = vrot.slane %v394, %v402
      %v404 = vlaneseq
      %v405 = vshrl.u32 %v404, 7
      %v406 = vsub.s32 2, %v405
      %v407 = vrot.slane %v394, %v406
      %v408 = vlaneseq
      %v409 = vshrl.u32 %v408, 7
      %v410 = vsub.s32 3, %v409
      %v411 = vrot.slane %v394, %v410
      %v448 = vunpack.c.l.b16 %v362
      %v449 = vunpack.c.h.b16 %v362
      %v450 = vunpack.c.l.b16 %v363
      %v451 = vunpack.c.h.b16 %v363
      %v452 = vunpack.c.l.b16 %v364
      %v453 = vunpack.c.h.b16 %v364
      %v454 = vunpack.c.l.b16 %v365
      %v455 = vunpack.c.h.b16 %v365
      %v456 = vunpack.c.l.b16 %v366
      %v457 = vunpack.c.h.b16 %v366
      %v458 = vunpack.c.l.b16 %v367
      %v459 = vunpack.c.h.b16 %v367
      %v460 = vunpack.c.l.b16 %v368
      %v461 = vunpack.c.h.b16 %v368
      %v462 = vunpack.c.l.b16 %v369
      %v463 = vunpack.c.h.b16 %v369
      %v464 = vunpack.c.l.b16 %v370
      %v465 = vunpack.c.h.b16 %v370
      %v466 = vunpack.c.l.b16 %v371
      %v467 = vunpack.c.h.b16 %v371
      %v468 = vunpack.c.l.b16 %v372
      %v469 = vunpack.c.h.b16 %v372
      %v470 = vunpack.c.l.b16 %v373
      %v471 = vunpack.c.h.b16 %v373
      %v472 = vunpack.c.l.b16 %v374
      %v473 = vunpack.c.h.b16 %v374
      %v474 = vunpack.c.l.b16 %v375
      %v475 = vunpack.c.h.b16 %v375
      %v476 = vunpack.c.l.b16 %v376
      %v477 = vunpack.c.h.b16 %v376
      %v478 = vunpack.c.l.b16 %v377
      %v479 = vunpack.c.h.b16 %v377
      %v480 = vunpack.c.l.b16 %v378
      %v481 = vunpack.c.h.b16 %v378
      %v482 = vunpack.c.l.b16 %v379
      %v483 = vunpack.c.h.b16 %v379
      %v484 = vunpack.c.l.b16 %v380
      %v485 = vunpack.c.h.b16 %v380
      %v486 = vunpack.c.l.b16 %v381
      %v487 = vunpack.c.h.b16 %v381
      %v488 = vunpack.c.l.b16 %v382
      %v489 = vunpack.c.h.b16 %v382
      %v490 = vunpack.c.l.b16 %v383
      %v491 = vunpack.c.h.b16 %v383
      %v492 = vunpack.c.l.b16 %v384
      %v493 = vunpack.c.h.b16 %v384
      %v494 = vunpack.c.l.b16 %v385
      %v495 = vunpack.c.h.b16 %v385
      %v496 = vunpack.c.l.b16 %v386
      %v497 = vunpack.c.h.b16 %v386
      %v498 = vunpack.c.l.b16 %v387
      %v499 = vunpack.c.h.b16 %v387
      %v500 = vunpack.c.l.b16 %v388
      %v501 = vunpack.c.h.b16 %v388
      %v502 = vunpack.c.l.b16 %v389
      %v503 = vunpack.c.h.b16 %v389
      %v504 = vunpack.c.l.b16 %v390
      %v505 = vunpack.c.h.b16 %v390
      %v506 = vunpack.c.l.b16 %v391
      %v507 = vunpack.c.h.b16 %v391
      %v508 = vunpack.c.l.b16 %v392
      %v509 = vunpack.c.h.b16 %v392
      %v510 = vunpack.c.l.b16 %v393
      %v511 = vunpack.c.h.b16 %v393
      %v512 = vpack.c.b16 %v452, %v448
      %v513 = vpack.c.b16 %v453, %v449
      %v514 = vpack.c.b16 %v454, %v450
      %v515 = vpack.c.b16 %v455, %v451
      %v516 = vpack.c.b16 %v460, %v456
      %v517 = vpack.c.b16 %v461, %v457
      %v518 = vpack.c.b16 %v462, %v458
      %v519 = vpack.c.b16 %v463, %v459
      %v520 = vpack.c.b16 %v468, %v464
      %v521 = vpack.c.b16 %v469, %v465
      %v522 = vpack.c.b16 %v470, %v466
      %v523 = vpack.c.b16 %v471, %v467
      %v524 = vpack.c.b16 %v476, %v472
      %v525 = vpack.c.b16 %v477, %v473
      %v526 = vpack.c.b16 %v478, %v474
      %v527 = vpack.c.b16 %v479, %v475
      %v528 = vpack.c.b16 %v484, %v480
      %v529 = vpack.c.b16 %v485, %v481
      %v530 = vpack.c.b16 %v486, %v482
      %v531 = vpack.c.b16 %v487, %v483
      %v532 = vpack.c.b16 %v492, %v488
      %v533 = vpack.c.b16 %v493, %v489
      %v534 = vpack.c.b16 %v494, %v490
      %v535 = vpack.c.b16 %v495, %v491
      %v536 = vpack.c.b16 %v500, %v496
      %v537 = vpack.c.b16 %v501, %v497
      %v538 = vpack.c.b16 %v502, %v498
      %v539 = vpack.c.b16 %v503, %v499
      %v540 = vpack.c.b16 %v508, %v504
      %v541 = vpack.c.b16 %v509, %v505
      %v542 = vpack.c.b16 %v510, %v506
      %v543 = vpack.c.b16 %v511, %v507
      %576 = vmatprep.subr.bf16.mxu0 %v513
      %577 = vmatpush1.bf16.msra.mxu0 %v512
      %578 = vmatprep.subr.bf16.mxu0 %v517
      %579 = vmatpush1.bf16.msra.mxu0 %v516
      %580 = vmatprep.subr.bf16.mxu0 %v521
      %581 = vmatpush1.bf16.msra.mxu0 %v520
      %582 = vmatprep.subr.bf16.mxu0 %v525
      %583 = vmatpush1.bf16.msra.mxu0 %v524
      %584 = vmatprep.subr.bf16.mxu0 %v529
      %585 = vmatpush1.bf16.msra.mxu0 %v528
      %586 = vmatprep.subr.bf16.mxu0 %v533
      %587 = vmatpush1.bf16.msra.mxu0 %v532
      %588 = vmatprep.subr.bf16.mxu0 %v537
      %589 = vmatpush1.bf16.msra.mxu0 %v536
      %590 = vmatprep.subr.bf16.mxu0 %v541
      %591 = vmatpush1.bf16.msra.mxu0 %v540
      %592 = vmatprep.subr.bf16.mxu0 0
      %593 = vmatpush1.bf16.msra.mxu0 0
      %594 = vmatprep.subr.bf16.mxu0 0
      %595 = vmatpush1.bf16.msra.mxu0 0
      %596 = vmatprep.subr.bf16.mxu0 0
      %597 = vmatpush1.bf16.msra.mxu0 0
      %598 = vmatprep.subr.bf16.mxu0 0
      %599 = vmatpush1.bf16.msra.mxu0 0
      %600 = vmatprep.subr.bf16.mxu0 0
      %601 = vmatpush1.bf16.msra.mxu0 0
      %602 = vmatprep.subr.bf16.mxu0 0
      %603 = vmatpush1.bf16.msra.mxu0 0
      %604 = vmatprep.subr.bf16.mxu0 0
      %605 = vmatpush1.bf16.msra.mxu0 0
      %606 = vmatprep.subr.bf16.mxu0 0
      %607 = vmatpush1.bf16.msra.mxu0 0
      %608 = vmatprep.mubr.bf16.mxu0 0
      %609 = vmatmul.mubr.bf16.gmra.mrb[0].mxu0 %v359
      %v610 = vpop.f32.mrb[0].mxu0
      %v611 = vadd.f32 %v399, %v610
      %v612 = vpop.f32.mrb[0].mxu0
      %v613 = vadd.f32 %v403, %v612
      %v614 = vpop.f32.mrb[0].mxu0
      %v615 = vadd.f32 %v399, %v614
      %v616 = vpop.f32.mrb[0].mxu0
      %v617 = vadd.f32 %v403, %v616
      %618 = vmatprep.mubr.bf16.mxu0 0
      %619 = vmatmul.mubr.bf16.gmra.mrb[0].mxu0 %v360
      %v620 = vpop.f32.mrb[0].mxu0
      %v621 = vadd.f32 %v399, %v620
      %v622 = vpop.f32.mrb[0].mxu0
      %v623 = vadd.f32 %v403, %v622
      %v624 = vpop.f32.mrb[0].mxu0
      %v625 = vadd.f32 %v399, %v624
      %v626 = vpop.f32.mrb[0].mxu0
      %v627 = vadd.f32 %v403, %v626
      %628 = vmatprep.mubr.bf16.mxu0 0
      %629 = vmatmul.mubr.bf16.gmra.mrb[0].mxu0 %v361
      %v630 = vpop.f32.mrb[0].mxu0
      %v631 = vadd.f32 %v399, %v630
      %v632 = vpop.f32.mrb[0].mxu0
      %v633 = vadd.f32 %v403, %v632
      %v634 = vpop.f32.mrb[0].mxu0
      %v635 = vpop.f32.mrb[0].mxu0
      %636 = vdwg.mxu0
      %637 = vmatprep.subr.bf16.mxu0 %v515
      %638 = vmatpush1.bf16.msra.mxu0 %v514
      %639 = vmatprep.subr.bf16.mxu0 %v519
      %640 = vmatpush1.bf16.msra.mxu0 %v518
      %641 = vmatprep.subr.bf16.mxu0 %v523
      %642 = vmatpush1.bf16.msra.mxu0 %v522
      %643 = vmatprep.subr.bf16.mxu0 %v527
      %644 = vmatpush1.bf16.msra.mxu0 %v526
      %645 = vmatprep.subr.bf16.mxu0 %v531
      %646 = vmatpush1.bf16.msra.mxu0 %v530
      %647 = vmatprep.subr.bf16.mxu0 %v535
      %648 = vmatpush1.bf16.msra.mxu0 %v534
      %649 = vmatprep.subr.bf16.mxu0 %v539
      %650 = vmatpush1.bf16.msra.mxu0 %v538
      %651 = vmatprep.subr.bf16.mxu0 %v543
      %652 = vmatpush1.bf16.msra.mxu0 %v542
      %653 = vmatprep.subr.bf16.mxu0 0
      %654 = vmatpush1.bf16.msra.mxu0 0
      %655 = vmatprep.subr.bf16.mxu0 0
      %656 = vmatpush1.bf16.msra.mxu0 0
      %657 = vmatprep.subr.bf16.mxu0 0
      %658 = vmatpush1.bf16.msra.mxu0 0
      %659 = vmatprep.subr.bf16.mxu0 0
      %660 = vmatpush1.bf16.msra.mxu0 0
      %661 = vmatprep.subr.bf16.mxu0 0
      %662 = vmatpush1.bf16.msra.mxu0 0
      %663 = vmatprep.subr.bf16.mxu0 0
      %664 = vmatpush1.bf16.msra.mxu0 0
      %665 = vmatprep.subr.bf16.mxu0 0
      %666 = vmatpush1.bf16.msra.mxu0 0
      %667 = vmatprep.subr.bf16.mxu0 0
      %668 = vmatpush1.bf16.msra.mxu0 0
      %669 = vmatprep.mubr.bf16.mxu0 0
      %670 = vmatmul.mubr.bf16.gmra.mrb[0].mxu0 %v359
      %v671 = vpop.f32.mrb[0].mxu0
      %v672 = vadd.f32 %v407, %v671
      %v673 = vpop.f32.mrb[0].mxu0
      %v674 = vadd.f32 %v411, %v673
      %v675 = vpop.f32.mrb[0].mxu0
      %v676 = vadd.f32 %v407, %v675
      %v677 = vpop.f32.mrb[0].mxu0
      %v678 = vadd.f32 %v411, %v677
      %679 = vmatprep.mubr.bf16.mxu0 0
      %680 = vmatmul.mubr.bf16.gmra.mrb[0].mxu0 %v360
      %v681 = vpop.f32.mrb[0].mxu0
      %v682 = vadd.f32 %v407, %v681
      %v683 = vpop.f32.mrb[0].mxu0
      %v684 = vadd.f32 %v411, %v683
      %v685 = vpop.f32.mrb[0].mxu0
      %v686 = vadd.f32 %v407, %v685
      %v687 = vpop.f32.mrb[0].mxu0
      %v688 = vadd.f32 %v411, %v687
      %689 = vmatprep.mubr.bf16.mxu0 0
      %690 = vmatmul.mubr.bf16.gmra.mrb[0].mxu0 %v361
      %v691 = vpop.f32.mrb[0].mxu0
      %v692 = vadd.f32 %v407, %v691
      %v693 = vpop.f32.mrb[0].mxu0
      %v694 = vadd.f32 %v411, %v693
      %v695 = vpop.f32.mrb[0].mxu0
      %v696 = vpop.f32.mrb[0].mxu0
      %697 = vdwg.mxu0
      %698 = vst [vmem:[#allocation5] sm:$0xff] %v611
      %699 = vst [vmem:[#allocation5 + $0x8] sm:$0xff] %v613
      %700 = vst [vmem:[#allocation5 + $0x10] sm:$0xff] %v672
      %701 = vst [vmem:[#allocation5 + $0x18] sm:$0xff] %v674
      %702 = vst [vmem:[#allocation5 + $0x20] sm:$0xff] %v615
      %703 = vst [vmem:[#allocation5 + $0x28] sm:$0xff] %v617
      %704 = vst [vmem:[#allocation5 + $0x30] sm:$0xff] %v676
      %705 = vst [vmem:[#allocation5 + $0x38] sm:$0xff] %v678
      %706 = vst [vmem:[#allocation5 + $0x40] sm:$0xff] %v621
      %707 = vst [vmem:[#allocation5 + $0x48] sm:$0xff] %v623
      %708 = vst [vmem:[#allocation5 + $0x50] sm:$0xff] %v682
      %709 = vst [vmem:[#allocation5 + $0x58] sm:$0xff] %v684
      %710 = vst [vmem:[#allocation5 + $0x60] sm:$0xff] %v625
      %711 = vst [vmem:[#allocation5 + $0x68] sm:$0xff] %v627
      %712 = vst [vmem:[#allocation5 + $0x70] sm:$0xff] %v686
      %713 = vst [vmem:[#allocation5 + $0x78] sm:$0xff] %v688
      %714 = vst [vmem:[#allocation5 + $0x80] sm:$0xff] %v631
      %715 = vst [vmem:[#allocation5 + $0x88] sm:$0xff] %v633
      %716 = vst [vmem:[#allocation5 + $0x90] sm:$0xff] %v692
      %717 = vst [vmem:[#allocation5 + $0x98] sm:$0xff] %v694
      %v718 = vld [vmem:[#allocation2] sm:$0xff]
      %v719 = vld [vmem:[#allocation3] sm:$0xff]
      %s720 = smul.u32 0, 4
      %s721 = smul.addr %s720, 8
      %s722 = scalar_lea.vmem [#allocation5], %s721
      %v723 = vld [vmem:[%s722] sm:$0xff]
      %v724 = vld [vmem:[%s722 + $0x8] sm:$0xff]
      %v725 = vld [vmem:[%s722 + $0x10] sm:$0xff]
      %v726 = vld [vmem:[%s722 + $0x18] sm:$0xff]
      %v727 = vld [vmem:[%s2] sm:$0xff]
      %v728 = vld [vmem:[%s2 + $0x8] sm:$0xff]
      %v729 = vld [vmem:[%s2 + $0x10] sm:$0xff]
      %v730 = vld [vmem:[%s2 + $0x18] sm:$0xff]
      %v731 = vld [vmem:[%s2 + $0x20] sm:$0xff]
      %v732 = vld [vmem:[%s2 + $0x28] sm:$0xff]
      %v733 = vld [vmem:[%s2 + $0x30] sm:$0xff]
      %v734 = vld [vmem:[%s2 + $0x38] sm:$0xff]
      %v735 = vld [vmem:[%s2 + $0x40] sm:$0xff]
      %v736 = vld [vmem:[%s2 + $0x48] sm:$0xff]
      %v737 = vld [vmem:[%s2 + $0x50] sm:$0xff]
      %v738 = vld [vmem:[%s2 + $0x58] sm:$0xff]
      %v739 = vld [vmem:[%s2 + $0x60] sm:$0xff]
      %v740 = vld [vmem:[%s2 + $0x68] sm:$0xff]
      %v741 = vld [vmem:[%s2 + $0x70] sm:$0xff]
      %v742 = vld [vmem:[%s2 + $0x78] sm:$0xff]
      %v743 = vld [vmem:[%s2 + $0x80] sm:$0xff]
      %v744 = vld [vmem:[%s2 + $0x88] sm:$0xff]
      %v745 = vld [vmem:[%s2 + $0x90] sm:$0xff]
      %v746 = vld [vmem:[%s2 + $0x98] sm:$0xff]
      %v747 = vld [vmem:[%s2 + $0xa0] sm:$0xff]
      %v748 = vld [vmem:[%s2 + $0xa8] sm:$0xff]
      %v749 = vld [vmem:[%s2 + $0xb0] sm:$0xff]
      %v750 = vld [vmem:[%s2 + $0xb8] sm:$0xff]
      %v751 = vld [vmem:[%s2 + $0xc0] sm:$0xff]
      %v752 = vld [vmem:[%s2 + $0xc8] sm:$0xff]
      %v753 = vld [vmem:[%s2 + $0xd0] sm:$0xff]
      %v754 = vld [vmem:[%s2 + $0xd8] sm:$0xff]
      %v755 = vld [vmem:[%s2 + $0xe0] sm:$0xff]
      %v756 = vld [vmem:[%s2 + $0xe8] sm:$0xff]
      %v757 = vld [vmem:[%s2 + $0xf0] sm:$0xff]
      %v758 = vld [vmem:[%s2 + $0xf8] sm:$0xff]
      %v759 = vld [vmem:[%s2 + $0x100] sm:$0xff]
      %v760 = vld [vmem:[%s2 + $0x108] sm:$0xff]
      %v761 = vld [vmem:[%s2 + $0x110] sm:$0xff]
      %v762 = vld [vmem:[%s2 + $0x118] sm:$0xff]
      %v763 = vld [vmem:[%s2 + $0x120] sm:$0xff]
      %v764 = vld [vmem:[%s2 + $0x128] sm:$0xff]
      %v765 = vld [vmem:[%s2 + $0x130] sm:$0xff]
      %v766 = vld [vmem:[%s2 + $0x138] sm:$0xff]
      %v767 = vld [vmem:[%s2 + $0x140] sm:$0xff]
      %v768 = vld [vmem:[%s2 + $0x148] sm:$0xff]
      %v769 = vld [vmem:[%s2 + $0x150] sm:$0xff]
      %v770 = vld [vmem:[%s2 + $0x158] sm:$0xff]
      %v771 = vld [vmem:[%s2 + $0x160] sm:$0xff]
      %v772 = vld [vmem:[%s2 + $0x168] sm:$0xff]
      %v773 = vld [vmem:[%s2 + $0x170] sm:$0xff]
      %v774 = vld [vmem:[%s2 + $0x178] sm:$0xff]
      %v775 = vld [vmem:[%s2 + $0x180] sm:$0xff]
      %v776 = vld [vmem:[%s2 + $0x188] sm:$0xff]
      %v777 = vld [vmem:[%s2 + $0x190] sm:$0xff]
      %v778 = vld [vmem:[%s2 + $0x198] sm:$0xff]
      %v779 = vld [vmem:[%s2 + $0x1a0] sm:$0xff]
      %v780 = vld [vmem:[%s2 + $0x1a8] sm:$0xff]
      %v781 = vld [vmem:[%s2 + $0x1b0] sm:$0xff]
      %v782 = vld [vmem:[%s2 + $0x1b8] sm:$0xff]
      %v783 = vld [vmem:[%s2 + $0x1c0] sm:$0xff]
      %v784 = vld [vmem:[%s2 + $0x1c8] sm:$0xff]
      %v785 = vld [vmem:[%s2 + $0x1d0] sm:$0xff]
      %v786 = vld [vmem:[%s2 + $0x1d8] sm:$0xff]
      %v787 = vld [vmem:[%s2 + $0x1e0] sm:$0xff]
      %v788 = vld [vmem:[%s2 + $0x1e8] sm:$0xff]
      %v789 = vld [vmem:[%s2 + $0x1f0] sm:$0xff]
      %v790 = vld [vmem:[%s2 + $0x1f8] sm:$0xff]
      %791 = vmatprep.subr.mxu0 %v728
      %792 = vmatpush1.msra.mxu0 %v727
      %793 = vmatprep.subr.mxu0 %v732
      %794 = vmatpush1.msra.mxu0 %v731
      %795 = vmatprep.subr.mxu0 %v736
      %796 = vmatpush1.msra.mxu0 %v735
      %797 = vmatprep.subr.mxu0 %v740
      %798 = vmatpush1.msra.mxu0 %v739
      %799 = vmatprep.subr.mxu0 %v744
      %800 = vmatpush1.msra.mxu0 %v743
      %801 = vmatprep.subr.mxu0 %v748
      %802 = vmatpush1.msra.mxu0 %v747
      %803 = vmatprep.subr.mxu0 %v752
      %804 = vmatpush1.msra.mxu0 %v751
      %805 = vmatprep.subr.mxu0 %v756
      %806 = vmatpush1.msra.mxu0 %v755
      %807 = vmatprep.subr.mxu0 %v760
      %808 = vmatpush1.msra.mxu0 %v759
      %809 = vmatprep.subr.mxu0 %v764
      %810 = vmatpush1.msra.mxu0 %v763
      %811 = vmatprep.subr.mxu0 %v768
      %812 = vmatpush1.msra.mxu0 %v767
      %813 = vmatprep.subr.mxu0 %v772
      %814 = vmatpush1.msra.mxu0 %v771
      %815 = vmatprep.subr.mxu0 %v776
      %816 = vmatpush1.msra.mxu0 %v775
      %817 = vmatprep.subr.mxu0 %v780
      %818 = vmatpush1.msra.mxu0 %v779
      %819 = vmatprep.subr.mxu0 %v784
      %820 = vmatpush1.msra.mxu0 %v783
      %821 = vmatprep.subr.mxu0 %v788
      %822 = vmatpush1.msra.mxu0 %v787
      %823 = vmatprep.subr.mxu0 0.0
      %824 = vmatpush1.msra.mxu0 0.0
      %825 = vmatprep.subr.mxu0 0.0
      %826 = vmatpush1.msra.mxu0 0.0
      %827 = vmatprep.subr.mxu0 0.0
      %828 = vmatpush1.msra.mxu0 0.0
      %829 = vmatprep.subr.mxu0 0.0
      %830 = vmatpush1.msra.mxu0 0.0
      %831 = vmatprep.subr.mxu0 0.0
      %832 = vmatpush1.msra.mxu0 0.0
      %833 = vmatprep.subr.mxu0 0.0
      %834 = vmatpush1.msra.mxu0 0.0
      %835 = vmatprep.subr.mxu0 0.0
      %836 = vmatpush1.msra.mxu0 0.0
      %837 = vmatprep.subr.mxu0 0.0
      %838 = vmatpush1.msra.mxu0 0.0
      %839 = vmatprep.subr.mxu0 0.0
      %840 = vmatpush1.msra.mxu0 0.0
      %841 = vmatprep.subr.mxu0 0.0
      %842 = vmatpush1.msra.mxu0 0.0
      %843 = vmatprep.subr.mxu0 0.0
      %844 = vmatpush1.msra.mxu0 0.0
      %845 = vmatprep.subr.mxu0 0.0
      %846 = vmatpush1.msra.mxu0 0.0
      %847 = vmatprep.subr.mxu0 0.0
      %848 = vmatpush1.msra.mxu0 0.0
      %849 = vmatprep.subr.mxu0 0.0
      %850 = vmatpush1.msra.mxu0 0.0
      %851 = vmatprep.subr.mxu0 0.0
      %852 = vmatpush1.msra.mxu0 0.0
      %853 = vmatprep.subr.mxu0 0.0
      %854 = vmatpush1.msra.mxu0 0.0
      %855 = vmatprep.mubr.f32.mxu0 0.0
      %856 = vmatmul.mubr.f32.gmra.mrb[0].mxu0 %v718
      %v857 = vpop.f32.mrb[0].mxu0
      %v858 = vadd.f32 0.0, %v857
      %v859 = vpop.f32.mrb[0].mxu0
      %v860 = vadd.f32 0.0, %v859
      %861 = vdwg.mxu0
      %862 = vmatprep.subr.mxu0 %v730
      %863 = vmatpush1.msra.mxu0 %v729
      %864 = vmatprep.subr.mxu0 %v734
      %865 = vmatpush1.msra.mxu0 %v733
      %866 = vmatprep.subr.mxu0 %v738
      %867 = vmatpush1.msra.mxu0 %v737
      %868 = vmatprep.subr.mxu0 %v742
      %869 = vmatpush1.msra.mxu0 %v741
      %870 = vmatprep.subr.mxu0 %v746
      %871 = vmatpush1.msra.mxu0 %v745
      %872 = vmatprep.subr.mxu0 %v750
      %873 = vmatpush1.msra.mxu0 %v749
      %874 = vmatprep.subr.mxu0 %v754
      %875 = vmatpush1.msra.mxu0 %v753
      %876 = vmatprep.subr.mxu0 %v758
      %877 = vmatpush1.msra.mxu0 %v757
      %878 = vmatprep.subr.mxu0 %v762
      %879 = vmatpush1.msra.mxu0 %v761
      %880 = vmatprep.subr.mxu0 %v766
      %881 = vmatpush1.msra.mxu0 %v765
      %882 = vmatprep.subr.mxu0 %v770
      %883 = vmatpush1.msra.mxu0 %v769
      %884 = vmatprep.subr.mxu0 %v774
      %885 = vmatpush1.msra.mxu0 %v773
      %886 = vmatprep.subr.mxu0 %v778
      %887 = vmatpush1.msra.mxu0 %v777
      %888 = vmatprep.subr.mxu0 %v782
      %889 = vmatpush1.msra.mxu0 %v781
      %890 = vmatprep.subr.mxu0 %v786
      %891 = vmatpush1.msra.mxu0 %v785
      %892 = vmatprep.subr.mxu0 %v790
      %893 = vmatpush1.msra.mxu0 %v789
      %894 = vmatprep.subr.mxu0 0.0
      %895 = vmatpush1.msra.mxu0 0.0
      %896 = vmatprep.subr.mxu0 0.0
      %897 = vmatpush1.msra.mxu0 0.0
      %898 = vmatprep.subr.mxu0 0.0
      %899 = vmatpush1.msra.mxu0 0.0
      %900 = vmatprep.subr.mxu0 0.0
      %901 = vmatpush1.msra.mxu0 0.0
      %902 = vmatprep.subr.mxu0 0.0
      %903 = vmatpush1.msra.mxu0 0.0
      %904 = vmatprep.subr.mxu0 0.0
      %905 = vmatpush1.msra.mxu0 0.0
      %906 = vmatprep.subr.mxu0 0.0
      %907 = vmatpush1.msra.mxu0 0.0
      %908 = vmatprep.subr.mxu0 0.0
      %909 = vmatpush1.msra.mxu0 0.0
      %910 = vmatprep.subr.mxu0 0.0
      %911 = vmatpush1.msra.mxu0 0.0
      %912 = vmatprep.subr.mxu0 0.0
      %913 = vmatpush1.msra.mxu0 0.0
      %914 = vmatprep.subr.mxu0 0.0
      %915 = vmatpush1.msra.mxu0 0.0
      %916 = vmatprep.subr.mxu0 0.0
      %917 = vmatpush1.msra.mxu0 0.0
      %918 = vmatprep.subr.mxu0 0.0
      %919 = vmatpush1.msra.mxu0 0.0
      %920 = vmatprep.subr.mxu0 0.0
      %921 = vmatpush1.msra.mxu0 0.0
      %922 = vmatprep.subr.mxu0 0.0
      %923 = vmatpush1.msra.mxu0 0.0
      %924 = vmatprep.subr.mxu0 0.0
      %925 = vmatpush1.msra.mxu0 0.0
      %926 = vmatprep.mubr.f32.mxu0 0.0
      %927 = vmatmul.mubr.f32.gmra.mrb[0].mxu0 %v718
      %v928 = vpop.f32.mrb[0].mxu0
      %v929 = vadd.f32 0.0, %v928
      %v930 = vpop.f32.mrb[0].mxu0
      %v931 = vadd.f32 0.0, %v930
      %932 = vdwg.mxu0
      %v933 = vadd.f32 %v723, %v858
      %v934 = vadd.f32 %v724, %v860
      %v935 = vadd.f32 %v725, %v929
      %v936 = vadd.f32 %v726, %v931
      %v937 = vxor.u32 %v933, 2147483648
      %v938 = vmul.f32 %v937, 1.442695
      %v939 = vpow.pop %v938
      %v940 = vadd.f32 %v939, 1.0
      %v941 = vrcp.pop %v940
      %v942 = vmul.f32 1.0, %v941
      %v943 = vxor.u32 %v934, 2147483648
      %v944 = vmul.f32 %v943, 1.442695
      %v945 = vpow.pop %v944
      %v946 = vadd.f32 %v945, 1.0
      %v947 = vrcp.pop %v946
      %v948 = vmul.f32 1.0, %v947
      %v949 = vtanh.pop %v935
      %v950 = vxor.u32 %v936, 2147483648
      %v951 = vmul.f32 %v950, 1.442695
      %v952 = vpow.pop %v951
      %v953 = vadd.f32 %v952, 1.0
      %v954 = vrcp.pop %v953
      %v955 = vmul.f32 1.0, %v954
      %v956 = vmul.f32 %v948, %v719
      %v957 = vmul.f32 %v942, %v949
      %v958 = vadd.f32 %v956, %v957
      %v959 = vtanh.pop %v958
      %v960 = vmul.f32 %v955, %v959
      %s961 = smul.u32 %s22, 5
      %p962 = scmp.lt.s32.totalorder %s961, 8
      %s963 = scalar_select %p962, 1, 0
      %s964 = scvt.s32.f32 %s963
      %v965 = vstv %s964
      %v966 = vmul.f32 %v965, %v958
      %s967 = ssub.f32 1.0, %s964
      %v968 = vstv %s967
      %v969 = vmul.f32 %v968, %v719
      %v970 = vadd.f32 %v966, %v969
      %v971 = vmul.f32 %v965, %v960
      %v972 = vmul.f32 %v968, %v718
      %v973 = vadd.f32 %v971, %v972
      %974 = vst [vmem:[#allocation3] sm:$0xff] %v970
      %975 = vst [vmem:[#allocation2] sm:$0xff] %v973
      %976 = vst [vmem:[#allocation4] sm:$0xff] %v973
      %v977 = vld [vmem:[#allocation2] sm:$0xff]
      %v978 = vld [vmem:[#allocation3] sm:$0xff]
      %s979 = smul.u32 1, 4
      %s980 = smul.addr %s979, 8
      %s981 = scalar_lea.vmem [#allocation5], %s980
      %v982 = vld [vmem:[%s981] sm:$0xff]
      %v983 = vld [vmem:[%s981 + $0x8] sm:$0xff]
      %v984 = vld [vmem:[%s981 + $0x10] sm:$0xff]
      %v985 = vld [vmem:[%s981 + $0x18] sm:$0xff]
      %v986 = vld [vmem:[%s2] sm:$0xff]
      %v987 = vld [vmem:[%s2 + $0x8] sm:$0xff]
      %v988 = vld [vmem:[%s2 + $0x10] sm:$0xff]
      %v989 = vld [vmem:[%s2 + $0x18] sm:$0xff]
      %v990 = vld [vmem:[%s2 + $0x20] sm:$0xff]
      %v991 = vld [vmem:[%s2 + $0x28] sm:$0xff]
      %v992 = vld [vmem:[%s2 + $0x30] sm:$0xff]
      %v993 = vld [vmem:[%s2 + $0x38] sm:$0xff]
      %v994 = vld [vmem:[%s2 + $0x40] sm:$0xff]
      %v995 = vld [vmem:[%s2 + $0x48] sm:$0xff]
      %v996 = vld [vmem:[%s2 + $0x50] sm:$0xff]
      %v997 = vld [vmem:[%s2 + $0x58] sm:$0xff]
      %v998 = vld [vmem:[%s2 + $0x60] sm:$0xff]
      %v999 = vld [vmem:[%s2 + $0x68] sm:$0xff]
      %v1000 = vld [vmem:[%s2 + $0x70] sm:$0xff]
      %v1001 = vld [vmem:[%s2 + $0x78] sm:$0xff]
      %v1002 = vld [vmem:[%s2 + $0x80] sm:$0xff]
      %v1003 = vld [vmem:[%s2 + $0x88] sm:$0xff]
      %v1004 = vld [vmem:[%s2 + $0x90] sm:$0xff]
      %v1005 = vld [vmem:[%s2 + $0x98] sm:$0xff]
      %v1006 = vld [vmem:[%s2 + $0xa0] sm:$0xff]
      %v1007 = vld [vmem:[%s2 + $0xa8] sm:$0xff]
      %v1008 = vld [vmem:[%s2 + $0xb0] sm:$0xff]
      %v1009 = vld [vmem:[%s2 + $0xb8] sm:$0xff]
      %v1010 = vld [vmem:[%s2 + $0xc0] sm:$0xff]
      %v1011 = vld [vmem:[%s2 + $0xc8] sm:$0xff]
      %v1012 = vld [vmem:[%s2 + $0xd0] sm:$0xff]
      %v1013 = vld [vmem:[%s2 + $0xd8] sm:$0xff]
      %v1014 = vld [vmem:[%s2 + $0xe0] sm:$0xff]
      %v1015 = vld [vmem:[%s2 + $0xe8] sm:$0xff]
      %v1016 = vld [vmem:[%s2 + $0xf0] sm:$0xff]
      %v1017 = vld [vmem:[%s2 + $0xf8] sm:$0xff]
      %v1018 = vld [vmem:[%s2 + $0x100] sm:$0xff]
      %v1019 = vld [vmem:[%s2 + $0x108] sm:$0xff]
      %v1020 = vld [vmem:[%s2 + $0x110] sm:$0xff]
      %v1021 = vld [vmem:[%s2 + $0x118] sm:$0xff]
      %v1022 = vld [vmem:[%s2 + $0x120] sm:$0xff]
      %v1023 = vld [vmem:[%s2 + $0x128] sm:$0xff]
      %v1024 = vld [vmem:[%s2 + $0x130] sm:$0xff]
      %v1025 = vld [vmem:[%s2 + $0x138] sm:$0xff]
      %v1026 = vld [vmem:[%s2 + $0x140] sm:$0xff]
      %v1027 = vld [vmem:[%s2 + $0x148] sm:$0xff]
      %v1028 = vld [vmem:[%s2 + $0x150] sm:$0xff]
      %v1029 = vld [vmem:[%s2 + $0x158] sm:$0xff]
      %v1030 = vld [vmem:[%s2 + $0x160] sm:$0xff]
      %v1031 = vld [vmem:[%s2 + $0x168] sm:$0xff]
      %v1032 = vld [vmem:[%s2 + $0x170] sm:$0xff]
      %v1033 = vld [vmem:[%s2 + $0x178] sm:$0xff]
      %v1034 = vld [vmem:[%s2 + $0x180] sm:$0xff]
      %v1035 = vld [vmem:[%s2 + $0x188] sm:$0xff]
      %v1036 = vld [vmem:[%s2 + $0x190] sm:$0xff]
      %v1037 = vld [vmem:[%s2 + $0x198] sm:$0xff]
      %v1038 = vld [vmem:[%s2 + $0x1a0] sm:$0xff]
      %v1039 = vld [vmem:[%s2 + $0x1a8] sm:$0xff]
      %v1040 = vld [vmem:[%s2 + $0x1b0] sm:$0xff]
      %v1041 = vld [vmem:[%s2 + $0x1b8] sm:$0xff]
      %v1042 = vld [vmem:[%s2 + $0x1c0] sm:$0xff]
      %v1043 = vld [vmem:[%s2 + $0x1c8] sm:$0xff]
      %v1044 = vld [vmem:[%s2 + $0x1d0] sm:$0xff]
      %v1045 = vld [vmem:[%s2 + $0x1d8] sm:$0xff]
      %v1046 = vld [vmem:[%s2 + $0x1e0] sm:$0xff]
      %v1047 = vld [vmem:[%s2 + $0x1e8] sm:$0xff]
      %v1048 = vld [vmem:[%s2 + $0x1f0] sm:$0xff]
      %v1049 = vld [vmem:[%s2 + $0x1f8] sm:$0xff]
      %1050 = vmatprep.subr.mxu0 %v987
      %1051 = vmatpush1.msra.mxu0 %v986
      %1052 = vmatprep.subr.mxu0 %v991
      %1053 = vmatpush1.msra.mxu0 %v990
      %1054 = vmatprep.subr.mxu0 %v995
      %1055 = vmatpush1.msra.mxu0 %v994
      %1056 = vmatprep.subr.mxu0 %v999
      %1057 = vmatpush1.msra.mxu0 %v998
      %1058 = vmatprep.subr.mxu0 %v1003
      %1059 = vmatpush1.msra.mxu0 %v1002
      %1060 = vmatprep.subr.mxu0 %v1007
      %1061 = vmatpush1.msra.mxu0 %v1006
      %1062 = vmatprep.subr.mxu0 %v1011
      %1063 = vmatpush1.msra.mxu0 %v1010
      %1064 = vmatprep.subr.mxu0 %v1015
      %1065 = vmatpush1.msra.mxu0 %v1014
      %1066 = vmatprep.subr.mxu0 %v1019
      %1067 = vmatpush1.msra.mxu0 %v1018
      %1068 = vmatprep.subr.mxu0 %v1023
      %1069 = vmatpush1.msra.mxu0 %v1022
      %1070 = vmatprep.subr.mxu0 %v1027
      %1071 = vmatpush1.msra.mxu0 %v1026
      %1072 = vmatprep.subr.mxu0 %v1031
      %1073 = vmatpush1.msra.mxu0 %v1030
      %1074 = vmatprep.subr.mxu0 %v1035
      %1075 = vmatpush1.msra.mxu0 %v1034
      %1076 = vmatprep.subr.mxu0 %v1039
      %1077 = vmatpush1.msra.mxu0 %v1038
      %1078 = vmatprep.subr.mxu0 %v1043
      %1079 = vmatpush1.msra.mxu0 %v1042
      %1080 = vmatprep.subr.mxu0 %v1047
      %1081 = vmatpush1.msra.mxu0 %v1046
      %1082 = vmatprep.subr.mxu0 0.0
      %1083 = vmatpush1.msra.mxu0 0.0
      %1084 = vmatprep.subr.mxu0 0.0
      %1085 = vmatpush1.msra.mxu0 0.0
      %1086 = vmatprep.subr.mxu0 0.0
      %1087 = vmatpush1.msra.mxu0 0.0
      %1088 = vmatprep.subr.mxu0 0.0
      %1089 = vmatpush1.msra.mxu0 0.0
      %1090 = vmatprep.subr.mxu0 0.0
      %1091 = vmatpush1.msra.mxu0 0.0
      %1092 = vmatprep.subr.mxu0 0.0
      %1093 = vmatpush1.msra.mxu0 0.0
      %1094 = vmatprep.subr.mxu0 0.0
      %1095 = vmatpush1.msra.mxu0 0.0
      %1096 = vmatprep.subr.mxu0 0.0
      %1097 = vmatpush1.msra.mxu0 0.0
      %1098 = vmatprep.subr.mxu0 0.0
      %1099 = vmatpush1.msra.mxu0 0.0
      %1100 = vmatprep.subr.mxu0 0.0
      %1101 = vmatpush1.msra.mxu0 0.0
      %1102 = vmatprep.subr.mxu0 0.0
      %1103 = vmatpush1.msra.mxu0 0.0
      %1104 = vmatprep.subr.mxu0 0.0
      %1105 = vmatpush1.msra.mxu0 0.0
      %1106 = vmatprep.subr.mxu0 0.0
      %1107 = vmatpush1.msra.mxu0 0.0
      %1108 = vmatprep.subr.mxu0 0.0
      %1109 = vmatpush1.msra.mxu0 0.0
      %1110 = vmatprep.subr.mxu0 0.0
      %1111 = vmatpush1.msra.mxu0 0.0
      %1112 = vmatprep.subr.mxu0 0.0
      %1113 = vmatpush1.msra.mxu0 0.0
      %1114 = vmatprep.mubr.f32.mxu0 0.0
      %1115 = vmatmul.mubr.f32.gmra.mrb[0].mxu0 %v977
      %v1116 = vpop.f32.mrb[0].mxu0
      %v1117 = vadd.f32 0.0, %v1116
      %v1118 = vpop.f32.mrb[0].mxu0
      %v1119 = vadd.f32 0.0, %v1118
      %1120 = vdwg.mxu0
      %1121 = vmatprep.subr.mxu0 %v989
      %1122 = vmatpush1.msra.mxu0 %v988
      %1123 = vmatprep.subr.mxu0 %v993
      %1124 = vmatpush1.msra.mxu0 %v992
      %1125 = vmatprep.subr.mxu0 %v997
      %1126 = vmatpush1.msra.mxu0 %v996
      %1127 = vmatprep.subr.mxu0 %v1001
      %1128 = vmatpush1.msra.mxu0 %v1000
      %1129 = vmatprep.subr.mxu0 %v1005
      %1130 = vmatpush1.msra.mxu0 %v1004
      %1131 = vmatprep.subr.mxu0 %v1009
      %1132 = vmatpush1.msra.mxu0 %v1008
      %1133 = vmatprep.subr.mxu0 %v1013
      %1134 = vmatpush1.msra.mxu0 %v1012
      %1135 = vmatprep.subr.mxu0 %v1017
      %1136 = vmatpush1.msra.mxu0 %v1016
      %1137 = vmatprep.subr.mxu0 %v1021
      %1138 = vmatpush1.msra.mxu0 %v1020
      %1139 = vmatprep.subr.mxu0 %v1025
      %1140 = vmatpush1.msra.mxu0 %v1024
      %1141 = vmatprep.subr.mxu0 %v1029
      %1142 = vmatpush1.msra.mxu0 %v1028
      %1143 = vmatprep.subr.mxu0 %v1033
      %1144 = vmatpush1.msra.mxu0 %v1032
      %1145 = vmatprep.subr.mxu0 %v1037
      %1146 = vmatpush1.msra.mxu0 %v1036
      %1147 = vmatprep.subr.mxu0 %v1041
      %1148 = vmatpush1.msra.mxu0 %v1040
      %1149 = vmatprep.subr.mxu0 %v1045
      %1150 = vmatpush1.msra.mxu0 %v1044
      %1151 = vmatprep.subr.mxu0 %v1049
      %1152 = vmatpush1.msra.mxu0 %v1048
      %1153 = vmatprep.subr.mxu0 0.0
      %1154 = vmatpush1.msra.mxu0 0.0
      %1155 = vmatprep.subr.mxu0 0.0
      %1156 = vmatpush1.msra.mxu0 0.0
      %1157 = vmatprep.subr.mxu0 0.0
      %1158 = vmatpush1.msra.mxu0 0.0
      %1159 = vmatprep.subr.mxu0 0.0
      %1160 = vmatpush1.msra.mxu0 0.0
      %1161 = vmatprep.subr.mxu0 0.0
      %1162 = vmatpush1.msra.mxu0 0.0
      %1163 = vmatprep.subr.mxu0 0.0
      %1164 = vmatpush1.msra.mxu0 0.0
      %1165 = vmatprep.subr.mxu0 0.0
      %1166 = vmatpush1.msra.mxu0 0.0
      %1167 = vmatprep.subr.mxu0 0.0
      %1168 = vmatpush1.msra.mxu0 0.0
      %1169 = vmatprep.subr.mxu0 0.0
      %1170 = vmatpush1.msra.mxu0 0.0
      %1171 = vmatprep.subr.mxu0 0.0
      %1172 = vmatpush1.msra.mxu0 0.0
      %1173 = vmatprep.subr.mxu0 0.0
      %1174 = vmatpush1.msra.mxu0 0.0
      %1175 = vmatprep.subr.mxu0 0.0
      %1176 = vmatpush1.msra.mxu0 0.0
      %1177 = vmatprep.subr.mxu0 0.0
      %1178 = vmatpush1.msra.mxu0 0.0
      %1179 = vmatprep.subr.mxu0 0.0
      %1180 = vmatpush1.msra.mxu0 0.0
      %1181 = vmatprep.subr.mxu0 0.0
      %1182 = vmatpush1.msra.mxu0 0.0
      %1183 = vmatprep.subr.mxu0 0.0
      %1184 = vmatpush1.msra.mxu0 0.0
      %1185 = vmatprep.mubr.f32.mxu0 0.0
      %1186 = vmatmul.mubr.f32.gmra.mrb[0].mxu0 %v977
      %v1187 = vpop.f32.mrb[0].mxu0
      %v1188 = vadd.f32 0.0, %v1187
      %v1189 = vpop.f32.mrb[0].mxu0
      %v1190 = vadd.f32 0.0, %v1189
      %1191 = vdwg.mxu0
      %v1192 = vadd.f32 %v982, %v1117
      %v1193 = vadd.f32 %v983, %v1119
      %v1194 = vadd.f32 %v984, %v1188
      %v1195 = vadd.f32 %v985, %v1190
      %v1196 = vxor.u32 %v1192, 2147483648
      %v1197 = vmul.f32 %v1196, 1.442695
      %v1198 = vpow.pop %v1197
      %v1199 = vadd.f32 %v1198, 1.0
      %v1200 = vrcp.pop %v1199
      %v1201 = vmul.f32 1.0, %v1200
      %v1202 = vxor.u32 %v1193, 2147483648
      %v1203 = vmul.f32 %v1202, 1.442695
      %v1204 = vpow.pop %v1203
      %v1205 = vadd.f32 %v1204, 1.0
      %v1206 = vrcp.pop %v1205
      %v1207 = vmul.f32 1.0, %v1206
      %v1208 = vtanh.pop %v1194
      %v1209 = vxor.u32 %v1195, 2147483648
      %v1210 = vmul.f32 %v1209, 1.442695
      %v1211 = vpow.pop %v1210
      %v1212 = vadd.f32 %v1211, 1.0
      %v1213 = vrcp.pop %v1212
      %v1214 = vmul.f32 1.0, %v1213
      %v1215 = vmul.f32 %v1207, %v978
      %v1216 = vmul.f32 %v1201, %v1208
      %v1217 = vadd.f32 %v1215, %v1216
      %v1218 = vtanh.pop %v1217
      %v1219 = vmul.f32 %v1214, %v1218
      %s1220 = sadd.s32 %s961, 1
      %p1221 = scmp.lt.s32.totalorder %s1220, 8
      %s1222 = scalar_select %p1221, 1, 0
      %s1223 = scvt.s32.f32 %s1222
      %v1224 = vstv %s1223
      %v1225 = vmul.f32 %v1224, %v1217
      %s1226 = ssub.f32 1.0, %s1223
      %v1227 = vstv %s1226
      %v1228 = vmul.f32 %v1227, %v978
      %v1229 = vadd.f32 %v1225, %v1228
      %v1230 = vmul.f32 %v1224, %v1219
      %v1231 = vmul.f32 %v1227, %v977
      %v1232 = vadd.f32 %v1230, %v1231
      %1233 = vst [vmem:[#allocation3] sm:$0xff] %v1229
      %1234 = vst [vmem:[#allocation2] sm:$0xff] %v1232
      %s1235 = scalar_lea.vmem [#allocation4], 8
      %1236 = vst [vmem:[%s1235] sm:$0xff] %v1232
      %v1237 = vld [vmem:[#allocation2] sm:$0xff]
      %v1238 = vld [vmem:[#allocation3] sm:$0xff]
      %s1239 = smul.u32 2, 4
      %s1240 = smul.addr %s1239, 8
      %s1241 = scalar_lea.vmem [#allocation5], %s1240
      %v1242 = vld [vmem:[%s1241] sm:$0xff]
      %v1243 = vld [vmem:[%s1241 + $0x8] sm:$0xff]
      %v1244 = vld [vmem:[%s1241 + $0x10] sm:$0xff]
      %v1245 = vld [vmem:[%s1241 + $0x18] sm:$0xff]
      %v1246 = vld [vmem:[%s2] sm:$0xff]
      %v1247 = vld [vmem:[%s2 + $0x8] sm:$0xff]
      %v1248 = vld [vmem:[%s2 + $0x10] sm:$0xff]
      %v1249 = vld [vmem:[%s2 + $0x18] sm:$0xff]
      %v1250 = vld [vmem:[%s2 + $0x20] sm:$0xff]
      %v1251 = vld [vmem:[%s2 + $0x28] sm:$0xff]
      %v1252 = vld [vmem:[%s2 + $0x30] sm:$0xff]
      %v1253 = vld [vmem:[%s2 + $0x38] sm:$0xff]
      %v1254 = vld [vmem:[%s2 + $0x40] sm:$0xff]
      %v1255 = vld [vmem:[%s2 + $0x48] sm:$0xff]
      %v1256 = vld [vmem:[%s2 + $0x50] sm:$0xff]
      %v1257 = vld [vmem:[%s2 + $0x58] sm:$0xff]
      %v1258 = vld [vmem:[%s2 + $0x60] sm:$0xff]
      %v1259 = vld [vmem:[%s2 + $0x68] sm:$0xff]
      %v1260 = vld [vmem:[%s2 + $0x70] sm:$0xff]
      %v1261 = vld [vmem:[%s2 + $0x78] sm:$0xff]
      %v1262 = vld [vmem:[%s2 + $0x80] sm:$0xff]
      %v1263 = vld [vmem:[%s2 + $0x88] sm:$0xff]
      %v1264 = vld [vmem:[%s2 + $0x90] sm:$0xff]
      %v1265 = vld [vmem:[%s2 + $0x98] sm:$0xff]
      %v1266 = vld [vmem:[%s2 + $0xa0] sm:$0xff]
      %v1267 = vld [vmem:[%s2 + $0xa8] sm:$0xff]
      %v1268 = vld [vmem:[%s2 + $0xb0] sm:$0xff]
      %v1269 = vld [vmem:[%s2 + $0xb8] sm:$0xff]
      %v1270 = vld [vmem:[%s2 + $0xc0] sm:$0xff]
      %v1271 = vld [vmem:[%s2 + $0xc8] sm:$0xff]
      %v1272 = vld [vmem:[%s2 + $0xd0] sm:$0xff]
      %v1273 = vld [vmem:[%s2 + $0xd8] sm:$0xff]
      %v1274 = vld [vmem:[%s2 + $0xe0] sm:$0xff]
      %v1275 = vld [vmem:[%s2 + $0xe8] sm:$0xff]
      %v1276 = vld [vmem:[%s2 + $0xf0] sm:$0xff]
      %v1277 = vld [vmem:[%s2 + $0xf8] sm:$0xff]
      %v1278 = vld [vmem:[%s2 + $0x100] sm:$0xff]
      %v1279 = vld [vmem:[%s2 + $0x108] sm:$0xff]
      %v1280 = vld [vmem:[%s2 + $0x110] sm:$0xff]
      %v1281 = vld [vmem:[%s2 + $0x118] sm:$0xff]
      %v1282 = vld [vmem:[%s2 + $0x120] sm:$0xff]
      %v1283 = vld [vmem:[%s2 + $0x128] sm:$0xff]
      %v1284 = vld [vmem:[%s2 + $0x130] sm:$0xff]
      %v1285 = vld [vmem:[%s2 + $0x138] sm:$0xff]
      %v1286 = vld [vmem:[%s2 + $0x140] sm:$0xff]
      %v1287 = vld [vmem:[%s2 + $0x148] sm:$0xff]
      %v1288 = vld [vmem:[%s2 + $0x150] sm:$0xff]
      %v1289 = vld [vmem:[%s2 + $0x158] sm:$0xff]
      %v1290 = vld [vmem:[%s2 + $0x160] sm:$0xff]
      %v1291 = vld [vmem:[%s2 + $0x168] sm:$0xff]
      %v1292 = vld [vmem:[%s2 + $0x170] sm:$0xff]
      %v1293 = vld [vmem:[%s2 + $0x178] sm:$0xff]
      %v1294 = vld [vmem:[%s2 + $0x180] sm:$0xff]
      %v1295 = vld [vmem:[%s2 + $0x188] sm:$0xff]
      %v1296 = vld [vmem:[%s2 + $0x190] sm:$0xff]
      %v1297 = vld [vmem:[%s2 + $0x198] sm:$0xff]
      %v1298 = vld [vmem:[%s2 + $0x1a0] sm:$0xff]
      %v1299 = vld [vmem:[%s2 + $0x1a8] sm:$0xff]
      %v1300 = vld [vmem:[%s2 + $0x1b0] sm:$0xff]
      %v1301 = vld [vmem:[%s2 + $0x1b8] sm:$0xff]
      %v1302 = vld [vmem:[%s2 + $0x1c0] sm:$0xff]
      %v1303 = vld [vmem:[%s2 + $0x1c8] sm:$0xff]
      %v1304 = vld [vmem:[%s2 + $0x1d0] sm:$0xff]
      %v1305 = vld [vmem:[%s2 + $0x1d8] sm:$0xff]
      %v1306 = vld [vmem:[%s2 + $0x1e0] sm:$0xff]
      %v1307 = vld [vmem:[%s2 + $0x1e8] sm:$0xff]
      %v1308 = vld [vmem:[%s2 + $0x1f0] sm:$0xff]
      %v1309 = vld [vmem:[%s2 + $0x1f8] sm:$0xff]
      %1310 = vmatprep.subr.mxu0 %v1247
      %1311 = vmatpush1.msra.mxu0 %v1246
      %1312 = vmatprep.subr.mxu0 %v1251
      %1313 = vmatpush1.msra.mxu0 %v1250
      %1314 = vmatprep.subr.mxu0 %v1255
      %1315 = vmatpush1.msra.mxu0 %v1254
      %1316 = vmatprep.subr.mxu0 %v1259
      %1317 = vmatpush1.msra.mxu0 %v1258
      %1318 = vmatprep.subr.mxu0 %v1263
      %1319 = vmatpush1.msra.mxu0 %v1262
      %1320 = vmatprep.subr.mxu0 %v1267
      %1321 = vmatpush1.msra.mxu0 %v1266
      %1322 = vmatprep.subr.mxu0 %v1271
      %1323 = vmatpush1.msra.mxu0 %v1270
      %1324 = vmatprep.subr.mxu0 %v1275
      %1325 = vmatpush1.msra.mxu0 %v1274
      %1326 = vmatprep.subr.mxu0 %v1279
      %1327 = vmatpush1.msra.mxu0 %v1278
      %1328 = vmatprep.subr.mxu0 %v1283
      %1329 = vmatpush1.msra.mxu0 %v1282
      %1330 = vmatprep.subr.mxu0 %v1287
      %1331 = vmatpush1.msra.mxu0 %v1286
      %1332 = vmatprep.subr.mxu0 %v1291
      %1333 = vmatpush1.msra.mxu0 %v1290
      %1334 = vmatprep.subr.mxu0 %v1295
      %1335 = vmatpush1.msra.mxu0 %v1294
      %1336 = vmatprep.subr.mxu0 %v1299
      %1337 = vmatpush1.msra.mxu0 %v1298
      %1338 = vmatprep.subr.mxu0 %v1303
      %1339 = vmatpush1.msra.mxu0 %v1302
      %1340 = vmatprep.subr.mxu0 %v1307
      %1341 = vmatpush1.msra.mxu0 %v1306
      %1342 = vmatprep.subr.mxu0 0.0
      %1343 = vmatpush1.msra.mxu0 0.0
      %1344 = vmatprep.subr.mxu0 0.0
      %1345 = vmatpush1.msra.mxu0 0.0
      %1346 = vmatprep.subr.mxu0 0.0
      %1347 = vmatpush1.msra.mxu0 0.0
      %1348 = vmatprep.subr.mxu0 0.0
      %1349 = vmatpush1.msra.mxu0 0.0
      %1350 = vmatprep.subr.mxu0 0.0
      %1351 = vmatpush1.msra.mxu0 0.0
      %1352 = vmatprep.subr.mxu0 0.0
      %1353 = vmatpush1.msra.mxu0 0.0
      %1354 = vmatprep.subr.mxu0 0.0
      %1355 = vmatpush1.msra.mxu0 0.0
      %1356 = vmatprep.subr.mxu0 0.0
      %1357 = vmatpush1.msra.mxu0 0.0
      %1358 = vmatprep.subr.mxu0 0.0
      %1359 = vmatpush1.msra.mxu0 0.0
      %1360 = vmatprep.subr.mxu0 0.0
      %1361 = vmatpush1.msra.mxu0 0.0
      %1362 = vmatprep.subr.mxu0 0.0
      %1363 = vmatpush1.msra.mxu0 0.0
      %1364 = vmatprep.subr.mxu0 0.0
      %1365 = vmatpush1.msra.mxu0 0.0
      %1366 = vmatprep.subr.mxu0 0.0
      %1367 = vmatpush1.msra.mxu0 0.0
      %1368 = vmatprep.subr.mxu0 0.0
      %1369 = vmatpush1.msra.mxu0 0.0
      %1370 = vmatprep.subr.mxu0 0.0
      %1371 = vmatpush1.msra.mxu0 0.0
      %1372 = vmatprep.subr.mxu0 0.0
      %1373 = vmatpush1.msra.mxu0 0.0
      %1374 = vmatprep.mubr.f32.mxu0 0.0
      %1375 = vmatmul.mubr.f32.gmra.mrb[0].mxu0 %v1237
      %v1376 = vpop.f32.mrb[0].mxu0
      %v1377 = vadd.f32 0.0, %v1376
      %v1378 = vpop.f32.mrb[0].mxu0
      %v1379 = vadd.f32 0.0, %v1378
      %1380 = vdwg.mxu0
      %1381 = vmatprep.subr.mxu0 %v1249
      %1382 = vmatpush1.msra.mxu0 %v1248
      %1383 = vmatprep.subr.mxu0 %v1253
      %1384 = vmatpush1.msra.mxu0 %v1252
      %1385 = vmatprep.subr.mxu0 %v1257
      %1386 = vmatpush1.msra.mxu0 %v1256
      %1387 = vmatprep.subr.mxu0 %v1261
      %1388 = vmatpush1.msra.mxu0 %v1260
      %1389 = vmatprep.subr.mxu0 %v1265
      %1390 = vmatpush1.msra.mxu0 %v1264
      %1391 = vmatprep.subr.mxu0 %v1269
      %1392 = vmatpush1.msra.mxu0 %v1268
      %1393 = vmatprep.subr.mxu0 %v1273
      %1394 = vmatpush1.msra.mxu0 %v1272
      %1395 = vmatprep.subr.mxu0 %v1277
      %1396 = vmatpush1.msra.mxu0 %v1276
      %1397 = vmatprep.subr.mxu0 %v1281
      %1398 = vmatpush1.msra.mxu0 %v1280
      %1399 = vmatprep.subr.mxu0 %v1285
      %1400 = vmatpush1.msra.mxu0 %v1284
      %1401 = vmatprep.subr.mxu0 %v1289
      %1402 = vmatpush1.msra.mxu0 %v1288
      %1403 = vmatprep.subr.mxu0 %v1293
      %1404 = vmatpush1.msra.mxu0 %v1292
      %1405 = vmatprep.subr.mxu0 %v1297
      %1406 = vmatpush1.msra.mxu0 %v1296
      %1407 = vmatprep.subr.mxu0 %v1301
      %1408 = vmatpush1.msra.mxu0 %v1300
      %1409 = vmatprep.subr.mxu0 %v1305
      %1410 = vmatpush1.msra.mxu0 %v1304
      %1411 = vmatprep.subr.mxu0 %v1309
      %1412 = vmatpush1.msra.mxu0 %v1308
      %1413 = vmatprep.subr.mxu0 0.0
      %1414 = vmatpush1.msra.mxu0 0.0
      %1415 = vmatprep.subr.mxu0 0.0
      %1416 = vmatpush1.msra.mxu0 0.0
      %1417 = vmatprep.subr.mxu0 0.0
      %1418 = vmatpush1.msra.mxu0 0.0
      %1419 = vmatprep.subr.mxu0 0.0
      %1420 = vmatpush1.msra.mxu0 0.0
      %1421 = vmatprep.subr.mxu0 0.0
      %1422 = vmatpush1.msra.mxu0 0.0
      %1423 = vmatprep.subr.mxu0 0.0
      %1424 = vmatpush1.msra.mxu0 0.0
      %1425 = vmatprep.subr.mxu0 0.0
      %1426 = vmatpush1.msra.mxu0 0.0
      %1427 = vmatprep.subr.mxu0 0.0
      %1428 = vmatpush1.msra.mxu0 0.0
      %1429 = vmatprep.subr.mxu0 0.0
      %1430 = vmatpush1.msra.mxu0 0.0
      %1431 = vmatprep.subr.mxu0 0.0
      %1432 = vmatpush1.msra.mxu0 0.0
      %1433 = vmatprep.subr.mxu0 0.0
      %1434 = vmatpush1.msra.mxu0 0.0
      %1435 = vmatprep.subr.mxu0 0.0
      %1436 = vmatpush1.msra.mxu0 0.0
      %1437 = vmatprep.subr.mxu0 0.0
      %1438 = vmatpush1.msra.mxu0 0.0
      %1439 = vmatprep.subr.mxu0 0.0
      %1440 = vmatpush1.msra.mxu0 0.0
      %1441 = vmatprep.subr.mxu0 0.0
      %1442 = vmatpush1.msra.mxu0 0.0
      %1443 = vmatprep.subr.mxu0 0.0
      %1444 = vmatpush1.msra.mxu0 0.0
      %1445 = vmatprep.mubr.f32.mxu0 0.0
      %1446 = vmatmul.mubr.f32.gmra.mrb[0].mxu0 %v1237
      %v1447 = vpop.f32.mrb[0].mxu0
      %v1448 = vadd.f32 0.0, %v1447
      %v1449 = vpop.f32.mrb[0].mxu0
      %v1450 = vadd.f32 0.0, %v1449
      %1451 = vdwg.mxu0
      %v1452 = vadd.f32 %v1242, %v1377
      %v1453 = vadd.f32 %v1243, %v1379
      %v1454 = vadd.f32 %v1244, %v1448
      %v1455 = vadd.f32 %v1245, %v1450
      %v1456 = vxor.u32 %v1452, 2147483648
      %v1457 = vmul.f32 %v1456, 1.442695
      %v1458 = vpow.pop %v1457
      %v1459 = vadd.f32 %v1458, 1.0
      %v1460 = vrcp.pop %v1459
      %v1461 = vmul.f32 1.0, %v1460
      %v1462 = vxor.u32 %v1453, 2147483648
      %v1463 = vmul.f32 %v1462, 1.442695
      %v1464 = vpow.pop %v1463
      %v1465 = vadd.f32 %v1464, 1.0
      %v1466 = vrcp.pop %v1465
      %v1467 = vmul.f32 1.0, %v1466
      %v1468 = vtanh.pop %v1454
      %v1469 = vxor.u32 %v1455, 2147483648
      %v1470 = vmul.f32 %v1469, 1.442695
      %v1471 = vpow.pop %v1470
      %v1472 = vadd.f32 %v1471, 1.0
      %v1473 = vrcp.pop %v1472
      %v1474 = vmul.f32 1.0, %v1473
      %v1475 = vmul.f32 %v1467, %v1238
      %v1476 = vmul.f32 %v1461, %v1468
      %v1477 = vadd.f32 %v1475, %v1476
      %v1478 = vtanh.pop %v1477
      %v1479 = vmul.f32 %v1474, %v1478
      %s1480 = sadd.s32 %s961, 2
      %p1481 = scmp.lt.s32.totalorder %s1480, 8
      %s1482 = scalar_select %p1481, 1, 0
      %s1483 = scvt.s32.f32 %s1482
      %v1484 = vstv %s1483
      %v1485 = vmul.f32 %v1484, %v1477
      %s1486 = ssub.f32 1.0, %s1483
      %v1487 = vstv %s1486
      %v1488 = vmul.f32 %v1487, %v1238
      %v1489 = vadd.f32 %v1485, %v1488
      %v1490 = vmul.f32 %v1484, %v1479
      %v1491 = vmul.f32 %v1487, %v1237
      %v1492 = vadd.f32 %v1490, %v1491
      %1493 = vst [vmem:[#allocation3] sm:$0xff] %v1489
      %1494 = vst [vmem:[#allocation2] sm:$0xff] %v1492
      %s1495 = scalar_lea.vmem [#allocation4], 16
      %1496 = vst [vmem:[%s1495] sm:$0xff] %v1492
      %v1497 = vld [vmem:[#allocation2] sm:$0xff]
      %v1498 = vld [vmem:[#allocation3] sm:$0xff]
      %s1499 = smul.u32 3, 4
      %s1500 = smul.addr %s1499, 8
      %s1501 = scalar_lea.vmem [#allocation5], %s1500
      %v1502 = vld [vmem:[%s1501] sm:$0xff]
      %v1503 = vld [vmem:[%s1501 + $0x8] sm:$0xff]
      %v1504 = vld [vmem:[%s1501 + $0x10] sm:$0xff]
      %v1505 = vld [vmem:[%s1501 + $0x18] sm:$0xff]
      %v1506 = vld [vmem:[%s2] sm:$0xff]
      %v1507 = vld [vmem:[%s2 + $0x8] sm:$0xff]
      %v1508 = vld [vmem:[%s2 + $0x10] sm:$0xff]
      %v1509 = vld [vmem:[%s2 + $0x18] sm:$0xff]
      %v1510 = vld [vmem:[%s2 + $0x20] sm:$0xff]
      %v1511 = vld [vmem:[%s2 + $0x28] sm:$0xff]
      %v1512 = vld [vmem:[%s2 + $0x30] sm:$0xff]
      %v1513 = vld [vmem:[%s2 + $0x38] sm:$0xff]
      %v1514 = vld [vmem:[%s2 + $0x40] sm:$0xff]
      %v1515 = vld [vmem:[%s2 + $0x48] sm:$0xff]
      %v1516 = vld [vmem:[%s2 + $0x50] sm:$0xff]
      %v1517 = vld [vmem:[%s2 + $0x58] sm:$0xff]
      %v1518 = vld [vmem:[%s2 + $0x60] sm:$0xff]
      %v1519 = vld [vmem:[%s2 + $0x68] sm:$0xff]
      %v1520 = vld [vmem:[%s2 + $0x70] sm:$0xff]
      %v1521 = vld [vmem:[%s2 + $0x78] sm:$0xff]
      %v1522 = vld [vmem:[%s2 + $0x80] sm:$0xff]
      %v1523 = vld [vmem:[%s2 + $0x88] sm:$0xff]
      %v1524 = vld [vmem:[%s2 + $0x90] sm:$0xff]
      %v1525 = vld [vmem:[%s2 + $0x98] sm:$0xff]
      %v1526 = vld [vmem:[%s2 + $0xa0] sm:$0xff]
      %v1527 = vld [vmem:[%s2 + $0xa8] sm:$0xff]
      %v1528 = vld [vmem:[%s2 + $0xb0] sm:$0xff]
      %v1529 = vld [vmem:[%s2 + $0xb8] sm:$0xff]
      %v1530 = vld [vmem:[%s2 + $0xc0] sm:$0xff]
      %v1531 = vld [vmem:[%s2 + $0xc8] sm:$0xff]
      %v1532 = vld [vmem:[%s2 + $0xd0] sm:$0xff]
      %v1533 = vld [vmem:[%s2 + $0xd8] sm:$0xff]
      %v1534 = vld [vmem:[%s2 + $0xe0] sm:$0xff]
      %v1535 = vld [vmem:[%s2 + $0xe8] sm:$0xff]
      %v1536 = vld [vmem:[%s2 + $0xf0] sm:$0xff]
      %v1537 = vld [vmem:[%s2 + $0xf8] sm:$0xff]
      %v1538 = vld [vmem:[%s2 + $0x100] sm:$0xff]
      %v1539 = vld [vmem:[%s2 + $0x108] sm:$0xff]
      %v1540 = vld [vmem:[%s2 + $0x110] sm:$0xff]
      %v1541 = vld [vmem:[%s2 + $0x118] sm:$0xff]
      %v1542 = vld [vmem:[%s2 + $0x120] sm:$0xff]
      %v1543 = vld [vmem:[%s2 + $0x128] sm:$0xff]
      %v1544 = vld [vmem:[%s2 + $0x130] sm:$0xff]
      %v1545 = vld [vmem:[%s2 + $0x138] sm:$0xff]
      %v1546 = vld [vmem:[%s2 + $0x140] sm:$0xff]
      %v1547 = vld [vmem:[%s2 + $0x148] sm:$0xff]
      %v1548 = vld [vmem:[%s2 + $0x150] sm:$0xff]
      %v1549 = vld [vmem:[%s2 + $0x158] sm:$0xff]
      %v1550 = vld [vmem:[%s2 + $0x160] sm:$0xff]
      %v1551 = vld [vmem:[%s2 + $0x168] sm:$0xff]
      %v1552 = vld [vmem:[%s2 + $0x170] sm:$0xff]
      %v1553 = vld [vmem:[%s2 + $0x178] sm:$0xff]
      %v1554 = vld [vmem:[%s2 + $0x180] sm:$0xff]
      %v1555 = vld [vmem:[%s2 + $0x188] sm:$0xff]
      %v1556 = vld [vmem:[%s2 + $0x190] sm:$0xff]
      %v1557 = vld [vmem:[%s2 + $0x198] sm:$0xff]
      %v1558 = vld [vmem:[%s2 + $0x1a0] sm:$0xff]
      %v1559 = vld [vmem:[%s2 + $0x1a8] sm:$0xff]
      %v1560 = vld [vmem:[%s2 + $0x1b0] sm:$0xff]
      %v1561 = vld [vmem:[%s2 + $0x1b8] sm:$0xff]
      %v1562 = vld [vmem:[%s2 + $0x1c0] sm:$0xff]
      %v1563 = vld [vmem:[%s2 + $0x1c8] sm:$0xff]
      %v1564 = vld [vmem:[%s2 + $0x1d0] sm:$0xff]
      %v1565 = vld [vmem:[%s2 + $0x1d8] sm:$0xff]
      %v1566 = vld [vmem:[%s2 + $0x1e0] sm:$0xff]
      %v1567 = vld [vmem:[%s2 + $0x1e8] sm:$0xff]
      %v1568 = vld [vmem:[%s2 + $0x1f0] sm:$0xff]
      %v1569 = vld [vmem:[%s2 + $0x1f8] sm:$0xff]
      %1570 = vmatprep.subr.mxu0 %v1507
      %1571 = vmatpush1.msra.mxu0 %v1506
      %1572 = vmatprep.subr.mxu0 %v1511
      %1573 = vmatpush1.msra.mxu0 %v1510
      %1574 = vmatprep.subr.mxu0 %v1515
      %1575 = vmatpush1.msra.mxu0 %v1514
      %1576 = vmatprep.subr.mxu0 %v1519
      %1577 = vmatpush1.msra.mxu0 %v1518
      %1578 = vmatprep.subr.mxu0 %v1523
      %1579 = vmatpush1.msra.mxu0 %v1522
      %1580 = vmatprep.subr.mxu0 %v1527
      %1581 = vmatpush1.msra.mxu0 %v1526
      %1582 = vmatprep.subr.mxu0 %v1531
      %1583 = vmatpush1.msra.mxu0 %v1530
      %1584 = vmatprep.subr.mxu0 %v1535
      %1585 = vmatpush1.msra.mxu0 %v1534
      %1586 = vmatprep.subr.mxu0 %v1539
      %1587 = vmatpush1.msra.mxu0 %v1538
      %1588 = vmatprep.subr.mxu0 %v1543
      %1589 = vmatpush1.msra.mxu0 %v1542
      %1590 = vmatprep.subr.mxu0 %v1547
      %1591 = vmatpush1.msra.mxu0 %v1546
      %1592 = vmatprep.subr.mxu0 %v1551
      %1593 = vmatpush1.msra.mxu0 %v1550
      %1594 = vmatprep.subr.mxu0 %v1555
      %1595 = vmatpush1.msra.mxu0 %v1554
      %1596 = vmatprep.subr.mxu0 %v1559
      %1597 = vmatpush1.msra.mxu0 %v1558
      %1598 = vmatprep.subr.mxu0 %v1563
      %1599 = vmatpush1.msra.mxu0 %v1562
      %1600 = vmatprep.subr.mxu0 %v1567
      %1601 = vmatpush1.msra.mxu0 %v1566
      %1602 = vmatprep.subr.mxu0 0.0
      %1603 = vmatpush1.msra.mxu0 0.0
      %1604 = vmatprep.subr.mxu0 0.0
      %1605 = vmatpush1.msra.mxu0 0.0
      %1606 = vmatprep.subr.mxu0 0.0
      %1607 = vmatpush1.msra.mxu0 0.0
      %1608 = vmatprep.subr.mxu0 0.0
      %1609 = vmatpush1.msra.mxu0 0.0
      %1610 = vmatprep.subr.mxu0 0.0
      %1611 = vmatpush1.msra.mxu0 0.0
      %1612 = vmatprep.subr.mxu0 0.0
      %1613 = vmatpush1.msra.mxu0 0.0
      %1614 = vmatprep.subr.mxu0 0.0
      %1615 = vmatpush1.msra.mxu0 0.0
      %1616 = vmatprep.subr.mxu0 0.0
      %1617 = vmatpush1.msra.mxu0 0.0
      %1618 = vmatprep.subr.mxu0 0.0
      %1619 = vmatpush1.msra.mxu0 0.0
      %1620 = vmatprep.subr.mxu0 0.0
      %1621 = vmatpush1.msra.mxu0 0.0
      %1622 = vmatprep.subr.mxu0 0.0
      %1623 = vmatpush1.msra.mxu0 0.0
      %1624 = vmatprep.subr.mxu0 0.0
      %1625 = vmatpush1.msra.mxu0 0.0
      %1626 = vmatprep.subr.mxu0 0.0
      %1627 = vmatpush1.msra.mxu0 0.0
      %1628 = vmatprep.subr.mxu0 0.0
      %1629 = vmatpush1.msra.mxu0 0.0
      %1630 = vmatprep.subr.mxu0 0.0
      %1631 = vmatpush1.msra.mxu0 0.0
      %1632 = vmatprep.subr.mxu0 0.0
      %1633 = vmatpush1.msra.mxu0 0.0
      %1634 = vmatprep.mubr.f32.mxu0 0.0
      %1635 = vmatmul.mubr.f32.gmra.mrb[0].mxu0 %v1497
      %v1636 = vpop.f32.mrb[0].mxu0
      %v1637 = vadd.f32 0.0, %v1636
      %v1638 = vpop.f32.mrb[0].mxu0
      %v1639 = vadd.f32 0.0, %v1638
      %1640 = vdwg.mxu0
      %1641 = vmatprep.subr.mxu0 %v1509
      %1642 = vmatpush1.msra.mxu0 %v1508
      %1643 = vmatprep.subr.mxu0 %v1513
      %1644 = vmatpush1.msra.mxu0 %v1512
      %1645 = vmatprep.subr.mxu0 %v1517
      %1646 = vmatpush1.msra.mxu0 %v1516
      %1647 = vmatprep.subr.mxu0 %v1521
      %1648 = vmatpush1.msra.mxu0 %v1520
      %1649 = vmatprep.subr.mxu0 %v1525
      %1650 = vmatpush1.msra.mxu0 %v1524
      %1651 = vmatprep.subr.mxu0 %v1529
      %1652 = vmatpush1.msra.mxu0 %v1528
      %1653 = vmatprep.subr.mxu0 %v1533
      %1654 = vmatpush1.msra.mxu0 %v1532
      %1655 = vmatprep.subr.mxu0 %v1537
      %1656 = vmatpush1.msra.mxu0 %v1536
      %1657 = vmatprep.subr.mxu0 %v1541
      %1658 = vmatpush1.msra.mxu0 %v1540
      %1659 = vmatprep.subr.mxu0 %v1545
      %1660 = vmatpush1.msra.mxu0 %v1544
      %1661 = vmatprep.subr.mxu0 %v1549
      %1662 = vmatpush1.msra.mxu0 %v1548
      %1663 = vmatprep.subr.mxu0 %v1553
      %1664 = vmatpush1.msra.mxu0 %v1552
      %1665 = vmatprep.subr.mxu0 %v1557
      %1666 = vmatpush1.msra.mxu0 %v1556
      %1667 = vmatprep.subr.mxu0 %v1561
      %1668 = vmatpush1.msra.mxu0 %v1560
      %1669 = vmatprep.subr.mxu0 %v1565
      %1670 = vmatpush1.msra.mxu0 %v1564
      %1671 = vmatprep.subr.mxu0 %v1569
      %1672 = vmatpush1.msra.mxu0 %v1568
      %1673 = vmatprep.subr.mxu0 0.0
      %1674 = vmatpush1.msra.mxu0 0.0
      %1675 = vmatprep.subr.mxu0 0.0
      %1676 = vmatpush1.msra.mxu0 0.0
      %1677 = vmatprep.subr.mxu0 0.0
      %1678 = vmatpush1.msra.mxu0 0.0
      %1679 = vmatprep.subr.mxu0 0.0
      %1680 = vmatpush1.msra.mxu0 0.0
      %1681 = vmatprep.subr.mxu0 0.0
      %1682 = vmatpush1.msra.mxu0 0.0
      %1683 = vmatprep.subr.mxu0 0.0
      %1684 = vmatpush1.msra.mxu0 0.0
      %1685 = vmatprep.subr.mxu0 0.0
      %1686 = vmatpush1.msra.mxu0 0.0
      %1687 = vmatprep.subr.mxu0 0.0
      %1688 = vmatpush1.msra.mxu0 0.0
      %1689 = vmatprep.subr.mxu0 0.0
      %1690 = vmatpush1.msra.mxu0 0.0
      %1691 = vmatprep.subr.mxu0 0.0
      %1692 = vmatpush1.msra.mxu0 0.0
      %1693 = vmatprep.subr.mxu0 0.0
      %1694 = vmatpush1.msra.mxu0 0.0
      %1695 = vmatprep.subr.mxu0 0.0
      %1696 = vmatpush1.msra.mxu0 0.0
      %1697 = vmatprep.subr.mxu0 0.0
      %1698 = vmatpush1.msra.mxu0 0.0
      %1699 = vmatprep.subr.mxu0 0.0
      %1700 = vmatpush1.msra.mxu0 0.0
      %1701 = vmatprep.subr.mxu0 0.0
      %1702 = vmatpush1.msra.mxu0 0.0
      %1703 = vmatprep.subr.mxu0 0.0
      %1704 = vmatpush1.msra.mxu0 0.0
      %1705 = vmatprep.mubr.f32.mxu0 0.0
      %1706 = vmatmul.mubr.f32.gmra.mrb[0].mxu0 %v1497
      %v1707 = vpop.f32.mrb[0].mxu0
      %v1708 = vadd.f32 0.0, %v1707
      %v1709 = vpop.f32.mrb[0].mxu0
      %v1710 = vadd.f32 0.0, %v1709
      %1711 = vdwg.mxu0
      %v1712 = vadd.f32 %v1502, %v1637
      %v1713 = vadd.f32 %v1503, %v1639
      %v1714 = vadd.f32 %v1504, %v1708
      %v1715 = vadd.f32 %v1505, %v1710
      %v1716 = vxor.u32 %v1712, 2147483648
      %v1717 = vmul.f32 %v1716, 1.442695
      %v1718 = vpow.pop %v1717
      %v1719 = vadd.f32 %v1718, 1.0
      %v1720 = vrcp.pop %v1719
      %v1721 = vmul.f32 1.0, %v1720
      %v1722 = vxor.u32 %v1713, 2147483648
      %v1723 = vmul.f32 %v1722, 1.442695
      %v1724 = vpow.pop %v1723
      %v1725 = vadd.f32 %v1724, 1.0
      %v1726 = vrcp.pop %v1725
      %v1727 = vmul.f32 1.0, %v1726
      %v1728 = vtanh.pop %v1714
      %v1729 = vxor.u32 %v1715, 2147483648
      %v1730 = vmul.f32 %v1729, 1.442695
      %v1731 = vpow.pop %v1730
      %v1732 = vadd.f32 %v1731, 1.0
      %v1733 = vrcp.pop %v1732
      %v1734 = vmul.f32 1.0, %v1733
      %v1735 = vmul.f32 %v1727, %v1498
      %v1736 = vmul.f32 %v1721, %v1728
      %v1737 = vadd.f32 %v1735, %v1736
      %v1738 = vtanh.pop %v1737
      %v1739 = vmul.f32 %v1734, %v1738
      %s1740 = sadd.s32 %s961, 3
      %p1741 = scmp.lt.s32.totalorder %s1740, 8
      %s1742 = scalar_select %p1741, 1, 0
      %s1743 = scvt.s32.f32 %s1742
      %v1744 = vstv %s1743
      %v1745 = vmul.f32 %v1744, %v1737
      %s1746 = ssub.f32 1.0, %s1743
      %v1747 = vstv %s1746
      %v1748 = vmul.f32 %v1747, %v1498
      %v1749 = vadd.f32 %v1745, %v1748
      %v1750 = vmul.f32 %v1744, %v1739
      %v1751 = vmul.f32 %v1747, %v1497
      %v1752 = vadd.f32 %v1750, %v1751
      %1753 = vst [vmem:[#allocation3] sm:$0xff] %v1749
      %1754 = vst [vmem:[#allocation2] sm:$0xff] %v1752
      %s1755 = scalar_lea.vmem [#allocation4], 24
      %1756 = vst [vmem:[%s1755] sm:$0xff] %v1752
      %v1757 = vld [vmem:[#allocation2] sm:$0xff]
      %v1758 = vld [vmem:[#allocation3] sm:$0xff]
      %s1759 = smul.u32 4, 4
      %s1760 = smul.addr %s1759, 8
      %s1761 = scalar_lea.vmem [#allocation5], %s1760
      %v1762 = vld [vmem:[%s1761] sm:$0xff]
      %v1763 = vld [vmem:[%s1761 + $0x8] sm:$0xff]
      %v1764 = vld [vmem:[%s1761 + $0x10] sm:$0xff]
      %v1765 = vld [vmem:[%s1761 + $0x18] sm:$0xff]
      %v1766 = vld [vmem:[%s2] sm:$0xff]
      %v1767 = vld [vmem:[%s2 + $0x8] sm:$0xff]
      %v1768 = vld [vmem:[%s2 + $0x10] sm:$0xff]
      %v1769 = vld [vmem:[%s2 + $0x18] sm:$0xff]
      %v1770 = vld [vmem:[%s2 + $0x20] sm:$0xff]
      %v1771 = vld [vmem:[%s2 + $0x28] sm:$0xff]
      %v1772 = vld [vmem:[%s2 + $0x30] sm:$0xff]
      %v1773 = vld [vmem:[%s2 + $0x38] sm:$0xff]
      %v1774 = vld [vmem:[%s2 + $0x40] sm:$0xff]
      %v1775 = vld [vmem:[%s2 + $0x48] sm:$0xff]
      %v1776 = vld [vmem:[%s2 + $0x50] sm:$0xff]
      %v1777 = vld [vmem:[%s2 + $0x58] sm:$0xff]
      %v1778 = vld [vmem:[%s2 + $0x60] sm:$0xff]
      %v1779 = vld [vmem:[%s2 + $0x68] sm:$0xff]
      %v1780 = vld [vmem:[%s2 + $0x70] sm:$0xff]
      %v1781 = vld [vmem:[%s2 + $0x78] sm:$0xff]
      %v1782 = vld [vmem:[%s2 + $0x80] sm:$0xff]
      %v1783 = vld [vmem:[%s2 + $0x88] sm:$0xff]
      %v1784 = vld [vmem:[%s2 + $0x90] sm:$0xff]
      %v1785 = vld [vmem:[%s2 + $0x98] sm:$0xff]
      %v1786 = vld [vmem:[%s2 + $0xa0] sm:$0xff]
      %v1787 = vld [vmem:[%s2 + $0xa8] sm:$0xff]
      %v1788 = vld [vmem:[%s2 + $0xb0] sm:$0xff]
      %v1789 = vld [vmem:[%s2 + $0xb8] sm:$0xff]
      %v1790 = vld [vmem:[%s2 + $0xc0] sm:$0xff]
      %v1791 = vld [vmem:[%s2 + $0xc8] sm:$0xff]
      %v1792 = vld [vmem:[%s2 + $0xd0] sm:$0xff]
      %v1793 = vld [vmem:[%s2 + $0xd8] sm:$0xff]
      %v1794 = vld [vmem:[%s2 + $0xe0] sm:$0xff]
      %v1795 = vld [vmem:[%s2 + $0xe8] sm:$0xff]
      %v1796 = vld [vmem:[%s2 + $0xf0] sm:$0xff]
      %v1797 = vld [vmem:[%s2 + $0xf8] sm:$0xff]
      %v1798 = vld [vmem:[%s2 + $0x100] sm:$0xff]
      %v1799 = vld [vmem:[%s2 + $0x108] sm:$0xff]
      %v1800 = vld [vmem:[%s2 + $0x110] sm:$0xff]
      %v1801 = vld [vmem:[%s2 + $0x118] sm:$0xff]
      %v1802 = vld [vmem:[%s2 + $0x120] sm:$0xff]
      %v1803 = vld [vmem:[%s2 + $0x128] sm:$0xff]
      %v1804 = vld [vmem:[%s2 + $0x130] sm:$0xff]
      %v1805 = vld [vmem:[%s2 + $0x138] sm:$0xff]
      %v1806 = vld [vmem:[%s2 + $0x140] sm:$0xff]
      %v1807 = vld [vmem:[%s2 + $0x148] sm:$0xff]
      %v1808 = vld [vmem:[%s2 + $0x150] sm:$0xff]
      %v1809 = vld [vmem:[%s2 + $0x158] sm:$0xff]
      %v1810 = vld [vmem:[%s2 + $0x160] sm:$0xff]
      %v1811 = vld [vmem:[%s2 + $0x168] sm:$0xff]
      %v1812 = vld [vmem:[%s2 + $0x170] sm:$0xff]
      %v1813 = vld [vmem:[%s2 + $0x178] sm:$0xff]
      %v1814 = vld [vmem:[%s2 + $0x180] sm:$0xff]
      %v1815 = vld [vmem:[%s2 + $0x188] sm:$0xff]
      %v1816 = vld [vmem:[%s2 + $0x190] sm:$0xff]
      %v1817 = vld [vmem:[%s2 + $0x198] sm:$0xff]
      %v1818 = vld [vmem:[%s2 + $0x1a0] sm:$0xff]
      %v1819 = vld [vmem:[%s2 + $0x1a8] sm:$0xff]
      %v1820 = vld [vmem:[%s2 + $0x1b0] sm:$0xff]
      %v1821 = vld [vmem:[%s2 + $0x1b8] sm:$0xff]
      %v1822 = vld [vmem:[%s2 + $0x1c0] sm:$0xff]
      %v1823 = vld [vmem:[%s2 + $0x1c8] sm:$0xff]
      %v1824 = vld [vmem:[%s2 + $0x1d0] sm:$0xff]
      %v1825 = vld [vmem:[%s2 + $0x1d8] sm:$0xff]
      %v1826 = vld [vmem:[%s2 + $0x1e0] sm:$0xff]
      %v1827 = vld [vmem:[%s2 + $0x1e8] sm:$0xff]
      %v1828 = vld [vmem:[%s2 + $0x1f0] sm:$0xff]
      %v1829 = vld [vmem:[%s2 + $0x1f8] sm:$0xff]
      %1830 = vmatprep.subr.mxu0 %v1767
      %1831 = vmatpush1.msra.mxu0 %v1766
      %1832 = vmatprep.subr.mxu0 %v1771
      %1833 = vmatpush1.msra.mxu0 %v1770
      %1834 = vmatprep.subr.mxu0 %v1775
      %1835 = vmatpush1.msra.mxu0 %v1774
      %1836 = vmatprep.subr.mxu0 %v1779
      %1837 = vmatpush1.msra.mxu0 %v1778
      %1838 = vmatprep.subr.mxu0 %v1783
      %1839 = vmatpush1.msra.mxu0 %v1782
      %1840 = vmatprep.subr.mxu0 %v1787
      %1841 = vmatpush1.msra.mxu0 %v1786
      %1842 = vmatprep.subr.mxu0 %v1791
      %1843 = vmatpush1.msra.mxu0 %v1790
      %1844 = vmatprep.subr.mxu0 %v1795
      %1845 = vmatpush1.msra.mxu0 %v1794
      %1846 = vmatprep.subr.mxu0 %v1799
      %1847 = vmatpush1.msra.mxu0 %v1798
      %1848 = vmatprep.subr.mxu0 %v1803
      %1849 = vmatpush1.msra.mxu0 %v1802
      %1850 = vmatprep.subr.mxu0 %v1807
      %1851 = vmatpush1.msra.mxu0 %v1806
      %1852 = vmatprep.subr.mxu0 %v1811
      %1853 = vmatpush1.msra.mxu0 %v1810
      %1854 = vmatprep.subr.mxu0 %v1815
      %1855 = vmatpush1.msra.mxu0 %v1814
      %1856 = vmatprep.subr.mxu0 %v1819
      %1857 = vmatpush1.msra.mxu0 %v1818
      %1858 = vmatprep.subr.mxu0 %v1823
      %1859 = vmatpush1.msra.mxu0 %v1822
      %1860 = vmatprep.subr.mxu0 %v1827
      %1861 = vmatpush1.msra.mxu0 %v1826
      %1862 = vmatprep.subr.mxu0 0.0
      %1863 = vmatpush1.msra.mxu0 0.0
      %1864 = vmatprep.subr.mxu0 0.0
      %1865 = vmatpush1.msra.mxu0 0.0
      %1866 = vmatprep.subr.mxu0 0.0
      %1867 = vmatpush1.msra.mxu0 0.0
      %1868 = vmatprep.subr.mxu0 0.0
      %1869 = vmatpush1.msra.mxu0 0.0
      %1870 = vmatprep.subr.mxu0 0.0
      %1871 = vmatpush1.msra.mxu0 0.0
      %1872 = vmatprep.subr.mxu0 0.0
      %1873 = vmatpush1.msra.mxu0 0.0
      %1874 = vmatprep.subr.mxu0 0.0
      %1875 = vmatpush1.msra.mxu0 0.0
      %1876 = vmatprep.subr.mxu0 0.0
      %1877 = vmatpush1.msra.mxu0 0.0
      %1878 = vmatprep.subr.mxu0 0.0
      %1879 = vmatpush1.msra.mxu0 0.0
      %1880 = vmatprep.subr.mxu0 0.0
      %1881 = vmatpush1.msra.mxu0 0.0
      %1882 = vmatprep.subr.mxu0 0.0
      %1883 = vmatpush1.msra.mxu0 0.0
      %1884 = vmatprep.subr.mxu0 0.0
      %1885 = vmatpush1.msra.mxu0 0.0
      %1886 = vmatprep.subr.mxu0 0.0
      %1887 = vmatpush1.msra.mxu0 0.0
      %1888 = vmatprep.subr.mxu0 0.0
      %1889 = vmatpush1.msra.mxu0 0.0
      %1890 = vmatprep.subr.mxu0 0.0
      %1891 = vmatpush1.msra.mxu0 0.0
      %1892 = vmatprep.subr.mxu0 0.0
      %1893 = vmatpush1.msra.mxu0 0.0
      %1894 = vmatprep.mubr.f32.mxu0 0.0
      %1895 = vmatmul.mubr.f32.gmra.mrb[0].mxu0 %v1757
      %v1896 = vpop.f32.mrb[0].mxu0
      %v1897 = vadd.f32 0.0, %v1896
      %v1898 = vpop.f32.mrb[0].mxu0
      %v1899 = vadd.f32 0.0, %v1898
      %1900 = vdwg.mxu0
      %1901 = vmatprep.subr.mxu0 %v1769
      %1902 = vmatpush1.msra.mxu0 %v1768
      %1903 = vmatprep.subr.mxu0 %v1773
      %1904 = vmatpush1.msra.mxu0 %v1772
      %1905 = vmatprep.subr.mxu0 %v1777
      %1906 = vmatpush1.msra.mxu0 %v1776
      %1907 = vmatprep.subr.mxu0 %v1781
      %1908 = vmatpush1.msra.mxu0 %v1780
      %1909 = vmatprep.subr.mxu0 %v1785
      %1910 = vmatpush1.msra.mxu0 %v1784
      %1911 = vmatprep.subr.mxu0 %v1789
      %1912 = vmatpush1.msra.mxu0 %v1788
      %1913 = vmatprep.subr.mxu0 %v1793
      %1914 = vmatpush1.msra.mxu0 %v1792
      %1915 = vmatprep.subr.mxu0 %v1797
      %1916 = vmatpush1.msra.mxu0 %v1796
      %1917 = vmatprep.subr.mxu0 %v1801
      %1918 = vmatpush1.msra.mxu0 %v1800
      %1919 = vmatprep.subr.mxu0 %v1805
      %1920 = vmatpush1.msra.mxu0 %v1804
      %1921 = vmatprep.subr.mxu0 %v1809
      %1922 = vmatpush1.msra.mxu0 %v1808
      %1923 = vmatprep.subr.mxu0 %v1813
      %1924 = vmatpush1.msra.mxu0 %v1812
      %1925 = vmatprep.subr.mxu0 %v1817
      %1926 = vmatpush1.msra.mxu0 %v1816
      %1927 = vmatprep.subr.mxu0 %v1821
      %1928 = vmatpush1.msra.mxu0 %v1820
      %1929 = vmatprep.subr.mxu0 %v1825
      %1930 = vmatpush1.msra.mxu0 %v1824
      %1931 = vmatprep.subr.mxu0 %v1829
      %1932 = vmatpush1.msra.mxu0 %v1828
      %1933 = vmatprep.subr.mxu0 0.0
      %1934 = vmatpush1.msra.mxu0 0.0
      %1935 = vmatprep.subr.mxu0 0.0
      %1936 = vmatpush1.msra.mxu0 0.0
      %1937 = vmatprep.subr.mxu0 0.0
      %1938 = vmatpush1.msra.mxu0 0.0
      %1939 = vmatprep.subr.mxu0 0.0
      %1940 = vmatpush1.msra.mxu0 0.0
      %1941 = vmatprep.subr.mxu0 0.0
      %1942 = vmatpush1.msra.mxu0 0.0
      %1943 = vmatprep.subr.mxu0 0.0
      %1944 = vmatpush1.msra.mxu0 0.0
      %1945 = vmatprep.subr.mxu0 0.0
      %1946 = vmatpush1.msra.mxu0 0.0
      %1947 = vmatprep.subr.mxu0 0.0
      %1948 = vmatpush1.msra.mxu0 0.0
      %1949 = vmatprep.subr.mxu0 0.0
      %1950 = vmatpush1.msra.mxu0 0.0
      %1951 = vmatprep.subr.mxu0 0.0
      %1952 = vmatpush1.msra.mxu0 0.0
      %1953 = vmatprep.subr.mxu0 0.0
      %1954 = vmatpush1.msra.mxu0 0.0
      %1955 = vmatprep.subr.mxu0 0.0
      %1956 = vmatpush1.msra.mxu0 0.0
      %1957 = vmatprep.subr.mxu0 0.0
      %1958 = vmatpush1.msra.mxu0 0.0
      %1959 = vmatprep.subr.mxu0 0.0
      %1960 = vmatpush1.msra.mxu0 0.0
      %1961 = vmatprep.subr.mxu0 0.0
      %1962 = vmatpush1.msra.mxu0 0.0
      %1963 = vmatprep.subr.mxu0 0.0
      %1964 = vmatpush1.msra.mxu0 0.0
      %1965 = vmatprep.mubr.f32.mxu0 0.0
      %1966 = vmatmul.mubr.f32.gmra.mrb[0].mxu0 %v1757
      %v1967 = vpop.f32.mrb[0].mxu0
      %v1968 = vadd.f32 0.0, %v1967
      %v1969 = vpop.f32.mrb[0].mxu0
      %v1970 = vadd.f32 0.0, %v1969
      %1971 = vdwg.mxu0
      %v1972 = vadd.f32 %v1762, %v1897
      %v1973 = vadd.f32 %v1763, %v1899
      %v1974 = vadd.f32 %v1764, %v1968
      %v1975 = vadd.f32 %v1765, %v1970
      %v1976 = vxor.u32 %v1972, 2147483648
      %v1977 = vmul.f32 %v1976, 1.442695
      %v1978 = vpow.pop %v1977
      %v1979 = vadd.f32 %v1978, 1.0
      %v1980 = vrcp.pop %v1979
      %v1981 = vmul.f32 1.0, %v1980
      %v1982 = vxor.u32 %v1973, 2147483648
      %v1983 = vmul.f32 %v1982, 1.442695
      %v1984 = vpow.pop %v1983
      %v1985 = vadd.f32 %v1984, 1.0
      %v1986 = vrcp.pop %v1985
      %v1987 = vmul.f32 1.0, %v1986
      %v1988 = vtanh.pop %v1974
      %v1989 = vxor.u32 %v1975, 2147483648
      %v1990 = vmul.f32 %v1989, 1.442695
      %v1991 = vpow.pop %v1990
      %v1992 = vadd.f32 %v1991, 1.0
      %v1993 = vrcp.pop %v1992
      %v1994 = vmul.f32 1.0, %v1993
      %v1995 = vmul.f32 %v1987, %v1758
      %v1996 = vmul.f32 %v1981, %v1988
      %v1997 = vadd.f32 %v1995, %v1996
      %v1998 = vtanh.pop %v1997
      %v1999 = vmul.f32 %v1994, %v1998
      %s2000 = sadd.s32 %s961, 4
      %p2001 = scmp.lt.s32.totalorder %s2000, 8
      %s2002 = scalar_select %p2001, 1, 0
      %s2003 = scvt.s32.f32 %s2002
      %v2004 = vstv %s2003
      %v2005 = vmul.f32 %v2004, %v1997
      %s2006 = ssub.f32 1.0, %s2003
      %v2007 = vstv %s2006
      %v2008 = vmul.f32 %v2007, %v1758
      %v2009 = vadd.f32 %v2005, %v2008
      %v2010 = vmul.f32 %v2004, %v1999
      %v2011 = vmul.f32 %v2007, %v1757
      %v2012 = vadd.f32 %v2010, %v2011
      %2013 = vst [vmem:[#allocation3] sm:$0xff] %v2009
      %2014 = vst [vmem:[#allocation2] sm:$0xff] %v2012
      %s2015 = scalar_lea.vmem [#allocation4], 32
      %2016 = vst [vmem:[%s2015] sm:$0xff] %v2012
      %v2017 = vld [vmem:[#allocation4] sm:$0xff]
      %v2018 = vld [vmem:[#allocation4 + $0x8] sm:$0xff]
      %v2019 = vld [vmem:[#allocation4 + $0x10] sm:$0xff]
      %v2020 = vld [vmem:[#allocation4 + $0x18] sm:$0xff]
      %v2021 = vld [vmem:[#allocation4 + $0x20] sm:$0xff]
      %v2022 = vpack.c.bf16 %v2018, %v2017
      %v2023 = vpack.c.bf16 %v2020, %v2019
      %v2024 = vpack.c.bf16 %v2021, %v2021
      %v2025 = vld [vmem:[%s4] sm:$0xff]
      %v2026 = vld [vmem:[%s4 + $0x8] sm:$0xff]
      %v2027 = vld [vmem:[%s4 + $0x10] sm:$0xff]
      %v2028 = vld [vmem:[%s4 + $0x18] sm:$0xff]
      %v2029 = vld [vmem:[%s4 + $0x20] sm:$0xff]
      %v2030 = vld [vmem:[%s4 + $0x28] sm:$0xff]
      %v2031 = vld [vmem:[%s4 + $0x30] sm:$0xff]
      %v2032 = vld [vmem:[%s4 + $0x38] sm:$0xff]
      %v2033 = vld [vmem:[%s4 + $0x40] sm:$0xff]
      %v2034 = vld [vmem:[%s4 + $0x48] sm:$0xff]
      %v2035 = vld [vmem:[%s4 + $0x50] sm:$0xff]
      %v2036 = vld [vmem:[%s4 + $0x58] sm:$0xff]
      %v2037 = vld [vmem:[%s4 + $0x60] sm:$0xff]
      %v2038 = vld [vmem:[%s4 + $0x68] sm:$0xff]
      %v2039 = vld [vmem:[%s4 + $0x70] sm:$0xff]
      %v2040 = vld [vmem:[%s4 + $0x78] sm:$0xff]
      %v2041 = vld [vmem:[%s4 + $0x80] sm:$0xff]
      %v2042 = vld [vmem:[%s4 + $0x88] sm:$0xff]
      %v2043 = vld [vmem:[%s4 + $0x90] sm:$0xff]
      %v2044 = vld [vmem:[%s4 + $0x98] sm:$0xff]
      %v2045 = vld [vmem:[%s4 + $0xa0] sm:$0xff]
      %v2046 = vld [vmem:[%s4 + $0xa8] sm:$0xff]
      %v2047 = vld [vmem:[%s4 + $0xb0] sm:$0xff]
      %v2048 = vld [vmem:[%s4 + $0xb8] sm:$0xff]
      %v2049 = vld [vmem:[%s4 + $0xc0] sm:$0xff]
      %v2050 = vld [vmem:[%s4 + $0xc8] sm:$0xff]
      %v2051 = vld [vmem:[%s4 + $0xd0] sm:$0xff]
      %v2052 = vld [vmem:[%s4 + $0xd8] sm:$0xff]
      %v2053 = vld [vmem:[%s4 + $0xe0] sm:$0xff]
      %v2054 = vld [vmem:[%s4 + $0xe8] sm:$0xff]
      %v2055 = vld [vmem:[%s4 + $0xf0] sm:$0xff]
      %v2056 = vld [vmem:[%s4 + $0xf8] sm:$0xff]
      %v2057 = vld [vmem:[%s6] sm:$0xf]
      %v2059 = vlaneseq
      %v2060 = vshrl.u32 %v2059, 7
      %v2061 = vsub.s32 0, %v2060
      %v2062 = vrot.slane %v2057, %v2061
      %v2063 = vlaneseq
      %v2064 = vshrl.u32 %v2063, 7
      %v2065 = vsub.s32 1, %v2064
      %v2066 = vrot.slane %v2057, %v2065
      %v2067 = vlaneseq
      %v2068 = vshrl.u32 %v2067, 7
      %v2069 = vsub.s32 2, %v2068
      %v2070 = vrot.slane %v2057, %v2069
      %v2071 = vlaneseq
      %v2072 = vshrl.u32 %v2071, 7
      %v2073 = vsub.s32 3, %v2072
      %v2074 = vrot.slane %v2057, %v2073
      %v2111 = vunpack.c.l.b16 %v2025
      %v2112 = vunpack.c.h.b16 %v2025
      %v2113 = vunpack.c.l.b16 %v2026
      %v2114 = vunpack.c.h.b16 %v2026
      %v2115 = vunpack.c.l.b16 %v2027
      %v2116 = vunpack.c.h.b16 %v2027
      %v2117 = vunpack.c.l.b16 %v2028
      %v2118 = vunpack.c.h.b16 %v2028
      %v2119 = vunpack.c.l.b16 %v2029
      %v2120 = vunpack.c.h.b16 %v2029
      %v2121 = vunpack.c.l.b16 %v2030
      %v2122 = vunpack.c.h.b16 %v2030
      %v2123 = vunpack.c.l.b16 %v2031
      %v2124 = vunpack.c.h.b16 %v2031
      %v2125 = vunpack.c.l.b16 %v2032
      %v2126 = vunpack.c.h.b16 %v2032
      %v2127 = vunpack.c.l.b16 %v2033
      %v2128 = vunpack.c.h.b16 %v2033
      %v2129 = vunpack.c.l.b16 %v2034
      %v2130 = vunpack.c.h.b16 %v2034
      %v2131 = vunpack.c.l.b16 %v2035
      %v2132 = vunpack.c.h.b16 %v2035
      %v2133 = vunpack.c.l.b16 %v2036
      %v2134 = vunpack.c.h.b16 %v2036
      %v2135 = vunpack.c.l.b16 %v2037
      %v2136 = vunpack.c.h.b16 %v2037
      %v2137 = vunpack.c.l.b16 %v2038
      %v2138 = vunpack.c.h.b16 %v2038
      %v2139 = vunpack.c.l.b16 %v2039
      %v2140 = vunpack.c.h.b16 %v2039
      %v2141 = vunpack.c.l.b16 %v2040
      %v2142 = vunpack.c.h.b16 %v2040
      %v2143 = vunpack.c.l.b16 %v2041
      %v2144 = vunpack.c.h.b16 %v2041
      %v2145 = vunpack.c.l.b16 %v2042
      %v2146 = vunpack.c.h.b16 %v2042
      %v2147 = vunpack.c.l.b16 %v2043
      %v2148 = vunpack.c.h.b16 %v2043
      %v2149 = vunpack.c.l.b16 %v2044
      %v2150 = vunpack.c.h.b16 %v2044
      %v2151 = vunpack.c.l.b16 %v2045
      %v2152 = vunpack.c.h.b16 %v2045
      %v2153 = vunpack.c.l.b16 %v2046
      %v2154 = vunpack.c.h.b16 %v2046
      %v2155 = vunpack.c.l.b16 %v2047
      %v2156 = vunpack.c.h.b16 %v2047
      %v2157 = vunpack.c.l.b16 %v2048
      %v2158 = vunpack.c.h.b16 %v2048
      %v2159 = vunpack.c.l.b16 %v2049
      %v2160 = vunpack.c.h.b16 %v2049
      %v2161 = vunpack.c.l.b16 %v2050
      %v2162 = vunpack.c.h.b16 %v2050
      %v2163 = vunpack.c.l.b16 %v2051
      %v2164 = vunpack.c.h.b16 %v2051
      %v2165 = vunpack.c.l.b16 %v2052
      %v2166 = vunpack.c.h.b16 %v2052
      %v2167 = vunpack.c.l.b16 %v2053
      %v2168 = vunpack.c.h.b16 %v2053
      %v2169 = vunpack.c.l.b16 %v2054
      %v2170 = vunpack.c.h.b16 %v2054
      %v2171 = vunpack.c.l.b16 %v2055
      %v2172 = vunpack.c.h.b16 %v2055
      %v2173 = vunpack.c.l.b16 %v2056
      %v2174 = vunpack.c.h.b16 %v2056
      %v2175 = vpack.c.b16 %v2115, %v2111
      %v2176 = vpack.c.b16 %v2116, %v2112
      %v2177 = vpack.c.b16 %v2117, %v2113
      %v2178 = vpack.c.b16 %v2118, %v2114
      %v2179 = vpack.c.b16 %v2123, %v2119
      %v2180 = vpack.c.b16 %v2124, %v2120
      %v2181 = vpack.c.b16 %v2125, %v2121
      %v2182 = vpack.c.b16 %v2126, %v2122
      %v2183 = vpack.c.b16 %v2131, %v2127
      %v2184 = vpack.c.b16 %v2132, %v2128
      %v2185 = vpack.c.b16 %v2133, %v2129
      %v2186 = vpack.c.b16 %v2134, %v2130
      %v2187 = vpack.c.b16 %v2139, %v2135
      %v2188 = vpack.c.b16 %v2140, %v2136
      %v2189 = vpack.c.b16 %v2141, %v2137
      %v2190 = vpack.c.b16 %v2142, %v2138
      %v2191 = vpack.c.b16 %v2147, %v2143
      %v2192 = vpack.c.b16 %v2148, %v2144
      %v2193 = vpack.c.b16 %v2149, %v2145
      %v2194 = vpack.c.b16 %v2150, %v2146
      %v2195 = vpack.c.b16 %v2155, %v2151
      %v2196 = vpack.c.b16 %v2156, %v2152
      %v2197 = vpack.c.b16 %v2157, %v2153
      %v2198 = vpack.c.b16 %v2158, %v2154
      %v2199 = vpack.c.b16 %v2163, %v2159
      %v2200 = vpack.c.b16 %v2164, %v2160
      %v2201 = vpack.c.b16 %v2165, %v2161
      %v2202 = vpack.c.b16 %v2166, %v2162
      %v2203 = vpack.c.b16 %v2171, %v2167
      %v2204 = vpack.c.b16 %v2172, %v2168
      %v2205 = vpack.c.b16 %v2173, %v2169
      %v2206 = vpack.c.b16 %v2174, %v2170
      %2239 = vmatprep.subr.bf16.mxu0 %v2176
      %2240 = vmatpush1.bf16.msra.mxu0 %v2175
      %2241 = vmatprep.subr.bf16.mxu0 %v2180
      %2242 = vmatpush1.bf16.msra.mxu0 %v2179
      %2243 = vmatprep.subr.bf16.mxu0 %v2184
      %2244 = vmatpush1.bf16.msra.mxu0 %v2183
      %2245 = vmatprep.subr.bf16.mxu0 %v2188
      %2246 = vmatpush1.bf16.msra.mxu0 %v2187
      %2247 = vmatprep.subr.bf16.mxu0 %v2192
      %2248 = vmatpush1.bf16.msra.mxu0 %v2191
      %2249 = vmatprep.subr.bf16.mxu0 %v2196
      %2250 = vmatpush1.bf16.msra.mxu0 %v2195
      %2251 = vmatprep.subr.bf16.mxu0 %v2200
      %2252 = vmatpush1.bf16.msra.mxu0 %v2199
      %2253 = vmatprep.subr.bf16.mxu0 %v2204
      %2254 = vmatpush1.bf16.msra.mxu0 %v2203
      %2255 = vmatprep.subr.bf16.mxu0 0
      %2256 = vmatpush1.bf16.msra.mxu0 0
      %2257 = vmatprep.subr.bf16.mxu0 0
      %2258 = vmatpush1.bf16.msra.mxu0 0
      %2259 = vmatprep.subr.bf16.mxu0 0
      %2260 = vmatpush1.bf16.msra.mxu0 0
      %2261 = vmatprep.subr.bf16.mxu0 0
      %2262 = vmatpush1.bf16.msra.mxu0 0
      %2263 = vmatprep.subr.bf16.mxu0 0
      %2264 = vmatpush1.bf16.msra.mxu0 0
      %2265 = vmatprep.subr.bf16.mxu0 0
      %2266 = vmatpush1.bf16.msra.mxu0 0
      %2267 = vmatprep.subr.bf16.mxu0 0
      %2268 = vmatpush1.bf16.msra.mxu0 0
      %2269 = vmatprep.subr.bf16.mxu0 0
      %2270 = vmatpush1.bf16.msra.mxu0 0
      %2271 = vmatprep.mubr.bf16.mxu0 0
      %2272 = vmatmul.mubr.bf16.gmra.mrb[0].mxu0 %v2022
      %v2273 = vpop.f32.mrb[0].mxu0
      %v2274 = vadd.f32 %v2062, %v2273
      %v2275 = vpop.f32.mrb[0].mxu0
      %v2276 = vadd.f32 %v2066, %v2275
      %v2277 = vpop.f32.mrb[0].mxu0
      %v2278 = vadd.f32 %v2062, %v2277
      %v2279 = vpop.f32.mrb[0].mxu0
      %v2280 = vadd.f32 %v2066, %v2279
      %2281 = vmatprep.mubr.bf16.mxu0 0
      %2282 = vmatmul.mubr.bf16.gmra.mrb[0].mxu0 %v2023
      %v2283 = vpop.f32.mrb[0].mxu0
      %v2284 = vadd.f32 %v2062, %v2283
      %v2285 = vpop.f32.mrb[0].mxu0
      %v2286 = vadd.f32 %v2066, %v2285
      %v2287 = vpop.f32.mrb[0].mxu0
      %v2288 = vadd.f32 %v2062, %v2287
      %v2289 = vpop.f32.mrb[0].mxu0
      %v2290 = vadd.f32 %v2066, %v2289
      %2291 = vmatprep.mubr.bf16.mxu0 0
      %2292 = vmatmul.mubr.bf16.gmra.mrb[0].mxu0 %v2024
      %v2293 = vpop.f32.mrb[0].mxu0
      %v2294 = vadd.f32 %v2062, %v2293
      %v2295 = vpop.f32.mrb[0].mxu0
      %v2296 = vadd.f32 %v2066, %v2295
      %v2297 = vpop.f32.mrb[0].mxu0
      %v2298 = vpop.f32.mrb[0].mxu0
      %2299 = vdwg.mxu0
      %2300 = vmatprep.subr.bf16.mxu0 %v2178
      %2301 = vmatpush1.bf16.msra.mxu0 %v2177
      %2302 = vmatprep.subr.bf16.mxu0 %v2182
      %2303 = vmatpush1.bf16.msra.mxu0 %v2181
      %2304 = vmatprep.subr.bf16.mxu0 %v2186
      %2305 = vmatpush1.bf16.msra.mxu0 %v2185
      %2306 = vmatprep.subr.bf16.mxu0 %v2190
      %2307 = vmatpush1.bf16.msra.mxu0 %v2189
      %2308 = vmatprep.subr.bf16.mxu0 %v2194
      %2309 = vmatpush1.bf16.msra.mxu0 %v2193
      %2310 = vmatprep.subr.bf16.mxu0 %v2198
      %2311 = vmatpush1.bf16.msra.mxu0 %v2197
      %2312 = vmatprep.subr.bf16.mxu0 %v2202
      %2313 = vmatpush1.bf16.msra.mxu0 %v2201
      %2314 = vmatprep.subr.bf16.mxu0 %v2206
      %2315 = vmatpush1.bf16.msra.mxu0 %v2205
      %2316 = vmatprep.subr.bf16.mxu0 0
      %2317 = vmatpush1.bf16.msra.mxu0 0
      %2318 = vmatprep.subr.bf16.mxu0 0
      %2319 = vmatpush1.bf16.msra.mxu0 0
      %2320 = vmatprep.subr.bf16.mxu0 0
      %2321 = vmatpush1.bf16.msra.mxu0 0
      %2322 = vmatprep.subr.bf16.mxu0 0
      %2323 = vmatpush1.bf16.msra.mxu0 0
      %2324 = vmatprep.subr.bf16.mxu0 0
      %2325 = vmatpush1.bf16.msra.mxu0 0
      %2326 = vmatprep.subr.bf16.mxu0 0
      %2327 = vmatpush1.bf16.msra.mxu0 0
      %2328 = vmatprep.subr.bf16.mxu0 0
      %2329 = vmatpush1.bf16.msra.mxu0 0
      %2330 = vmatprep.subr.bf16.mxu0 0
      %2331 = vmatpush1.bf16.msra.mxu0 0
      %2332 = vmatprep.mubr.bf16.mxu0 0
      %2333 = vmatmul.mubr.bf16.gmra.mrb[0].mxu0 %v2022
      %v2334 = vpop.f32.mrb[0].mxu0
      %v2335 = vadd.f32 %v2070, %v2334
      %v2336 = vpop.f32.mrb[0].mxu0
      %v2337 = vadd.f32 %v2074, %v2336
      %v2338 = vpop.f32.mrb[0].mxu0
      %v2339 = vadd.f32 %v2070, %v2338
      %v2340 = vpop.f32.mrb[0].mxu0
      %v2341 = vadd.f32 %v2074, %v2340
      %2342 = vmatprep.mubr.bf16.mxu0 0
      %2343 = vmatmul.mubr.bf16.gmra.mrb[0].mxu0 %v2023
      %v2344 = vpop.f32.mrb[0].mxu0
      %v2345 = vadd.f32 %v2070, %v2344
      %v2346 = vpop.f32.mrb[0].mxu0
      %v2347 = vadd.f32 %v2074, %v2346
      %v2348 = vpop.f32.mrb[0].mxu0
      %v2349 = vadd.f32 %v2070, %v2348
      %v2350 = vpop.f32.mrb[0].mxu0
      %v2351 = vadd.f32 %v2074, %v2350
      %2352 = vmatprep.mubr.bf16.mxu0 0
      %2353 = vmatmul.mubr.bf16.gmra.mrb[0].mxu0 %v2024
      %v2354 = vpop.f32.mrb[0].mxu0
      %v2355 = vadd.f32 %v2070, %v2354
      %v2356 = vpop.f32.mrb[0].mxu0
      %v2357 = vadd.f32 %v2074, %v2356
      %v2358 = vpop.f32.mrb[0].mxu0
      %v2359 = vpop.f32.mrb[0].mxu0
      %2360 = vdwg.mxu0
      %2361 = vst [vmem:[#allocation5] sm:$0xff] %v2274
      %2362 = vst [vmem:[#allocation5 + $0x8] sm:$0xff] %v2276
      %2363 = vst [vmem:[#allocation5 + $0x10] sm:$0xff] %v2335
      %2364 = vst [vmem:[#allocation5 + $0x18] sm:$0xff] %v2337
      %2365 = vst [vmem:[#allocation5 + $0x20] sm:$0xff] %v2278
      %2366 = vst [vmem:[#allocation5 + $0x28] sm:$0xff] %v2280
      %2367 = vst [vmem:[#allocation5 + $0x30] sm:$0xff] %v2339
      %2368 = vst [vmem:[#allocation5 + $0x38] sm:$0xff] %v2341
      %2369 = vst [vmem:[#allocation5 + $0x40] sm:$0xff] %v2284
      %2370 = vst [vmem:[#allocation5 + $0x48] sm:$0xff] %v2286
      %2371 = vst [vmem:[#allocation5 + $0x50] sm:$0xff] %v2345
      %2372 = vst [vmem:[#allocation5 + $0x58] sm:$0xff] %v2347
      %2373 = vst [vmem:[#allocation5 + $0x60] sm:$0xff] %v2288
      %2374 = vst [vmem:[#allocation5 + $0x68] sm:$0xff] %v2290
      %2375 = vst [vmem:[#allocation5 + $0x70] sm:$0xff] %v2349
      %2376 = vst [vmem:[#allocation5 + $0x78] sm:$0xff] %v2351
      %2377 = vst [vmem:[#allocation5 + $0x80] sm:$0xff] %v2294
      %2378 = vst [vmem:[#allocation5 + $0x88] sm:$0xff] %v2296
      %2379 = vst [vmem:[#allocation5 + $0x90] sm:$0xff] %v2355
      %2380 = vst [vmem:[#allocation5 + $0x98] sm:$0xff] %v2357
      %s2381 = scalar_lea.vmem [#allocation2], 8
      %v2382 = vld [vmem:[%s2381] sm:$0xff]
      %s2383 = scalar_lea.vmem [#allocation3], 8
      %v2384 = vld [vmem:[%s2383] sm:$0xff]
      %v2385 = vld [vmem:[%s722] sm:$0xff]
      %v2386 = vld [vmem:[%s722 + $0x8] sm:$0xff]
      %v2387 = vld [vmem:[%s722 + $0x10] sm:$0xff]
      %v2388 = vld [vmem:[%s722 + $0x18] sm:$0xff]
      %v2389 = vld [vmem:[%s5] sm:$0xff]
      %v2390 = vld [vmem:[%s5 + $0x8] sm:$0xff]
      %v2391 = vld [vmem:[%s5 + $0x10] sm:$0xff]
      %v2392 = vld [vmem:[%s5 + $0x18] sm:$0xff]
      %v2393 = vld [vmem:[%s5 + $0x20] sm:$0xff]
      %v2394 = vld [vmem:[%s5 + $0x28] sm:$0xff]
      %v2395 = vld [vmem:[%s5 + $0x30] sm:$0xff]
      %v2396 = vld [vmem:[%s5 + $0x38] sm:$0xff]
      %v2397 = vld [vmem:[%s5 + $0x40] sm:$0xff]
      %v2398 = vld [vmem:[%s5 + $0x48] sm:$0xff]
      %v2399 = vld [vmem:[%s5 + $0x50] sm:$0xff]
      %v2400 = vld [vmem:[%s5 + $0x58] sm:$0xff]
      %v2401 = vld [vmem:[%s5 + $0x60] sm:$0xff]
      %v2402 = vld [vmem:[%s5 + $0x68] sm:$0xff]
      %v2403 = vld [vmem:[%s5 + $0x70] sm:$0xff]
      %v2404 = vld [vmem:[%s5 + $0x78] sm:$0xff]
      %v2405 = vld [vmem:[%s5 + $0x80] sm:$0xff]
      %v2406 = vld [vmem:[%s5 + $0x88] sm:$0xff]
      %v2407 = vld [vmem:[%s5 + $0x90] sm:$0xff]
      %v2408 = vld [vmem:[%s5 + $0x98] sm:$0xff]
      %v2409 = vld [vmem:[%s5 + $0xa0] sm:$0xff]
      %v2410 = vld [vmem:[%s5 + $0xa8] sm:$0xff]
      %v2411 = vld [vmem:[%s5 + $0xb0] sm:$0xff]
      %v2412 = vld [vmem:[%s5 + $0xb8] sm:$0xff]
      %v2413 = vld [vmem:[%s5 + $0xc0] sm:$0xff]
      %v2414 = vld [vmem:[%s5 + $0xc8] sm:$0xff]
      %v2415 = vld [vmem:[%s5 + $0xd0] sm:$0xff]
      %v2416 = vld [vmem:[%s5 + $0xd8] sm:$0xff]
      %v2417 = vld [vmem:[%s5 + $0xe0] sm:$0xff]
      %v2418 = vld [vmem:[%s5 + $0xe8] sm:$0xff]
      %v2419 = vld [vmem:[%s5 + $0xf0] sm:$0xff]
      %v2420 = vld [vmem:[%s5 + $0xf8] sm:$0xff]
      %v2421 = vld [vmem:[%s5 + $0x100] sm:$0xff]
      %v2422 = vld [vmem:[%s5 + $0x108] sm:$0xff]
      %v2423 = vld [vmem:[%s5 + $0x110] sm:$0xff]
      %v2424 = vld [vmem:[%s5 + $0x118] sm:$0xff]
      %v2425 = vld [vmem:[%s5 + $0x120] sm:$0xff]
      %v2426 = vld [vmem:[%s5 + $0x128] sm:$0xff]
      %v2427 = vld [vmem:[%s5 + $0x130] sm:$0xff]
      %v2428 = vld [vmem:[%s5 + $0x138] sm:$0xff]
      %v2429 = vld [vmem:[%s5 + $0x140] sm:$0xff]
      %v2430 = vld [vmem:[%s5 + $0x148] sm:$0xff]
      %v2431 = vld [vmem:[%s5 + $0x150] sm:$0xff]
      %v2432 = vld [vmem:[%s5 + $0x158] sm:$0xff]
      %v2433 = vld [vmem:[%s5 + $0x160] sm:$0xff]
      %v2434 = vld [vmem:[%s5 + $0x168] sm:$0xff]
      %v2435 = vld [vmem:[%s5 + $0x170] sm:$0xff]
      %v2436 = vld [vmem:[%s5 + $0x178] sm:$0xff]
      %v2437 = vld [vmem:[%s5 + $0x180] sm:$0xff]
      %v2438 = vld [vmem:[%s5 + $0x188] sm:$0xff]
      %v2439 = vld [vmem:[%s5 + $0x190] sm:$0xff]
      %v2440 = vld [vmem:[%s5 + $0x198] sm:$0xff]
      %v2441 = vld [vmem:[%s5 + $0x1a0] sm:$0xff]
      %v2442 = vld [vmem:[%s5 + $0x1a8] sm:$0xff]
      %v2443 = vld [vmem:[%s5 + $0x1b0] sm:$0xff]
      %v2444 = vld [vmem:[%s5 + $0x1b8] sm:$0xff]
      %v2445 = vld [vmem:[%s5 + $0x1c0] sm:$0xff]
      %v2446 = vld [vmem:[%s5 + $0x1c8] sm:$0xff]
      %v2447 = vld [vmem:[%s5 + $0x1d0] sm:$0xff]
      %v2448 = vld [vmem:[%s5 + $0x1d8] sm:$0xff]
      %v2449 = vld [vmem:[%s5 + $0x1e0] sm:$0xff]
      %v2450 = vld [vmem:[%s5 + $0x1e8] sm:$0xff]
      %v2451 = vld [vmem:[%s5 + $0x1f0] sm:$0xff]
      %v2452 = vld [vmem:[%s5 + $0x1f8] sm:$0xff]
      %2453 = vmatprep.subr.mxu0 %v2390
      %2454 = vmatpush1.msra.mxu0 %v2389
      %2455 = vmatprep.subr.mxu0 %v2394
      %2456 = vmatpush1.msra.mxu0 %v2393
      %2457 = vmatprep.subr.mxu0 %v2398
      %2458 = vmatpush1.msra.mxu0 %v2397
      %2459 = vmatprep.subr.mxu0 %v2402
      %2460 = vmatpush1.msra.mxu0 %v2401
      %2461 = vmatprep.subr.mxu0 %v2406
      %2462 = vmatpush1.msra.mxu0 %v2405
      %2463 = vmatprep.subr.mxu0 %v2410
      %2464 = vmatpush1.msra.mxu0 %v2409
      %2465 = vmatprep.subr.mxu0 %v2414
      %2466 = vmatpush1.msra.mxu0 %v2413
      %2467 = vmatprep.subr.mxu0 %v2418
      %2468 = vmatpush1.msra.mxu0 %v2417
      %2469 = vmatprep.subr.mxu0 %v2422
      %2470 = vmatpush1.msra.mxu0 %v2421
      %2471 = vmatprep.subr.mxu0 %v2426
      %2472 = vmatpush1.msra.mxu0 %v2425
      %2473 = vmatprep.subr.mxu0 %v2430
      %2474 = vmatpush1.msra.mxu0 %v2429
      %2475 = vmatprep.subr.mxu0 %v2434
      %2476 = vmatpush1.msra.mxu0 %v2433
      %2477 = vmatprep.subr.mxu0 %v2438
      %2478 = vmatpush1.msra.mxu0 %v2437
      %2479 = vmatprep.subr.mxu0 %v2442
      %2480 = vmatpush1.msra.mxu0 %v2441
      %2481 = vmatprep.subr.mxu0 %v2446
      %2482 = vmatpush1.msra.mxu0 %v2445
      %2483 = vmatprep.subr.mxu0 %v2450
      %2484 = vmatpush1.msra.mxu0 %v2449
      %2485 = vmatprep.subr.mxu0 0.0
      %2486 = vmatpush1.msra.mxu0 0.0
      %2487 = vmatprep.subr.mxu0 0.0
      %2488 = vmatpush1.msra.mxu0 0.0
      %2489 = vmatprep.subr.mxu0 0.0
      %2490 = vmatpush1.msra.mxu0 0.0
      %2491 = vmatprep.subr.mxu0 0.0
      %2492 = vmatpush1.msra.mxu0 0.0
      %2493 = vmatprep.subr.mxu0 0.0
      %2494 = vmatpush1.msra.mxu0 0.0
      %2495 = vmatprep.subr.mxu0 0.0
      %2496 = vmatpush1.msra.mxu0 0.0
      %2497 = vmatprep.subr.mxu0 0.0
      %2498 = vmatpush1.msra.mxu0 0.0
      %2499 = vmatprep.subr.mxu0 0.0
      %2500 = vmatpush1.msra.mxu0 0.0
      %2501 = vmatprep.subr.mxu0 0.0
      %2502 = vmatpush1.msra.mxu0 0.0
      %2503 = vmatprep.subr.mxu0 0.0
      %2504 = vmatpush1.msra.mxu0 0.0
      %2505 = vmatprep.subr.mxu0 0.0
      %2506 = vmatpush1.msra.mxu0 0.0
      %2507 = vmatprep.subr.mxu0 0.0
      %2508 = vmatpush1.msra.mxu0 0.0
      %2509 = vmatprep.subr.mxu0 0.0
      %2510 = vmatpush1.msra.mxu0 0.0
      %2511 = vmatprep.subr.mxu0 0.0
      %2512 = vmatpush1.msra.mxu0 0.0
      %2513 = vmatprep.subr.mxu0 0.0
      %2514 = vmatpush1.msra.mxu0 0.0
      %2515 = vmatprep.subr.mxu0 0.0
      %2516 = vmatpush1.msra.mxu0 0.0
      %2517 = vmatprep.mubr.f32.mxu0 0.0
      %2518 = vmatmul.mubr.f32.gmra.mrb[0].mxu0 %v2382
      %v2519 = vpop.f32.mrb[0].mxu0
      %v2520 = vadd.f32 0.0, %v2519
      %v2521 = vpop.f32.mrb[0].mxu0
      %v2522 = vadd.f32 0.0, %v2521
      %2523 = vdwg.mxu0
      %2524 = vmatprep.subr.mxu0 %v2392
      %2525 = vmatpush1.msra.mxu0 %v2391
      %2526 = vmatprep.subr.mxu0 %v2396
      %2527 = vmatpush1.msra.mxu0 %v2395
      %2528 = vmatprep.subr.mxu0 %v2400
      %2529 = vmatpush1.msra.mxu0 %v2399
      %2530 = vmatprep.subr.mxu0 %v2404
      %2531 = vmatpush1.msra.mxu0 %v2403
      %2532 = vmatprep.subr.mxu0 %v2408
      %2533 = vmatpush1.msra.mxu0 %v2407
      %2534 = vmatprep.subr.mxu0 %v2412
      %2535 = vmatpush1.msra.mxu0 %v2411
      %2536 = vmatprep.subr.mxu0 %v2416
      %2537 = vmatpush1.msra.mxu0 %v2415
      %2538 = vmatprep.subr.mxu0 %v2420
      %2539 = vmatpush1.msra.mxu0 %v2419
      %2540 = vmatprep.subr.mxu0 %v2424
      %2541 = vmatpush1.msra.mxu0 %v2423
      %2542 = vmatprep.subr.mxu0 %v2428
      %2543 = vmatpush1.msra.mxu0 %v2427
      %2544 = vmatprep.subr.mxu0 %v2432
      %2545 = vmatpush1.msra.mxu0 %v2431
      %2546 = vmatprep.subr.mxu0 %v2436
      %2547 = vmatpush1.msra.mxu0 %v2435
      %2548 = vmatprep.subr.mxu0 %v2440
      %2549 = vmatpush1.msra.mxu0 %v2439
      %2550 = vmatprep.subr.mxu0 %v2444
      %2551 = vmatpush1.msra.mxu0 %v2443
      %2552 = vmatprep.subr.mxu0 %v2448
      %2553 = vmatpush1.msra.mxu0 %v2447
      %2554 = vmatprep.subr.mxu0 %v2452
      %2555 = vmatpush1.msra.mxu0 %v2451
      %2556 = vmatprep.subr.mxu0 0.0
      %2557 = vmatpush1.msra.mxu0 0.0
      %2558 = vmatprep.subr.mxu0 0.0
      %2559 = vmatpush1.msra.mxu0 0.0
      %2560 = vmatprep.subr.mxu0 0.0
      %2561 = vmatpush1.msra.mxu0 0.0
      %2562 = vmatprep.subr.mxu0 0.0
      %2563 = vmatpush1.msra.mxu0 0.0
      %2564 = vmatprep.subr.mxu0 0.0
      %2565 = vmatpush1.msra.mxu0 0.0
      %2566 = vmatprep.subr.mxu0 0.0
      %2567 = vmatpush1.msra.mxu0 0.0
      %2568 = vmatprep.subr.mxu0 0.0
      %2569 = vmatpush1.msra.mxu0 0.0
      %2570 = vmatprep.subr.mxu0 0.0
      %2571 = vmatpush1.msra.mxu0 0.0
      %2572 = vmatprep.subr.mxu0 0.0
      %2573 = vmatpush1.msra.mxu0 0.0
      %2574 = vmatprep.subr.mxu0 0.0
      %2575 = vmatpush1.msra.mxu0 0.0
      %2576 = vmatprep.subr.mxu0 0.0
      %2577 = vmatpush1.msra.mxu0 0.0
      %2578 = vmatprep.subr.mxu0 0.0
      %2579 = vmatpush1.msra.mxu0 0.0
      %2580 = vmatprep.subr.mxu0 0.0
      %2581 = vmatpush1.msra.mxu0 0.0
      %2582 = vmatprep.subr.mxu0 0.0
      %2583 = vmatpush1.msra.mxu0 0.0
      %2584 = vmatprep.subr.mxu0 0.0
      %2585 = vmatpush1.msra.mxu0 0.0
      %2586 = vmatprep.subr.mxu0 0.0
      %2587 = vmatpush1.msra.mxu0 0.0
      %2588 = vmatprep.mubr.f32.mxu0 0.0
      %2589 = vmatmul.mubr.f32.gmra.mrb[0].mxu0 %v2382
      %v2590 = vpop.f32.mrb[0].mxu0
      %v2591 = vadd.f32 0.0, %v2590
      %v2592 = vpop.f32.mrb[0].mxu0
      %v2593 = vadd.f32 0.0, %v2592
      %2594 = vdwg.mxu0
      %v2595 = vadd.f32 %v2385, %v2520
      %v2596 = vadd.f32 %v2386, %v2522
      %v2597 = vadd.f32 %v2387, %v2591
      %v2598 = vadd.f32 %v2388, %v2593
      %v2599 = vxor.u32 %v2595, 2147483648
      %v2600 = vmul.f32 %v2599, 1.442695
      %v2601 = vpow.pop %v2600
      %v2602 = vadd.f32 %v2601, 1.0
      %v2603 = vrcp.pop %v2602
      %v2604 = vmul.f32 1.0, %v2603
      %v2605 = vxor.u32 %v2596, 2147483648
      %v2606 = vmul.f32 %v2605, 1.442695
      %v2607 = vpow.pop %v2606
      %v2608 = vadd.f32 %v2607, 1.0
      %v2609 = vrcp.pop %v2608
      %v2610 = vmul.f32 1.0, %v2609
      %v2611 = vtanh.pop %v2597
      %v2612 = vxor.u32 %v2598, 2147483648
      %v2613 = vmul.f32 %v2612, 1.442695
      %v2614 = vpow.pop %v2613
      %v2615 = vadd.f32 %v2614, 1.0
      %v2616 = vrcp.pop %v2615
      %v2617 = vmul.f32 1.0, %v2616
      %v2618 = vmul.f32 %v2610, %v2384
      %v2619 = vmul.f32 %v2604, %v2611
      %v2620 = vadd.f32 %v2618, %v2619
      %v2621 = vtanh.pop %v2620
      %v2622 = vmul.f32 %v2617, %v2621
      %v2623 = vmul.f32 %v965, %v2620
      %v2624 = vmul.f32 %v968, %v2384
      %v2625 = vadd.f32 %v2623, %v2624
      %v2626 = vmul.f32 %v965, %v2622
      %v2627 = vmul.f32 %v968, %v2382
      %v2628 = vadd.f32 %v2626, %v2627
      %2629 = vst [vmem:[%s2383] sm:$0xff] %v2625
      %2630 = vst [vmem:[%s2381] sm:$0xff] %v2628
      %v2631 = vld [vmem:[%s2381] sm:$0xff]
      %v2632 = vld [vmem:[%s2383] sm:$0xff]
      %v2633 = vld [vmem:[%s981] sm:$0xff]
      %v2634 = vld [vmem:[%s981 + $0x8] sm:$0xff]
      %v2635 = vld [vmem:[%s981 + $0x10] sm:$0xff]
      %v2636 = vld [vmem:[%s981 + $0x18] sm:$0xff]
      %v2637 = vld [vmem:[%s5] sm:$0xff]
      %v2638 = vld [vmem:[%s5 + $0x8] sm:$0xff]
      %v2639 = vld [vmem:[%s5 + $0x10] sm:$0xff]
      %v2640 = vld [vmem:[%s5 + $0x18] sm:$0xff]
      %v2641 = vld [vmem:[%s5 + $0x20] sm:$0xff]
      %v2642 = vld [vmem:[%s5 + $0x28] sm:$0xff]
      %v2643 = vld [vmem:[%s5 + $0x30] sm:$0xff]
      %v2644 = vld [vmem:[%s5 + $0x38] sm:$0xff]
      %v2645 = vld [vmem:[%s5 + $0x40] sm:$0xff]
      %v2646 = vld [vmem:[%s5 + $0x48] sm:$0xff]
      %v2647 = vld [vmem:[%s5 + $0x50] sm:$0xff]
      %v2648 = vld [vmem:[%s5 + $0x58] sm:$0xff]
      %v2649 = vld [vmem:[%s5 + $0x60] sm:$0xff]
      %v2650 = vld [vmem:[%s5 + $0x68] sm:$0xff]
      %v2651 = vld [vmem:[%s5 + $0x70] sm:$0xff]
      %v2652 = vld [vmem:[%s5 + $0x78] sm:$0xff]
      %v2653 = vld [vmem:[%s5 + $0x80] sm:$0xff]
      %v2654 = vld [vmem:[%s5 + $0x88] sm:$0xff]
      %v2655 = vld [vmem:[%s5 + $0x90] sm:$0xff]
      %v2656 = vld [vmem:[%s5 + $0x98] sm:$0xff]
      %v2657 = vld [vmem:[%s5 + $0xa0] sm:$0xff]
      %v2658 = vld [vmem:[%s5 + $0xa8] sm:$0xff]
      %v2659 = vld [vmem:[%s5 + $0xb0] sm:$0xff]
      %v2660 = vld [vmem:[%s5 + $0xb8] sm:$0xff]
      %v2661 = vld [vmem:[%s5 + $0xc0] sm:$0xff]
      %v2662 = vld [vmem:[%s5 + $0xc8] sm:$0xff]
      %v2663 = vld [vmem:[%s5 + $0xd0] sm:$0xff]
      %v2664 = vld [vmem:[%s5 + $0xd8] sm:$0xff]
      %v2665 = vld [vmem:[%s5 + $0xe0] sm:$0xff]
      %v2666 = vld [vmem:[%s5 + $0xe8] sm:$0xff]
      %v2667 = vld [vmem:[%s5 + $0xf0] sm:$0xff]
      %v2668 = vld [vmem:[%s5 + $0xf8] sm:$0xff]
      %v2669 = vld [vmem:[%s5 + $0x100] sm:$0xff]
      %v2670 = vld [vmem:[%s5 + $0x108] sm:$0xff]
      %v2671 = vld [vmem:[%s5 + $0x110] sm:$0xff]
      %v2672 = vld [vmem:[%s5 + $0x118] sm:$0xff]
      %v2673 = vld [vmem:[%s5 + $0x120] sm:$0xff]
      %v2674 = vld [vmem:[%s5 + $0x128] sm:$0xff]
      %v2675 = vld [vmem:[%s5 + $0x130] sm:$0xff]
      %v2676 = vld [vmem:[%s5 + $0x138] sm:$0xff]
      %v2677 = vld [vmem:[%s5 + $0x140] sm:$0xff]
      %v2678 = vld [vmem:[%s5 + $0x148] sm:$0xff]
      %v2679 = vld [vmem:[%s5 + $0x150] sm:$0xff]
      %v2680 = vld [vmem:[%s5 + $0x158] sm:$0xff]
      %v2681 = vld [vmem:[%s5 + $0x160] sm:$0xff]
      %v2682 = vld [vmem:[%s5 + $0x168] sm:$0xff]
      %v2683 = vld [vmem:[%s5 + $0x170] sm:$0xff]
      %v2684 = vld [vmem:[%s5 + $0x178] sm:$0xff]
      %v2685 = vld [vmem:[%s5 + $0x180] sm:$0xff]
      %v2686 = vld [vmem:[%s5 + $0x188] sm:$0xff]
      %v2687 = vld [vmem:[%s5 + $0x190] sm:$0xff]
      %v2688 = vld [vmem:[%s5 + $0x198] sm:$0xff]
      %v2689 = vld [vmem:[%s5 + $0x1a0] sm:$0xff]
      %v2690 = vld [vmem:[%s5 + $0x1a8] sm:$0xff]
      %v2691 = vld [vmem:[%s5 + $0x1b0] sm:$0xff]
      %v2692 = vld [vmem:[%s5 + $0x1b8] sm:$0xff]
      %v2693 = vld [vmem:[%s5 + $0x1c0] sm:$0xff]
      %v2694 = vld [vmem:[%s5 + $0x1c8] sm:$0xff]
      %v2695 = vld [vmem:[%s5 + $0x1d0] sm:$0xff]
      %v2696 = vld [vmem:[%s5 + $0x1d8] sm:$0xff]
      %v2697 = vld [vmem:[%s5 + $0x1e0] sm:$0xff]
      %v2698 = vld [vmem:[%s5 + $0x1e8] sm:$0xff]
      %v2699 = vld [vmem:[%s5 + $0x1f0] sm:$0xff]
      %v2700 = vld [vmem:[%s5 + $0x1f8] sm:$0xff]
      %2701 = vmatprep.subr.mxu0 %v2638
      %2702 = vmatpush1.msra.mxu0 %v2637
      %2703 = vmatprep.subr.mxu0 %v2642
      %2704 = vmatpush1.msra.mxu0 %v2641
      %2705 = vmatprep.subr.mxu0 %v2646
      %2706 = vmatpush1.msra.mxu0 %v2645
      %2707 = vmatprep.subr.mxu0 %v2650
      %2708 = vmatpush1.msra.mxu0 %v2649
      %2709 = vmatprep.subr.mxu0 %v2654
      %2710 = vmatpush1.msra.mxu0 %v2653
      %2711 = vmatprep.subr.mxu0 %v2658
      %2712 = vmatpush1.msra.mxu0 %v2657
      %2713 = vmatprep.subr.mxu0 %v2662
      %2714 = vmatpush1.msra.mxu0 %v2661
      %2715 = vmatprep.subr.mxu0 %v2666
      %2716 = vmatpush1.msra.mxu0 %v2665
      %2717 = vmatprep.subr.mxu0 %v2670
      %2718 = vmatpush1.msra.mxu0 %v2669
      %2719 = vmatprep.subr.mxu0 %v2674
      %2720 = vmatpush1.msra.mxu0 %v2673
      %2721 = vmatprep.subr.mxu0 %v2678
      %2722 = vmatpush1.msra.mxu0 %v2677
      %2723 = vmatprep.subr.mxu0 %v2682
      %2724 = vmatpush1.msra.mxu0 %v2681
      %2725 = vmatprep.subr.mxu0 %v2686
      %2726 = vmatpush1.msra.mxu0 %v2685
      %2727 = vmatprep.subr.mxu0 %v2690
      %2728 = vmatpush1.msra.mxu0 %v2689
      %2729 = vmatprep.subr.mxu0 %v2694
      %2730 = vmatpush1.msra.mxu0 %v2693
      %2731 = vmatprep.subr.mxu0 %v2698
      %2732 = vmatpush1.msra.mxu0 %v2697
      %2733 = vmatprep.subr.mxu0 0.0
      %2734 = vmatpush1.msra.mxu0 0.0
      %2735 = vmatprep.subr.mxu0 0.0
      %2736 = vmatpush1.msra.mxu0 0.0
      %2737 = vmatprep.subr.mxu0 0.0
      %2738 = vmatpush1.msra.mxu0 0.0
      %2739 = vmatprep.subr.mxu0 0.0
      %2740 = vmatpush1.msra.mxu0 0.0
      %2741 = vmatprep.subr.mxu0 0.0
      %2742 = vmatpush1.msra.mxu0 0.0
      %2743 = vmatprep.subr.mxu0 0.0
      %2744 = vmatpush1.msra.mxu0 0.0
      %2745 = vmatprep.subr.mxu0 0.0
      %2746 = vmatpush1.msra.mxu0 0.0
      %2747 = vmatprep.subr.mxu0 0.0
      %2748 = vmatpush1.msra.mxu0 0.0
      %2749 = vmatprep.subr.mxu0 0.0
      %2750 = vmatpush1.msra.mxu0 0.0
      %2751 = vmatprep.subr.mxu0 0.0
      %2752 = vmatpush1.msra.mxu0 0.0
      %2753 = vmatprep.subr.mxu0 0.0
      %2754 = vmatpush1.msra.mxu0 0.0
      %2755 = vmatprep.subr.mxu0 0.0
      %2756 = vmatpush1.msra.mxu0 0.0
      %2757 = vmatprep.subr.mxu0 0.0
      %2758 = vmatpush1.msra.mxu0 0.0
      %2759 = vmatprep.subr.mxu0 0.0
      %2760 = vmatpush1.msra.mxu0 0.0
      %2761 = vmatprep.subr.mxu0 0.0
      %2762 = vmatpush1.msra.mxu0 0.0
      %2763 = vmatprep.subr.mxu0 0.0
      %2764 = vmatpush1.msra.mxu0 0.0
      %2765 = vmatprep.mubr.f32.mxu0 0.0
      %2766 = vmatmul.mubr.f32.gmra.mrb[0].mxu0 %v2631
      %v2767 = vpop.f32.mrb[0].mxu0
      %v2768 = vadd.f32 0.0, %v2767
      %v2769 = vpop.f32.mrb[0].mxu0
      %v2770 = vadd.f32 0.0, %v2769
      %2771 = vdwg.mxu0
      %2772 = vmatprep.subr.mxu0 %v2640
      %2773 = vmatpush1.msra.mxu0 %v2639
      %2774 = vmatprep.subr.mxu0 %v2644
      %2775 = vmatpush1.msra.mxu0 %v2643
      %2776 = vmatprep.subr.mxu0 %v2648
      %2777 = vmatpush1.msra.mxu0 %v2647
      %2778 = vmatprep.subr.mxu0 %v2652
      %2779 = vmatpush1.msra.mxu0 %v2651
      %2780 = vmatprep.subr.mxu0 %v2656
      %2781 = vmatpush1.msra.mxu0 %v2655
      %2782 = vmatprep.subr.mxu0 %v2660
      %2783 = vmatpush1.msra.mxu0 %v2659
      %2784 = vmatprep.subr.mxu0 %v2664
      %2785 = vmatpush1.msra.mxu0 %v2663
      %2786 = vmatprep.subr.mxu0 %v2668
      %2787 = vmatpush1.msra.mxu0 %v2667
      %2788 = vmatprep.subr.mxu0 %v2672
      %2789 = vmatpush1.msra.mxu0 %v2671
      %2790 = vmatprep.subr.mxu0 %v2676
      %2791 = vmatpush1.msra.mxu0 %v2675
      %2792 = vmatprep.subr.mxu0 %v2680
      %2793 = vmatpush1.msra.mxu0 %v2679
      %2794 = vmatprep.subr.mxu0 %v2684
      %2795 = vmatpush1.msra.mxu0 %v2683
      %2796 = vmatprep.subr.mxu0 %v2688
      %2797 = vmatpush1.msra.mxu0 %v2687
      %2798 = vmatprep.subr.mxu0 %v2692
      %2799 = vmatpush1.msra.mxu0 %v2691
      %2800 = vmatprep.subr.mxu0 %v2696
      %2801 = vmatpush1.msra.mxu0 %v2695
      %2802 = vmatprep.subr.mxu0 %v2700
      %2803 = vmatpush1.msra.mxu0 %v2699
      %2804 = vmatprep.subr.mxu0 0.0
      %2805 = vmatpush1.msra.mxu0 0.0
      %2806 = vmatprep.subr.mxu0 0.0
      %2807 = vmatpush1.msra.mxu0 0.0
      %2808 = vmatprep.subr.mxu0 0.0
      %2809 = vmatpush1.msra.mxu0 0.0
      %2810 = vmatprep.subr.mxu0 0.0
      %2811 = vmatpush1.msra.mxu0 0.0
      %2812 = vmatprep.subr.mxu0 0.0
      %2813 = vmatpush1.msra.mxu0 0.0
      %2814 = vmatprep.subr.mxu0 0.0
      %2815 = vmatpush1.msra.mxu0 0.0
      %2816 = vmatprep.subr.mxu0 0.0
      %2817 = vmatpush1.msra.mxu0 0.0
      %2818 = vmatprep.subr.mxu0 0.0
      %2819 = vmatpush1.msra.mxu0 0.0
      %2820 = vmatprep.subr.mxu0 0.0
      %2821 = vmatpush1.msra.mxu0 0.0
      %2822 = vmatprep.subr.mxu0 0.0
      %2823 = vmatpush1.msra.mxu0 0.0
      %2824 = vmatprep.subr.mxu0 0.0
      %2825 = vmatpush1.msra.mxu0 0.0
      %2826 = vmatprep.subr.mxu0 0.0
      %2827 = vmatpush1.msra.mxu0 0.0
      %2828 = vmatprep.subr.mxu0 0.0
      %2829 = vmatpush1.msra.mxu0 0.0
      %2830 = vmatprep.subr.mxu0 0.0
      %2831 = vmatpush1.msra.mxu0 0.0
      %2832 = vmatprep.subr.mxu0 0.0
      %2833 = vmatpush1.msra.mxu0 0.0
      %2834 = vmatprep.subr.mxu0 0.0
      %2835 = vmatpush1.msra.mxu0 0.0
      %2836 = vmatprep.mubr.f32.mxu0 0.0
      %2837 = vmatmul.mubr.f32.gmra.mrb[0].mxu0 %v2631
      %v2838 = vpop.f32.mrb[0].mxu0
      %v2839 = vadd.f32 0.0, %v2838
      %v2840 = vpop.f32.mrb[0].mxu0
      %v2841 = vadd.f32 0.0, %v2840
      %2842 = vdwg.mxu0
      %v2843 = vadd.f32 %v2633, %v2768
      %v2844 = vadd.f32 %v2634, %v2770
      %v2845 = vadd.f32 %v2635, %v2839
      %v2846 = vadd.f32 %v2636, %v2841
      %v2847 = vxor.u32 %v2843, 2147483648
      %v2848 = vmul.f32 %v2847, 1.442695
      %v2849 = vpow.pop %v2848
      %v2850 = vadd.f32 %v2849, 1.0
      %v2851 = vrcp.pop %v2850
      %v2852 = vmul.f32 1.0, %v2851
      %v2853 = vxor.u32 %v2844, 2147483648
      %v2854 = vmul.f32 %v2853, 1.442695
      %v2855 = vpow.pop %v2854
      %v2856 = vadd.f32 %v2855, 1.0
      %v2857 = vrcp.pop %v2856
      %v2858 = vmul.f32 1.0, %v2857
      %v2859 = vtanh.pop %v2845
      %v2860 = vxor.u32 %v2846, 2147483648
      %v2861 = vmul.f32 %v2860, 1.442695
      %v2862 = vpow.pop %v2861
      %v2863 = vadd.f32 %v2862, 1.0
      %v2864 = vrcp.pop %v2863
      %v2865 = vmul.f32 1.0, %v2864
      %v2866 = vmul.f32 %v2858, %v2632
      %v2867 = vmul.f32 %v2852, %v2859
      %v2868 = vadd.f32 %v2866, %v2867
      %v2869 = vtanh.pop %v2868
      %v2870 = vmul.f32 %v2865, %v2869
      %v2871 = vmul.f32 %v1224, %v2868
      %v2872 = vmul.f32 %v1227, %v2632
      %v2873 = vadd.f32 %v2871, %v2872
      %v2874 = vmul.f32 %v1224, %v2870
      %v2875 = vmul.f32 %v1227, %v2631
      %v2876 = vadd.f32 %v2874, %v2875
      %2877 = vst [vmem:[%s2383] sm:$0xff] %v2873
      %2878 = vst [vmem:[%s2381] sm:$0xff] %v2876
      %v2879 = vld [vmem:[%s2381] sm:$0xff]
      %v2880 = vld [vmem:[%s2383] sm:$0xff]
      %v2881 = vld [vmem:[%s1241] sm:$0xff]
      %v2882 = vld [vmem:[%s1241 + $0x8] sm:$0xff]
      %v2883 = vld [vmem:[%s1241 + $0x10] sm:$0xff]
      %v2884 = vld [vmem:[%s1241 + $0x18] sm:$0xff]
      %v2885 = vld [vmem:[%s5] sm:$0xff]
      %v2886 = vld [vmem:[%s5 + $0x8] sm:$0xff]
      %v2887 = vld [vmem:[%s5 + $0x10] sm:$0xff]
      %v2888 = vld [vmem:[%s5 + $0x18] sm:$0xff]
      %v2889 = vld [vmem:[%s5 + $0x20] sm:$0xff]
      %v2890 = vld [vmem:[%s5 + $0x28] sm:$0xff]
      %v2891 = vld [vmem:[%s5 + $0x30] sm:$0xff]
      %v2892 = vld [vmem:[%s5 + $0x38] sm:$0xff]
      %v2893 = vld [vmem:[%s5 + $0x40] sm:$0xff]
      %v2894 = vld [vmem:[%s5 + $0x48] sm:$0xff]
      %v2895 = vld [vmem:[%s5 + $0x50] sm:$0xff]
      %v2896 = vld [vmem:[%s5 + $0x58] sm:$0xff]
      %v2897 = vld [vmem:[%s5 + $0x60] sm:$0xff]
      %v2898 = vld [vmem:[%s5 + $0x68] sm:$0xff]
      %v2899 = vld [vmem:[%s5 + $0x70] sm:$0xff]
      %v2900 = vld [vmem:[%s5 + $0x78] sm:$0xff]
      %v2901 = vld [vmem:[%s5 + $0x80] sm:$0xff]
      %v2902 = vld [vmem:[%s5 + $0x88] sm:$0xff]
      %v2903 = vld [vmem:[%s5 + $0x90] sm:$0xff]
      %v2904 = vld [vmem:[%s5 + $0x98] sm:$0xff]
      %v2905 = vld [vmem:[%s5 + $0xa0] sm:$0xff]
      %v2906 = vld [vmem:[%s5 + $0xa8] sm:$0xff]
      %v2907 = vld [vmem:[%s5 + $0xb0] sm:$0xff]
      %v2908 = vld [vmem:[%s5 + $0xb8] sm:$0xff]
      %v2909 = vld [vmem:[%s5 + $0xc0] sm:$0xff]
      %v2910 = vld [vmem:[%s5 + $0xc8] sm:$0xff]
      %v2911 = vld [vmem:[%s5 + $0xd0] sm:$0xff]
      %v2912 = vld [vmem:[%s5 + $0xd8] sm:$0xff]
      %v2913 = vld [vmem:[%s5 + $0xe0] sm:$0xff]
      %v2914 = vld [vmem:[%s5 + $0xe8] sm:$0xff]
      %v2915 = vld [vmem:[%s5 + $0xf0] sm:$0xff]
      %v2916 = vld [vmem:[%s5 + $0xf8] sm:$0xff]
      %v2917 = vld [vmem:[%s5 + $0x100] sm:$0xff]
      %v2918 = vld [vmem:[%s5 + $0x108] sm:$0xff]
      %v2919 = vld [vmem:[%s5 + $0x110] sm:$0xff]
      %v2920 = vld [vmem:[%s5 + $0x118] sm:$0xff]
      %v2921 = vld [vmem:[%s5 + $0x120] sm:$0xff]
      %v2922 = vld [vmem:[%s5 + $0x128] sm:$0xff]
      %v2923 = vld [vmem:[%s5 + $0x130] sm:$0xff]
      %v2924 = vld [vmem:[%s5 + $0x138] sm:$0xff]
      %v2925 = vld [vmem:[%s5 + $0x140] sm:$0xff]
      %v2926 = vld [vmem:[%s5 + $0x148] sm:$0xff]
      %v2927 = vld [vmem:[%s5 + $0x150] sm:$0xff]
      %v2928 = vld [vmem:[%s5 + $0x158] sm:$0xff]
      %v2929 = vld [vmem:[%s5 + $0x160] sm:$0xff]
      %v2930 = vld [vmem:[%s5 + $0x168] sm:$0xff]
      %v2931 = vld [vmem:[%s5 + $0x170] sm:$0xff]
      %v2932 = vld [vmem:[%s5 + $0x178] sm:$0xff]
      %v2933 = vld [vmem:[%s5 + $0x180] sm:$0xff]
      %v2934 = vld [vmem:[%s5 + $0x188] sm:$0xff]
      %v2935 = vld [vmem:[%s5 + $0x190] sm:$0xff]
      %v2936 = vld [vmem:[%s5 + $0x198] sm:$0xff]
      %v2937 = vld [vmem:[%s5 + $0x1a0] sm:$0xff]
      %v2938 = vld [vmem:[%s5 + $0x1a8] sm:$0xff]
      %v2939 = vld [vmem:[%s5 + $0x1b0] sm:$0xff]
      %v2940 = vld [vmem:[%s5 + $0x1b8] sm:$0xff]
      %v2941 = vld [vmem:[%s5 + $0x1c0] sm:$0xff]
      %v2942 = vld [vmem:[%s5 + $0x1c8] sm:$0xff]
      %v2943 = vld [vmem:[%s5 + $0x1d0] sm:$0xff]
      %v2944 = vld [vmem:[%s5 + $0x1d8] sm:$0xff]
      %v2945 = vld [vmem:[%s5 + $0x1e0] sm:$0xff]
      %v2946 = vld [vmem:[%s5 + $0x1e8] sm:$0xff]
      %v2947 = vld [vmem:[%s5 + $0x1f0] sm:$0xff]
      %v2948 = vld [vmem:[%s5 + $0x1f8] sm:$0xff]
      %2949 = vmatprep.subr.mxu0 %v2886
      %2950 = vmatpush1.msra.mxu0 %v2885
      %2951 = vmatprep.subr.mxu0 %v2890
      %2952 = vmatpush1.msra.mxu0 %v2889
      %2953 = vmatprep.subr.mxu0 %v2894
      %2954 = vmatpush1.msra.mxu0 %v2893
      %2955 = vmatprep.subr.mxu0 %v2898
      %2956 = vmatpush1.msra.mxu0 %v2897
      %2957 = vmatprep.subr.mxu0 %v2902
      %2958 = vmatpush1.msra.mxu0 %v2901
      %2959 = vmatprep.subr.mxu0 %v2906
      %2960 = vmatpush1.msra.mxu0 %v2905
      %2961 = vmatprep.subr.mxu0 %v2910
      %2962 = vmatpush1.msra.mxu0 %v2909
      %2963 = vmatprep.subr.mxu0 %v2914
      %2964 = vmatpush1.msra.mxu0 %v2913
      %2965 = vmatprep.subr.mxu0 %v2918
      %2966 = vmatpush1.msra.mxu0 %v2917
      %2967 = vmatprep.subr.mxu0 %v2922
      %2968 = vmatpush1.msra.mxu0 %v2921
      %2969 = vmatprep.subr.mxu0 %v2926
      %2970 = vmatpush1.msra.mxu0 %v2925
      %2971 = vmatprep.subr.mxu0 %v2930
      %2972 = vmatpush1.msra.mxu0 %v2929
      %2973 = vmatprep.subr.mxu0 %v2934
      %2974 = vmatpush1.msra.mxu0 %v2933
      %2975 = vmatprep.subr.mxu0 %v2938
      %2976 = vmatpush1.msra.mxu0 %v2937
      %2977 = vmatprep.subr.mxu0 %v2942
      %2978 = vmatpush1.msra.mxu0 %v2941
      %2979 = vmatprep.subr.mxu0 %v2946
      %2980 = vmatpush1.msra.mxu0 %v2945
      %2981 = vmatprep.subr.mxu0 0.0
      %2982 = vmatpush1.msra.mxu0 0.0
      %2983 = vmatprep.subr.mxu0 0.0
      %2984 = vmatpush1.msra.mxu0 0.0
      %2985 = vmatprep.subr.mxu0 0.0
      %2986 = vmatpush1.msra.mxu0 0.0
      %2987 = vmatprep.subr.mxu0 0.0
      %2988 = vmatpush1.msra.mxu0 0.0
      %2989 = vmatprep.subr.mxu0 0.0
      %2990 = vmatpush1.msra.mxu0 0.0
      %2991 = vmatprep.subr.mxu0 0.0
      %2992 = vmatpush1.msra.mxu0 0.0
      %2993 = vmatprep.subr.mxu0 0.0
      %2994 = vmatpush1.msra.mxu0 0.0
      %2995 = vmatprep.subr.mxu0 0.0
      %2996 = vmatpush1.msra.mxu0 0.0
      %2997 = vmatprep.subr.mxu0 0.0
      %2998 = vmatpush1.msra.mxu0 0.0
      %2999 = vmatprep.subr.mxu0 0.0
      %3000 = vmatpush1.msra.mxu0 0.0
      %3001 = vmatprep.subr.mxu0 0.0
      %3002 = vmatpush1.msra.mxu0 0.0
      %3003 = vmatprep.subr.mxu0 0.0
      %3004 = vmatpush1.msra.mxu0 0.0
      %3005 = vmatprep.subr.mxu0 0.0
      %3006 = vmatpush1.msra.mxu0 0.0
      %3007 = vmatprep.subr.mxu0 0.0
      %3008 = vmatpush1.msra.mxu0 0.0
      %3009 = vmatprep.subr.mxu0 0.0
      %3010 = vmatpush1.msra.mxu0 0.0
      %3011 = vmatprep.subr.mxu0 0.0
      %3012 = vmatpush1.msra.mxu0 0.0
      %3013 = vmatprep.mubr.f32.mxu0 0.0
      %3014 = vmatmul.mubr.f32.gmra.mrb[0].mxu0 %v2879
      %v3015 = vpop.f32.mrb[0].mxu0
      %v3016 = vadd.f32 0.0, %v3015
      %v3017 = vpop.f32.mrb[0].mxu0
      %v3018 = vadd.f32 0.0, %v3017
      %3019 = vdwg.mxu0
      %3020 = vmatprep.subr.mxu0 %v2888
      %3021 = vmatpush1.msra.mxu0 %v2887
      %3022 = vmatprep.subr.mxu0 %v2892
      %3023 = vmatpush1.msra.mxu0 %v2891
      %3024 = vmatprep.subr.mxu0 %v2896
      %3025 = vmatpush1.msra.mxu0 %v2895
      %3026 = vmatprep.subr.mxu0 %v2900
      %3027 = vmatpush1.msra.mxu0 %v2899
      %3028 = vmatprep.subr.mxu0 %v2904
      %3029 = vmatpush1.msra.mxu0 %v2903
      %3030 = vmatprep.subr.mxu0 %v2908
      %3031 = vmatpush1.msra.mxu0 %v2907
      %3032 = vmatprep.subr.mxu0 %v2912
      %3033 = vmatpush1.msra.mxu0 %v2911
      %3034 = vmatprep.subr.mxu0 %v2916
      %3035 = vmatpush1.msra.mxu0 %v2915
      %3036 = vmatprep.subr.mxu0 %v2920
      %3037 = vmatpush1.msra.mxu0 %v2919
      %3038 = vmatprep.subr.mxu0 %v2924
      %3039 = vmatpush1.msra.mxu0 %v2923
      %3040 = vmatprep.subr.mxu0 %v2928
      %3041 = vmatpush1.msra.mxu0 %v2927
      %3042 = vmatprep.subr.mxu0 %v2932
      %3043 = vmatpush1.msra.mxu0 %v2931
      %3044 = vmatprep.subr.mxu0 %v2936
      %3045 = vmatpush1.msra.mxu0 %v2935
      %3046 = vmatprep.subr.mxu0 %v2940
      %3047 = vmatpush1.msra.mxu0 %v2939
      %3048 = vmatprep.subr.mxu0 %v2944
      %3049 = vmatpush1.msra.mxu0 %v2943
      %3050 = vmatprep.subr.mxu0 %v2948
      %3051 = vmatpush1.msra.mxu0 %v2947
      %3052 = vmatprep.subr.mxu0 0.0
      %3053 = vmatpush1.msra.mxu0 0.0
      %3054 = vmatprep.subr.mxu0 0.0
      %3055 = vmatpush1.msra.mxu0 0.0
      %3056 = vmatprep.subr.mxu0 0.0
      %3057 = vmatpush1.msra.mxu0 0.0
      %3058 = vmatprep.subr.mxu0 0.0
      %3059 = vmatpush1.msra.mxu0 0.0
      %3060 = vmatprep.subr.mxu0 0.0
      %3061 = vmatpush1.msra.mxu0 0.0
      %3062 = vmatprep.subr.mxu0 0.0
      %3063 = vmatpush1.msra.mxu0 0.0
      %3064 = vmatprep.subr.mxu0 0.0
      %3065 = vmatpush1.msra.mxu0 0.0
      %3066 = vmatprep.subr.mxu0 0.0
      %3067 = vmatpush1.msra.mxu0 0.0
      %3068 = vmatprep.subr.mxu0 0.0
      %3069 = vmatpush1.msra.mxu0 0.0
      %3070 = vmatprep.subr.mxu0 0.0
      %3071 = vmatpush1.msra.mxu0 0.0
      %3072 = vmatprep.subr.mxu0 0.0
      %3073 = vmatpush1.msra.mxu0 0.0
      %3074 = vmatprep.subr.mxu0 0.0
      %3075 = vmatpush1.msra.mxu0 0.0
      %3076 = vmatprep.subr.mxu0 0.0
      %3077 = vmatpush1.msra.mxu0 0.0
      %3078 = vmatprep.subr.mxu0 0.0
      %3079 = vmatpush1.msra.mxu0 0.0
      %3080 = vmatprep.subr.mxu0 0.0
      %3081 = vmatpush1.msra.mxu0 0.0
      %3082 = vmatprep.subr.mxu0 0.0
      %3083 = vmatpush1.msra.mxu0 0.0
      %3084 = vmatprep.mubr.f32.mxu0 0.0
      %3085 = vmatmul.mubr.f32.gmra.mrb[0].mxu0 %v2879
      %v3086 = vpop.f32.mrb[0].mxu0
      %v3087 = vadd.f32 0.0, %v3086
      %v3088 = vpop.f32.mrb[0].mxu0
      %v3089 = vadd.f32 0.0, %v3088
      %3090 = vdwg.mxu0
      %v3091 = vadd.f32 %v2881, %v3016
      %v3092 = vadd.f32 %v2882, %v3018
      %v3093 = vadd.f32 %v2883, %v3087
      %v3094 = vadd.f32 %v2884, %v3089
      %v3095 = vxor.u32 %v3091, 2147483648
      %v3096 = vmul.f32 %v3095, 1.442695
      %v3097 = vpow.pop %v3096
      %v3098 = vadd.f32 %v3097, 1.0
      %v3099 = vrcp.pop %v3098
      %v3100 = vmul.f32 1.0, %v3099
      %v3101 = vxor.u32 %v3092, 2147483648
      %v3102 = vmul.f32 %v3101, 1.442695
      %v3103 = vpow.pop %v3102
      %v3104 = vadd.f32 %v3103, 1.0
      %v3105 = vrcp.pop %v3104
      %v3106 = vmul.f32 1.0, %v3105
      %v3107 = vtanh.pop %v3093
      %v3108 = vxor.u32 %v3094, 2147483648
      %v3109 = vmul.f32 %v3108, 1.442695
      %v3110 = vpow.pop %v3109
      %v3111 = vadd.f32 %v3110, 1.0
      %v3112 = vrcp.pop %v3111
      %v3113 = vmul.f32 1.0, %v3112
      %v3114 = vmul.f32 %v3106, %v2880
      %v3115 = vmul.f32 %v3100, %v3107
      %v3116 = vadd.f32 %v3114, %v3115
      %v3117 = vtanh.pop %v3116
      %v3118 = vmul.f32 %v3113, %v3117
      %v3119 = vmul.f32 %v1484, %v3116
      %v3120 = vmul.f32 %v1487, %v2880
      %v3121 = vadd.f32 %v3119, %v3120
      %v3122 = vmul.f32 %v1484, %v3118
      %v3123 = vmul.f32 %v1487, %v2879
      %v3124 = vadd.f32 %v3122, %v3123
      %3125 = vst [vmem:[%s2383] sm:$0xff] %v3121
      %3126 = vst [vmem:[%s2381] sm:$0xff] %v3124
      %v3127 = vld [vmem:[%s2381] sm:$0xff]
      %v3128 = vld [vmem:[%s2383] sm:$0xff]
      %v3129 = vld [vmem:[%s1501] sm:$0xff]
      %v3130 = vld [vmem:[%s1501 + $0x8] sm:$0xff]
      %v3131 = vld [vmem:[%s1501 + $0x10] sm:$0xff]
      %v3132 = vld [vmem:[%s1501 + $0x18] sm:$0xff]
      %v3133 = vld [vmem:[%s5] sm:$0xff]
      %v3134 = vld [vmem:[%s5 + $0x8] sm:$0xff]
      %v3135 = vld [vmem:[%s5 + $0x10] sm:$0xff]
      %v3136 = vld [vmem:[%s5 + $0x18] sm:$0xff]
      %v3137 = vld [vmem:[%s5 + $0x20] sm:$0xff]
      %v3138 = vld [vmem:[%s5 + $0x28] sm:$0xff]
      %v3139 = vld [vmem:[%s5 + $0x30] sm:$0xff]
      %v3140 = vld [vmem:[%s5 + $0x38] sm:$0xff]
      %v3141 = vld [vmem:[%s5 + $0x40] sm:$0xff]
      %v3142 = vld [vmem:[%s5 + $0x48] sm:$0xff]
      %v3143 = vld [vmem:[%s5 + $0x50] sm:$0xff]
      %v3144 = vld [vmem:[%s5 + $0x58] sm:$0xff]
      %v3145 = vld [vmem:[%s5 + $0x60] sm:$0xff]
      %v3146 = vld [vmem:[%s5 + $0x68] sm:$0xff]
      %v3147 = vld [vmem:[%s5 + $0x70] sm:$0xff]
      %v3148 = vld [vmem:[%s5 + $0x78] sm:$0xff]
      %v3149 = vld [vmem:[%s5 + $0x80] sm:$0xff]
      %v3150 = vld [vmem:[%s5 + $0x88] sm:$0xff]
      %v3151 = vld [vmem:[%s5 + $0x90] sm:$0xff]
      %v3152 = vld [vmem:[%s5 + $0x98] sm:$0xff]
      %v3153 = vld [vmem:[%s5 + $0xa0] sm:$0xff]
      %v3154 = vld [vmem:[%s5 + $0xa8] sm:$0xff]
      %v3155 = vld [vmem:[%s5 + $0xb0] sm:$0xff]
      %v3156 = vld [vmem:[%s5 + $0xb8] sm:$0xff]
      %v3157 = vld [vmem:[%s5 + $0xc0] sm:$0xff]
      %v3158 = vld [vmem:[%s5 + $0xc8] sm:$0xff]
      %v3159 = vld [vmem:[%s5 + $0xd0] sm:$0xff]
      %v3160 = vld [vmem:[%s5 + $0xd8] sm:$0xff]
      %v3161 = vld [vmem:[%s5 + $0xe0] sm:$0xff]
      %v3162 = vld [vmem:[%s5 + $0xe8] sm:$0xff]
      %v3163 = vld [vmem:[%s5 + $0xf0] sm:$0xff]
      %v3164 = vld [vmem:[%s5 + $0xf8] sm:$0xff]
      %v3165 = vld [vmem:[%s5 + $0x100] sm:$0xff]
      %v3166 = vld [vmem:[%s5 + $0x108] sm:$0xff]
      %v3167 = vld [vmem:[%s5 + $0x110] sm:$0xff]
      %v3168 = vld [vmem:[%s5 + $0x118] sm:$0xff]
      %v3169 = vld [vmem:[%s5 + $0x120] sm:$0xff]
      %v3170 = vld [vmem:[%s5 + $0x128] sm:$0xff]
      %v3171 = vld [vmem:[%s5 + $0x130] sm:$0xff]
      %v3172 = vld [vmem:[%s5 + $0x138] sm:$0xff]
      %v3173 = vld [vmem:[%s5 + $0x140] sm:$0xff]
      %v3174 = vld [vmem:[%s5 + $0x148] sm:$0xff]
      %v3175 = vld [vmem:[%s5 + $0x150] sm:$0xff]
      %v3176 = vld [vmem:[%s5 + $0x158] sm:$0xff]
      %v3177 = vld [vmem:[%s5 + $0x160] sm:$0xff]
      %v3178 = vld [vmem:[%s5 + $0x168] sm:$0xff]
      %v3179 = vld [vmem:[%s5 + $0x170] sm:$0xff]
      %v3180 = vld [vmem:[%s5 + $0x178] sm:$0xff]
      %v3181 = vld [vmem:[%s5 + $0x180] sm:$0xff]
      %v3182 = vld [vmem:[%s5 + $0x188] sm:$0xff]
      %v3183 = vld [vmem:[%s5 + $0x190] sm:$0xff]
      %v3184 = vld [vmem:[%s5 + $0x198] sm:$0xff]
      %v3185 = vld [vmem:[%s5 + $0x1a0] sm:$0xff]
      %v3186 = vld [vmem:[%s5 + $0x1a8] sm:$0xff]
      %v3187 = vld [vmem:[%s5 + $0x1b0] sm:$0xff]
      %v3188 = vld [vmem:[%s5 + $0x1b8] sm:$0xff]
      %v3189 = vld [vmem:[%s5 + $0x1c0] sm:$0xff]
      %v3190 = vld [vmem:[%s5 + $0x1c8] sm:$0xff]
      %v3191 = vld [vmem:[%s5 + $0x1d0] sm:$0xff]
      %v3192 = vld [vmem:[%s5 + $0x1d8] sm:$0xff]
      %v3193 = vld [vmem:[%s5 + $0x1e0] sm:$0xff]
      %v3194 = vld [vmem:[%s5 + $0x1e8] sm:$0xff]
      %v3195 = vld [vmem:[%s5 + $0x1f0] sm:$0xff]
      %v3196 = vld [vmem:[%s5 + $0x1f8] sm:$0xff]
      %3197 = vmatprep.subr.mxu0 %v3134
      %3198 = vmatpush1.msra.mxu0 %v3133
      %3199 = vmatprep.subr.mxu0 %v3138
      %3200 = vmatpush1.msra.mxu0 %v3137
      %3201 = vmatprep.subr.mxu0 %v3142
      %3202 = vmatpush1.msra.mxu0 %v3141
      %3203 = vmatprep.subr.mxu0 %v3146
      %3204 = vmatpush1.msra.mxu0 %v3145
      %3205 = vmatprep.subr.mxu0 %v3150
      %3206 = vmatpush1.msra.mxu0 %v3149
      %3207 = vmatprep.subr.mxu0 %v3154
      %3208 = vmatpush1.msra.mxu0 %v3153
      %3209 = vmatprep.subr.mxu0 %v3158
      %3210 = vmatpush1.msra.mxu0 %v3157
      %3211 = vmatprep.subr.mxu0 %v3162
      %3212 = vmatpush1.msra.mxu0 %v3161
      %3213 = vmatprep.subr.mxu0 %v3166
      %3214 = vmatpush1.msra.mxu0 %v3165
      %3215 = vmatprep.subr.mxu0 %v3170
      %3216 = vmatpush1.msra.mxu0 %v3169
      %3217 = vmatprep.subr.mxu0 %v3174
      %3218 = vmatpush1.msra.mxu0 %v3173
      %3219 = vmatprep.subr.mxu0 %v3178
      %3220 = vmatpush1.msra.mxu0 %v3177
      %3221 = vmatprep.subr.mxu0 %v3182
      %3222 = vmatpush1.msra.mxu0 %v3181
      %3223 = vmatprep.subr.mxu0 %v3186
      %3224 = vmatpush1.msra.mxu0 %v3185
      %3225 = vmatprep.subr.mxu0 %v3190
      %3226 = vmatpush1.msra.mxu0 %v3189
      %3227 = vmatprep.subr.mxu0 %v3194
      %3228 = vmatpush1.msra.mxu0 %v3193
      %3229 = vmatprep.subr.mxu0 0.0
      %3230 = vmatpush1.msra.mxu0 0.0
      %3231 = vmatprep.subr.mxu0 0.0
      %3232 = vmatpush1.msra.mxu0 0.0
      %3233 = vmatprep.subr.mxu0 0.0
      %3234 = vmatpush1.msra.mxu0 0.0
      %3235 = vmatprep.subr.mxu0 0.0
      %3236 = vmatpush1.msra.mxu0 0.0
      %3237 = vmatprep.subr.mxu0 0.0
      %3238 = vmatpush1.msra.mxu0 0.0
      %3239 = vmatprep.subr.mxu0 0.0
      %3240 = vmatpush1.msra.mxu0 0.0
      %3241 = vmatprep.subr.mxu0 0.0
      %3242 = vmatpush1.msra.mxu0 0.0
      %3243 = vmatprep.subr.mxu0 0.0
      %3244 = vmatpush1.msra.mxu0 0.0
      %3245 = vmatprep.subr.mxu0 0.0
      %3246 = vmatpush1.msra.mxu0 0.0
      %3247 = vmatprep.subr.mxu0 0.0
      %3248 = vmatpush1.msra.mxu0 0.0
      %3249 = vmatprep.subr.mxu0 0.0
      %3250 = vmatpush1.msra.mxu0 0.0
      %3251 = vmatprep.subr.mxu0 0.0
      %3252 = vmatpush1.msra.mxu0 0.0
      %3253 = vmatprep.subr.mxu0 0.0
      %3254 = vmatpush1.msra.mxu0 0.0
      %3255 = vmatprep.subr.mxu0 0.0
      %3256 = vmatpush1.msra.mxu0 0.0
      %3257 = vmatprep.subr.mxu0 0.0
      %3258 = vmatpush1.msra.mxu0 0.0
      %3259 = vmatprep.subr.mxu0 0.0
      %3260 = vmatpush1.msra.mxu0 0.0
      %3261 = vmatprep.mubr.f32.mxu0 0.0
      %3262 = vmatmul.mubr.f32.gmra.mrb[0].mxu0 %v3127
      %v3263 = vpop.f32.mrb[0].mxu0
      %v3264 = vadd.f32 0.0, %v3263
      %v3265 = vpop.f32.mrb[0].mxu0
      %v3266 = vadd.f32 0.0, %v3265
      %3267 = vdwg.mxu0
      %3268 = vmatprep.subr.mxu0 %v3136
      %3269 = vmatpush1.msra.mxu0 %v3135
      %3270 = vmatprep.subr.mxu0 %v3140
      %3271 = vmatpush1.msra.mxu0 %v3139
      %3272 = vmatprep.subr.mxu0 %v3144
      %3273 = vmatpush1.msra.mxu0 %v3143
      %3274 = vmatprep.subr.mxu0 %v3148
      %3275 = vmatpush1.msra.mxu0 %v3147
      %3276 = vmatprep.subr.mxu0 %v3152
      %3277 = vmatpush1.msra.mxu0 %v3151
      %3278 = vmatprep.subr.mxu0 %v3156
      %3279 = vmatpush1.msra.mxu0 %v3155
      %3280 = vmatprep.subr.mxu0 %v3160
      %3281 = vmatpush1.msra.mxu0 %v3159
      %3282 = vmatprep.subr.mxu0 %v3164
      %3283 = vmatpush1.msra.mxu0 %v3163
      %3284 = vmatprep.subr.mxu0 %v3168
      %3285 = vmatpush1.msra.mxu0 %v3167
      %3286 = vmatprep.subr.mxu0 %v3172
      %3287 = vmatpush1.msra.mxu0 %v3171
      %3288 = vmatprep.subr.mxu0 %v3176
      %3289 = vmatpush1.msra.mxu0 %v3175
      %3290 = vmatprep.subr.mxu0 %v3180
      %3291 = vmatpush1.msra.mxu0 %v3179
      %3292 = vmatprep.subr.mxu0 %v3184
      %3293 = vmatpush1.msra.mxu0 %v3183
      %3294 = vmatprep.subr.mxu0 %v3188
      %3295 = vmatpush1.msra.mxu0 %v3187
      %3296 = vmatprep.subr.mxu0 %v3192
      %3297 = vmatpush1.msra.mxu0 %v3191
      %3298 = vmatprep.subr.mxu0 %v3196
      %3299 = vmatpush1.msra.mxu0 %v3195
      %3300 = vmatprep.subr.mxu0 0.0
      %3301 = vmatpush1.msra.mxu0 0.0
      %3302 = vmatprep.subr.mxu0 0.0
      %3303 = vmatpush1.msra.mxu0 0.0
      %3304 = vmatprep.subr.mxu0 0.0
      %3305 = vmatpush1.msra.mxu0 0.0
      %3306 = vmatprep.subr.mxu0 0.0
      %3307 = vmatpush1.msra.mxu0 0.0
      %3308 = vmatprep.subr.mxu0 0.0
      %3309 = vmatpush1.msra.mxu0 0.0
      %3310 = vmatprep.subr.mxu0 0.0
      %3311 = vmatpush1.msra.mxu0 0.0
      %3312 = vmatprep.subr.mxu0 0.0
      %3313 = vmatpush1.msra.mxu0 0.0
      %3314 = vmatprep.subr.mxu0 0.0
      %3315 = vmatpush1.msra.mxu0 0.0
      %3316 = vmatprep.subr.mxu0 0.0
      %3317 = vmatpush1.msra.mxu0 0.0
      %3318 = vmatprep.subr.mxu0 0.0
      %3319 = vmatpush1.msra.mxu0 0.0
      %3320 = vmatprep.subr.mxu0 0.0
      %3321 = vmatpush1.msra.mxu0 0.0
      %3322 = vmatprep.subr.mxu0 0.0
      %3323 = vmatpush1.msra.mxu0 0.0
      %3324 = vmatprep.subr.mxu0 0.0
      %3325 = vmatpush1.msra.mxu0 0.0
      %3326 = vmatprep.subr.mxu0 0.0
      %3327 = vmatpush1.msra.mxu0 0.0
      %3328 = vmatprep.subr.mxu0 0.0
      %3329 = vmatpush1.msra.mxu0 0.0
      %3330 = vmatprep.subr.mxu0 0.0
      %3331 = vmatpush1.msra.mxu0 0.0
      %3332 = vmatprep.mubr.f32.mxu0 0.0
      %3333 = vmatmul.mubr.f32.gmra.mrb[0].mxu0 %v3127
      %v3334 = vpop.f32.mrb[0].mxu0
      %v3335 = vadd.f32 0.0, %v3334
      %v3336 = vpop.f32.mrb[0].mxu0
      %v3337 = vadd.f32 0.0, %v3336
      %3338 = vdwg.mxu0
      %v3339 = vadd.f32 %v3129, %v3264
      %v3340 = vadd.f32 %v3130, %v3266
      %v3341 = vadd.f32 %v3131, %v3335
      %v3342 = vadd.f32 %v3132, %v3337
      %v3343 = vxor.u32 %v3339, 2147483648
      %v3344 = vmul.f32 %v3343, 1.442695
      %v3345 = vpow.pop %v3344
      %v3346 = vadd.f32 %v3345, 1.0
      %v3347 = vrcp.pop %v3346
      %v3348 = vmul.f32 1.0, %v3347
      %v3349 = vxor.u32 %v3340, 2147483648
      %v3350 = vmul.f32 %v3349, 1.442695
      %v3351 = vpow.pop %v3350
      %v3352 = vadd.f32 %v3351, 1.0
      %v3353 = vrcp.pop %v3352
      %v3354 = vmul.f32 1.0, %v3353
      %v3355 = vtanh.pop %v3341
      %v3356 = vxor.u32 %v3342, 2147483648
      %v3357 = vmul.f32 %v3356, 1.442695
      %v3358 = vpow.pop %v3357
      %v3359 = vadd.f32 %v3358, 1.0
      %v3360 = vrcp.pop %v3359
      %v3361 = vmul.f32 1.0, %v3360
      %v3362 = vmul.f32 %v3354, %v3128
      %v3363 = vmul.f32 %v3348, %v3355
      %v3364 = vadd.f32 %v3362, %v3363
      %v3365 = vtanh.pop %v3364
      %v3366 = vmul.f32 %v3361, %v3365
      %v3367 = vmul.f32 %v1744, %v3364
      %v3368 = vmul.f32 %v1747, %v3128
      %v3369 = vadd.f32 %v3367, %v3368
      %v3370 = vmul.f32 %v1744, %v3366
      %v3371 = vmul.f32 %v1747, %v3127
      %v3372 = vadd.f32 %v3370, %v3371
      %3373 = vst [vmem:[%s2383] sm:$0xff] %v3369
      %3374 = vst [vmem:[%s2381] sm:$0xff] %v3372
      %v3375 = vld [vmem:[%s2381] sm:$0xff]
      %v3376 = vld [vmem:[%s2383] sm:$0xff]
      %v3377 = vld [vmem:[%s1761] sm:$0xff]
      %v3378 = vld [vmem:[%s1761 + $0x8] sm:$0xff]
      %v3379 = vld [vmem:[%s1761 + $0x10] sm:$0xff]
      %v3380 = vld [vmem:[%s1761 + $0x18] sm:$0xff]
      %v3381 = vld [vmem:[%s5] sm:$0xff]
      %v3382 = vld [vmem:[%s5 + $0x8] sm:$0xff]
      %v3383 = vld [vmem:[%s5 + $0x10] sm:$0xff]
      %v3384 = vld [vmem:[%s5 + $0x18] sm:$0xff]
      %v3385 = vld [vmem:[%s5 + $0x20] sm:$0xff]
      %v3386 = vld [vmem:[%s5 + $0x28] sm:$0xff]
      %v3387 = vld [vmem:[%s5 + $0x30] sm:$0xff]
      %v3388 = vld [vmem:[%s5 + $0x38] sm:$0xff]
      %v3389 = vld [vmem:[%s5 + $0x40] sm:$0xff]
      %v3390 = vld [vmem:[%s5 + $0x48] sm:$0xff]
      %v3391 = vld [vmem:[%s5 + $0x50] sm:$0xff]
      %v3392 = vld [vmem:[%s5 + $0x58] sm:$0xff]
      %v3393 = vld [vmem:[%s5 + $0x60] sm:$0xff]
      %v3394 = vld [vmem:[%s5 + $0x68] sm:$0xff]
      %v3395 = vld [vmem:[%s5 + $0x70] sm:$0xff]
      %v3396 = vld [vmem:[%s5 + $0x78] sm:$0xff]
      %v3397 = vld [vmem:[%s5 + $0x80] sm:$0xff]
      %v3398 = vld [vmem:[%s5 + $0x88] sm:$0xff]
      %v3399 = vld [vmem:[%s5 + $0x90] sm:$0xff]
      %v3400 = vld [vmem:[%s5 + $0x98] sm:$0xff]
      %v3401 = vld [vmem:[%s5 + $0xa0] sm:$0xff]
      %v3402 = vld [vmem:[%s5 + $0xa8] sm:$0xff]
      %v3403 = vld [vmem:[%s5 + $0xb0] sm:$0xff]
      %v3404 = vld [vmem:[%s5 + $0xb8] sm:$0xff]
      %v3405 = vld [vmem:[%s5 + $0xc0] sm:$0xff]
      %v3406 = vld [vmem:[%s5 + $0xc8] sm:$0xff]
      %v3407 = vld [vmem:[%s5 + $0xd0] sm:$0xff]
      %v3408 = vld [vmem:[%s5 + $0xd8] sm:$0xff]
      %v3409 = vld [vmem:[%s5 + $0xe0] sm:$0xff]
      %v3410 = vld [vmem:[%s5 + $0xe8] sm:$0xff]
      %v3411 = vld [vmem:[%s5 + $0xf0] sm:$0xff]
      %v3412 = vld [vmem:[%s5 + $0xf8] sm:$0xff]
      %v3413 = vld [vmem:[%s5 + $0x100] sm:$0xff]
      %v3414 = vld [vmem:[%s5 + $0x108] sm:$0xff]
      %v3415 = vld [vmem:[%s5 + $0x110] sm:$0xff]
      %v3416 = vld [vmem:[%s5 + $0x118] sm:$0xff]
      %v3417 = vld [vmem:[%s5 + $0x120] sm:$0xff]
      %v3418 = vld [vmem:[%s5 + $0x128] sm:$0xff]
      %v3419 = vld [vmem:[%s5 + $0x130] sm:$0xff]
      %v3420 = vld [vmem:[%s5 + $0x138] sm:$0xff]
      %v3421 = vld [vmem:[%s5 + $0x140] sm:$0xff]
      %v3422 = vld [vmem:[%s5 + $0x148] sm:$0xff]
      %v3423 = vld [vmem:[%s5 + $0x150] sm:$0xff]
      %v3424 = vld [vmem:[%s5 + $0x158] sm:$0xff]
      %v3425 = vld [vmem:[%s5 + $0x160] sm:$0xff]
      %v3426 = vld [vmem:[%s5 + $0x168] sm:$0xff]
      %v3427 = vld [vmem:[%s5 + $0x170] sm:$0xff]
      %v3428 = vld [vmem:[%s5 + $0x178] sm:$0xff]
      %v3429 = vld [vmem:[%s5 + $0x180] sm:$0xff]
      %v3430 = vld [vmem:[%s5 + $0x188] sm:$0xff]
      %v3431 = vld [vmem:[%s5 + $0x190] sm:$0xff]
      %v3432 = vld [vmem:[%s5 + $0x198] sm:$0xff]
      %v3433 = vld [vmem:[%s5 + $0x1a0] sm:$0xff]
      %v3434 = vld [vmem:[%s5 + $0x1a8] sm:$0xff]
      %v3435 = vld [vmem:[%s5 + $0x1b0] sm:$0xff]
      %v3436 = vld [vmem:[%s5 + $0x1b8] sm:$0xff]
      %v3437 = vld [vmem:[%s5 + $0x1c0] sm:$0xff]
      %v3438 = vld [vmem:[%s5 + $0x1c8] sm:$0xff]
      %v3439 = vld [vmem:[%s5 + $0x1d0] sm:$0xff]
      %v3440 = vld [vmem:[%s5 + $0x1d8] sm:$0xff]
      %v3441 = vld [vmem:[%s5 + $0x1e0] sm:$0xff]
      %v3442 = vld [vmem:[%s5 + $0x1e8] sm:$0xff]
      %v3443 = vld [vmem:[%s5 + $0x1f0] sm:$0xff]
      %v3444 = vld [vmem:[%s5 + $0x1f8] sm:$0xff]
      %3445 = vmatprep.subr.mxu0 %v3382
      %3446 = vmatpush1.msra.mxu0 %v3381
      %3447 = vmatprep.subr.mxu0 %v3386
      %3448 = vmatpush1.msra.mxu0 %v3385
      %3449 = vmatprep.subr.mxu0 %v3390
      %3450 = vmatpush1.msra.mxu0 %v3389
      %3451 = vmatprep.subr.mxu0 %v3394
      %3452 = vmatpush1.msra.mxu0 %v3393
      %3453 = vmatprep.subr.mxu0 %v3398
      %3454 = vmatpush1.msra.mxu0 %v3397
      %3455 = vmatprep.subr.mxu0 %v3402
      %3456 = vmatpush1.msra.mxu0 %v3401
      %3457 = vmatprep.subr.mxu0 %v3406
      %3458 = vmatpush1.msra.mxu0 %v3405
      %3459 = vmatprep.subr.mxu0 %v3410
      %3460 = vmatpush1.msra.mxu0 %v3409
      %3461 = vmatprep.subr.mxu0 %v3414
      %3462 = vmatpush1.msra.mxu0 %v3413
      %3463 = vmatprep.subr.mxu0 %v3418
      %3464 = vmatpush1.msra.mxu0 %v3417
      %3465 = vmatprep.subr.mxu0 %v3422
      %3466 = vmatpush1.msra.mxu0 %v3421
      %3467 = vmatprep.subr.mxu0 %v3426
      %3468 = vmatpush1.msra.mxu0 %v3425
      %3469 = vmatprep.subr.mxu0 %v3430
      %3470 = vmatpush1.msra.mxu0 %v3429
      %3471 = vmatprep.subr.mxu0 %v3434
      %3472 = vmatpush1.msra.mxu0 %v3433
      %3473 = vmatprep.subr.mxu0 %v3438
      %3474 = vmatpush1.msra.mxu0 %v3437
      %3475 = vmatprep.subr.mxu0 %v3442
      %3476 = vmatpush1.msra.mxu0 %v3441
      %3477 = vmatprep.subr.mxu0 0.0
      %3478 = vmatpush1.msra.mxu0 0.0
      %3479 = vmatprep.subr.mxu0 0.0
      %3480 = vmatpush1.msra.mxu0 0.0
      %3481 = vmatprep.subr.mxu0 0.0
      %3482 = vmatpush1.msra.mxu0 0.0
      %3483 = vmatprep.subr.mxu0 0.0
      %3484 = vmatpush1.msra.mxu0 0.0
      %3485 = vmatprep.subr.mxu0 0.0
      %3486 = vmatpush1.msra.mxu0 0.0
      %3487 = vmatprep.subr.mxu0 0.0
      %3488 = vmatpush1.msra.mxu0 0.0
      %3489 = vmatprep.subr.mxu0 0.0
      %3490 = vmatpush1.msra.mxu0 0.0
      %3491 = vmatprep.subr.mxu0 0.0
      %3492 = vmatpush1.msra.mxu0 0.0
      %3493 = vmatprep.subr.mxu0 0.0
      %3494 = vmatpush1.msra.mxu0 0.0
      %3495 = vmatprep.subr.mxu0 0.0
      %3496 = vmatpush1.msra.mxu0 0.0
      %3497 = vmatprep.subr.mxu0 0.0
      %3498 = vmatpush1.msra.mxu0 0.0
      %3499 = vmatprep.subr.mxu0 0.0
      %3500 = vmatpush1.msra.mxu0 0.0
      %3501 = vmatprep.subr.mxu0 0.0
      %3502 = vmatpush1.msra.mxu0 0.0
      %3503 = vmatprep.subr.mxu0 0.0
      %3504 = vmatpush1.msra.mxu0 0.0
      %3505 = vmatprep.subr.mxu0 0.0
      %3506 = vmatpush1.msra.mxu0 0.0
      %3507 = vmatprep.subr.mxu0 0.0
      %3508 = vmatpush1.msra.mxu0 0.0
      %3509 = vmatprep.mubr.f32.mxu0 0.0
      %3510 = vmatmul.mubr.f32.gmra.mrb[0].mxu0 %v3375
      %v3511 = vpop.f32.mrb[0].mxu0
      %v3512 = vadd.f32 0.0, %v3511
      %v3513 = vpop.f32.mrb[0].mxu0
      %v3514 = vadd.f32 0.0, %v3513
      %3515 = vdwg.mxu0
      %3516 = vmatprep.subr.mxu0 %v3384
      %3517 = vmatpush1.msra.mxu0 %v3383
      %3518 = vmatprep.subr.mxu0 %v3388
      %3519 = vmatpush1.msra.mxu0 %v3387
      %3520 = vmatprep.subr.mxu0 %v3392
      %3521 = vmatpush1.msra.mxu0 %v3391
      %3522 = vmatprep.subr.mxu0 %v3396
      %3523 = vmatpush1.msra.mxu0 %v3395
      %3524 = vmatprep.subr.mxu0 %v3400
      %3525 = vmatpush1.msra.mxu0 %v3399
      %3526 = vmatprep.subr.mxu0 %v3404
      %3527 = vmatpush1.msra.mxu0 %v3403
      %3528 = vmatprep.subr.mxu0 %v3408
      %3529 = vmatpush1.msra.mxu0 %v3407
      %3530 = vmatprep.subr.mxu0 %v3412
      %3531 = vmatpush1.msra.mxu0 %v3411
      %3532 = vmatprep.subr.mxu0 %v3416
      %3533 = vmatpush1.msra.mxu0 %v3415
      %3534 = vmatprep.subr.mxu0 %v3420
      %3535 = vmatpush1.msra.mxu0 %v3419
      %3536 = vmatprep.subr.mxu0 %v3424
      %3537 = vmatpush1.msra.mxu0 %v3423
      %3538 = vmatprep.subr.mxu0 %v3428
      %3539 = vmatpush1.msra.mxu0 %v3427
      %3540 = vmatprep.subr.mxu0 %v3432
      %3541 = vmatpush1.msra.mxu0 %v3431
      %3542 = vmatprep.subr.mxu0 %v3436
      %3543 = vmatpush1.msra.mxu0 %v3435
      %3544 = vmatprep.subr.mxu0 %v3440
      %3545 = vmatpush1.msra.mxu0 %v3439
      %3546 = vmatprep.subr.mxu0 %v3444
      %3547 = vmatpush1.msra.mxu0 %v3443
      %3548 = vmatprep.subr.mxu0 0.0
      %3549 = vmatpush1.msra.mxu0 0.0
      %3550 = vmatprep.subr.mxu0 0.0
      %3551 = vmatpush1.msra.mxu0 0.0
      %3552 = vmatprep.subr.mxu0 0.0
      %3553 = vmatpush1.msra.mxu0 0.0
      %3554 = vmatprep.subr.mxu0 0.0
      %3555 = vmatpush1.msra.mxu0 0.0
      %3556 = vmatprep.subr.mxu0 0.0
      %3557 = vmatpush1.msra.mxu0 0.0
      %3558 = vmatprep.subr.mxu0 0.0
      %3559 = vmatpush1.msra.mxu0 0.0
      %3560 = vmatprep.subr.mxu0 0.0
      %3561 = vmatpush1.msra.mxu0 0.0
      %3562 = vmatprep.subr.mxu0 0.0
      %3563 = vmatpush1.msra.mxu0 0.0
      %3564 = vmatprep.subr.mxu0 0.0
      %3565 = vmatpush1.msra.mxu0 0.0
      %3566 = vmatprep.subr.mxu0 0.0
      %3567 = vmatpush1.msra.mxu0 0.0
      %3568 = vmatprep.subr.mxu0 0.0
      %3569 = vmatpush1.msra.mxu0 0.0
      %3570 = vmatprep.subr.mxu0 0.0
      %3571 = vmatpush1.msra.mxu0 0.0
      %3572 = vmatprep.subr.mxu0 0.0
      %3573 = vmatpush1.msra.mxu0 0.0
      %3574 = vmatprep.subr.mxu0 0.0
      %3575 = vmatpush1.msra.mxu0 0.0
      %3576 = vmatprep.subr.mxu0 0.0
      %3577 = vmatpush1.msra.mxu0 0.0
      %3578 = vmatprep.subr.mxu0 0.0
      %3579 = vmatpush1.msra.mxu0 0.0
      %3580 = vmatprep.mubr.f32.mxu0 0.0
      %3581 = vmatmul.mubr.f32.gmra.mrb[0].mxu0 %v3375
      %v3582 = vpop.f32.mrb[0].mxu0
      %v3583 = vadd.f32 0.0, %v3582
      %v3584 = vpop.f32.mrb[0].mxu0
      %v3585 = vadd.f32 0.0, %v3584
      %3586 = vdwg.mxu0
      %v3587 = vadd.f32 %v3377, %v3512
      %v3588 = vadd.f32 %v3378, %v3514
      %v3589 = vadd.f32 %v3379, %v3583
      %v3590 = vadd.f32 %v3380, %v3585
      %v3591 = vxor.u32 %v3587, 2147483648
      %v3592 = vmul.f32 %v3591, 1.442695
      %v3593 = vpow.pop %v3592
      %v3594 = vadd.f32 %v3593, 1.0
      %v3595 = vrcp.pop %v3594
      %v3596 = vmul.f32 1.0, %v3595
      %v3597 = vxor.u32 %v3588, 2147483648
      %v3598 = vmul.f32 %v3597, 1.442695
      %v3599 = vpow.pop %v3598
      %v3600 = vadd.f32 %v3599, 1.0
      %v3601 = vrcp.pop %v3600
      %v3602 = vmul.f32 1.0, %v3601
      %v3603 = vtanh.pop %v3589
      %v3604 = vxor.u32 %v3590, 2147483648
      %v3605 = vmul.f32 %v3604, 1.442695
      %v3606 = vpow.pop %v3605
      %v3607 = vadd.f32 %v3606, 1.0
      %v3608 = vrcp.pop %v3607
      %v3609 = vmul.f32 1.0, %v3608
      %v3610 = vmul.f32 %v3602, %v3376
      %v3611 = vmul.f32 %v3596, %v3603
      %v3612 = vadd.f32 %v3610, %v3611
      %v3613 = vtanh.pop %v3612
      %v3614 = vmul.f32 %v3609, %v3613
      %v3615 = vmul.f32 %v2004, %v3612
      %v3616 = vmul.f32 %v2007, %v3376
      %v3617 = vadd.f32 %v3615, %v3616
      %v3618 = vmul.f32 %v2004, %v3614
      %v3619 = vmul.f32 %v2007, %v3375
      %v3620 = vadd.f32 %v3618, %v3619
      %3621 = vst [vmem:[%s2383] sm:$0xff] %v3617
      %3622 = vst [vmem:[%s2381] sm:$0xff] %v3620
      %p3623 = scmp.eq.s32.totalorder %s22, 1
      // Predicated region
      $region61: #{bayes_lstm_forward.3} parent=55 // pred_check
        %p3624 = pneg %p3623
      $region62: #{bayes_lstm_forward.3} parent=55 // pred_check_branch
        %3626 = sbr.rel (%p3624) target = $region64
      $region63: #{bayes_lstm_forward.3} parent=55 // pred_region
        %v3627 = vld [vmem:[#allocation2] sm:$0xff]
        %v3628 = vld [vmem:[#allocation2 + $0x8] sm:$0xff]
        %3629 = vst [vmem:[%s10] sm:$0xff] %v3627
        %3630 = vst [vmem:[%s10 + $0x8] sm:$0xff] %v3628
        %v3631 = vld [vmem:[%s2381] sm:$0xff]
        %v3632 = vld [vmem:[%s7] sm:$0xff]
        %v3633 = vld [vmem:[%s7 + $0x8] sm:$0xff]
        %v3634 = vld [vmem:[%s7 + $0x10] sm:$0xff]
        %v3635 = vld [vmem:[%s7 + $0x18] sm:$0xff]
        %v3636 = vld [vmem:[%s7 + $0x20] sm:$0xff]
        %v3637 = vld [vmem:[%s7 + $0x28] sm:$0xff]
        %v3638 = vld [vmem:[%s7 + $0x30] sm:$0xff]
        %v3639 = vld [vmem:[%s7 + $0x38] sm:$0xff]
        %v3640 = vld [vmem:[%s7 + $0x40] sm:$0xff]
        %v3641 = vld [vmem:[%s7 + $0x48] sm:$0xff]
        %v3642 = vld [vmem:[%s7 + $0x50] sm:$0xff]
        %v3643 = vld [vmem:[%s7 + $0x58] sm:$0xff]
        %v3644 = vld [vmem:[%s7 + $0x60] sm:$0xff]
        %v3645 = vld [vmem:[%s7 + $0x68] sm:$0xff]
        %v3646 = vld [vmem:[%s7 + $0x70] sm:$0xff]
        %v3647 = vld [vmem:[%s7 + $0x78] sm:$0xff]
        %v3648 = vld [vmem:[%s8] sm:$0x1]
        %v3650 = vlaneseq
        %v3651 = vshrl.u32 %v3650, 7
        %v3652 = vsub.s32 0, %v3651
        %v3653 = vrot.slane %v3648, %v3652
        %3655 = vmatprep.subr.mxu0 0.0
        %3656 = vmatpush1.msra.mxu0 %v3632
        %3657 = vmatprep.subr.mxu0 0.0
        %3658 = vmatpush1.msra.mxu0 %v3633
        %3659 = vmatprep.subr.mxu0 0.0
        %3660 = vmatpush1.msra.mxu0 %v3634
        %3661 = vmatprep.subr.mxu0 0.0
        %3662 = vmatpush1.msra.mxu0 %v3635
        %3663 = vmatprep.subr.mxu0 0.0
        %3664 = vmatpush1.msra.mxu0 %v3636
        %3665 = vmatprep.subr.mxu0 0.0
        %3666 = vmatpush1.msra.mxu0 %v3637
        %3667 = vmatprep.subr.mxu0 0.0
        %3668 = vmatpush1.msra.mxu0 %v3638
        %3669 = vmatprep.subr.mxu0 0.0
        %3670 = vmatpush1.msra.mxu0 %v3639
        %3671 = vmatprep.subr.mxu0 0.0
        %3672 = vmatpush1.msra.mxu0 %v3640
        %3673 = vmatprep.subr.mxu0 0.0
        %3674 = vmatpush1.msra.mxu0 %v3641
        %3675 = vmatprep.subr.mxu0 0.0
        %3676 = vmatpush1.msra.mxu0 %v3642
        %3677 = vmatprep.subr.mxu0 0.0
        %3678 = vmatpush1.msra.mxu0 %v3643
        %3679 = vmatprep.subr.mxu0 0.0
        %3680 = vmatpush1.msra.mxu0 %v3644
        %3681 = vmatprep.subr.mxu0 0.0
        %3682 = vmatpush1.msra.mxu0 %v3645
        %3683 = vmatprep.subr.mxu0 0.0
        %3684 = vmatpush1.msra.mxu0 %v3646
        %3685 = vmatprep.subr.mxu0 0.0
        %3686 = vmatpush1.msra.mxu0 %v3647
        %3687 = vmatprep.subr.mxu0 0.0
        %3688 = vmatpush1.msra.mxu0 0.0
        %3689 = vmatprep.subr.mxu0 0.0
        %3690 = vmatpush1.msra.mxu0 0.0
        %3691 = vmatprep.subr.mxu0 0.0
        %3692 = vmatpush1.msra.mxu0 0.0
        %3693 = vmatprep.subr.mxu0 0.0
        %3694 = vmatpush1.msra.mxu0 0.0
        %3695 = vmatprep.subr.mxu0 0.0
        %3696 = vmatpush1.msra.mxu0 0.0
        %3697 = vmatprep.subr.mxu0 0.0
        %3698 = vmatpush1.msra.mxu0 0.0
        %3699 = vmatprep.subr.mxu0 0.0
        %3700 = vmatpush1.msra.mxu0 0.0
        %3701 = vmatprep.subr.mxu0 0.0
        %3702 = vmatpush1.msra.mxu0 0.0
        %3703 = vmatprep.subr.mxu0 0.0
        %3704 = vmatpush1.msra.mxu0 0.0
        %3705 = vmatprep.subr.mxu0 0.0
        %3706 = vmatpush1.msra.mxu0 0.0
        %3707 = vmatprep.subr.mxu0 0.0
        %3708 = vmatpush1.msra.mxu0 0.0
        %3709 = vmatprep.subr.mxu0 0.0
        %3710 = vmatpush1.msra.mxu0 0.0
        %3711 = vmatprep.subr.mxu0 0.0
        %3712 = vmatpush1.msra.mxu0 0.0
        %3713 = vmatprep.subr.mxu0 0.0
        %3714 = vmatpush1.msra.mxu0 0.0
        %3715 = vmatprep.subr.mxu0 0.0
        %3716 = vmatpush1.msra.mxu0 0.0
        %3717 = vmatprep.subr.mxu0 0.0
        %3718 = vmatpush1.msra.mxu0 0.0
        %3719 = vmatprep.mubr.f32.mxu0 0.0
        %3720 = vmatmul.mubr.f32.gmra.mrb[0].mxu0 %v3631
        %v3721 = vpop.f32.mrb[0].mxu0
        %v3722 = vadd.f32 %v3653, %v3721
        %v3723 = vpop.f32.mrb[0].mxu0
        %3724 = vdwg.mxu0
        %3725 = vst [vmem:[%s9] sm:$0xff] %v3722
      $region64: #{bayes_lstm_forward.3} parent=55 // pred_fallthru
        _
      // Predicated region
      $region65: #{bayes_lstm_forward.3} parent=55 // pred_check
        %p3726 = pneg %p229
      $region66: #{bayes_lstm_forward.3} parent=55 // pred_check_branch
        %3728 = sbr.rel (%p3726) target = $region68
      $region67: #{bayes_lstm_forward.3} parent=55 // pred_region
        _
      $region68: #{bayes_lstm_forward.3} parent=55 // pred_fallthru
        _
      // Predicated region
      $region69: #{bayes_lstm_forward.3} parent=55 // pred_check
        %p3729 = pneg %p250
      $region70: #{bayes_lstm_forward.3} parent=55 // pred_check_branch
        %3731 = sbr.rel (%p3729) target = $region72
      $region71: #{bayes_lstm_forward.3} parent=55 // pred_region
        _
      $region72: #{bayes_lstm_forward.3} parent=55 // pred_fallthru
        _
      // Predicated region
      $region73: #{bayes_lstm_forward.3} parent=55 // pred_check
        %p3732 = pneg %p229
      $region74: #{bayes_lstm_forward.3} parent=55 // pred_check_branch
        %3734 = sbr.rel (%p3732) target = $region76
      $region75: #{bayes_lstm_forward.3} parent=55 // pred_region
        _
      $region76: #{bayes_lstm_forward.3} parent=55 // pred_fallthru
        _
      // Predicated region
      $region77: #{bayes_lstm_forward.3} parent=55 // pred_check
        %p3735 = pneg %p250
      $region78: #{bayes_lstm_forward.3} parent=55 // pred_check_branch
        %3737 = sbr.rel (%p3735) target = $region80
      $region79: #{bayes_lstm_forward.3} parent=55 // pred_region
        _
      $region80: #{bayes_lstm_forward.3} parent=55 // pred_fallthru
        _
    $region56: #{bayes_lstm_forward.3} parent=5 // pred_fallthru
      _
    %p3738 = scmp.le.s32.totalorder 2, %s17
    // Predicated region
    $region81: #{bayes_lstm_forward.3} parent=5 // pred_check
      %p3739 = pneg %p3738
    $region82: #{bayes_lstm_forward.3} parent=5 // pred_check_branch
      %3741 = sbr.rel (%p3739) target = $region84
    $region83: #{bayes_lstm_forward.3} parent=5 // pred_region
      %s3742 = ssub.s32 %s17, 2
    $region84: #{bayes_lstm_forward.3} parent=5 // pred_fallthru
      _
  $region6: #{bayes_lstm_forward.3} parent=0 // loop_footer
    %s21 = sadd.s32 1, %s17
  $region7: #{bayes_lstm_forward.3} parent=0 // loop_footer_branch
    %16 = sbr.rel target = $region3
  $region8: #{bayes_lstm_forward.3} parent=0 // loop_exit
    _

</llo_original>
